<compile_context>
chip_gen: v7x
topology: tpu7x:2x2x1
jax: 0.10.0
libtpu: 0.0.40
codegen_flags: <defaults>
</compile_context>

<pallas_src>
import functools

import numpy as np

import jax
import jax.numpy as jnp
from jax.experimental import pallas as pl
from jax.experimental.pallas import tpu as pltpu


# ----------------------------------------------------------------------------
# Fused forward kernel (single pallas_call, everything VMEM-resident)
# ----------------------------------------------------------------------------

def _vae_encoder_kernel(x_ref, m1_ref, b1_ref, m2_ref, p_ref, pt_ref,
                        gamma_ref, beta_ref, m3_ref, b3_ref,
                        w1_ref, bl1_ref, w23_ref, b23_ref, eps_ref,
                        z_ref, kl_ref, *, latent_dims, bn_eps, bn_count):
    f32 = jnp.float32

    # conv1 (unrolled to a single matmul; padding/stride baked into m1) + ReLU
    x = x_ref[...].astype(jnp.bfloat16)
    h1 = jnp.dot(x, m1_ref[...], preferred_element_type=f32) + b1_ref[...]
    h1 = jnp.maximum(h1, 0.0)                                    # (B, 14*14*8)

    # conv2 (bias dropped — cancelled by training-mode BN mean subtraction)
    h2 = jnp.dot(h1.astype(jnp.bfloat16), m2_ref[...],
                 preferred_element_type=f32)                     # (B, 7*7*16)

    # BatchNorm2d, training-mode batch stats, per-channel via group-indicator
    # matmuls (feature f belongs to channel f % C).  All stats stay in f32.
    inv_n = 1.0 / bn_count
    colsum = jnp.sum(h2, axis=0, keepdims=True)                              # (1, S*C)
    mean_c = jnp.dot(colsum, p_ref[...], preferred_element_type=f32) * inv_n  # (1, C)
    mean_f = jnp.dot(mean_c, pt_ref[...], preferred_element_type=f32)         # (1, S*C)
    xc = h2 - mean_f
    var_c = jnp.dot(jnp.sum(xc * xc, axis=0, keepdims=True), p_ref[...],
                    preferred_element_type=f32) * inv_n                       # (1, C)
    scale_c = gamma_ref[...] * jax.lax.rsqrt(var_c + bn_eps)
    scale_f = jnp.dot(scale_c, pt_ref[...], preferred_element_type=f32)
    shift_f = jnp.dot(beta_ref[...], pt_ref[...], preferred_element_type=f32)
    h2 = jnp.maximum(xc * scale_f + shift_f, 0.0)

    # conv3 + bias + ReLU; columns of m3 already ordered like torch.flatten
    # (NCHW channel-major), so no permutation before linear1.
    h3 = jnp.dot(h2.astype(jnp.bfloat16), m3_ref[...],
                 preferred_element_type=f32) + b3_ref[...]       # (B, 288)
    h3 = jnp.maximum(h3, 0.0)

    # linear1 + ReLU
    h4 = jnp.dot(h3.astype(jnp.bfloat16), w1_ref[...],
                 preferred_element_type=f32) + bl1_ref[...]      # (B, 128)
    h4 = jnp.maximum(h4, 0.0)

    # linear2 | linear3 fused (lane-concatenated weights)
    ms = jnp.dot(h4.astype(jnp.bfloat16), w23_ref[...],
                 preferred_element_type=f32) + b23_ref[...]      # (B, 2L)
    mu = ms[:, :latent_dims]
    logsig = ms[:, latent_dims:]                                  # = log(sigma) exactly
    sigma = jnp.exp(logsig)

    # reparameterization
    z_ref[...] = (mu + sigma * eps_ref[...]).astype(z_ref.dtype)

    # KL = sum(sigma^2 + mu^2 - log(sigma) - 1/2); log(sigma) == logsig (exact)
    kl_elem = sigma * sigma + mu * mu - logsig - 0.5
    kl_ref[...] = jnp.sum(jnp.sum(kl_elem, axis=1, keepdims=True),
                          axis=0, keepdims=True)


# ----------------------------------------------------------------------------
# Forward wrapper: one reshape + one pallas_call
# ----------------------------------------------------------------------------

def variational_encoder_forward(packed, x_nchw, eps_noise):
    B = x_nchw.shape[0]
    latent = eps_noise.shape[1]
    x_flat = x_nchw.reshape(B, -1).astype(jnp.float32)   # (B, 784); C=1 so NCHW==NHWC flat

    n_spatial = packed["m2"].shape[1] // packed["gamma"].shape[1]   # 49 (static)
    kernel = functools.partial(
        _vae_encoder_kernel,
        latent_dims=latent, bn_eps=1e-5, bn_count=float(B * n_spatial))

    vmem = pl.BlockSpec(memory_space=pltpu.MemorySpace.VMEM)
    # Note: gridless call — everything is a full-array VMEM ref (total < 6 MB).
    # If B grows large, tile the row axis with a 'parallel' grid dim (v7x 2 TCs).
    z, kl = pl.pallas_call(
        kernel,
        out_shape=(jax.ShapeDtypeStruct((B, latent), jnp.float32),
                   jax.ShapeDtypeStruct((1, 1), jnp.float32)),
        in_specs=[vmem] * 15,
        out_specs=(vmem, vmem),
        compiler_params=pltpu.CompilerParams(vmem_limit_bytes=32 * 1024 * 1024),
    )(x_flat,
      packed["m1"], packed["b1"],
      packed["m2"], packed["p"], packed["pt"], packed["gamma"], packed["beta"],
      packed["m3"], packed["b3"],
      packed["w1"], packed["bl1"], packed["w23"], packed["b23"],
      eps_noise.astype(jnp.float32))
    return z, kl[0, 0]


# ----------------------------------------------------------------------------
# Init-time packing: unroll convs to dense matmuls, expand biases, pre-cast.
# ----------------------------------------------------------------------------

def _conv_unrolled(w, IH, IW, stride, padding, out_order):
    """Dense (IH*IW*IC, OH*OW*OC) matrix equivalent to the conv (NHWC-flat in).

    out_order='nhwc' -> columns ordered (oh, ow, oc) (NHWC flatten);
    out_order='nchw' -> columns ordered (oc, oh, ow) (torch.flatten on NCHW).
    """
    w = np.asarray(w, np.float32)
    OC, IC, KH, KW = w.shape
    OH = (IH + 2 * padding - KH) // stride + 1
    OW = (IW + 2 * padding - KW) // stride + 1
    M = np.zeros((IH * IW * IC, OH * OW * OC), np.float32)
    for oh in range(OH):
        for ow in range(OW):
            if out_order == "nhwc":
                out_idx = (oh * OW + ow) * OC + np.arange(OC)
            else:
                out_idx = np.arange(OC) * (OH * OW) + oh * OW + ow
            for ki in range(KH):
                for kj in range(KW):
                    ih = oh * stride + ki - padding
                    iw = ow * stride + kj - padding
                    if not (0 <= ih < IH and 0 <= iw < IW):
                        continue  # padded position -> contributes nothing
                    in_idx = (ih * IW + iw) * IC + np.arange(IC)
                    M[np.ix_(in_idx, out_idx)] = w[:, :, ki, kj].T
    return M, OH, OW


def init_params(key, latent_dims):
    ks = jax.random.split(key, 12)

    def uni(k, shape, fan_in):
        bound = 1.0 / float(fan_in) ** 0.5
        return np.asarray(jax.random.uniform(k, shape, jnp.float32, -bound, bound))

    # Raw PyTorch-layout parameters (deterministic, PyTorch-default-style init)
    w_c1 = uni(ks[0], (8, 1, 3, 3), 1 * 9);    b_c1 = uni(ks[1], (8,), 1 * 9)
    w_c2 = uni(ks[2], (16, 8, 3, 3), 8 * 9)    # conv2 bias omitted: cancelled by BN
    w_c3 = uni(ks[4], (32, 16, 3, 3), 16 * 9); b_c3 = uni(ks[5], (32,), 16 * 9)
    w_l1 = uni(ks[6], (288, 128), 288);        b_l1 = uni(ks[7], (128,), 288)
    w_l2 = uni(ks[8], (128, latent_dims), 128); b_l2 = uni(ks[9], (latent_dims,), 128)
    w_l3 = uni(ks[10], (128, latent_dims), 128); b_l3 = uni(ks[11], (latent_dims,), 128)
    gamma = np.ones((16,), np.float32)
    beta = np.zeros((16,), np.float32)

    # Unrolled conv matrices (padding/stride baked in)
    m1, oh1, ow1 = _conv_unrolled(w_c1, 28, 28, stride=2, padding=1, out_order="nhwc")  # (784, 1568)
    m2, oh2, ow2 = _conv_unrolled(w_c2, oh1, ow1, stride=2, padding=1, out_order="nhwc")  # (1568, 784)
    m3, oh3, ow3 = _conv_unrolled(w_c3, oh2, ow2, stride=2, padding=0, out_order="nchw")  # (784, 288)

    # Expanded biases (matching the column order of the unrolled matrices)
    b1_flat = np.tile(b_c1, oh1 * ow1)        # NHWC order: channel = f % 8
    b3_flat = np.repeat(b_c3, oh3 * ow3)      # NCHW (torch.flatten) order

    # BatchNorm group-indicator matrices: channel of feature f is f % 16
    C2 = 16
    F2 = oh2 * ow2 * C2
    P = np.zeros((F2, C2), np.float32)
    P[np.arange(F2), np.arange(F2) % C2] = 1.0

    # Fused linear2|linear3
    w23 = np.concatenate([w_l2, w_l3], axis=1)
    b23 = np.concatenate([b_l2, b_l3])

    bf16, f32 = jnp.bfloat16, jnp.float32
    return {
        "m1": jnp.asarray(m1, bf16), "b1": jnp.asarray(b1_flat.reshape(1, -1), f32),
        "m2": jnp.asarray(m2, bf16),
        "p": jnp.asarray(P, f32), "pt": jnp.asarray(P.T.copy(), f32),
        "gamma": jnp.asarray(gamma.reshape(1, -1), f32),
        "beta": jnp.asarray(beta.reshape(1, -1), f32),
        "m3": jnp.asarray(m3, bf16), "b3": jnp.asarray(b3_flat.reshape(1, -1), f32),
        "w1": jnp.asarray(w_l1, bf16), "bl1": jnp.asarray(b_l1.reshape(1, -1), f32),
        "w23": jnp.asarray(w23, bf16), "b23": jnp.asarray(b23.reshape(1, -1), f32),
    }


# ----------------------------------------------------------------------------

if __name__ == "__main__":
    latent_dims = 8
    B = 2

    key = jax.random.PRNGKey(0)
    k_params, k_x, k_eps = jax.random.split(key, 3)

    packed = init_params(k_params, latent_dims)
    x = jax.random.normal(k_x, (B, 1, 28, 28), jnp.float32)       # NCHW, like PyTorch
    eps_noise = jax.random.normal(k_eps, (B, latent_dims), jnp.float32)

    fwd = jax.jit(variational_encoder_forward)
    z, kl = fwd(packed, x, eps_noise)
    z = jax.block_until_ready(z)

    assert z.shape == (B, latent_dims), z.shape
    assert bool(jnp.all(jnp.isfinite(z)))
    assert bool(jnp.isfinite(kl))
    print("KERNEL_OK")
</pallas_src>

<mosaic_0001>
module attributes {stable_mosaic.version = 11 : i64} {
  func.func @_vae_encoder_kernel(%arg0: memref<2x784xf32, #tpu.memory_space<vmem>>, %arg1: memref<784x1568xbf16, #tpu.memory_space<vmem>>, %arg2: memref<1x1568xf32, #tpu.memory_space<vmem>>, %arg3: memref<1568x784xbf16, #tpu.memory_space<vmem>>, %arg4: memref<784x16xf32, #tpu.memory_space<vmem>>, %arg5: memref<16x784xf32, #tpu.memory_space<vmem>>, %arg6: memref<1x16xf32, #tpu.memory_space<vmem>>, %arg7: memref<1x16xf32, #tpu.memory_space<vmem>>, %arg8: memref<784x288xbf16, #tpu.memory_space<vmem>>, %arg9: memref<1x288xf32, #tpu.memory_space<vmem>>, %arg10: memref<288x128xbf16, #tpu.memory_space<vmem>>, %arg11: memref<1x128xf32, #tpu.memory_space<vmem>>, %arg12: memref<128x16xbf16, #tpu.memory_space<vmem>>, %arg13: memref<1x16xf32, #tpu.memory_space<vmem>>, %arg14: memref<2x8xf32, #tpu.memory_space<vmem>>, %arg15: memref<2x8xf32, #tpu.memory_space<vmem>>, %arg16: memref<1x1xf32, #tpu.memory_space<vmem>>) attributes {dimension_semantics = [], scalar_prefetch = 0 : i64, scratch_operands = 0 : i64, tpu.core_type = #tpu.core_type<tc>} {
    %c0 = arith.constant 0 : index
    %c0_0 = arith.constant 0 : index
    %0 = vector.load %arg0[%c0, %c0_0] : memref<2x784xf32, #tpu.memory_space<vmem>>, vector<2x784xf32>
    %1 = arith.truncf %0 : vector<2x784xf32> to vector<2x784xbf16>
    %c0_1 = arith.constant 0 : index
    %c0_2 = arith.constant 0 : index
    %2 = vector.load %arg1[%c0_1, %c0_2] : memref<784x1568xbf16, #tpu.memory_space<vmem>>, vector<784x1568xbf16>
    %cst = arith.constant dense<0.000000e+00> : vector<2x1568xf32>
    %3 = tpu.matmul %1, %2, %cst {dimension_numbers = #tpu.dot_dimension_numbers<[1], [0], [0], [1], [0, 0, 1, 1], [], []>} : vector<2x784xbf16>, vector<784x1568xbf16>, vector<2x1568xf32> -> vector<2x1568xf32>
    %c0_3 = arith.constant 0 : index
    %c0_4 = arith.constant 0 : index
    %4 = vector.load %arg2[%c0_3, %c0_4] : memref<1x1568xf32, #tpu.memory_space<vmem>>, vector<1x1568xf32>
    %5 = vector.broadcast %4 : vector<1x1568xf32> to vector<2x1568xf32>
    %6 = arith.addf %3, %5 : vector<2x1568xf32>
    %cst_5 = arith.constant 0.000000e+00 : f32
    %7 = vector.broadcast %cst_5 : f32 to vector<2x1568xf32>
    %8 = arith.maximumf %6, %7 : vector<2x1568xf32>
    %9 = arith.truncf %8 : vector<2x1568xf32> to vector<2x1568xbf16>
    %c0_6 = arith.constant 0 : index
    %c0_7 = arith.constant 0 : index
    %10 = vector.load %arg3[%c0_6, %c0_7] : memref<1568x784xbf16, #tpu.memory_space<vmem>>, vector<1568x784xbf16>
    %cst_8 = arith.constant dense<0.000000e+00> : vector<2x784xf32>
    %11 = tpu.matmul %9, %10, %cst_8 {dimension_numbers = #tpu.dot_dimension_numbers<[1], [0], [0], [1], [0, 0, 1, 1], [], []>} : vector<2x1568xbf16>, vector<1568x784xbf16>, vector<2x784xf32> -> vector<2x784xf32>
    %cst_9 = arith.constant dense<0.000000e+00> : vector<784xf32>
    %12 = vector.multi_reduction <add>, %11, %cst_9 [0] : vector<2x784xf32> to vector<784xf32>
    %13 = vector.shape_cast %12 : vector<784xf32> to vector<1x784xf32>
    %c0_10 = arith.constant 0 : index
    %c0_11 = arith.constant 0 : index
    %14 = vector.load %arg4[%c0_10, %c0_11] : memref<784x16xf32, #tpu.memory_space<vmem>>, vector<784x16xf32>
    %cst_12 = arith.constant dense<0.000000e+00> : vector<1x16xf32>
    %15 = tpu.matmul %13, %14, %cst_12 {dimension_numbers = #tpu.dot_dimension_numbers<[1], [0], [0], [1], [0, 0, 1, 1], [], []>} : vector<1x784xf32>, vector<784x16xf32>, vector<1x16xf32> -> vector<1x16xf32>
    %cst_13 = arith.constant 0.0102040814 : f32
    %16 = vector.broadcast %cst_13 : f32 to vector<1x16xf32>
    %17 = arith.mulf %15, %16 : vector<1x16xf32>
    %c0_14 = arith.constant 0 : index
    %c0_15 = arith.constant 0 : index
    %18 = vector.load %arg5[%c0_14, %c0_15] : memref<16x784xf32, #tpu.memory_space<vmem>>, vector<16x784xf32>
    %cst_16 = arith.constant dense<0.000000e+00> : vector<1x784xf32>
    %19 = tpu.matmul %17, %18, %cst_16 {dimension_numbers = #tpu.dot_dimension_numbers<[1], [0], [0], [1], [0, 0, 1, 1], [], []>} : vector<1x16xf32>, vector<16x784xf32>, vector<1x784xf32> -> vector<1x784xf32>
    %20 = vector.broadcast %19 : vector<1x784xf32> to vector<2x784xf32>
    %21 = arith.subf %11, %20 : vector<2x784xf32>
    %22 = arith.mulf %21, %21 : vector<2x784xf32>
    %cst_17 = arith.constant dense<0.000000e+00> : vector<784xf32>
    %23 = vector.multi_reduction <add>, %22, %cst_17 [0] : vector<2x784xf32> to vector<784xf32>
    %24 = vector.shape_cast %23 : vector<784xf32> to vector<1x784xf32>
    %c0_18 = arith.constant 0 : index
    %c0_19 = arith.constant 0 : index
    %25 = vector.load %arg4[%c0_18, %c0_19] : memref<784x16xf32, #tpu.memory_space<vmem>>, vector<784x16xf32>
    %cst_20 = arith.constant dense<0.000000e+00> : vector<1x16xf32>
    %26 = tpu.matmul %24, %25, %cst_20 {dimension_numbers = #tpu.dot_dimension_numbers<[1], [0], [0], [1], [0, 0, 1, 1], [], []>} : vector<1x784xf32>, vector<784x16xf32>, vector<1x16xf32> -> vector<1x16xf32>
    %cst_21 = arith.constant 0.0102040814 : f32
    %27 = vector.broadcast %cst_21 : f32 to vector<1x16xf32>
    %28 = arith.mulf %26, %27 : vector<1x16xf32>
    %c0_22 = arith.constant 0 : index
    %c0_23 = arith.constant 0 : index
    %29 = vector.load %arg6[%c0_22, %c0_23] : memref<1x16xf32, #tpu.memory_space<vmem>>, vector<1x16xf32>
    %cst_24 = arith.constant 9.99999974E-6 : f32
    %30 = vector.broadcast %cst_24 : f32 to vector<1x16xf32>
    %31 = arith.addf %28, %30 : vector<1x16xf32>
    %32 = math.rsqrt %31 : vector<1x16xf32>
    %33 = arith.mulf %29, %32 : vector<1x16xf32>
    %c0_25 = arith.constant 0 : index
    %c0_26 = arith.constant 0 : index
    %34 = vector.load %arg5[%c0_25, %c0_26] : memref<16x784xf32, #tpu.memory_space<vmem>>, vector<16x784xf32>
    %cst_27 = arith.constant dense<0.000000e+00> : vector<1x784xf32>
    %35 = tpu.matmul %33, %34, %cst_27 {dimension_numbers = #tpu.dot_dimension_numbers<[1], [0], [0], [1], [0, 0, 1, 1], [], []>} : vector<1x16xf32>, vector<16x784xf32>, vector<1x784xf32> -> vector<1x784xf32>
    %c0_28 = arith.constant 0 : index
    %c0_29 = arith.constant 0 : index
    %36 = vector.load %arg7[%c0_28, %c0_29] : memref<1x16xf32, #tpu.memory_space<vmem>>, vector<1x16xf32>
    %c0_30 = arith.constant 0 : index
    %c0_31 = arith.constant 0 : index
    %37 = vector.load %arg5[%c0_30, %c0_31] : memref<16x784xf32, #tpu.memory_space<vmem>>, vector<16x784xf32>
    %cst_32 = arith.constant dense<0.000000e+00> : vector<1x784xf32>
    %38 = tpu.matmul %36, %37, %cst_32 {dimension_numbers = #tpu.dot_dimension_numbers<[1], [0], [0], [1], [0, 0, 1, 1], [], []>} : vector<1x16xf32>, vector<16x784xf32>, vector<1x784xf32> -> vector<1x784xf32>
    %39 = vector.broadcast %35 : vector<1x784xf32> to vector<2x784xf32>
    %40 = arith.mulf %21, %39 : vector<2x784xf32>
    %41 = vector.broadcast %38 : vector<1x784xf32> to vector<2x784xf32>
    %42 = arith.addf %40, %41 : vector<2x784xf32>
    %cst_33 = arith.constant 0.000000e+00 : f32
    %43 = vector.broadcast %cst_33 : f32 to vector<2x784xf32>
    %44 = arith.maximumf %42, %43 : vector<2x784xf32>
    %45 = arith.truncf %44 : vector<2x784xf32> to vector<2x784xbf16>
    %c0_34 = arith.constant 0 : index
    %c0_35 = arith.constant 0 : index
    %46 = vector.load %arg8[%c0_34, %c0_35] : memref<784x288xbf16, #tpu.memory_space<vmem>>, vector<784x288xbf16>
    %cst_36 = arith.constant dense<0.000000e+00> : vector<2x288xf32>
    %47 = tpu.matmul %45, %46, %cst_36 {dimension_numbers = #tpu.dot_dimension_numbers<[1], [0], [0], [1], [0, 0, 1, 1], [], []>} : vector<2x784xbf16>, vector<784x288xbf16>, vector<2x288xf32> -> vector<2x288xf32>
    %c0_37 = arith.constant 0 : index
    %c0_38 = arith.constant 0 : index
    %48 = vector.load %arg9[%c0_37, %c0_38] : memref<1x288xf32, #tpu.memory_space<vmem>>, vector<1x288xf32>
    %49 = vector.broadcast %48 : vector<1x288xf32> to vector<2x288xf32>
    %50 = arith.addf %47, %49 : vector<2x288xf32>
    %cst_39 = arith.constant 0.000000e+00 : f32
    %51 = vector.broadcast %cst_39 : f32 to vector<2x288xf32>
    %52 = arith.maximumf %50, %51 : vector<2x288xf32>
    %53 = arith.truncf %52 : vector<2x288xf32> to vector<2x288xbf16>
    %c0_40 = arith.constant 0 : index
    %c0_41 = arith.constant 0 : index
    %54 = vector.load %arg10[%c0_40, %c0_41] : memref<288x128xbf16, #tpu.memory_space<vmem>>, vector<288x128xbf16>
    %cst_42 = arith.constant dense<0.000000e+00> : vector<2x128xf32>
    %55 = tpu.matmul %53, %54, %cst_42 {dimension_numbers = #tpu.dot_dimension_numbers<[1], [0], [0], [1], [0, 0, 1, 1], [], []>} : vector<2x288xbf16>, vector<288x128xbf16>, vector<2x128xf32> -> vector<2x128xf32>
    %c0_43 = arith.constant 0 : index
    %c0_44 = arith.constant 0 : index
    %56 = vector.load %arg11[%c0_43, %c0_44] : memref<1x128xf32, #tpu.memory_space<vmem>>, vector<1x128xf32>
    %57 = vector.broadcast %56 : vector<1x128xf32> to vector<2x128xf32>
    %58 = arith.addf %55, %57 : vector<2x128xf32>
    %cst_45 = arith.constant 0.000000e+00 : f32
    %59 = vector.broadcast %cst_45 : f32 to vector<2x128xf32>
    %60 = arith.maximumf %58, %59 : vector<2x128xf32>
    %61 = arith.truncf %60 : vector<2x128xf32> to vector<2x128xbf16>
    %c0_46 = arith.constant 0 : index
    %c0_47 = arith.constant 0 : index
    %62 = vector.load %arg12[%c0_46, %c0_47] : memref<128x16xbf16, #tpu.memory_space<vmem>>, vector<128x16xbf16>
    %cst_48 = arith.constant dense<0.000000e+00> : vector<2x16xf32>
    %63 = tpu.matmul %61, %62, %cst_48 {dimension_numbers = #tpu.dot_dimension_numbers<[1], [0], [0], [1], [0, 0, 1, 1], [], []>} : vector<2x128xbf16>, vector<128x16xbf16>, vector<2x16xf32> -> vector<2x16xf32>
    %c0_49 = arith.constant 0 : index
    %c0_50 = arith.constant 0 : index
    %64 = vector.load %arg13[%c0_49, %c0_50] : memref<1x16xf32, #tpu.memory_space<vmem>>, vector<1x16xf32>
    %65 = vector.broadcast %64 : vector<1x16xf32> to vector<2x16xf32>
    %66 = arith.addf %63, %65 : vector<2x16xf32>
    %67 = vector.extract_strided_slice %66 {offsets = [0, 0], sizes = [2, 8], strides = [1, 1]} : vector<2x16xf32> to vector<2x8xf32>
    %68 = vector.extract_strided_slice %66 {offsets = [0, 8], sizes = [2, 8], strides = [1, 1]} : vector<2x16xf32> to vector<2x8xf32>
    %69 = math.exp %68 : vector<2x8xf32>
    %c0_51 = arith.constant 0 : index
    %c0_52 = arith.constant 0 : index
    %70 = vector.load %arg14[%c0_51, %c0_52] : memref<2x8xf32, #tpu.memory_space<vmem>>, vector<2x8xf32>
    %71 = arith.mulf %69, %70 : vector<2x8xf32>
    %72 = arith.addf %67, %71 : vector<2x8xf32>
    %c0_53 = arith.constant 0 : index
    %c0_54 = arith.constant 0 : index
    %73 = vector.load %arg15[%c0_53, %c0_54] : memref<2x8xf32, #tpu.memory_space<vmem>>, vector<2x8xf32>
    tpu.vector_store %arg15[%c0_53, %c0_54], %72 {strides = array<i32>} : memref<2x8xf32, #tpu.memory_space<vmem>>, vector<2x8xf32>,
    %74 = arith.mulf %69, %69 : vector<2x8xf32>
    %75 = arith.mulf %67, %67 : vector<2x8xf32>
    %76 = arith.addf %74, %75 : vector<2x8xf32>
    %77 = arith.subf %76, %68 : vector<2x8xf32>
    %cst_55 = arith.constant 5.000000e-01 : f32
    %78 = vector.broadcast %cst_55 : f32 to vector<2x8xf32>
    %79 = arith.subf %77, %78 : vector<2x8xf32>
    %cst_56 = arith.constant dense<0.000000e+00> : vector<2xf32>
    %80 = vector.multi_reduction <add>, %79, %cst_56 [1] : vector<2x8xf32> to vector<2xf32>
    %81 = vector.shape_cast %80 : vector<2xf32> to vector<2x1xf32>
    %cst_57 = arith.constant dense<0.000000e+00> : vector<1xf32>
    %82 = vector.multi_reduction <add>, %81, %cst_57 [0] : vector<2x1xf32> to vector<1xf32>
    %83 = vector.shape_cast %82 : vector<1xf32> to vector<1x1xf32>
    %c0_58 = arith.constant 0 : index
    %c0_59 = arith.constant 0 : index
    %84 = vector.load %arg16[%c0_58, %c0_59] : memref<1x1xf32, #tpu.memory_space<vmem>>, vector<1x1xf32>
    tpu.vector_store %arg16[%c0_58, %c0_59], %83 {strides = array<i32>} : memref<1x1xf32, #tpu.memory_space<vmem>>, vector<1x1xf32>,
    return
  }
}

</mosaic_0001>

<llo_original>
// kernel: variational_encoder_forward.1
$region0: #{variational_encoder_forward.1}
  #allocation0 [shape = 'u32[]', space=smem, size = 0x4, offset = 0x4, fixed_abs, tag = 'smem constant byte address 0x4 - core index']
  #allocation1 [shape = 'u32[144,128]{1,0:T(1,128)}', space=vmem, size = 0x12000, scoped, tag = 'internal scratch']
  %s0 = inlined_call_operand.vmem [shape: f32[2,784], index: 0, kind: input, shape index: {}]
  %s1 = inlined_call_operand.vmem [shape: bf16[784,1568], index: 1, kind: input, shape index: {}]
  %s2 = inlined_call_operand.vmem [shape: f32[1,1568], index: 2, kind: input, shape index: {}]
  %s3 = inlined_call_operand.vmem [shape: bf16[1568,784], index: 3, kind: input, shape index: {}]
  %s4 = inlined_call_operand.vmem [shape: f32[784,16], index: 4, kind: input, shape index: {}]
  %s5 = inlined_call_operand.vmem [shape: f32[16,784], index: 5, kind: input, shape index: {}]
  %s6 = inlined_call_operand.vmem [shape: f32[1,16], index: 6, kind: input, shape index: {}]
  %s7 = inlined_call_operand.vmem [shape: f32[1,16], index: 7, kind: input, shape index: {}]
  %s8 = inlined_call_operand.vmem [shape: bf16[784,288], index: 8, kind: input, shape index: {}]
  %s9 = inlined_call_operand.vmem [shape: f32[1,288], index: 9, kind: input, shape index: {}]
  %s10 = inlined_call_operand.vmem [shape: bf16[288,128], index: 10, kind: input, shape index: {}]
  %s11 = inlined_call_operand.vmem [shape: f32[1,128], index: 11, kind: input, shape index: {}]
  %s12 = inlined_call_operand.vmem [shape: bf16[128,16], index: 12, kind: input, shape index: {}]
  %s13 = inlined_call_operand.vmem [shape: f32[1,16], index: 13, kind: input, shape index: {}]
  %s14 = inlined_call_operand.vmem [shape: f32[2,8], index: 14, kind: input, shape index: {}]
  %s15 = inlined_call_operand.hbm [shape: f32[2,8], index: 15, kind: output, shape index: {0}]
  %s16 = inlined_call_operand.hbm [shape: f32[1,1], index: 16, kind: output, shape index: {1}]
  %17 = xla_tuple %s15, %s16
  %s18 = sld [smem:[#allocation0]]
  $region78: #{variational_encoder_forward.1} parent=0
    _
  %s20 = ssub.s32 1, %s18
  %s21 = scalar_select 0, %s20, %s18
  $region1: #{variational_encoder_forward.1} parent=0
    #allocation2 [shape = 'u8[1024]{0}', space=vmem, size = 0x400, scoped, tag = 'output window, operand 0, single buffered']
    #allocation3 [shape = 's32[1]{0}', space=sflag, size = 0x4, scoped, tag = 'scoped memory for variational_encoder_forward.1']
    #allocation4 [shape = 'u8[512]{0}', space=vmem, size = 0x400, scoped, tag = 'output window, operand 1, single buffered']
    #allocation5 [shape = 's32[1]{0}', space=sflag, size = 0x4, scoped, tag = 'scoped memory for variational_encoder_forward.1']
    %22 = vsyncpa [#allocation3], 0
    %23 = vsyncpa [#allocation5], 0
    // Predicated region
    $region2: #{variational_encoder_forward.1} parent=1 // pred_check
      _
    $region3: #{variational_encoder_forward.1} parent=1 // pred_check_branch
      %25 = sbr.rel (0) target = $region5
    $region4: #{variational_encoder_forward.1} parent=1 // pred_region
      _
    $region5: #{variational_encoder_forward.1} parent=1 // pred_fallthru
      _
    // Predicated region
    $region6: #{variational_encoder_forward.1} parent=1 // pred_check
      _
    $region7: #{variational_encoder_forward.1} parent=1 // pred_check_branch
      %27 = sbr.rel (0) target = $region9
    $region8: #{variational_encoder_forward.1} parent=1 // pred_region
      _
    $region9: #{variational_encoder_forward.1} parent=1 // pred_fallthru
      _
    // Predicated region
    $region10: #{variational_encoder_forward.1} parent=1 // pred_check
      _
    $region11: #{variational_encoder_forward.1} parent=1 // pred_check_branch
      %29 = sbr.rel (0) target = $region13
    $region12: #{variational_encoder_forward.1} parent=1 // pred_region
      _
    $region13: #{variational_encoder_forward.1} parent=1 // pred_fallthru
      _
    // Predicated region
    $region14: #{variational_encoder_forward.1} parent=1 // pred_check
      _
    $region15: #{variational_encoder_forward.1} parent=1 // pred_check_branch
      %31 = sbr.rel (0) target = $region17
    $region16: #{variational_encoder_forward.1} parent=1 // pred_region
      _
    $region17: #{variational_encoder_forward.1} parent=1 // pred_fallthru
      _
    // Predicated region
    $region18: #{variational_encoder_forward.1} parent=1 // pred_check
      _
    $region19: #{variational_encoder_forward.1} parent=1 // pred_check_branch
      %33 = sbr.rel (0) target = $region21
    $region20: #{variational_encoder_forward.1} parent=1 // pred_region
      _
    $region21: #{variational_encoder_forward.1} parent=1 // pred_fallthru
      _
    // Predicated region
    $region22: #{variational_encoder_forward.1} parent=1 // pred_check
      _
    $region23: #{variational_encoder_forward.1} parent=1 // pred_check_branch
      %35 = sbr.rel (0) target = $region25
    $region24: #{variational_encoder_forward.1} parent=1 // pred_region
      _
    $region25: #{variational_encoder_forward.1} parent=1 // pred_fallthru
      _
    // Predicated region
    $region26: #{variational_encoder_forward.1} parent=1 // pred_check
      _
    $region27: #{variational_encoder_forward.1} parent=1 // pred_check_branch
      %37 = sbr.rel (0) target = $region29
    $region28: #{variational_encoder_forward.1} parent=1 // pred_region
      _
    $region29: #{variational_encoder_forward.1} parent=1 // pred_fallthru
      _
    // Predicated region
    $region30: #{variational_encoder_forward.1} parent=1 // pred_check
      _
    $region31: #{variational_encoder_forward.1} parent=1 // pred_check_branch
      %39 = sbr.rel (0) target = $region33
    $region32: #{variational_encoder_forward.1} parent=1 // pred_region
      _
    $region33: #{variational_encoder_forward.1} parent=1 // pred_fallthru
      _
    // Predicated region
    $region34: #{variational_encoder_forward.1} parent=1 // pred_check
      _
    $region35: #{variational_encoder_forward.1} parent=1 // pred_check_branch
      %41 = sbr.rel (0) target = $region37
    $region36: #{variational_encoder_forward.1} parent=1 // pred_region
      _
    $region37: #{variational_encoder_forward.1} parent=1 // pred_fallthru
      _
    // Predicated region
    $region38: #{variational_encoder_forward.1} parent=1 // pred_check
      _
    $region39: #{variational_encoder_forward.1} parent=1 // pred_check_branch
      %43 = sbr.rel (0) target = $region41
    $region40: #{variational_encoder_forward.1} parent=1 // pred_region
      _
    $region41: #{variational_encoder_forward.1} parent=1 // pred_fallthru
      _
    // Predicated region
    $region42: #{variational_encoder_forward.1} parent=1 // pred_check
      _
    $region43: #{variational_encoder_forward.1} parent=1 // pred_check_branch
      %45 = sbr.rel (0) target = $region45
    $region44: #{variational_encoder_forward.1} parent=1 // pred_region
      _
    $region45: #{variational_encoder_forward.1} parent=1 // pred_fallthru
      _
    // Predicated region
    $region46: #{variational_encoder_forward.1} parent=1 // pred_check
      _
    $region47: #{variational_encoder_forward.1} parent=1 // pred_check_branch
      %47 = sbr.rel (0) target = $region49
    $region48: #{variational_encoder_forward.1} parent=1 // pred_region
      _
    $region49: #{variational_encoder_forward.1} parent=1 // pred_fallthru
      _
    // Predicated region
    $region50: #{variational_encoder_forward.1} parent=1 // pred_check
      _
    $region51: #{variational_encoder_forward.1} parent=1 // pred_check_branch
      %49 = sbr.rel (0) target = $region53
    $region52: #{variational_encoder_forward.1} parent=1 // pred_region
      _
    $region53: #{variational_encoder_forward.1} parent=1 // pred_fallthru
      _
    // Predicated region
    $region54: #{variational_encoder_forward.1} parent=1 // pred_check
      _
    $region55: #{variational_encoder_forward.1} parent=1 // pred_check_branch
      %51 = sbr.rel (0) target = $region57
    $region56: #{variational_encoder_forward.1} parent=1 // pred_region
      _
    $region57: #{variational_encoder_forward.1} parent=1 // pred_fallthru
      _
    // Predicated region
    $region58: #{variational_encoder_forward.1} parent=1 // pred_check
      _
    $region59: #{variational_encoder_forward.1} parent=1 // pred_check_branch
      %53 = sbr.rel (0) target = $region61
    $region60: #{variational_encoder_forward.1} parent=1 // pred_region
      _
    $region61: #{variational_encoder_forward.1} parent=1 // pred_fallthru
      _
    %v55 = vld [vmem:[%s0] sm:$0xff]
    %v56 = vld [vmem:[%s0 + $0x8] sm:$0x3f]
    %v59 = vcombine.high %v55, %v55
    %v61 = vunpack.c.l.s4 1983009808
    %v62 = vunpack.c.0.s8 %v61
    %v63 = vlaneseq
    %v64 = vshrl.u32 %v63, 7
    %v65 = vsub.s32 %v62, %v64
    %v66 = vrot.slane %v55, %v65
    %v68 = vunpack.c.l.s4 1983009808
    %v69 = vunpack.c.0.s8 %v68
    %v70 = vlaneseq
    %v71 = vshrl.u32 %v70, 7
    %v72 = vsub.s32 %v69, %v71
    %v73 = vrot.slane %v59, %v72
    %v74 = vcombine.high %v66, %v66
    %v75 = vcombine.high %v73, %v73
    %v76 = vcombine.high %v56, %v56
    %v78 = vunpack.c.l.s4 1983009808
    %v79 = vunpack.c.0.s8 %v78
    %v80 = vlaneseq
    %v81 = vshrl.u32 %v80, 7
    %v82 = vsub.s32 %v79, %v81
    %v83 = vrot.slane %v56, %v82
    %v85 = vunpack.c.l.s4 1983009808
    %v86 = vunpack.c.0.s8 %v85
    %v87 = vlaneseq
    %v88 = vshrl.u32 %v87, 7
    %v89 = vsub.s32 %v86, %v88
    %v90 = vrot.slane %v76, %v89
    %v91 = vcombine.high %v83, %v83
    %v99 = vpack.c.bf16 %v66, %v66
    %v100 = vpack.c.bf16 %v74, %v74
    %v101 = vpack.c.bf16 %v73, %v73
    %v102 = vpack.c.bf16 %v75, %v75
    %v103 = vpack.c.bf16 %v83, %v83
    %v104 = vpack.c.bf16 %v91, %v91
    %v105 = vpack.c.bf16 %v90, %v90
    %v106 = vld [vmem:[%s1] sm:$0xff]
    %v107 = vld [vmem:[%s1 + $0x8] sm:$0xff]
    %v108 = vld [vmem:[%s1 + $0x10] sm:$0xff]
    %v109 = vld [vmem:[%s1 + $0x18] sm:$0xff]
    %v110 = vld [vmem:[%s1 + $0x20] sm:$0xff]
    %v111 = vld [vmem:[%s1 + $0x28] sm:$0xff]
    %v112 = vld [vmem:[%s1 + $0x30] sm:$0xf]
    %v113 = vld [vmem:[%s1 + $0x34] sm:$0xff]
    %v114 = vld [vmem:[%s1 + $0x3c] sm:$0xff]
    %v115 = vld [vmem:[%s1 + $0x44] sm:$0xff]
    %v116 = vld [vmem:[%s1 + $0x4c] sm:$0xff]
    %v117 = vld [vmem:[%s1 + $0x54] sm:$0xff]
    %v118 = vld [vmem:[%s1 + $0x5c] sm:$0xff]
    %v119 = vld [vmem:[%s1 + $0x64] sm:$0xf]
    %v120 = vld [vmem:[%s1 + $0x68] sm:$0xff]
    %v121 = vld [vmem:[%s1 + $0x70] sm:$0xff]
    %v122 = vld [vmem:[%s1 + $0x78] sm:$0xff]
    %v123 = vld [vmem:[%s1 + $0x80] sm:$0xff]
    %v124 = vld [vmem:[%s1 + $0x88] sm:$0xff]
    %v125 = vld [vmem:[%s1 + $0x90] sm:$0xff]
    %v126 = vld [vmem:[%s1 + $0x98] sm:$0xf]
    %v127 = vld [vmem:[%s1 + $0x9c] sm:$0xff]
    %v128 = vld [vmem:[%s1 + $0xa4] sm:$0xff]
    %v129 = vld [vmem:[%s1 + $0xac] sm:$0xff]
    %v130 = vld [vmem:[%s1 + $0xb4] sm:$0xff]
    %v131 = vld [vmem:[%s1 + $0xbc] sm:$0xff]
    %v132 = vld [vmem:[%s1 + $0xc4] sm:$0xff]
    %v133 = vld [vmem:[%s1 + $0xcc] sm:$0xf]
    %v134 = vld [vmem:[%s1 + $0xd0] sm:$0xff]
    %v135 = vld [vmem:[%s1 + $0xd8] sm:$0xff]
    %v136 = vld [vmem:[%s1 + $0xe0] sm:$0xff]
    %v137 = vld [vmem:[%s1 + $0xe8] sm:$0xff]
    %v138 = vld [vmem:[%s1 + $0xf0] sm:$0xff]
    %v139 = vld [vmem:[%s1 + $0xf8] sm:$0xff]
    %v140 = vld [vmem:[%s1 + $0x100] sm:$0xf]
    %v141 = vld [vmem:[%s1 + $0x104] sm:$0xff]
    %v142 = vld [vmem:[%s1 + $0x10c] sm:$0xff]
    %v143 = vld [vmem:[%s1 + $0x114] sm:$0xff]
    %v144 = vld [vmem:[%s1 + $0x11c] sm:$0xff]
    %v145 = vld [vmem:[%s1 + $0x124] sm:$0xff]
    %v146 = vld [vmem:[%s1 + $0x12c] sm:$0xff]
    %v147 = vld [vmem:[%s1 + $0x134] sm:$0xf]
    %v148 = vld [vmem:[%s1 + $0x138] sm:$0xff]
    %v149 = vld [vmem:[%s1 + $0x140] sm:$0xff]
    %v150 = vld [vmem:[%s1 + $0x148] sm:$0xff]
    %v151 = vld [vmem:[%s1 + $0x150] sm:$0xff]
    %v152 = vld [vmem:[%s1 + $0x158] sm:$0xff]
    %v153 = vld [vmem:[%s1 + $0x160] sm:$0xff]
    %v154 = vld [vmem:[%s1 + $0x168] sm:$0xf]
    %v155 = vld [vmem:[%s1 + $0x16c] sm:$0xff]
    %v156 = vld [vmem:[%s1 + $0x174] sm:$0xff]
    %v157 = vld [vmem:[%s1 + $0x17c] sm:$0xff]
    %v158 = vld [vmem:[%s1 + $0x184] sm:$0xff]
    %v159 = vld [vmem:[%s1 + $0x18c] sm:$0xff]
    %v160 = vld [vmem:[%s1 + $0x194] sm:$0xff]
    %v161 = vld [vmem:[%s1 + $0x19c] sm:$0xf]
    %v162 = vld [vmem:[%s1 + $0x1a0] sm:$0xff]
    %v163 = vld [vmem:[%s1 + $0x1a8] sm:$0xff]
    %v164 = vld [vmem:[%s1 + $0x1b0] sm:$0xff]
    %v165 = vld [vmem:[%s1 + $0x1b8] sm:$0xff]
    %v166 = vld [vmem:[%s1 + $0x1c0] sm:$0xff]
    %v167 = vld [vmem:[%s1 + $0x1c8] sm:$0xff]
    %v168 = vld [vmem:[%s1 + $0x1d0] sm:$0xf]
    %v169 = vld [vmem:[%s1 + $0x1d4] sm:$0xff]
    %v170 = vld [vmem:[%s1 + $0x1dc] sm:$0xff]
    %v171 = vld [vmem:[%s1 + $0x1e4] sm:$0xff]
    %v172 = vld [vmem:[%s1 + $0x1ec] sm:$0xff]
    %v173 = vld [vmem:[%s1 + $0x1f4] sm:$0xff]
    %v174 = vld [vmem:[%s1 + $0x1fc] sm:$0xff]
    %v175 = vld [vmem:[%s1 + $0x204] sm:$0xf]
    %v176 = vld [vmem:[%s1 + $0x208] sm:$0xff]
    %v177 = vld [vmem:[%s1 + $0x210] sm:$0xff]
    %v178 = vld [vmem:[%s1 + $0x218] sm:$0xff]
    %v179 = vld [vmem:[%s1 + $0x220] sm:$0xff]
    %v180 = vld [vmem:[%s1 + $0x228] sm:$0xff]
    %v181 = vld [vmem:[%s1 + $0x230] sm:$0xff]
    %v182 = vld [vmem:[%s1 + $0x238] sm:$0xf]
    %v183 = vld [vmem:[%s1 + $0x23c] sm:$0xff]
    %v184 = vld [vmem:[%s1 + $0x244] sm:$0xff]
    %v185 = vld [vmem:[%s1 + $0x24c] sm:$0xff]
    %v186 = vld [vmem:[%s1 + $0x254] sm:$0xff]
    %v187 = vld [vmem:[%s1 + $0x25c] sm:$0xff]
    %v188 = vld [vmem:[%s1 + $0x264] sm:$0xff]
    %v189 = vld [vmem:[%s1 + $0x26c] sm:$0xf]
    %v190 = vld [vmem:[%s1 + $0x270] sm:$0xff]
    %v191 = vld [vmem:[%s1 + $0x278] sm:$0xff]
    %v192 = vld [vmem:[%s1 + $0x280] sm:$0xff]
    %v193 = vld [vmem:[%s1 + $0x288] sm:$0xff]
    %v194 = vld [vmem:[%s1 + $0x290] sm:$0xff]
    %v195 = vld [vmem:[%s1 + $0x298] sm:$0xff]
    %v196 = vld [vmem:[%s1 + $0x2a0] sm:$0xf]
    %v197 = vld [vmem:[%s1 + $0x2a4] sm:$0xff]
    %v198 = vld [vmem:[%s1 + $0x2ac] sm:$0xff]
    %v199 = vld [vmem:[%s1 + $0x2b4] sm:$0xff]
    %v200 = vld [vmem:[%s1 + $0x2bc] sm:$0xff]
    %v201 = vld [vmem:[%s1 + $0x2c4] sm:$0xff]
    %v202 = vld [vmem:[%s1 + $0x2cc] sm:$0xff]
    %v203 = vld [vmem:[%s1 + $0x2d4] sm:$0xf]
    %v204 = vld [vmem:[%s1 + $0x2d8] sm:$0xff]
    %v205 = vld [vmem:[%s1 + $0x2e0] sm:$0xff]
    %v206 = vld [vmem:[%s1 + $0x2e8] sm:$0xff]
    %v207 = vld [vmem:[%s1 + $0x2f0] sm:$0xff]
    %v208 = vld [vmem:[%s1 + $0x2f8] sm:$0xff]
    %v209 = vld [vmem:[%s1 + $0x300] sm:$0xff]
    %v210 = vld [vmem:[%s1 + $0x308] sm:$0xf]
    %v211 = vld [vmem:[%s1 + $0x30c] sm:$0xff]
    %v212 = vld [vmem:[%s1 + $0x314] sm:$0xff]
    %v213 = vld [vmem:[%s1 + $0x31c] sm:$0xff]
    %v214 = vld [vmem:[%s1 + $0x324] sm:$0xff]
    %v215 = vld [vmem:[%s1 + $0x32c] sm:$0xff]
    %v216 = vld [vmem:[%s1 + $0x334] sm:$0xff]
    %v217 = vld [vmem:[%s1 + $0x33c] sm:$0xf]
    %v218 = vld [vmem:[%s1 + $0x340] sm:$0xff]
    %v219 = vld [vmem:[%s1 + $0x348] sm:$0xff]
    %v220 = vld [vmem:[%s1 + $0x350] sm:$0xff]
    %v221 = vld [vmem:[%s1 + $0x358] sm:$0xff]
    %v222 = vld [vmem:[%s1 + $0x360] sm:$0xff]
    %v223 = vld [vmem:[%s1 + $0x368] sm:$0xff]
    %v224 = vld [vmem:[%s1 + $0x370] sm:$0xf]
    %v225 = vld [vmem:[%s1 + $0x374] sm:$0xff]
    %v226 = vld [vmem:[%s1 + $0x37c] sm:$0xff]
    %v227 = vld [vmem:[%s1 + $0x384] sm:$0xff]
    %v228 = vld [vmem:[%s1 + $0x38c] sm:$0xff]
    %v229 = vld [vmem:[%s1 + $0x394] sm:$0xff]
    %v230 = vld [vmem:[%s1 + $0x39c] sm:$0xff]
    %v231 = vld [vmem:[%s1 + $0x3a4] sm:$0xf]
    %v232 = vld [vmem:[%s1 + $0x3a8] sm:$0xff]
    %v233 = vld [vmem:[%s1 + $0x3b0] sm:$0xff]
    %v234 = vld [vmem:[%s1 + $0x3b8] sm:$0xff]
    %v235 = vld [vmem:[%s1 + $0x3c0] sm:$0xff]
    %v236 = vld [vmem:[%s1 + $0x3c8] sm:$0xff]
    %v237 = vld [vmem:[%s1 + $0x3d0] sm:$0xff]
    %v238 = vld [vmem:[%s1 + $0x3d8] sm:$0xf]
    %v239 = vld [vmem:[%s1 + $0x3dc] sm:$0xff]
    %v240 = vld [vmem:[%s1 + $0x3e4] sm:$0xff]
    %v241 = vld [vmem:[%s1 + $0x3ec] sm:$0xff]
    %v242 = vld [vmem:[%s1 + $0x3f4] sm:$0xff]
    %v243 = vld [vmem:[%s1 + $0x3fc] sm:$0xff]
    %v244 = vld [vmem:[%s1 + $0x404] sm:$0xff]
    %v245 = vld [vmem:[%s1 + $0x40c] sm:$0xf]
    %v246 = vld [vmem:[%s1 + $0x410] sm:$0xff]
    %v247 = vld [vmem:[%s1 + $0x418] sm:$0xff]
    %v248 = vld [vmem:[%s1 + $0x420] sm:$0xff]
    %v249 = vld [vmem:[%s1 + $0x428] sm:$0xff]
    %v250 = vld [vmem:[%s1 + $0x430] sm:$0xff]
    %v251 = vld [vmem:[%s1 + $0x438] sm:$0xff]
    %v252 = vld [vmem:[%s1 + $0x440] sm:$0xf]
    %v253 = vld [vmem:[%s1 + $0x444] sm:$0xff]
    %v254 = vld [vmem:[%s1 + $0x44c] sm:$0xff]
    %v255 = vld [vmem:[%s1 + $0x454] sm:$0xff]
    %v256 = vld [vmem:[%s1 + $0x45c] sm:$0xff]
    %v257 = vld [vmem:[%s1 + $0x464] sm:$0xff]
    %v258 = vld [vmem:[%s1 + $0x46c] sm:$0xff]
    %v259 = vld [vmem:[%s1 + $0x474] sm:$0xf]
    %v260 = vld [vmem:[%s1 + $0x478] sm:$0xff]
    %v261 = vld [vmem:[%s1 + $0x480] sm:$0xff]
    %v262 = vld [vmem:[%s1 + $0x488] sm:$0xff]
    %v263 = vld [vmem:[%s1 + $0x490] sm:$0xff]
    %v264 = vld [vmem:[%s1 + $0x498] sm:$0xff]
    %v265 = vld [vmem:[%s1 + $0x4a0] sm:$0xff]
    %v266 = vld [vmem:[%s1 + $0x4a8] sm:$0xf]
    %v267 = vld [vmem:[%s1 + $0x4ac] sm:$0xff]
    %v268 = vld [vmem:[%s1 + $0x4b4] sm:$0xff]
    %v269 = vld [vmem:[%s1 + $0x4bc] sm:$0xff]
    %v270 = vld [vmem:[%s1 + $0x4c4] sm:$0xff]
    %v271 = vld [vmem:[%s1 + $0x4cc] sm:$0xff]
    %v272 = vld [vmem:[%s1 + $0x4d4] sm:$0xff]
    %v273 = vld [vmem:[%s1 + $0x4dc] sm:$0xf]
    %v274 = vld [vmem:[%s1 + $0x4e0] sm:$0xff]
    %v275 = vld [vmem:[%s1 + $0x4e8] sm:$0xff]
    %v276 = vld [vmem:[%s1 + $0x4f0] sm:$0xff]
    %v277 = vld [vmem:[%s1 + $0x4f8] sm:$0xff]
    %v278 = vld [vmem:[%s1 + $0x500] sm:$0xff]
    %v279 = vld [vmem:[%s1 + $0x508] sm:$0xff]
    %v280 = vld [vmem:[%s1 + $0x510] sm:$0xf]
    %v281 = vld [vmem:[%s1 + $0x514] sm:$0xff]
    %v282 = vld [vmem:[%s1 + $0x51c] sm:$0xff]
    %v283 = vld [vmem:[%s1 + $0x524] sm:$0xff]
    %v284 = vld [vmem:[%s1 + $0x52c] sm:$0xff]
    %v285 = vld [vmem:[%s1 + $0x534] sm:$0xff]
    %v286 = vld [vmem:[%s1 + $0x53c] sm:$0xff]
    %v287 = vld [vmem:[%s1 + $0x544] sm:$0xf]
    %v288 = vld [vmem:[%s1 + $0x548] sm:$0xff]
    %v289 = vld [vmem:[%s1 + $0x550] sm:$0xff]
    %v290 = vld [vmem:[%s1 + $0x558] sm:$0xff]
    %v291 = vld [vmem:[%s1 + $0x560] sm:$0xff]
    %v292 = vld [vmem:[%s1 + $0x568] sm:$0xff]
    %v293 = vld [vmem:[%s1 + $0x570] sm:$0xff]
    %v294 = vld [vmem:[%s1 + $0x578] sm:$0xf]
    %v295 = vld [vmem:[%s1 + $0x57c] sm:$0xff]
    %v296 = vld [vmem:[%s1 + $0x584] sm:$0xff]
    %v297 = vld [vmem:[%s1 + $0x58c] sm:$0xff]
    %v298 = vld [vmem:[%s1 + $0x594] sm:$0xff]
    %v299 = vld [vmem:[%s1 + $0x59c] sm:$0xff]
    %v300 = vld [vmem:[%s1 + $0x5a4] sm:$0xff]
    %v301 = vld [vmem:[%s1 + $0x5ac] sm:$0xf]
    %v302 = vld [vmem:[%s1 + $0x5b0] sm:$0xff]
    %v303 = vld [vmem:[%s1 + $0x5b8] sm:$0xff]
    %v304 = vld [vmem:[%s1 + $0x5c0] sm:$0xff]
    %v305 = vld [vmem:[%s1 + $0x5c8] sm:$0xff]
    %v306 = vld [vmem:[%s1 + $0x5d0] sm:$0xff]
    %v307 = vld [vmem:[%s1 + $0x5d8] sm:$0xff]
    %v308 = vld [vmem:[%s1 + $0x5e0] sm:$0xf]
    %v309 = vld [vmem:[%s1 + $0x5e4] sm:$0xff]
    %v310 = vld [vmem:[%s1 + $0x5ec] sm:$0xff]
    %v311 = vld [vmem:[%s1 + $0x5f4] sm:$0xff]
    %v312 = vld [vmem:[%s1 + $0x5fc] sm:$0xff]
    %v313 = vld [vmem:[%s1 + $0x604] sm:$0xff]
    %v314 = vld [vmem:[%s1 + $0x60c] sm:$0xff]
    %v315 = vld [vmem:[%s1 + $0x614] sm:$0xf]
    %v316 = vld [vmem:[%s1 + $0x618] sm:$0xff]
    %v317 = vld [vmem:[%s1 + $0x620] sm:$0xff]
    %v318 = vld [vmem:[%s1 + $0x628] sm:$0xff]
    %v319 = vld [vmem:[%s1 + $0x630] sm:$0xff]
    %v320 = vld [vmem:[%s1 + $0x638] sm:$0xff]
    %v321 = vld [vmem:[%s1 + $0x640] sm:$0xff]
    %v322 = vld [vmem:[%s1 + $0x648] sm:$0xf]
    %v323 = vld [vmem:[%s1 + $0x64c] sm:$0xff]
    %v324 = vld [vmem:[%s1 + $0x654] sm:$0xff]
    %v325 = vld [vmem:[%s1 + $0x65c] sm:$0xff]
    %v326 = vld [vmem:[%s1 + $0x664] sm:$0xff]
    %v327 = vld [vmem:[%s1 + $0x66c] sm:$0xff]
    %v328 = vld [vmem:[%s1 + $0x674] sm:$0xff]
    %v329 = vld [vmem:[%s1 + $0x67c] sm:$0xf]
    %v330 = vld [vmem:[%s1 + $0x680] sm:$0xff]
    %v331 = vld [vmem:[%s1 + $0x688] sm:$0xff]
    %v332 = vld [vmem:[%s1 + $0x690] sm:$0xff]
    %v333 = vld [vmem:[%s1 + $0x698] sm:$0xff]
    %v334 = vld [vmem:[%s1 + $0x6a0] sm:$0xff]
    %v335 = vld [vmem:[%s1 + $0x6a8] sm:$0xff]
    %v336 = vld [vmem:[%s1 + $0x6b0] sm:$0xf]
    %v337 = vld [vmem:[%s1 + $0x6b4] sm:$0xff]
    %v338 = vld [vmem:[%s1 + $0x6bc] sm:$0xff]
    %v339 = vld [vmem:[%s1 + $0x6c4] sm:$0xff]
    %v340 = vld [vmem:[%s1 + $0x6cc] sm:$0xff]
    %v341 = vld [vmem:[%s1 + $0x6d4] sm:$0xff]
    %v342 = vld [vmem:[%s1 + $0x6dc] sm:$0xff]
    %v343 = vld [vmem:[%s1 + $0x6e4] sm:$0xf]
    %v344 = vld [vmem:[%s1 + $0x6e8] sm:$0xff]
    %v345 = vld [vmem:[%s1 + $0x6f0] sm:$0xff]
    %v346 = vld [vmem:[%s1 + $0x6f8] sm:$0xff]
    %v347 = vld [vmem:[%s1 + $0x700] sm:$0xff]
    %v348 = vld [vmem:[%s1 + $0x708] sm:$0xff]
    %v349 = vld [vmem:[%s1 + $0x710] sm:$0xff]
    %v350 = vld [vmem:[%s1 + $0x718] sm:$0xf]
    %v351 = vld [vmem:[%s1 + $0x71c] sm:$0xff]
    %v352 = vld [vmem:[%s1 + $0x724] sm:$0xff]
    %v353 = vld [vmem:[%s1 + $0x72c] sm:$0xff]
    %v354 = vld [vmem:[%s1 + $0x734] sm:$0xff]
    %v355 = vld [vmem:[%s1 + $0x73c] sm:$0xff]
    %v356 = vld [vmem:[%s1 + $0x744] sm:$0xff]
    %v357 = vld [vmem:[%s1 + $0x74c] sm:$0xf]
    %v358 = vld [vmem:[%s1 + $0x750] sm:$0xff]
    %v359 = vld [vmem:[%s1 + $0x758] sm:$0xff]
    %v360 = vld [vmem:[%s1 + $0x760] sm:$0xff]
    %v361 = vld [vmem:[%s1 + $0x768] sm:$0xff]
    %v362 = vld [vmem:[%s1 + $0x770] sm:$0xff]
    %v363 = vld [vmem:[%s1 + $0x778] sm:$0xff]
    %v364 = vld [vmem:[%s1 + $0x780] sm:$0xf]
    %v365 = vld [vmem:[%s1 + $0x784] sm:$0xff]
    %v366 = vld [vmem:[%s1 + $0x78c] sm:$0xff]
    %v367 = vld [vmem:[%s1 + $0x794] sm:$0xff]
    %v368 = vld [vmem:[%s1 + $0x79c] sm:$0xff]
    %v369 = vld [vmem:[%s1 + $0x7a4] sm:$0xff]
    %v370 = vld [vmem:[%s1 + $0x7ac] sm:$0xff]
    %v371 = vld [vmem:[%s1 + $0x7b4] sm:$0xf]
    %v372 = vld [vmem:[%s1 + $0x7b8] sm:$0xff]
    %v373 = vld [vmem:[%s1 + $0x7c0] sm:$0xff]
    %v374 = vld [vmem:[%s1 + $0x7c8] sm:$0xff]
    %v375 = vld [vmem:[%s1 + $0x7d0] sm:$0xff]
    %v376 = vld [vmem:[%s1 + $0x7d8] sm:$0xff]
    %v377 = vld [vmem:[%s1 + $0x7e0] sm:$0xff]
    %v378 = vld [vmem:[%s1 + $0x7e8] sm:$0xf]
    %v379 = vld [vmem:[%s1 + $0x7ec] sm:$0xff]
    %v380 = vld [vmem:[%s1 + $0x7f4] sm:$0xff]
    %v381 = vld [vmem:[%s1 + $0x7fc] sm:$0xff]
    %v382 = vld [vmem:[%s1 + $0x804] sm:$0xff]
    %v383 = vld [vmem:[%s1 + $0x80c] sm:$0xff]
    %v384 = vld [vmem:[%s1 + $0x814] sm:$0xff]
    %v385 = vld [vmem:[%s1 + $0x81c] sm:$0xf]
    %v386 = vld [vmem:[%s1 + $0x820] sm:$0xff]
    %v387 = vld [vmem:[%s1 + $0x828] sm:$0xff]
    %v388 = vld [vmem:[%s1 + $0x830] sm:$0xff]
    %v389 = vld [vmem:[%s1 + $0x838] sm:$0xff]
    %v390 = vld [vmem:[%s1 + $0x840] sm:$0xff]
    %v391 = vld [vmem:[%s1 + $0x848] sm:$0xff]
    %v392 = vld [vmem:[%s1 + $0x850] sm:$0xf]
    %v393 = vld [vmem:[%s1 + $0x854] sm:$0xff]
    %v394 = vld [vmem:[%s1 + $0x85c] sm:$0xff]
    %v395 = vld [vmem:[%s1 + $0x864] sm:$0xff]
    %v396 = vld [vmem:[%s1 + $0x86c] sm:$0xff]
    %v397 = vld [vmem:[%s1 + $0x874] sm:$0xff]
    %v398 = vld [vmem:[%s1 + $0x87c] sm:$0xff]
    %v399 = vld [vmem:[%s1 + $0x884] sm:$0xf]
    %v400 = vld [vmem:[%s1 + $0x888] sm:$0xff]
    %v401 = vld [vmem:[%s1 + $0x890] sm:$0xff]
    %v402 = vld [vmem:[%s1 + $0x898] sm:$0xff]
    %v403 = vld [vmem:[%s1 + $0x8a0] sm:$0xff]
    %v404 = vld [vmem:[%s1 + $0x8a8] sm:$0xff]
    %v405 = vld [vmem:[%s1 + $0x8b0] sm:$0xff]
    %v406 = vld [vmem:[%s1 + $0x8b8] sm:$0xf]
    %v407 = vld [vmem:[%s1 + $0x8bc] sm:$0xff]
    %v408 = vld [vmem:[%s1 + $0x8c4] sm:$0xff]
    %v409 = vld [vmem:[%s1 + $0x8cc] sm:$0xff]
    %v410 = vld [vmem:[%s1 + $0x8d4] sm:$0xff]
    %v411 = vld [vmem:[%s1 + $0x8dc] sm:$0xff]
    %v412 = vld [vmem:[%s1 + $0x8e4] sm:$0xff]
    %v413 = vld [vmem:[%s1 + $0x8ec] sm:$0xf]
    %v414 = vld [vmem:[%s1 + $0x8f0] sm:$0xff]
    %v415 = vld [vmem:[%s1 + $0x8f8] sm:$0xff]
    %v416 = vld [vmem:[%s1 + $0x900] sm:$0xff]
    %v417 = vld [vmem:[%s1 + $0x908] sm:$0xff]
    %v418 = vld [vmem:[%s1 + $0x910] sm:$0xff]
    %v419 = vld [vmem:[%s1 + $0x918] sm:$0xff]
    %v420 = vld [vmem:[%s1 + $0x920] sm:$0xf]
    %v421 = vld [vmem:[%s1 + $0x924] sm:$0xff]
    %v422 = vld [vmem:[%s1 + $0x92c] sm:$0xff]
    %v423 = vld [vmem:[%s1 + $0x934] sm:$0xff]
    %v424 = vld [vmem:[%s1 + $0x93c] sm:$0xff]
    %v425 = vld [vmem:[%s1 + $0x944] sm:$0xff]
    %v426 = vld [vmem:[%s1 + $0x94c] sm:$0xff]
    %v427 = vld [vmem:[%s1 + $0x954] sm:$0xf]
    %v428 = vld [vmem:[%s1 + $0x958] sm:$0xff]
    %v429 = vld [vmem:[%s1 + $0x960] sm:$0xff]
    %v430 = vld [vmem:[%s1 + $0x968] sm:$0xff]
    %v431 = vld [vmem:[%s1 + $0x970] sm:$0xff]
    %v432 = vld [vmem:[%s1 + $0x978] sm:$0xff]
    %v433 = vld [vmem:[%s1 + $0x980] sm:$0xff]
    %v434 = vld [vmem:[%s1 + $0x988] sm:$0xf]
    %v435 = vld [vmem:[%s1 + $0x98c] sm:$0xff]
    %v436 = vld [vmem:[%s1 + $0x994] sm:$0xff]
    %v437 = vld [vmem:[%s1 + $0x99c] sm:$0xff]
    %v438 = vld [vmem:[%s1 + $0x9a4] sm:$0xff]
    %v439 = vld [vmem:[%s1 + $0x9ac] sm:$0xff]
    %v440 = vld [vmem:[%s1 + $0x9b4] sm:$0xff]
    %v441 = vld [vmem:[%s1 + $0x9bc] sm:$0xf]
    %v442 = vld [vmem:[%s1 + $0x9c0] sm:$0xff]
    %v443 = vld [vmem:[%s1 + $0x9c8] sm:$0xff]
    %v444 = vld [vmem:[%s1 + $0x9d0] sm:$0xff]
    %v445 = vld [vmem:[%s1 + $0x9d8] sm:$0xff]
    %v446 = vld [vmem:[%s1 + $0x9e0] sm:$0xff]
    %v447 = vld [vmem:[%s1 + $0x9e8] sm:$0xff]
    %v448 = vld [vmem:[%s1 + $0x9f0] sm:$0xf]
    %v449 = vld [vmem:[%s1 + $0x9f4] sm:$0xff]
    %v450 = vld [vmem:[%s1 + $0x9fc] sm:$0xff]
    %v451 = vld [vmem:[%s1 + $0xa04] sm:$0xff]
    %v452 = vld [vmem:[%s1 + $0xa0c] sm:$0xff]
    %v453 = vld [vmem:[%s1 + $0xa14] sm:$0xff]
    %v454 = vld [vmem:[%s1 + $0xa1c] sm:$0xff]
    %v455 = vld [vmem:[%s1 + $0xa24] sm:$0xf]
    %v456 = vld [vmem:[%s1 + $0xa28] sm:$0xff]
    %v457 = vld [vmem:[%s1 + $0xa30] sm:$0xff]
    %v458 = vld [vmem:[%s1 + $0xa38] sm:$0xff]
    %v459 = vld [vmem:[%s1 + $0xa40] sm:$0xff]
    %v460 = vld [vmem:[%s1 + $0xa48] sm:$0xff]
    %v461 = vld [vmem:[%s1 + $0xa50] sm:$0xff]
    %v462 = vld [vmem:[%s1 + $0xa58] sm:$0xf]
    %v463 = vld [vmem:[%s1 + $0xa5c] sm:$0xff]
    %v464 = vld [vmem:[%s1 + $0xa64] sm:$0xff]
    %v465 = vld [vmem:[%s1 + $0xa6c] sm:$0xff]
    %v466 = vld [vmem:[%s1 + $0xa74] sm:$0xff]
    %v467 = vld [vmem:[%s1 + $0xa7c] sm:$0xff]
    %v468 = vld [vmem:[%s1 + $0xa84] sm:$0xff]
    %v469 = vld [vmem:[%s1 + $0xa8c] sm:$0xf]
    %v470 = vld [vmem:[%s1 + $0xa90] sm:$0xff]
    %v471 = vld [vmem:[%s1 + $0xa98] sm:$0xff]
    %v472 = vld [vmem:[%s1 + $0xaa0] sm:$0xff]
    %v473 = vld [vmem:[%s1 + $0xaa8] sm:$0xff]
    %v474 = vld [vmem:[%s1 + $0xab0] sm:$0xff]
    %v475 = vld [vmem:[%s1 + $0xab8] sm:$0xff]
    %v476 = vld [vmem:[%s1 + $0xac0] sm:$0xf]
    %v477 = vld [vmem:[%s1 + $0xac4] sm:$0xff]
    %v478 = vld [vmem:[%s1 + $0xacc] sm:$0xff]
    %v479 = vld [vmem:[%s1 + $0xad4] sm:$0xff]
    %v480 = vld [vmem:[%s1 + $0xadc] sm:$0xff]
    %v481 = vld [vmem:[%s1 + $0xae4] sm:$0xff]
    %v482 = vld [vmem:[%s1 + $0xaec] sm:$0xff]
    %v483 = vld [vmem:[%s1 + $0xaf4] sm:$0xf]
    %v484 = vld [vmem:[%s1 + $0xaf8] sm:$0xff]
    %v485 = vld [vmem:[%s1 + $0xb00] sm:$0xff]
    %v486 = vld [vmem:[%s1 + $0xb08] sm:$0xff]
    %v487 = vld [vmem:[%s1 + $0xb10] sm:$0xff]
    %v488 = vld [vmem:[%s1 + $0xb18] sm:$0xff]
    %v489 = vld [vmem:[%s1 + $0xb20] sm:$0xff]
    %v490 = vld [vmem:[%s1 + $0xb28] sm:$0xf]
    %v491 = vld [vmem:[%s1 + $0xb2c] sm:$0xff]
    %v492 = vld [vmem:[%s1 + $0xb34] sm:$0xff]
    %v493 = vld [vmem:[%s1 + $0xb3c] sm:$0xff]
    %v494 = vld [vmem:[%s1 + $0xb44] sm:$0xff]
    %v495 = vld [vmem:[%s1 + $0xb4c] sm:$0xff]
    %v496 = vld [vmem:[%s1 + $0xb54] sm:$0xff]
    %v497 = vld [vmem:[%s1 + $0xb5c] sm:$0xf]
    %v498 = vld [vmem:[%s1 + $0xb60] sm:$0xff]
    %v499 = vld [vmem:[%s1 + $0xb68] sm:$0xff]
    %v500 = vld [vmem:[%s1 + $0xb70] sm:$0xff]
    %v501 = vld [vmem:[%s1 + $0xb78] sm:$0xff]
    %v502 = vld [vmem:[%s1 + $0xb80] sm:$0xff]
    %v503 = vld [vmem:[%s1 + $0xb88] sm:$0xff]
    %v504 = vld [vmem:[%s1 + $0xb90] sm:$0xf]
    %v505 = vld [vmem:[%s1 + $0xb94] sm:$0xff]
    %v506 = vld [vmem:[%s1 + $0xb9c] sm:$0xff]
    %v507 = vld [vmem:[%s1 + $0xba4] sm:$0xff]
    %v508 = vld [vmem:[%s1 + $0xbac] sm:$0xff]
    %v509 = vld [vmem:[%s1 + $0xbb4] sm:$0xff]
    %v510 = vld [vmem:[%s1 + $0xbbc] sm:$0xff]
    %v511 = vld [vmem:[%s1 + $0xbc4] sm:$0xf]
    %v512 = vld [vmem:[%s1 + $0xbc8] sm:$0xff]
    %v513 = vld [vmem:[%s1 + $0xbd0] sm:$0xff]
    %v514 = vld [vmem:[%s1 + $0xbd8] sm:$0xff]
    %v515 = vld [vmem:[%s1 + $0xbe0] sm:$0xff]
    %v516 = vld [vmem:[%s1 + $0xbe8] sm:$0xff]
    %v517 = vld [vmem:[%s1 + $0xbf0] sm:$0xff]
    %v518 = vld [vmem:[%s1 + $0xbf8] sm:$0xf]
    %v519 = vld [vmem:[%s1 + $0xbfc] sm:$0xff]
    %v520 = vld [vmem:[%s1 + $0xc04] sm:$0xff]
    %v521 = vld [vmem:[%s1 + $0xc0c] sm:$0xff]
    %v522 = vld [vmem:[%s1 + $0xc14] sm:$0xff]
    %v523 = vld [vmem:[%s1 + $0xc1c] sm:$0xff]
    %v524 = vld [vmem:[%s1 + $0xc24] sm:$0xff]
    %v525 = vld [vmem:[%s1 + $0xc2c] sm:$0xf]
    %v526 = vld [vmem:[%s1 + $0xc30] sm:$0xff]
    %v527 = vld [vmem:[%s1 + $0xc38] sm:$0xff]
    %v528 = vld [vmem:[%s1 + $0xc40] sm:$0xff]
    %v529 = vld [vmem:[%s1 + $0xc48] sm:$0xff]
    %v530 = vld [vmem:[%s1 + $0xc50] sm:$0xff]
    %v531 = vld [vmem:[%s1 + $0xc58] sm:$0xff]
    %v532 = vld [vmem:[%s1 + $0xc60] sm:$0xf]
    %v533 = vld [vmem:[%s1 + $0xc64] sm:$0xff]
    %v534 = vld [vmem:[%s1 + $0xc6c] sm:$0xff]
    %v535 = vld [vmem:[%s1 + $0xc74] sm:$0xff]
    %v536 = vld [vmem:[%s1 + $0xc7c] sm:$0xff]
    %v537 = vld [vmem:[%s1 + $0xc84] sm:$0xff]
    %v538 = vld [vmem:[%s1 + $0xc8c] sm:$0xff]
    %v539 = vld [vmem:[%s1 + $0xc94] sm:$0xf]
    %v540 = vld [vmem:[%s1 + $0xc98] sm:$0xff]
    %v541 = vld [vmem:[%s1 + $0xca0] sm:$0xff]
    %v542 = vld [vmem:[%s1 + $0xca8] sm:$0xff]
    %v543 = vld [vmem:[%s1 + $0xcb0] sm:$0xff]
    %v544 = vld [vmem:[%s1 + $0xcb8] sm:$0xff]
    %v545 = vld [vmem:[%s1 + $0xcc0] sm:$0xff]
    %v546 = vld [vmem:[%s1 + $0xcc8] sm:$0xf]
    %v547 = vld [vmem:[%s1 + $0xccc] sm:$0xff]
    %v548 = vld [vmem:[%s1 + $0xcd4] sm:$0xff]
    %v549 = vld [vmem:[%s1 + $0xcdc] sm:$0xff]
    %v550 = vld [vmem:[%s1 + $0xce4] sm:$0xff]
    %v551 = vld [vmem:[%s1 + $0xcec] sm:$0xff]
    %v552 = vld [vmem:[%s1 + $0xcf4] sm:$0xff]
    %v553 = vld [vmem:[%s1 + $0xcfc] sm:$0xf]
    %v554 = vld [vmem:[%s1 + $0xd00] sm:$0xff]
    %v555 = vld [vmem:[%s1 + $0xd08] sm:$0xff]
    %v556 = vld [vmem:[%s1 + $0xd10] sm:$0xff]
    %v557 = vld [vmem:[%s1 + $0xd18] sm:$0xff]
    %v558 = vld [vmem:[%s1 + $0xd20] sm:$0xff]
    %v559 = vld [vmem:[%s1 + $0xd28] sm:$0xff]
    %v560 = vld [vmem:[%s1 + $0xd30] sm:$0xf]
    %v561 = vld [vmem:[%s1 + $0xd34] sm:$0xff]
    %v562 = vld [vmem:[%s1 + $0xd3c] sm:$0xff]
    %v563 = vld [vmem:[%s1 + $0xd44] sm:$0xff]
    %v564 = vld [vmem:[%s1 + $0xd4c] sm:$0xff]
    %v565 = vld [vmem:[%s1 + $0xd54] sm:$0xff]
    %v566 = vld [vmem:[%s1 + $0xd5c] sm:$0xff]
    %v567 = vld [vmem:[%s1 + $0xd64] sm:$0xf]
    %v568 = vld [vmem:[%s1 + $0xd68] sm:$0xff]
    %v569 = vld [vmem:[%s1 + $0xd70] sm:$0xff]
    %v570 = vld [vmem:[%s1 + $0xd78] sm:$0xff]
    %v571 = vld [vmem:[%s1 + $0xd80] sm:$0xff]
    %v572 = vld [vmem:[%s1 + $0xd88] sm:$0xff]
    %v573 = vld [vmem:[%s1 + $0xd90] sm:$0xff]
    %v574 = vld [vmem:[%s1 + $0xd98] sm:$0xf]
    %v575 = vld [vmem:[%s1 + $0xd9c] sm:$0xff]
    %v576 = vld [vmem:[%s1 + $0xda4] sm:$0xff]
    %v577 = vld [vmem:[%s1 + $0xdac] sm:$0xff]
    %v578 = vld [vmem:[%s1 + $0xdb4] sm:$0xff]
    %v579 = vld [vmem:[%s1 + $0xdbc] sm:$0xff]
    %v580 = vld [vmem:[%s1 + $0xdc4] sm:$0xff]
    %v581 = vld [vmem:[%s1 + $0xdcc] sm:$0xf]
    %v582 = vld [vmem:[%s1 + $0xdd0] sm:$0xff]
    %v583 = vld [vmem:[%s1 + $0xdd8] sm:$0xff]
    %v584 = vld [vmem:[%s1 + $0xde0] sm:$0xff]
    %v585 = vld [vmem:[%s1 + $0xde8] sm:$0xff]
    %v586 = vld [vmem:[%s1 + $0xdf0] sm:$0xff]
    %v587 = vld [vmem:[%s1 + $0xdf8] sm:$0xff]
    %v588 = vld [vmem:[%s1 + $0xe00] sm:$0xf]
    %v589 = vld [vmem:[%s1 + $0xe04] sm:$0xff]
    %v590 = vld [vmem:[%s1 + $0xe0c] sm:$0xff]
    %v591 = vld [vmem:[%s1 + $0xe14] sm:$0xff]
    %v592 = vld [vmem:[%s1 + $0xe1c] sm:$0xff]
    %v593 = vld [vmem:[%s1 + $0xe24] sm:$0xff]
    %v594 = vld [vmem:[%s1 + $0xe2c] sm:$0xff]
    %v595 = vld [vmem:[%s1 + $0xe34] sm:$0xf]
    %v596 = vld [vmem:[%s1 + $0xe38] sm:$0xff]
    %v597 = vld [vmem:[%s1 + $0xe40] sm:$0xff]
    %v598 = vld [vmem:[%s1 + $0xe48] sm:$0xff]
    %v599 = vld [vmem:[%s1 + $0xe50] sm:$0xff]
    %v600 = vld [vmem:[%s1 + $0xe58] sm:$0xff]
    %v601 = vld [vmem:[%s1 + $0xe60] sm:$0xff]
    %v602 = vld [vmem:[%s1 + $0xe68] sm:$0xf]
    %v603 = vld [vmem:[%s1 + $0xe6c] sm:$0xff]
    %v604 = vld [vmem:[%s1 + $0xe74] sm:$0xff]
    %v605 = vld [vmem:[%s1 + $0xe7c] sm:$0xff]
    %v606 = vld [vmem:[%s1 + $0xe84] sm:$0xff]
    %v607 = vld [vmem:[%s1 + $0xe8c] sm:$0xff]
    %v608 = vld [vmem:[%s1 + $0xe94] sm:$0xff]
    %v609 = vld [vmem:[%s1 + $0xe9c] sm:$0xf]
    %v610 = vld [vmem:[%s1 + $0xea0] sm:$0xff]
    %v611 = vld [vmem:[%s1 + $0xea8] sm:$0xff]
    %v612 = vld [vmem:[%s1 + $0xeb0] sm:$0xff]
    %v613 = vld [vmem:[%s1 + $0xeb8] sm:$0xff]
    %v614 = vld [vmem:[%s1 + $0xec0] sm:$0xff]
    %v615 = vld [vmem:[%s1 + $0xec8] sm:$0xff]
    %v616 = vld [vmem:[%s1 + $0xed0] sm:$0xf]
    %v617 = vld [vmem:[%s1 + $0xed4] sm:$0xff]
    %v618 = vld [vmem:[%s1 + $0xedc] sm:$0xff]
    %v619 = vld [vmem:[%s1 + $0xee4] sm:$0xff]
    %v620 = vld [vmem:[%s1 + $0xeec] sm:$0xff]
    %v621 = vld [vmem:[%s1 + $0xef4] sm:$0xff]
    %v622 = vld [vmem:[%s1 + $0xefc] sm:$0xff]
    %v623 = vld [vmem:[%s1 + $0xf04] sm:$0xf]
    %v624 = vld [vmem:[%s1 + $0xf08] sm:$0xff]
    %v625 = vld [vmem:[%s1 + $0xf10] sm:$0xff]
    %v626 = vld [vmem:[%s1 + $0xf18] sm:$0xff]
    %v627 = vld [vmem:[%s1 + $0xf20] sm:$0xff]
    %v628 = vld [vmem:[%s1 + $0xf28] sm:$0xff]
    %v629 = vld [vmem:[%s1 + $0xf30] sm:$0xff]
    %v630 = vld [vmem:[%s1 + $0xf38] sm:$0xf]
    %v631 = vld [vmem:[%s1 + $0xf3c] sm:$0xff]
    %v632 = vld [vmem:[%s1 + $0xf44] sm:$0xff]
    %v633 = vld [vmem:[%s1 + $0xf4c] sm:$0xff]
    %v634 = vld [vmem:[%s1 + $0xf54] sm:$0xff]
    %v635 = vld [vmem:[%s1 + $0xf5c] sm:$0xff]
    %v636 = vld [vmem:[%s1 + $0xf64] sm:$0xff]
    %v637 = vld [vmem:[%s1 + $0xf6c] sm:$0xf]
    %v638 = vld [vmem:[%s1 + $0xf70] sm:$0xff]
    %v639 = vld [vmem:[%s1 + $0xf78] sm:$0xff]
    %v640 = vld [vmem:[%s1 + $0xf80] sm:$0xff]
    %v641 = vld [vmem:[%s1 + $0xf88] sm:$0xff]
    %v642 = vld [vmem:[%s1 + $0xf90] sm:$0xff]
    %v643 = vld [vmem:[%s1 + $0xf98] sm:$0xff]
    %v644 = vld [vmem:[%s1 + $0xfa0] sm:$0xf]
    %v645 = vld [vmem:[%s1 + $0xfa4] sm:$0xff]
    %v646 = vld [vmem:[%s1 + $0xfac] sm:$0xff]
    %v647 = vld [vmem:[%s1 + $0xfb4] sm:$0xff]
    %v648 = vld [vmem:[%s1 + $0xfbc] sm:$0xff]
    %v649 = vld [vmem:[%s1 + $0xfc4] sm:$0xff]
    %v650 = vld [vmem:[%s1 + $0xfcc] sm:$0xff]
    %v651 = vld [vmem:[%s1 + $0xfd4] sm:$0xf]
    %v652 = vld [vmem:[%s1 + $0xfd8] sm:$0xff]
    %v653 = vld [vmem:[%s1 + $0xfe0] sm:$0xff]
    %v654 = vld [vmem:[%s1 + $0xfe8] sm:$0xff]
    %v655 = vld [vmem:[%s1 + $0xff0] sm:$0xff]
    %v656 = vld [vmem:[%s1 + $0xff8] sm:$0xff]
    %v657 = vld [vmem:[%s1 + $0x1000] sm:$0xff]
    %v658 = vld [vmem:[%s1 + $0x1008] sm:$0xf]
    %v659 = vld [vmem:[%s1 + $0x100c] sm:$0xff]
    %v660 = vld [vmem:[%s1 + $0x1014] sm:$0xff]
    %v661 = vld [vmem:[%s1 + $0x101c] sm:$0xff]
    %v662 = vld [vmem:[%s1 + $0x1024] sm:$0xff]
    %v663 = vld [vmem:[%s1 + $0x102c] sm:$0xff]
    %v664 = vld [vmem:[%s1 + $0x1034] sm:$0xff]
    %v665 = vld [vmem:[%s1 + $0x103c] sm:$0xf]
    %v666 = vld [vmem:[%s1 + $0x1040] sm:$0xff]
    %v667 = vld [vmem:[%s1 + $0x1048] sm:$0xff]
    %v668 = vld [vmem:[%s1 + $0x1050] sm:$0xff]
    %v669 = vld [vmem:[%s1 + $0x1058] sm:$0xff]
    %v670 = vld [vmem:[%s1 + $0x1060] sm:$0xff]
    %v671 = vld [vmem:[%s1 + $0x1068] sm:$0xff]
    %v672 = vld [vmem:[%s1 + $0x1070] sm:$0xf]
    %v673 = vld [vmem:[%s1 + $0x1074] sm:$0xff]
    %v674 = vld [vmem:[%s1 + $0x107c] sm:$0xff]
    %v675 = vld [vmem:[%s1 + $0x1084] sm:$0xff]
    %v676 = vld [vmem:[%s1 + $0x108c] sm:$0xff]
    %v677 = vld [vmem:[%s1 + $0x1094] sm:$0xff]
    %v678 = vld [vmem:[%s1 + $0x109c] sm:$0xff]
    %v679 = vld [vmem:[%s1 + $0x10a4] sm:$0xf]
    %v680 = vld [vmem:[%s1 + $0x10a8] sm:$0xff]
    %v681 = vld [vmem:[%s1 + $0x10b0] sm:$0xff]
    %v682 = vld [vmem:[%s1 + $0x10b8] sm:$0xff]
    %v683 = vld [vmem:[%s1 + $0x10c0] sm:$0xff]
    %v684 = vld [vmem:[%s1 + $0x10c8] sm:$0xff]
    %v685 = vld [vmem:[%s1 + $0x10d0] sm:$0xff]
    %v686 = vld [vmem:[%s1 + $0x10d8] sm:$0xf]
    %v687 = vld [vmem:[%s1 + $0x10dc] sm:$0xff]
    %v688 = vld [vmem:[%s1 + $0x10e4] sm:$0xff]
    %v689 = vld [vmem:[%s1 + $0x10ec] sm:$0xff]
    %v690 = vld [vmem:[%s1 + $0x10f4] sm:$0xff]
    %v691 = vld [vmem:[%s1 + $0x10fc] sm:$0xff]
    %v692 = vld [vmem:[%s1 + $0x1104] sm:$0xff]
    %v693 = vld [vmem:[%s1 + $0x110c] sm:$0xf]
    %v694 = vld [vmem:[%s1 + $0x1110] sm:$0xff]
    %v695 = vld [vmem:[%s1 + $0x1118] sm:$0xff]
    %v696 = vld [vmem:[%s1 + $0x1120] sm:$0xff]
    %v697 = vld [vmem:[%s1 + $0x1128] sm:$0xff]
    %v698 = vld [vmem:[%s1 + $0x1130] sm:$0xff]
    %v699 = vld [vmem:[%s1 + $0x1138] sm:$0xff]
    %v700 = vld [vmem:[%s1 + $0x1140] sm:$0xf]
    %v701 = vld [vmem:[%s1 + $0x1144] sm:$0xff]
    %v702 = vld [vmem:[%s1 + $0x114c] sm:$0xff]
    %v703 = vld [vmem:[%s1 + $0x1154] sm:$0xff]
    %v704 = vld [vmem:[%s1 + $0x115c] sm:$0xff]
    %v705 = vld [vmem:[%s1 + $0x1164] sm:$0xff]
    %v706 = vld [vmem:[%s1 + $0x116c] sm:$0xff]
    %v707 = vld [vmem:[%s1 + $0x1174] sm:$0xf]
    %v708 = vld [vmem:[%s1 + $0x1178] sm:$0xff]
    %v709 = vld [vmem:[%s1 + $0x1180] sm:$0xff]
    %v710 = vld [vmem:[%s1 + $0x1188] sm:$0xff]
    %v711 = vld [vmem:[%s1 + $0x1190] sm:$0xff]
    %v712 = vld [vmem:[%s1 + $0x1198] sm:$0xff]
    %v713 = vld [vmem:[%s1 + $0x11a0] sm:$0xff]
    %v714 = vld [vmem:[%s1 + $0x11a8] sm:$0xf]
    %v715 = vld [vmem:[%s1 + $0x11ac] sm:$0xff]
    %v716 = vld [vmem:[%s1 + $0x11b4] sm:$0xff]
    %v717 = vld [vmem:[%s1 + $0x11bc] sm:$0xff]
    %v718 = vld [vmem:[%s1 + $0x11c4] sm:$0xff]
    %v719 = vld [vmem:[%s1 + $0x11cc] sm:$0xff]
    %v720 = vld [vmem:[%s1 + $0x11d4] sm:$0xff]
    %v721 = vld [vmem:[%s1 + $0x11dc] sm:$0xf]
    %v722 = vld [vmem:[%s1 + $0x11e0] sm:$0xff]
    %v723 = vld [vmem:[%s1 + $0x11e8] sm:$0xff]
    %v724 = vld [vmem:[%s1 + $0x11f0] sm:$0xff]
    %v725 = vld [vmem:[%s1 + $0x11f8] sm:$0xff]
    %v726 = vld [vmem:[%s1 + $0x1200] sm:$0xff]
    %v727 = vld [vmem:[%s1 + $0x1208] sm:$0xff]
    %v728 = vld [vmem:[%s1 + $0x1210] sm:$0xf]
    %v729 = vld [vmem:[%s1 + $0x1214] sm:$0xff]
    %v730 = vld [vmem:[%s1 + $0x121c] sm:$0xff]
    %v731 = vld [vmem:[%s1 + $0x1224] sm:$0xff]
    %v732 = vld [vmem:[%s1 + $0x122c] sm:$0xff]
    %v733 = vld [vmem:[%s1 + $0x1234] sm:$0xff]
    %v734 = vld [vmem:[%s1 + $0x123c] sm:$0xff]
    %v735 = vld [vmem:[%s1 + $0x1244] sm:$0xf]
    %v736 = vld [vmem:[%s1 + $0x1248] sm:$0xff]
    %v737 = vld [vmem:[%s1 + $0x1250] sm:$0xff]
    %v738 = vld [vmem:[%s1 + $0x1258] sm:$0xff]
    %v739 = vld [vmem:[%s1 + $0x1260] sm:$0xff]
    %v740 = vld [vmem:[%s1 + $0x1268] sm:$0xff]
    %v741 = vld [vmem:[%s1 + $0x1270] sm:$0xff]
    %v742 = vld [vmem:[%s1 + $0x1278] sm:$0xf]
    %v743 = vld [vmem:[%s1 + $0x127c] sm:$0xff]
    %v744 = vld [vmem:[%s1 + $0x1284] sm:$0xff]
    %v745 = vld [vmem:[%s1 + $0x128c] sm:$0xff]
    %v746 = vld [vmem:[%s1 + $0x1294] sm:$0xff]
    %v747 = vld [vmem:[%s1 + $0x129c] sm:$0xff]
    %v748 = vld [vmem:[%s1 + $0x12a4] sm:$0xff]
    %v749 = vld [vmem:[%s1 + $0x12ac] sm:$0xf]
    %v750 = vld [vmem:[%s1 + $0x12b0] sm:$0xff]
    %v751 = vld [vmem:[%s1 + $0x12b8] sm:$0xff]
    %v752 = vld [vmem:[%s1 + $0x12c0] sm:$0xff]
    %v753 = vld [vmem:[%s1 + $0x12c8] sm:$0xff]
    %v754 = vld [vmem:[%s1 + $0x12d0] sm:$0xff]
    %v755 = vld [vmem:[%s1 + $0x12d8] sm:$0xff]
    %v756 = vld [vmem:[%s1 + $0x12e0] sm:$0xf]
    %v757 = vld [vmem:[%s1 + $0x12e4] sm:$0xff]
    %v758 = vld [vmem:[%s1 + $0x12ec] sm:$0xff]
    %v759 = vld [vmem:[%s1 + $0x12f4] sm:$0xff]
    %v760 = vld [vmem:[%s1 + $0x12fc] sm:$0xff]
    %v761 = vld [vmem:[%s1 + $0x1304] sm:$0xff]
    %v762 = vld [vmem:[%s1 + $0x130c] sm:$0xff]
    %v763 = vld [vmem:[%s1 + $0x1314] sm:$0xf]
    %v764 = vld [vmem:[%s1 + $0x1318] sm:$0xff]
    %v765 = vld [vmem:[%s1 + $0x1320] sm:$0xff]
    %v766 = vld [vmem:[%s1 + $0x1328] sm:$0xff]
    %v767 = vld [vmem:[%s1 + $0x1330] sm:$0xff]
    %v768 = vld [vmem:[%s1 + $0x1338] sm:$0xff]
    %v769 = vld [vmem:[%s1 + $0x1340] sm:$0xff]
    %v770 = vld [vmem:[%s1 + $0x1348] sm:$0xf]
    %v771 = vld [vmem:[%s1 + $0x134c] sm:$0xff]
    %v772 = vld [vmem:[%s1 + $0x1354] sm:$0xff]
    %v773 = vld [vmem:[%s1 + $0x135c] sm:$0xff]
    %v774 = vld [vmem:[%s1 + $0x1364] sm:$0xff]
    %v775 = vld [vmem:[%s1 + $0x136c] sm:$0xff]
    %v776 = vld [vmem:[%s1 + $0x1374] sm:$0xff]
    %v777 = vld [vmem:[%s1 + $0x137c] sm:$0xf]
    %v778 = vld [vmem:[%s1 + $0x1380] sm:$0xff]
    %v779 = vld [vmem:[%s1 + $0x1388] sm:$0xff]
    %v780 = vld [vmem:[%s1 + $0x1390] sm:$0xff]
    %v781 = vld [vmem:[%s1 + $0x1398] sm:$0xff]
    %v782 = vld [vmem:[%s1 + $0x13a0] sm:$0xff]
    %v783 = vld [vmem:[%s1 + $0x13a8] sm:$0xff]
    %v784 = vld [vmem:[%s1 + $0x13b0] sm:$0xf]
    %v785 = vld [vmem:[%s1 + $0x13b4] sm:$0xff]
    %v786 = vld [vmem:[%s1 + $0x13bc] sm:$0xff]
    %v787 = vld [vmem:[%s1 + $0x13c4] sm:$0xff]
    %v788 = vld [vmem:[%s1 + $0x13cc] sm:$0xff]
    %v789 = vld [vmem:[%s1 + $0x13d4] sm:$0xff]
    %v790 = vld [vmem:[%s1 + $0x13dc] sm:$0xff]
    %v791 = vld [vmem:[%s1 + $0x13e4] sm:$0xf]
    %v792 = vld [vmem:[%s2] sm:$0xff]
    %v793 = vld [vmem:[%s2 + $0x8] sm:$0x1f]
    %v796 = vlaneseq
    %v797 = vshrl.u32 %v796, 7
    %v798 = vsub.s32 0, %v797
    %v799 = vrot.slane %v792, %v798
    %v800 = vlaneseq
    %v801 = vshrl.u32 %v800, 7
    %v802 = vsub.s32 1, %v801
    %v803 = vrot.slane %v792, %v802
    %v804 = vlaneseq
    %v805 = vshrl.u32 %v804, 7
    %v806 = vsub.s32 2, %v805
    %v807 = vrot.slane %v792, %v806
    %v808 = vlaneseq
    %v809 = vshrl.u32 %v808, 7
    %v810 = vsub.s32 3, %v809
    %v811 = vrot.slane %v792, %v810
    %v812 = vlaneseq
    %v813 = vshrl.u32 %v812, 7
    %v814 = vsub.s32 4, %v813
    %v815 = vrot.slane %v792, %v814
    %v816 = vlaneseq
    %v817 = vshrl.u32 %v816, 7
    %v818 = vsub.s32 5, %v817
    %v819 = vrot.slane %v792, %v818
    %v820 = vlaneseq
    %v821 = vshrl.u32 %v820, 7
    %v822 = vsub.s32 6, %v821
    %v823 = vrot.slane %v792, %v822
    %v824 = vlaneseq
    %v825 = vshrl.u32 %v824, 7
    %v826 = vsub.s32 7, %v825
    %v827 = vrot.slane %v792, %v826
    %v828 = vlaneseq
    %v829 = vshrl.u32 %v828, 7
    %v830 = vsub.s32 0, %v829
    %v831 = vrot.slane %v793, %v830
    %v832 = vlaneseq
    %v833 = vshrl.u32 %v832, 7
    %v834 = vsub.s32 1, %v833
    %v835 = vrot.slane %v793, %v834
    %v836 = vlaneseq
    %v837 = vshrl.u32 %v836, 7
    %v838 = vsub.s32 2, %v837
    %v839 = vrot.slane %v793, %v838
    %v840 = vlaneseq
    %v841 = vshrl.u32 %v840, 7
    %v842 = vsub.s32 3, %v841
    %v843 = vrot.slane %v793, %v842
    %v844 = vlaneseq
    %v845 = vshrl.u32 %v844, 7
    %v846 = vsub.s32 4, %v845
    %v847 = vrot.slane %v793, %v846
    %v1547 = vunpack.c.l.b16 %v106
    %v1548 = vunpack.c.h.b16 %v106
    %v1549 = vunpack.c.l.b16 %v107
    %v1550 = vunpack.c.h.b16 %v107
    %v1551 = vunpack.c.l.b16 %v108
    %v1552 = vunpack.c.h.b16 %v108
    %v1553 = vunpack.c.l.b16 %v109
    %v1554 = vunpack.c.h.b16 %v109
    %v1555 = vunpack.c.l.b16 %v110
    %v1556 = vunpack.c.h.b16 %v110
    %v1557 = vunpack.c.l.b16 %v111
    %v1558 = vunpack.c.h.b16 %v111
    %v1559 = vunpack.c.l.b16 %v112
    %v1560 = vunpack.c.l.b16 %v113
    %v1561 = vunpack.c.h.b16 %v113
    %v1562 = vunpack.c.l.b16 %v114
    %v1563 = vunpack.c.h.b16 %v114
    %v1564 = vunpack.c.l.b16 %v115
    %v1565 = vunpack.c.h.b16 %v115
    %v1566 = vunpack.c.l.b16 %v116
    %v1567 = vunpack.c.h.b16 %v116
    %v1568 = vunpack.c.l.b16 %v117
    %v1569 = vunpack.c.h.b16 %v117
    %v1570 = vunpack.c.l.b16 %v118
    %v1571 = vunpack.c.h.b16 %v118
    %v1572 = vunpack.c.l.b16 %v119
    %v1573 = vunpack.c.l.b16 %v120
    %v1574 = vunpack.c.h.b16 %v120
    %v1575 = vunpack.c.l.b16 %v121
    %v1576 = vunpack.c.h.b16 %v121
    %v1577 = vunpack.c.l.b16 %v122
    %v1578 = vunpack.c.h.b16 %v122
    %v1579 = vunpack.c.l.b16 %v123
    %v1580 = vunpack.c.h.b16 %v123
    %v1581 = vunpack.c.l.b16 %v124
    %v1582 = vunpack.c.h.b16 %v124
    %v1583 = vunpack.c.l.b16 %v125
    %v1584 = vunpack.c.h.b16 %v125
    %v1585 = vunpack.c.l.b16 %v126
    %v1586 = vunpack.c.l.b16 %v127
    %v1587 = vunpack.c.h.b16 %v127
    %v1588 = vunpack.c.l.b16 %v128
    %v1589 = vunpack.c.h.b16 %v128
    %v1590 = vunpack.c.l.b16 %v129
    %v1591 = vunpack.c.h.b16 %v129
    %v1592 = vunpack.c.l.b16 %v130
    %v1593 = vunpack.c.h.b16 %v130
    %v1594 = vunpack.c.l.b16 %v131
    %v1595 = vunpack.c.h.b16 %v131
    %v1596 = vunpack.c.l.b16 %v132
    %v1597 = vunpack.c.h.b16 %v132
    %v1598 = vunpack.c.l.b16 %v133
    %v1599 = vunpack.c.l.b16 %v134
    %v1600 = vunpack.c.h.b16 %v134
    %v1601 = vunpack.c.l.b16 %v135
    %v1602 = vunpack.c.h.b16 %v135
    %v1603 = vunpack.c.l.b16 %v136
    %v1604 = vunpack.c.h.b16 %v136
    %v1605 = vunpack.c.l.b16 %v137
    %v1606 = vunpack.c.h.b16 %v137
    %v1607 = vunpack.c.l.b16 %v138
    %v1608 = vunpack.c.h.b16 %v138
    %v1609 = vunpack.c.l.b16 %v139
    %v1610 = vunpack.c.h.b16 %v139
    %v1611 = vunpack.c.l.b16 %v140
    %v1612 = vunpack.c.l.b16 %v141
    %v1613 = vunpack.c.h.b16 %v141
    %v1614 = vunpack.c.l.b16 %v142
    %v1615 = vunpack.c.h.b16 %v142
    %v1616 = vunpack.c.l.b16 %v143
    %v1617 = vunpack.c.h.b16 %v143
    %v1618 = vunpack.c.l.b16 %v144
    %v1619 = vunpack.c.h.b16 %v144
    %v1620 = vunpack.c.l.b16 %v145
    %v1621 = vunpack.c.h.b16 %v145
    %v1622 = vunpack.c.l.b16 %v146
    %v1623 = vunpack.c.h.b16 %v146
    %v1624 = vunpack.c.l.b16 %v147
    %v1625 = vunpack.c.l.b16 %v148
    %v1626 = vunpack.c.h.b16 %v148
    %v1627 = vunpack.c.l.b16 %v149
    %v1628 = vunpack.c.h.b16 %v149
    %v1629 = vunpack.c.l.b16 %v150
    %v1630 = vunpack.c.h.b16 %v150
    %v1631 = vunpack.c.l.b16 %v151
    %v1632 = vunpack.c.h.b16 %v151
    %v1633 = vunpack.c.l.b16 %v152
    %v1634 = vunpack.c.h.b16 %v152
    %v1635 = vunpack.c.l.b16 %v153
    %v1636 = vunpack.c.h.b16 %v153
    %v1637 = vunpack.c.l.b16 %v154
    %v1638 = vunpack.c.l.b16 %v155
    %v1639 = vunpack.c.h.b16 %v155
    %v1640 = vunpack.c.l.b16 %v156
    %v1641 = vunpack.c.h.b16 %v156
    %v1642 = vunpack.c.l.b16 %v157
    %v1643 = vunpack.c.h.b16 %v157
    %v1644 = vunpack.c.l.b16 %v158
    %v1645 = vunpack.c.h.b16 %v158
    %v1646 = vunpack.c.l.b16 %v159
    %v1647 = vunpack.c.h.b16 %v159
    %v1648 = vunpack.c.l.b16 %v160
    %v1649 = vunpack.c.h.b16 %v160
    %v1650 = vunpack.c.l.b16 %v161
    %v1651 = vunpack.c.l.b16 %v162
    %v1652 = vunpack.c.h.b16 %v162
    %v1653 = vunpack.c.l.b16 %v163
    %v1654 = vunpack.c.h.b16 %v163
    %v1655 = vunpack.c.l.b16 %v164
    %v1656 = vunpack.c.h.b16 %v164
    %v1657 = vunpack.c.l.b16 %v165
    %v1658 = vunpack.c.h.b16 %v165
    %v1659 = vunpack.c.l.b16 %v166
    %v1660 = vunpack.c.h.b16 %v166
    %v1661 = vunpack.c.l.b16 %v167
    %v1662 = vunpack.c.h.b16 %v167
    %v1663 = vunpack.c.l.b16 %v168
    %v1664 = vunpack.c.l.b16 %v169
    %v1665 = vunpack.c.h.b16 %v169
    %v1666 = vunpack.c.l.b16 %v170
    %v1667 = vunpack.c.h.b16 %v170
    %v1668 = vunpack.c.l.b16 %v171
    %v1669 = vunpack.c.h.b16 %v171
    %v1670 = vunpack.c.l.b16 %v172
    %v1671 = vunpack.c.h.b16 %v172
    %v1672 = vunpack.c.l.b16 %v173
    %v1673 = vunpack.c.h.b16 %v173
    %v1674 = vunpack.c.l.b16 %v174
    %v1675 = vunpack.c.h.b16 %v174
    %v1676 = vunpack.c.l.b16 %v175
    %v1677 = vunpack.c.l.b16 %v176
    %v1678 = vunpack.c.h.b16 %v176
    %v1679 = vunpack.c.l.b16 %v177
    %v1680 = vunpack.c.h.b16 %v177
    %v1681 = vunpack.c.l.b16 %v178
    %v1682 = vunpack.c.h.b16 %v178
    %v1683 = vunpack.c.l.b16 %v179
    %v1684 = vunpack.c.h.b16 %v179
    %v1685 = vunpack.c.l.b16 %v180
    %v1686 = vunpack.c.h.b16 %v180
    %v1687 = vunpack.c.l.b16 %v181
    %v1688 = vunpack.c.h.b16 %v181
    %v1689 = vunpack.c.l.b16 %v182
    %v1690 = vunpack.c.l.b16 %v183
    %v1691 = vunpack.c.h.b16 %v183
    %v1692 = vunpack.c.l.b16 %v184
    %v1693 = vunpack.c.h.b16 %v184
    %v1694 = vunpack.c.l.b16 %v185
    %v1695 = vunpack.c.h.b16 %v185
    %v1696 = vunpack.c.l.b16 %v186
    %v1697 = vunpack.c.h.b16 %v186
    %v1698 = vunpack.c.l.b16 %v187
    %v1699 = vunpack.c.h.b16 %v187
    %v1700 = vunpack.c.l.b16 %v188
    %v1701 = vunpack.c.h.b16 %v188
    %v1702 = vunpack.c.l.b16 %v189
    %v1703 = vunpack.c.l.b16 %v190
    %v1704 = vunpack.c.h.b16 %v190
    %v1705 = vunpack.c.l.b16 %v191
    %v1706 = vunpack.c.h.b16 %v191
    %v1707 = vunpack.c.l.b16 %v192
    %v1708 = vunpack.c.h.b16 %v192
    %v1709 = vunpack.c.l.b16 %v193
    %v1710 = vunpack.c.h.b16 %v193
    %v1711 = vunpack.c.l.b16 %v194
    %v1712 = vunpack.c.h.b16 %v194
    %v1713 = vunpack.c.l.b16 %v195
    %v1714 = vunpack.c.h.b16 %v195
    %v1715 = vunpack.c.l.b16 %v196
    %v1716 = vunpack.c.l.b16 %v197
    %v1717 = vunpack.c.h.b16 %v197
    %v1718 = vunpack.c.l.b16 %v198
    %v1719 = vunpack.c.h.b16 %v198
    %v1720 = vunpack.c.l.b16 %v199
    %v1721 = vunpack.c.h.b16 %v199
    %v1722 = vunpack.c.l.b16 %v200
    %v1723 = vunpack.c.h.b16 %v200
    %v1724 = vunpack.c.l.b16 %v201
    %v1725 = vunpack.c.h.b16 %v201
    %v1726 = vunpack.c.l.b16 %v202
    %v1727 = vunpack.c.h.b16 %v202
    %v1728 = vunpack.c.l.b16 %v203
    %v1729 = vunpack.c.l.b16 %v204
    %v1730 = vunpack.c.h.b16 %v204
    %v1731 = vunpack.c.l.b16 %v205
    %v1732 = vunpack.c.h.b16 %v205
    %v1733 = vunpack.c.l.b16 %v206
    %v1734 = vunpack.c.h.b16 %v206
    %v1735 = vunpack.c.l.b16 %v207
    %v1736 = vunpack.c.h.b16 %v207
    %v1737 = vunpack.c.l.b16 %v208
    %v1738 = vunpack.c.h.b16 %v208
    %v1739 = vunpack.c.l.b16 %v209
    %v1740 = vunpack.c.h.b16 %v209
    %v1741 = vunpack.c.l.b16 %v210
    %v1742 = vunpack.c.l.b16 %v211
    %v1743 = vunpack.c.h.b16 %v211
    %v1744 = vunpack.c.l.b16 %v212
    %v1745 = vunpack.c.h.b16 %v212
    %v1746 = vunpack.c.l.b16 %v213
    %v1747 = vunpack.c.h.b16 %v213
    %v1748 = vunpack.c.l.b16 %v214
    %v1749 = vunpack.c.h.b16 %v214
    %v1750 = vunpack.c.l.b16 %v215
    %v1751 = vunpack.c.h.b16 %v215
    %v1752 = vunpack.c.l.b16 %v216
    %v1753 = vunpack.c.h.b16 %v216
    %v1754 = vunpack.c.l.b16 %v217
    %v1755 = vunpack.c.l.b16 %v218
    %v1756 = vunpack.c.h.b16 %v218
    %v1757 = vunpack.c.l.b16 %v219
    %v1758 = vunpack.c.h.b16 %v219
    %v1759 = vunpack.c.l.b16 %v220
    %v1760 = vunpack.c.h.b16 %v220
    %v1761 = vunpack.c.l.b16 %v221
    %v1762 = vunpack.c.h.b16 %v221
    %v1763 = vunpack.c.l.b16 %v222
    %v1764 = vunpack.c.h.b16 %v222
    %v1765 = vunpack.c.l.b16 %v223
    %v1766 = vunpack.c.h.b16 %v223
    %v1767 = vunpack.c.l.b16 %v224
    %v1768 = vunpack.c.l.b16 %v225
    %v1769 = vunpack.c.h.b16 %v225
    %v1770 = vunpack.c.l.b16 %v226
    %v1771 = vunpack.c.h.b16 %v226
    %v1772 = vunpack.c.l.b16 %v227
    %v1773 = vunpack.c.h.b16 %v227
    %v1774 = vunpack.c.l.b16 %v228
    %v1775 = vunpack.c.h.b16 %v228
    %v1776 = vunpack.c.l.b16 %v229
    %v1777 = vunpack.c.h.b16 %v229
    %v1778 = vunpack.c.l.b16 %v230
    %v1779 = vunpack.c.h.b16 %v230
    %v1780 = vunpack.c.l.b16 %v231
    %v1781 = vunpack.c.l.b16 %v232
    %v1782 = vunpack.c.h.b16 %v232
    %v1783 = vunpack.c.l.b16 %v233
    %v1784 = vunpack.c.h.b16 %v233
    %v1785 = vunpack.c.l.b16 %v234
    %v1786 = vunpack.c.h.b16 %v234
    %v1787 = vunpack.c.l.b16 %v235
    %v1788 = vunpack.c.h.b16 %v235
    %v1789 = vunpack.c.l.b16 %v236
    %v1790 = vunpack.c.h.b16 %v236
    %v1791 = vunpack.c.l.b16 %v237
    %v1792 = vunpack.c.h.b16 %v237
    %v1793 = vunpack.c.l.b16 %v238
    %v1794 = vunpack.c.l.b16 %v239
    %v1795 = vunpack.c.h.b16 %v239
    %v1796 = vunpack.c.l.b16 %v240
    %v1797 = vunpack.c.h.b16 %v240
    %v1798 = vunpack.c.l.b16 %v241
    %v1799 = vunpack.c.h.b16 %v241
    %v1800 = vunpack.c.l.b16 %v242
    %v1801 = vunpack.c.h.b16 %v242
    %v1802 = vunpack.c.l.b16 %v243
    %v1803 = vunpack.c.h.b16 %v243
    %v1804 = vunpack.c.l.b16 %v244
    %v1805 = vunpack.c.h.b16 %v244
    %v1806 = vunpack.c.l.b16 %v245
    %v1807 = vunpack.c.l.b16 %v246
    %v1808 = vunpack.c.h.b16 %v246
    %v1809 = vunpack.c.l.b16 %v247
    %v1810 = vunpack.c.h.b16 %v247
    %v1811 = vunpack.c.l.b16 %v248
    %v1812 = vunpack.c.h.b16 %v248
    %v1813 = vunpack.c.l.b16 %v249
    %v1814 = vunpack.c.h.b16 %v249
    %v1815 = vunpack.c.l.b16 %v250
    %v1816 = vunpack.c.h.b16 %v250
    %v1817 = vunpack.c.l.b16 %v251
    %v1818 = vunpack.c.h.b16 %v251
    %v1819 = vunpack.c.l.b16 %v252
    %v1820 = vunpack.c.l.b16 %v253
    %v1821 = vunpack.c.h.b16 %v253
    %v1822 = vunpack.c.l.b16 %v254
    %v1823 = vunpack.c.h.b16 %v254
    %v1824 = vunpack.c.l.b16 %v255
    %v1825 = vunpack.c.h.b16 %v255
    %v1826 = vunpack.c.l.b16 %v256
    %v1827 = vunpack.c.h.b16 %v256
    %v1828 = vunpack.c.l.b16 %v257
    %v1829 = vunpack.c.h.b16 %v257
    %v1830 = vunpack.c.l.b16 %v258
    %v1831 = vunpack.c.h.b16 %v258
    %v1832 = vunpack.c.l.b16 %v259
    %v1833 = vunpack.c.l.b16 %v260
    %v1834 = vunpack.c.h.b16 %v260
    %v1835 = vunpack.c.l.b16 %v261
    %v1836 = vunpack.c.h.b16 %v261
    %v1837 = vunpack.c.l.b16 %v262
    %v1838 = vunpack.c.h.b16 %v262
    %v1839 = vunpack.c.l.b16 %v263
    %v1840 = vunpack.c.h.b16 %v263
    %v1841 = vunpack.c.l.b16 %v264
    %v1842 = vunpack.c.h.b16 %v264
    %v1843 = vunpack.c.l.b16 %v265
    %v1844 = vunpack.c.h.b16 %v265
    %v1845 = vunpack.c.l.b16 %v266
    %v1846 = vunpack.c.l.b16 %v267
    %v1847 = vunpack.c.h.b16 %v267
    %v1848 = vunpack.c.l.b16 %v268
    %v1849 = vunpack.c.h.b16 %v268
    %v1850 = vunpack.c.l.b16 %v269
    %v1851 = vunpack.c.h.b16 %v269
    %v1852 = vunpack.c.l.b16 %v270
    %v1853 = vunpack.c.h.b16 %v270
    %v1854 = vunpack.c.l.b16 %v271
    %v1855 = vunpack.c.h.b16 %v271
    %v1856 = vunpack.c.l.b16 %v272
    %v1857 = vunpack.c.h.b16 %v272
    %v1858 = vunpack.c.l.b16 %v273
    %v1859 = vunpack.c.l.b16 %v274
    %v1860 = vunpack.c.h.b16 %v274
    %v1861 = vunpack.c.l.b16 %v275
    %v1862 = vunpack.c.h.b16 %v275
    %v1863 = vunpack.c.l.b16 %v276
    %v1864 = vunpack.c.h.b16 %v276
    %v1865 = vunpack.c.l.b16 %v277
    %v1866 = vunpack.c.h.b16 %v277
    %v1867 = vunpack.c.l.b16 %v278
    %v1868 = vunpack.c.h.b16 %v278
    %v1869 = vunpack.c.l.b16 %v279
    %v1870 = vunpack.c.h.b16 %v279
    %v1871 = vunpack.c.l.b16 %v280
    %v1872 = vunpack.c.l.b16 %v281
    %v1873 = vunpack.c.h.b16 %v281
    %v1874 = vunpack.c.l.b16 %v282
    %v1875 = vunpack.c.h.b16 %v282
    %v1876 = vunpack.c.l.b16 %v283
    %v1877 = vunpack.c.h.b16 %v283
    %v1878 = vunpack.c.l.b16 %v284
    %v1879 = vunpack.c.h.b16 %v284
    %v1880 = vunpack.c.l.b16 %v285
    %v1881 = vunpack.c.h.b16 %v285
    %v1882 = vunpack.c.l.b16 %v286
    %v1883 = vunpack.c.h.b16 %v286
    %v1884 = vunpack.c.l.b16 %v287
    %v1885 = vunpack.c.l.b16 %v288
    %v1886 = vunpack.c.h.b16 %v288
    %v1887 = vunpack.c.l.b16 %v289
    %v1888 = vunpack.c.h.b16 %v289
    %v1889 = vunpack.c.l.b16 %v290
    %v1890 = vunpack.c.h.b16 %v290
    %v1891 = vunpack.c.l.b16 %v291
    %v1892 = vunpack.c.h.b16 %v291
    %v1893 = vunpack.c.l.b16 %v292
    %v1894 = vunpack.c.h.b16 %v292
    %v1895 = vunpack.c.l.b16 %v293
    %v1896 = vunpack.c.h.b16 %v293
    %v1897 = vunpack.c.l.b16 %v294
    %v1898 = vunpack.c.l.b16 %v295
    %v1899 = vunpack.c.h.b16 %v295
    %v1900 = vunpack.c.l.b16 %v296
    %v1901 = vunpack.c.h.b16 %v296
    %v1902 = vunpack.c.l.b16 %v297
    %v1903 = vunpack.c.h.b16 %v297
    %v1904 = vunpack.c.l.b16 %v298
    %v1905 = vunpack.c.h.b16 %v298
    %v1906 = vunpack.c.l.b16 %v299
    %v1907 = vunpack.c.h.b16 %v299
    %v1908 = vunpack.c.l.b16 %v300
    %v1909 = vunpack.c.h.b16 %v300
    %v1910 = vunpack.c.l.b16 %v301
    %v1911 = vunpack.c.l.b16 %v302
    %v1912 = vunpack.c.h.b16 %v302
    %v1913 = vunpack.c.l.b16 %v303
    %v1914 = vunpack.c.h.b16 %v303
    %v1915 = vunpack.c.l.b16 %v304
    %v1916 = vunpack.c.h.b16 %v304
    %v1917 = vunpack.c.l.b16 %v305
    %v1918 = vunpack.c.h.b16 %v305
    %v1919 = vunpack.c.l.b16 %v306
    %v1920 = vunpack.c.h.b16 %v306
    %v1921 = vunpack.c.l.b16 %v307
    %v1922 = vunpack.c.h.b16 %v307
    %v1923 = vunpack.c.l.b16 %v308
    %v1924 = vunpack.c.l.b16 %v309
    %v1925 = vunpack.c.h.b16 %v309
    %v1926 = vunpack.c.l.b16 %v310
    %v1927 = vunpack.c.h.b16 %v310
    %v1928 = vunpack.c.l.b16 %v311
    %v1929 = vunpack.c.h.b16 %v311
    %v1930 = vunpack.c.l.b16 %v312
    %v1931 = vunpack.c.h.b16 %v312
    %v1932 = vunpack.c.l.b16 %v313
    %v1933 = vunpack.c.h.b16 %v313
    %v1934 = vunpack.c.l.b16 %v314
    %v1935 = vunpack.c.h.b16 %v314
    %v1936 = vunpack.c.l.b16 %v315
    %v1937 = vunpack.c.l.b16 %v316
    %v1938 = vunpack.c.h.b16 %v316
    %v1939 = vunpack.c.l.b16 %v317
    %v1940 = vunpack.c.h.b16 %v317
    %v1941 = vunpack.c.l.b16 %v318
    %v1942 = vunpack.c.h.b16 %v318
    %v1943 = vunpack.c.l.b16 %v319
    %v1944 = vunpack.c.h.b16 %v319
    %v1945 = vunpack.c.l.b16 %v320
    %v1946 = vunpack.c.h.b16 %v320
    %v1947 = vunpack.c.l.b16 %v321
    %v1948 = vunpack.c.h.b16 %v321
    %v1949 = vunpack.c.l.b16 %v322
    %v1950 = vunpack.c.l.b16 %v323
    %v1951 = vunpack.c.h.b16 %v323
    %v1952 = vunpack.c.l.b16 %v324
    %v1953 = vunpack.c.h.b16 %v324
    %v1954 = vunpack.c.l.b16 %v325
    %v1955 = vunpack.c.h.b16 %v325
    %v1956 = vunpack.c.l.b16 %v326
    %v1957 = vunpack.c.h.b16 %v326
    %v1958 = vunpack.c.l.b16 %v327
    %v1959 = vunpack.c.h.b16 %v327
    %v1960 = vunpack.c.l.b16 %v328
    %v1961 = vunpack.c.h.b16 %v328
    %v1962 = vunpack.c.l.b16 %v329
    %v1963 = vunpack.c.l.b16 %v330
    %v1964 = vunpack.c.h.b16 %v330
    %v1965 = vunpack.c.l.b16 %v331
    %v1966 = vunpack.c.h.b16 %v331
    %v1967 = vunpack.c.l.b16 %v332
    %v1968 = vunpack.c.h.b16 %v332
    %v1969 = vunpack.c.l.b16 %v333
    %v1970 = vunpack.c.h.b16 %v333
    %v1971 = vunpack.c.l.b16 %v334
    %v1972 = vunpack.c.h.b16 %v334
    %v1973 = vunpack.c.l.b16 %v335
    %v1974 = vunpack.c.h.b16 %v335
    %v1975 = vunpack.c.l.b16 %v336
    %v1976 = vunpack.c.l.b16 %v337
    %v1977 = vunpack.c.h.b16 %v337
    %v1978 = vunpack.c.l.b16 %v338
    %v1979 = vunpack.c.h.b16 %v338
    %v1980 = vunpack.c.l.b16 %v339
    %v1981 = vunpack.c.h.b16 %v339
    %v1982 = vunpack.c.l.b16 %v340
    %v1983 = vunpack.c.h.b16 %v340
    %v1984 = vunpack.c.l.b16 %v341
    %v1985 = vunpack.c.h.b16 %v341
    %v1986 = vunpack.c.l.b16 %v342
    %v1987 = vunpack.c.h.b16 %v342
    %v1988 = vunpack.c.l.b16 %v343
    %v1989 = vunpack.c.l.b16 %v344
    %v1990 = vunpack.c.h.b16 %v344
    %v1991 = vunpack.c.l.b16 %v345
    %v1992 = vunpack.c.h.b16 %v345
    %v1993 = vunpack.c.l.b16 %v346
    %v1994 = vunpack.c.h.b16 %v346
    %v1995 = vunpack.c.l.b16 %v347
    %v1996 = vunpack.c.h.b16 %v347
    %v1997 = vunpack.c.l.b16 %v348
    %v1998 = vunpack.c.h.b16 %v348
    %v1999 = vunpack.c.l.b16 %v349
    %v2000 = vunpack.c.h.b16 %v349
    %v2001 = vunpack.c.l.b16 %v350
    %v2002 = vunpack.c.l.b16 %v351
    %v2003 = vunpack.c.h.b16 %v351
    %v2004 = vunpack.c.l.b16 %v352
    %v2005 = vunpack.c.h.b16 %v352
    %v2006 = vunpack.c.l.b16 %v353
    %v2007 = vunpack.c.h.b16 %v353
    %v2008 = vunpack.c.l.b16 %v354
    %v2009 = vunpack.c.h.b16 %v354
    %v2010 = vunpack.c.l.b16 %v355
    %v2011 = vunpack.c.h.b16 %v355
    %v2012 = vunpack.c.l.b16 %v356
    %v2013 = vunpack.c.h.b16 %v356
    %v2014 = vunpack.c.l.b16 %v357
    %v2015 = vunpack.c.l.b16 %v358
    %v2016 = vunpack.c.h.b16 %v358
    %v2017 = vunpack.c.l.b16 %v359
    %v2018 = vunpack.c.h.b16 %v359
    %v2019 = vunpack.c.l.b16 %v360
    %v2020 = vunpack.c.h.b16 %v360
    %v2021 = vunpack.c.l.b16 %v361
    %v2022 = vunpack.c.h.b16 %v361
    %v2023 = vunpack.c.l.b16 %v362
    %v2024 = vunpack.c.h.b16 %v362
    %v2025 = vunpack.c.l.b16 %v363
    %v2026 = vunpack.c.h.b16 %v363
    %v2027 = vunpack.c.l.b16 %v364
    %v2028 = vunpack.c.l.b16 %v365
    %v2029 = vunpack.c.h.b16 %v365
    %v2030 = vunpack.c.l.b16 %v366
    %v2031 = vunpack.c.h.b16 %v366
    %v2032 = vunpack.c.l.b16 %v367
    %v2033 = vunpack.c.h.b16 %v367
    %v2034 = vunpack.c.l.b16 %v368
    %v2035 = vunpack.c.h.b16 %v368
    %v2036 = vunpack.c.l.b16 %v369
    %v2037 = vunpack.c.h.b16 %v369
    %v2038 = vunpack.c.l.b16 %v370
    %v2039 = vunpack.c.h.b16 %v370
    %v2040 = vunpack.c.l.b16 %v371
    %v2041 = vunpack.c.l.b16 %v372
    %v2042 = vunpack.c.h.b16 %v372
    %v2043 = vunpack.c.l.b16 %v373
    %v2044 = vunpack.c.h.b16 %v373
    %v2045 = vunpack.c.l.b16 %v374
    %v2046 = vunpack.c.h.b16 %v374
    %v2047 = vunpack.c.l.b16 %v375
    %v2048 = vunpack.c.h.b16 %v375
    %v2049 = vunpack.c.l.b16 %v376
    %v2050 = vunpack.c.h.b16 %v376
    %v2051 = vunpack.c.l.b16 %v377
    %v2052 = vunpack.c.h.b16 %v377
    %v2053 = vunpack.c.l.b16 %v378
    %v2054 = vunpack.c.l.b16 %v379
    %v2055 = vunpack.c.h.b16 %v379
    %v2056 = vunpack.c.l.b16 %v380
    %v2057 = vunpack.c.h.b16 %v380
    %v2058 = vunpack.c.l.b16 %v381
    %v2059 = vunpack.c.h.b16 %v381
    %v2060 = vunpack.c.l.b16 %v382
    %v2061 = vunpack.c.h.b16 %v382
    %v2062 = vunpack.c.l.b16 %v383
    %v2063 = vunpack.c.h.b16 %v383
    %v2064 = vunpack.c.l.b16 %v384
    %v2065 = vunpack.c.h.b16 %v384
    %v2066 = vunpack.c.l.b16 %v385
    %v2067 = vunpack.c.l.b16 %v386
    %v2068 = vunpack.c.h.b16 %v386
    %v2069 = vunpack.c.l.b16 %v387
    %v2070 = vunpack.c.h.b16 %v387
    %v2071 = vunpack.c.l.b16 %v388
    %v2072 = vunpack.c.h.b16 %v388
    %v2073 = vunpack.c.l.b16 %v389
    %v2074 = vunpack.c.h.b16 %v389
    %v2075 = vunpack.c.l.b16 %v390
    %v2076 = vunpack.c.h.b16 %v390
    %v2077 = vunpack.c.l.b16 %v391
    %v2078 = vunpack.c.h.b16 %v391
    %v2079 = vunpack.c.l.b16 %v392
    %v2080 = vunpack.c.l.b16 %v393
    %v2081 = vunpack.c.h.b16 %v393
    %v2082 = vunpack.c.l.b16 %v394
    %v2083 = vunpack.c.h.b16 %v394
    %v2084 = vunpack.c.l.b16 %v395
    %v2085 = vunpack.c.h.b16 %v395
    %v2086 = vunpack.c.l.b16 %v396
    %v2087 = vunpack.c.h.b16 %v396
    %v2088 = vunpack.c.l.b16 %v397
    %v2089 = vunpack.c.h.b16 %v397
    %v2090 = vunpack.c.l.b16 %v398
    %v2091 = vunpack.c.h.b16 %v398
    %v2092 = vunpack.c.l.b16 %v399
    %v2093 = vunpack.c.l.b16 %v400
    %v2094 = vunpack.c.h.b16 %v400
    %v2095 = vunpack.c.l.b16 %v401
    %v2096 = vunpack.c.h.b16 %v401
    %v2097 = vunpack.c.l.b16 %v402
    %v2098 = vunpack.c.h.b16 %v402
    %v2099 = vunpack.c.l.b16 %v403
    %v2100 = vunpack.c.h.b16 %v403
    %v2101 = vunpack.c.l.b16 %v404
    %v2102 = vunpack.c.h.b16 %v404
    %v2103 = vunpack.c.l.b16 %v405
    %v2104 = vunpack.c.h.b16 %v405
    %v2105 = vunpack.c.l.b16 %v406
    %v2106 = vunpack.c.l.b16 %v407
    %v2107 = vunpack.c.h.b16 %v407
    %v2108 = vunpack.c.l.b16 %v408
    %v2109 = vunpack.c.h.b16 %v408
    %v2110 = vunpack.c.l.b16 %v409
    %v2111 = vunpack.c.h.b16 %v409
    %v2112 = vunpack.c.l.b16 %v410
    %v2113 = vunpack.c.h.b16 %v410
    %v2114 = vunpack.c.l.b16 %v411
    %v2115 = vunpack.c.h.b16 %v411
    %v2116 = vunpack.c.l.b16 %v412
    %v2117 = vunpack.c.h.b16 %v412
    %v2118 = vunpack.c.l.b16 %v413
    %v2119 = vunpack.c.l.b16 %v414
    %v2120 = vunpack.c.h.b16 %v414
    %v2121 = vunpack.c.l.b16 %v415
    %v2122 = vunpack.c.h.b16 %v415
    %v2123 = vunpack.c.l.b16 %v416
    %v2124 = vunpack.c.h.b16 %v416
    %v2125 = vunpack.c.l.b16 %v417
    %v2126 = vunpack.c.h.b16 %v417
    %v2127 = vunpack.c.l.b16 %v418
    %v2128 = vunpack.c.h.b16 %v418
    %v2129 = vunpack.c.l.b16 %v419
    %v2130 = vunpack.c.h.b16 %v419
    %v2131 = vunpack.c.l.b16 %v420
    %v2132 = vunpack.c.l.b16 %v421
    %v2133 = vunpack.c.h.b16 %v421
    %v2134 = vunpack.c.l.b16 %v422
    %v2135 = vunpack.c.h.b16 %v422
    %v2136 = vunpack.c.l.b16 %v423
    %v2137 = vunpack.c.h.b16 %v423
    %v2138 = vunpack.c.l.b16 %v424
    %v2139 = vunpack.c.h.b16 %v424
    %v2140 = vunpack.c.l.b16 %v425
    %v2141 = vunpack.c.h.b16 %v425
    %v2142 = vunpack.c.l.b16 %v426
    %v2143 = vunpack.c.h.b16 %v426
    %v2144 = vunpack.c.l.b16 %v427
    %v2145 = vunpack.c.l.b16 %v428
    %v2146 = vunpack.c.h.b16 %v428
    %v2147 = vunpack.c.l.b16 %v429
    %v2148 = vunpack.c.h.b16 %v429
    %v2149 = vunpack.c.l.b16 %v430
    %v2150 = vunpack.c.h.b16 %v430
    %v2151 = vunpack.c.l.b16 %v431
    %v2152 = vunpack.c.h.b16 %v431
    %v2153 = vunpack.c.l.b16 %v432
    %v2154 = vunpack.c.h.b16 %v432
    %v2155 = vunpack.c.l.b16 %v433
    %v2156 = vunpack.c.h.b16 %v433
    %v2157 = vunpack.c.l.b16 %v434
    %v2158 = vunpack.c.l.b16 %v435
    %v2159 = vunpack.c.h.b16 %v435
    %v2160 = vunpack.c.l.b16 %v436
    %v2161 = vunpack.c.h.b16 %v436
    %v2162 = vunpack.c.l.b16 %v437
    %v2163 = vunpack.c.h.b16 %v437
    %v2164 = vunpack.c.l.b16 %v438
    %v2165 = vunpack.c.h.b16 %v438
    %v2166 = vunpack.c.l.b16 %v439
    %v2167 = vunpack.c.h.b16 %v439
    %v2168 = vunpack.c.l.b16 %v440
    %v2169 = vunpack.c.h.b16 %v440
    %v2170 = vunpack.c.l.b16 %v441
    %v2171 = vunpack.c.l.b16 %v442
    %v2172 = vunpack.c.h.b16 %v442
    %v2173 = vunpack.c.l.b16 %v443
    %v2174 = vunpack.c.h.b16 %v443
    %v2175 = vunpack.c.l.b16 %v444
    %v2176 = vunpack.c.h.b16 %v444
    %v2177 = vunpack.c.l.b16 %v445
    %v2178 = vunpack.c.h.b16 %v445
    %v2179 = vunpack.c.l.b16 %v446
    %v2180 = vunpack.c.h.b16 %v446
    %v2181 = vunpack.c.l.b16 %v447
    %v2182 = vunpack.c.h.b16 %v447
    %v2183 = vunpack.c.l.b16 %v448
    %v2184 = vunpack.c.l.b16 %v449
    %v2185 = vunpack.c.h.b16 %v449
    %v2186 = vunpack.c.l.b16 %v450
    %v2187 = vunpack.c.h.b16 %v450
    %v2188 = vunpack.c.l.b16 %v451
    %v2189 = vunpack.c.h.b16 %v451
    %v2190 = vunpack.c.l.b16 %v452
    %v2191 = vunpack.c.h.b16 %v452
    %v2192 = vunpack.c.l.b16 %v453
    %v2193 = vunpack.c.h.b16 %v453
    %v2194 = vunpack.c.l.b16 %v454
    %v2195 = vunpack.c.h.b16 %v454
    %v2196 = vunpack.c.l.b16 %v455
    %v2197 = vunpack.c.l.b16 %v456
    %v2198 = vunpack.c.h.b16 %v456
    %v2199 = vunpack.c.l.b16 %v457
    %v2200 = vunpack.c.h.b16 %v457
    %v2201 = vunpack.c.l.b16 %v458
    %v2202 = vunpack.c.h.b16 %v458
    %v2203 = vunpack.c.l.b16 %v459
    %v2204 = vunpack.c.h.b16 %v459
    %v2205 = vunpack.c.l.b16 %v460
    %v2206 = vunpack.c.h.b16 %v460
    %v2207 = vunpack.c.l.b16 %v461
    %v2208 = vunpack.c.h.b16 %v461
    %v2209 = vunpack.c.l.b16 %v462
    %v2210 = vunpack.c.l.b16 %v463
    %v2211 = vunpack.c.h.b16 %v463
    %v2212 = vunpack.c.l.b16 %v464
    %v2213 = vunpack.c.h.b16 %v464
    %v2214 = vunpack.c.l.b16 %v465
    %v2215 = vunpack.c.h.b16 %v465
    %v2216 = vunpack.c.l.b16 %v466
    %v2217 = vunpack.c.h.b16 %v466
    %v2218 = vunpack.c.l.b16 %v467
    %v2219 = vunpack.c.h.b16 %v467
    %v2220 = vunpack.c.l.b16 %v468
    %v2221 = vunpack.c.h.b16 %v468
    %v2222 = vunpack.c.l.b16 %v469
    %v2223 = vunpack.c.l.b16 %v470
    %v2224 = vunpack.c.h.b16 %v470
    %v2225 = vunpack.c.l.b16 %v471
    %v2226 = vunpack.c.h.b16 %v471
    %v2227 = vunpack.c.l.b16 %v472
    %v2228 = vunpack.c.h.b16 %v472
    %v2229 = vunpack.c.l.b16 %v473
    %v2230 = vunpack.c.h.b16 %v473
    %v2231 = vunpack.c.l.b16 %v474
    %v2232 = vunpack.c.h.b16 %v474
    %v2233 = vunpack.c.l.b16 %v475
    %v2234 = vunpack.c.h.b16 %v475
    %v2235 = vunpack.c.l.b16 %v476
    %v2236 = vunpack.c.l.b16 %v477
    %v2237 = vunpack.c.h.b16 %v477
    %v2238 = vunpack.c.l.b16 %v478
    %v2239 = vunpack.c.h.b16 %v478
    %v2240 = vunpack.c.l.b16 %v479
    %v2241 = vunpack.c.h.b16 %v479
    %v2242 = vunpack.c.l.b16 %v480
    %v2243 = vunpack.c.h.b16 %v480
    %v2244 = vunpack.c.l.b16 %v481
    %v2245 = vunpack.c.h.b16 %v481
    %v2246 = vunpack.c.l.b16 %v482
    %v2247 = vunpack.c.h.b16 %v482
    %v2248 = vunpack.c.l.b16 %v483
    %v2249 = vunpack.c.l.b16 %v484
    %v2250 = vunpack.c.h.b16 %v484
    %v2251 = vunpack.c.l.b16 %v485
    %v2252 = vunpack.c.h.b16 %v485
    %v2253 = vunpack.c.l.b16 %v486
    %v2254 = vunpack.c.h.b16 %v486
    %v2255 = vunpack.c.l.b16 %v487
    %v2256 = vunpack.c.h.b16 %v487
    %v2257 = vunpack.c.l.b16 %v488
    %v2258 = vunpack.c.h.b16 %v488
    %v2259 = vunpack.c.l.b16 %v489
    %v2260 = vunpack.c.h.b16 %v489
    %v2261 = vunpack.c.l.b16 %v490
    %v2262 = vunpack.c.l.b16 %v491
    %v2263 = vunpack.c.h.b16 %v491
    %v2264 = vunpack.c.l.b16 %v492
    %v2265 = vunpack.c.h.b16 %v492
    %v2266 = vunpack.c.l.b16 %v493
    %v2267 = vunpack.c.h.b16 %v493
    %v2268 = vunpack.c.l.b16 %v494
    %v2269 = vunpack.c.h.b16 %v494
    %v2270 = vunpack.c.l.b16 %v495
    %v2271 = vunpack.c.h.b16 %v495
    %v2272 = vunpack.c.l.b16 %v496
    %v2273 = vunpack.c.h.b16 %v496
    %v2274 = vunpack.c.l.b16 %v497
    %v2275 = vunpack.c.l.b16 %v498
    %v2276 = vunpack.c.h.b16 %v498
    %v2277 = vunpack.c.l.b16 %v499
    %v2278 = vunpack.c.h.b16 %v499
    %v2279 = vunpack.c.l.b16 %v500
    %v2280 = vunpack.c.h.b16 %v500
    %v2281 = vunpack.c.l.b16 %v501
    %v2282 = vunpack.c.h.b16 %v501
    %v2283 = vunpack.c.l.b16 %v502
    %v2284 = vunpack.c.h.b16 %v502
    %v2285 = vunpack.c.l.b16 %v503
    %v2286 = vunpack.c.h.b16 %v503
    %v2287 = vunpack.c.l.b16 %v504
    %v2288 = vunpack.c.l.b16 %v505
    %v2289 = vunpack.c.h.b16 %v505
    %v2290 = vunpack.c.l.b16 %v506
    %v2291 = vunpack.c.h.b16 %v506
    %v2292 = vunpack.c.l.b16 %v507
    %v2293 = vunpack.c.h.b16 %v507
    %v2294 = vunpack.c.l.b16 %v508
    %v2295 = vunpack.c.h.b16 %v508
    %v2296 = vunpack.c.l.b16 %v509
    %v2297 = vunpack.c.h.b16 %v509
    %v2298 = vunpack.c.l.b16 %v510
    %v2299 = vunpack.c.h.b16 %v510
    %v2300 = vunpack.c.l.b16 %v511
    %v2301 = vunpack.c.l.b16 %v512
    %v2302 = vunpack.c.h.b16 %v512
    %v2303 = vunpack.c.l.b16 %v513
    %v2304 = vunpack.c.h.b16 %v513
    %v2305 = vunpack.c.l.b16 %v514
    %v2306 = vunpack.c.h.b16 %v514
    %v2307 = vunpack.c.l.b16 %v515
    %v2308 = vunpack.c.h.b16 %v515
    %v2309 = vunpack.c.l.b16 %v516
    %v2310 = vunpack.c.h.b16 %v516
    %v2311 = vunpack.c.l.b16 %v517
    %v2312 = vunpack.c.h.b16 %v517
    %v2313 = vunpack.c.l.b16 %v518
    %v2314 = vunpack.c.l.b16 %v519
    %v2315 = vunpack.c.h.b16 %v519
    %v2316 = vunpack.c.l.b16 %v520
    %v2317 = vunpack.c.h.b16 %v520
    %v2318 = vunpack.c.l.b16 %v521
    %v2319 = vunpack.c.h.b16 %v521
    %v2320 = vunpack.c.l.b16 %v522
    %v2321 = vunpack.c.h.b16 %v522
    %v2322 = vunpack.c.l.b16 %v523
    %v2323 = vunpack.c.h.b16 %v523
    %v2324 = vunpack.c.l.b16 %v524
    %v2325 = vunpack.c.h.b16 %v524
    %v2326 = vunpack.c.l.b16 %v525
    %v2327 = vunpack.c.l.b16 %v526
    %v2328 = vunpack.c.h.b16 %v526
    %v2329 = vunpack.c.l.b16 %v527
    %v2330 = vunpack.c.h.b16 %v527
    %v2331 = vunpack.c.l.b16 %v528
    %v2332 = vunpack.c.h.b16 %v528
    %v2333 = vunpack.c.l.b16 %v529
    %v2334 = vunpack.c.h.b16 %v529
    %v2335 = vunpack.c.l.b16 %v530
    %v2336 = vunpack.c.h.b16 %v530
    %v2337 = vunpack.c.l.b16 %v531
    %v2338 = vunpack.c.h.b16 %v531
    %v2339 = vunpack.c.l.b16 %v532
    %v2340 = vunpack.c.l.b16 %v533
    %v2341 = vunpack.c.h.b16 %v533
    %v2342 = vunpack.c.l.b16 %v534
    %v2343 = vunpack.c.h.b16 %v534
    %v2344 = vunpack.c.l.b16 %v535
    %v2345 = vunpack.c.h.b16 %v535
    %v2346 = vunpack.c.l.b16 %v536
    %v2347 = vunpack.c.h.b16 %v536
    %v2348 = vunpack.c.l.b16 %v537
    %v2349 = vunpack.c.h.b16 %v537
    %v2350 = vunpack.c.l.b16 %v538
    %v2351 = vunpack.c.h.b16 %v538
    %v2352 = vunpack.c.l.b16 %v539
    %v2353 = vunpack.c.l.b16 %v540
    %v2354 = vunpack.c.h.b16 %v540
    %v2355 = vunpack.c.l.b16 %v541
    %v2356 = vunpack.c.h.b16 %v541
    %v2357 = vunpack.c.l.b16 %v542
    %v2358 = vunpack.c.h.b16 %v542
    %v2359 = vunpack.c.l.b16 %v543
    %v2360 = vunpack.c.h.b16 %v543
    %v2361 = vunpack.c.l.b16 %v544
    %v2362 = vunpack.c.h.b16 %v544
    %v2363 = vunpack.c.l.b16 %v545
    %v2364 = vunpack.c.h.b16 %v545
    %v2365 = vunpack.c.l.b16 %v546
    %v2366 = vunpack.c.l.b16 %v547
    %v2367 = vunpack.c.h.b16 %v547
    %v2368 = vunpack.c.l.b16 %v548
    %v2369 = vunpack.c.h.b16 %v548
    %v2370 = vunpack.c.l.b16 %v549
    %v2371 = vunpack.c.h.b16 %v549
    %v2372 = vunpack.c.l.b16 %v550
    %v2373 = vunpack.c.h.b16 %v550
    %v2374 = vunpack.c.l.b16 %v551
    %v2375 = vunpack.c.h.b16 %v551
    %v2376 = vunpack.c.l.b16 %v552
    %v2377 = vunpack.c.h.b16 %v552
    %v2378 = vunpack.c.l.b16 %v553
    %v2379 = vunpack.c.l.b16 %v554
    %v2380 = vunpack.c.h.b16 %v554
    %v2381 = vunpack.c.l.b16 %v555
    %v2382 = vunpack.c.h.b16 %v555
    %v2383 = vunpack.c.l.b16 %v556
    %v2384 = vunpack.c.h.b16 %v556
    %v2385 = vunpack.c.l.b16 %v557
    %v2386 = vunpack.c.h.b16 %v557
    %v2387 = vunpack.c.l.b16 %v558
    %v2388 = vunpack.c.h.b16 %v558
    %v2389 = vunpack.c.l.b16 %v559
    %v2390 = vunpack.c.h.b16 %v559
    %v2391 = vunpack.c.l.b16 %v560
    %v2392 = vunpack.c.l.b16 %v561
    %v2393 = vunpack.c.h.b16 %v561
    %v2394 = vunpack.c.l.b16 %v562
    %v2395 = vunpack.c.h.b16 %v562
    %v2396 = vunpack.c.l.b16 %v563
    %v2397 = vunpack.c.h.b16 %v563
    %v2398 = vunpack.c.l.b16 %v564
    %v2399 = vunpack.c.h.b16 %v564
    %v2400 = vunpack.c.l.b16 %v565
    %v2401 = vunpack.c.h.b16 %v565
    %v2402 = vunpack.c.l.b16 %v566
    %v2403 = vunpack.c.h.b16 %v566
    %v2404 = vunpack.c.l.b16 %v567
    %v2405 = vunpack.c.l.b16 %v568
    %v2406 = vunpack.c.h.b16 %v568
    %v2407 = vunpack.c.l.b16 %v569
    %v2408 = vunpack.c.h.b16 %v569
    %v2409 = vunpack.c.l.b16 %v570
    %v2410 = vunpack.c.h.b16 %v570
    %v2411 = vunpack.c.l.b16 %v571
    %v2412 = vunpack.c.h.b16 %v571
    %v2413 = vunpack.c.l.b16 %v572
    %v2414 = vunpack.c.h.b16 %v572
    %v2415 = vunpack.c.l.b16 %v573
    %v2416 = vunpack.c.h.b16 %v573
    %v2417 = vunpack.c.l.b16 %v574
    %v2418 = vunpack.c.l.b16 %v575
    %v2419 = vunpack.c.h.b16 %v575
    %v2420 = vunpack.c.l.b16 %v576
    %v2421 = vunpack.c.h.b16 %v576
    %v2422 = vunpack.c.l.b16 %v577
    %v2423 = vunpack.c.h.b16 %v577
    %v2424 = vunpack.c.l.b16 %v578
    %v2425 = vunpack.c.h.b16 %v578
    %v2426 = vunpack.c.l.b16 %v579
    %v2427 = vunpack.c.h.b16 %v579
    %v2428 = vunpack.c.l.b16 %v580
    %v2429 = vunpack.c.h.b16 %v580
    %v2430 = vunpack.c.l.b16 %v581
    %v2431 = vunpack.c.l.b16 %v582
    %v2432 = vunpack.c.h.b16 %v582
    %v2433 = vunpack.c.l.b16 %v583
    %v2434 = vunpack.c.h.b16 %v583
    %v2435 = vunpack.c.l.b16 %v584
    %v2436 = vunpack.c.h.b16 %v584
    %v2437 = vunpack.c.l.b16 %v585
    %v2438 = vunpack.c.h.b16 %v585
    %v2439 = vunpack.c.l.b16 %v586
    %v2440 = vunpack.c.h.b16 %v586
    %v2441 = vunpack.c.l.b16 %v587
    %v2442 = vunpack.c.h.b16 %v587
    %v2443 = vunpack.c.l.b16 %v588
    %v2444 = vunpack.c.l.b16 %v589
    %v2445 = vunpack.c.h.b16 %v589
    %v2446 = vunpack.c.l.b16 %v590
    %v2447 = vunpack.c.h.b16 %v590
    %v2448 = vunpack.c.l.b16 %v591
    %v2449 = vunpack.c.h.b16 %v591
    %v2450 = vunpack.c.l.b16 %v592
    %v2451 = vunpack.c.h.b16 %v592
    %v2452 = vunpack.c.l.b16 %v593
    %v2453 = vunpack.c.h.b16 %v593
    %v2454 = vunpack.c.l.b16 %v594
    %v2455 = vunpack.c.h.b16 %v594
    %v2456 = vunpack.c.l.b16 %v595
    %v2457 = vunpack.c.l.b16 %v596
    %v2458 = vunpack.c.h.b16 %v596
    %v2459 = vunpack.c.l.b16 %v597
    %v2460 = vunpack.c.h.b16 %v597
    %v2461 = vunpack.c.l.b16 %v598
    %v2462 = vunpack.c.h.b16 %v598
    %v2463 = vunpack.c.l.b16 %v599
    %v2464 = vunpack.c.h.b16 %v599
    %v2465 = vunpack.c.l.b16 %v600
    %v2466 = vunpack.c.h.b16 %v600
    %v2467 = vunpack.c.l.b16 %v601
    %v2468 = vunpack.c.h.b16 %v601
    %v2469 = vunpack.c.l.b16 %v602
    %v2470 = vunpack.c.l.b16 %v603
    %v2471 = vunpack.c.h.b16 %v603
    %v2472 = vunpack.c.l.b16 %v604
    %v2473 = vunpack.c.h.b16 %v604
    %v2474 = vunpack.c.l.b16 %v605
    %v2475 = vunpack.c.h.b16 %v605
    %v2476 = vunpack.c.l.b16 %v606
    %v2477 = vunpack.c.h.b16 %v606
    %v2478 = vunpack.c.l.b16 %v607
    %v2479 = vunpack.c.h.b16 %v607
    %v2480 = vunpack.c.l.b16 %v608
    %v2481 = vunpack.c.h.b16 %v608
    %v2482 = vunpack.c.l.b16 %v609
    %v2483 = vunpack.c.l.b16 %v610
    %v2484 = vunpack.c.h.b16 %v610
    %v2485 = vunpack.c.l.b16 %v611
    %v2486 = vunpack.c.h.b16 %v611
    %v2487 = vunpack.c.l.b16 %v612
    %v2488 = vunpack.c.h.b16 %v612
    %v2489 = vunpack.c.l.b16 %v613
    %v2490 = vunpack.c.h.b16 %v613
    %v2491 = vunpack.c.l.b16 %v614
    %v2492 = vunpack.c.h.b16 %v614
    %v2493 = vunpack.c.l.b16 %v615
    %v2494 = vunpack.c.h.b16 %v615
    %v2495 = vunpack.c.l.b16 %v616
    %v2496 = vunpack.c.l.b16 %v617
    %v2497 = vunpack.c.h.b16 %v617
    %v2498 = vunpack.c.l.b16 %v618
    %v2499 = vunpack.c.h.b16 %v618
    %v2500 = vunpack.c.l.b16 %v619
    %v2501 = vunpack.c.h.b16 %v619
    %v2502 = vunpack.c.l.b16 %v620
    %v2503 = vunpack.c.h.b16 %v620
    %v2504 = vunpack.c.l.b16 %v621
    %v2505 = vunpack.c.h.b16 %v621
    %v2506 = vunpack.c.l.b16 %v622
    %v2507 = vunpack.c.h.b16 %v622
    %v2508 = vunpack.c.l.b16 %v623
    %v2509 = vunpack.c.l.b16 %v624
    %v2510 = vunpack.c.h.b16 %v624
    %v2511 = vunpack.c.l.b16 %v625
    %v2512 = vunpack.c.h.b16 %v625
    %v2513 = vunpack.c.l.b16 %v626
    %v2514 = vunpack.c.h.b16 %v626
    %v2515 = vunpack.c.l.b16 %v627
    %v2516 = vunpack.c.h.b16 %v627
    %v2517 = vunpack.c.l.b16 %v628
    %v2518 = vunpack.c.h.b16 %v628
    %v2519 = vunpack.c.l.b16 %v629
    %v2520 = vunpack.c.h.b16 %v629
    %v2521 = vunpack.c.l.b16 %v630
    %v2522 = vunpack.c.l.b16 %v631
    %v2523 = vunpack.c.h.b16 %v631
    %v2524 = vunpack.c.l.b16 %v632
    %v2525 = vunpack.c.h.b16 %v632
    %v2526 = vunpack.c.l.b16 %v633
    %v2527 = vunpack.c.h.b16 %v633
    %v2528 = vunpack.c.l.b16 %v634
    %v2529 = vunpack.c.h.b16 %v634
    %v2530 = vunpack.c.l.b16 %v635
    %v2531 = vunpack.c.h.b16 %v635
    %v2532 = vunpack.c.l.b16 %v636
    %v2533 = vunpack.c.h.b16 %v636
    %v2534 = vunpack.c.l.b16 %v637
    %v2535 = vunpack.c.l.b16 %v638
    %v2536 = vunpack.c.h.b16 %v638
    %v2537 = vunpack.c.l.b16 %v639
    %v2538 = vunpack.c.h.b16 %v639
    %v2539 = vunpack.c.l.b16 %v640
    %v2540 = vunpack.c.h.b16 %v640
    %v2541 = vunpack.c.l.b16 %v641
    %v2542 = vunpack.c.h.b16 %v641
    %v2543 = vunpack.c.l.b16 %v642
    %v2544 = vunpack.c.h.b16 %v642
    %v2545 = vunpack.c.l.b16 %v643
    %v2546 = vunpack.c.h.b16 %v643
    %v2547 = vunpack.c.l.b16 %v644
    %v2548 = vunpack.c.l.b16 %v645
    %v2549 = vunpack.c.h.b16 %v645
    %v2550 = vunpack.c.l.b16 %v646
    %v2551 = vunpack.c.h.b16 %v646
    %v2552 = vunpack.c.l.b16 %v647
    %v2553 = vunpack.c.h.b16 %v647
    %v2554 = vunpack.c.l.b16 %v648
    %v2555 = vunpack.c.h.b16 %v648
    %v2556 = vunpack.c.l.b16 %v649
    %v2557 = vunpack.c.h.b16 %v649
    %v2558 = vunpack.c.l.b16 %v650
    %v2559 = vunpack.c.h.b16 %v650
    %v2560 = vunpack.c.l.b16 %v651
    %v2561 = vunpack.c.l.b16 %v652
    %v2562 = vunpack.c.h.b16 %v652
    %v2563 = vunpack.c.l.b16 %v653
    %v2564 = vunpack.c.h.b16 %v653
    %v2565 = vunpack.c.l.b16 %v654
    %v2566 = vunpack.c.h.b16 %v654
    %v2567 = vunpack.c.l.b16 %v655
    %v2568 = vunpack.c.h.b16 %v655
    %v2569 = vunpack.c.l.b16 %v656
    %v2570 = vunpack.c.h.b16 %v656
    %v2571 = vunpack.c.l.b16 %v657
    %v2572 = vunpack.c.h.b16 %v657
    %v2573 = vunpack.c.l.b16 %v658
    %v2574 = vunpack.c.l.b16 %v659
    %v2575 = vunpack.c.h.b16 %v659
    %v2576 = vunpack.c.l.b16 %v660
    %v2577 = vunpack.c.h.b16 %v660
    %v2578 = vunpack.c.l.b16 %v661
    %v2579 = vunpack.c.h.b16 %v661
    %v2580 = vunpack.c.l.b16 %v662
    %v2581 = vunpack.c.h.b16 %v662
    %v2582 = vunpack.c.l.b16 %v663
    %v2583 = vunpack.c.h.b16 %v663
    %v2584 = vunpack.c.l.b16 %v664
    %v2585 = vunpack.c.h.b16 %v664
    %v2586 = vunpack.c.l.b16 %v665
    %v2587 = vunpack.c.l.b16 %v666
    %v2588 = vunpack.c.h.b16 %v666
    %v2589 = vunpack.c.l.b16 %v667
    %v2590 = vunpack.c.h.b16 %v667
    %v2591 = vunpack.c.l.b16 %v668
    %v2592 = vunpack.c.h.b16 %v668
    %v2593 = vunpack.c.l.b16 %v669
    %v2594 = vunpack.c.h.b16 %v669
    %v2595 = vunpack.c.l.b16 %v670
    %v2596 = vunpack.c.h.b16 %v670
    %v2597 = vunpack.c.l.b16 %v671
    %v2598 = vunpack.c.h.b16 %v671
    %v2599 = vunpack.c.l.b16 %v672
    %v2600 = vunpack.c.l.b16 %v673
    %v2601 = vunpack.c.h.b16 %v673
    %v2602 = vunpack.c.l.b16 %v674
    %v2603 = vunpack.c.h.b16 %v674
    %v2604 = vunpack.c.l.b16 %v675
    %v2605 = vunpack.c.h.b16 %v675
    %v2606 = vunpack.c.l.b16 %v676
    %v2607 = vunpack.c.h.b16 %v676
    %v2608 = vunpack.c.l.b16 %v677
    %v2609 = vunpack.c.h.b16 %v677
    %v2610 = vunpack.c.l.b16 %v678
    %v2611 = vunpack.c.h.b16 %v678
    %v2612 = vunpack.c.l.b16 %v679
    %v2613 = vunpack.c.l.b16 %v680
    %v2614 = vunpack.c.h.b16 %v680
    %v2615 = vunpack.c.l.b16 %v681
    %v2616 = vunpack.c.h.b16 %v681
    %v2617 = vunpack.c.l.b16 %v682
    %v2618 = vunpack.c.h.b16 %v682
    %v2619 = vunpack.c.l.b16 %v683
    %v2620 = vunpack.c.h.b16 %v683
    %v2621 = vunpack.c.l.b16 %v684
    %v2622 = vunpack.c.h.b16 %v684
    %v2623 = vunpack.c.l.b16 %v685
    %v2624 = vunpack.c.h.b16 %v685
    %v2625 = vunpack.c.l.b16 %v686
    %v2626 = vunpack.c.l.b16 %v687
    %v2627 = vunpack.c.h.b16 %v687
    %v2628 = vunpack.c.l.b16 %v688
    %v2629 = vunpack.c.h.b16 %v688
    %v2630 = vunpack.c.l.b16 %v689
    %v2631 = vunpack.c.h.b16 %v689
    %v2632 = vunpack.c.l.b16 %v690
    %v2633 = vunpack.c.h.b16 %v690
    %v2634 = vunpack.c.l.b16 %v691
    %v2635 = vunpack.c.h.b16 %v691
    %v2636 = vunpack.c.l.b16 %v692
    %v2637 = vunpack.c.h.b16 %v692
    %v2638 = vunpack.c.l.b16 %v693
    %v2639 = vunpack.c.l.b16 %v694
    %v2640 = vunpack.c.h.b16 %v694
    %v2641 = vunpack.c.l.b16 %v695
    %v2642 = vunpack.c.h.b16 %v695
    %v2643 = vunpack.c.l.b16 %v696
    %v2644 = vunpack.c.h.b16 %v696
    %v2645 = vunpack.c.l.b16 %v697
    %v2646 = vunpack.c.h.b16 %v697
    %v2647 = vunpack.c.l.b16 %v698
    %v2648 = vunpack.c.h.b16 %v698
    %v2649 = vunpack.c.l.b16 %v699
    %v2650 = vunpack.c.h.b16 %v699
    %v2651 = vunpack.c.l.b16 %v700
    %v2652 = vunpack.c.l.b16 %v701
    %v2653 = vunpack.c.h.b16 %v701
    %v2654 = vunpack.c.l.b16 %v702
    %v2655 = vunpack.c.h.b16 %v702
    %v2656 = vunpack.c.l.b16 %v703
    %v2657 = vunpack.c.h.b16 %v703
    %v2658 = vunpack.c.l.b16 %v704
    %v2659 = vunpack.c.h.b16 %v704
    %v2660 = vunpack.c.l.b16 %v705
    %v2661 = vunpack.c.h.b16 %v705
    %v2662 = vunpack.c.l.b16 %v706
    %v2663 = vunpack.c.h.b16 %v706
    %v2664 = vunpack.c.l.b16 %v707
    %v2665 = vunpack.c.l.b16 %v708
    %v2666 = vunpack.c.h.b16 %v708
    %v2667 = vunpack.c.l.b16 %v709
    %v2668 = vunpack.c.h.b16 %v709
    %v2669 = vunpack.c.l.b16 %v710
    %v2670 = vunpack.c.h.b16 %v710
    %v2671 = vunpack.c.l.b16 %v711
    %v2672 = vunpack.c.h.b16 %v711
    %v2673 = vunpack.c.l.b16 %v712
    %v2674 = vunpack.c.h.b16 %v712
    %v2675 = vunpack.c.l.b16 %v713
    %v2676 = vunpack.c.h.b16 %v713
    %v2677 = vunpack.c.l.b16 %v714
    %v2678 = vunpack.c.l.b16 %v715
    %v2679 = vunpack.c.h.b16 %v715
    %v2680 = vunpack.c.l.b16 %v716
    %v2681 = vunpack.c.h.b16 %v716
    %v2682 = vunpack.c.l.b16 %v717
    %v2683 = vunpack.c.h.b16 %v717
    %v2684 = vunpack.c.l.b16 %v718
    %v2685 = vunpack.c.h.b16 %v718
    %v2686 = vunpack.c.l.b16 %v719
    %v2687 = vunpack.c.h.b16 %v719
    %v2688 = vunpack.c.l.b16 %v720
    %v2689 = vunpack.c.h.b16 %v720
    %v2690 = vunpack.c.l.b16 %v721
    %v2691 = vunpack.c.l.b16 %v722
    %v2692 = vunpack.c.h.b16 %v722
    %v2693 = vunpack.c.l.b16 %v723
    %v2694 = vunpack.c.h.b16 %v723
    %v2695 = vunpack.c.l.b16 %v724
    %v2696 = vunpack.c.h.b16 %v724
    %v2697 = vunpack.c.l.b16 %v725
    %v2698 = vunpack.c.h.b16 %v725
    %v2699 = vunpack.c.l.b16 %v726
    %v2700 = vunpack.c.h.b16 %v726
    %v2701 = vunpack.c.l.b16 %v727
    %v2702 = vunpack.c.h.b16 %v727
    %v2703 = vunpack.c.l.b16 %v728
    %v2704 = vunpack.c.l.b16 %v729
    %v2705 = vunpack.c.h.b16 %v729
    %v2706 = vunpack.c.l.b16 %v730
    %v2707 = vunpack.c.h.b16 %v730
    %v2708 = vunpack.c.l.b16 %v731
    %v2709 = vunpack.c.h.b16 %v731
    %v2710 = vunpack.c.l.b16 %v732
    %v2711 = vunpack.c.h.b16 %v732
    %v2712 = vunpack.c.l.b16 %v733
    %v2713 = vunpack.c.h.b16 %v733
    %v2714 = vunpack.c.l.b16 %v734
    %v2715 = vunpack.c.h.b16 %v734
    %v2716 = vunpack.c.l.b16 %v735
    %v2717 = vunpack.c.l.b16 %v736
    %v2718 = vunpack.c.h.b16 %v736
    %v2719 = vunpack.c.l.b16 %v737
    %v2720 = vunpack.c.h.b16 %v737
    %v2721 = vunpack.c.l.b16 %v738
    %v2722 = vunpack.c.h.b16 %v738
    %v2723 = vunpack.c.l.b16 %v739
    %v2724 = vunpack.c.h.b16 %v739
    %v2725 = vunpack.c.l.b16 %v740
    %v2726 = vunpack.c.h.b16 %v740
    %v2727 = vunpack.c.l.b16 %v741
    %v2728 = vunpack.c.h.b16 %v741
    %v2729 = vunpack.c.l.b16 %v742
    %v2730 = vunpack.c.l.b16 %v743
    %v2731 = vunpack.c.h.b16 %v743
    %v2732 = vunpack.c.l.b16 %v744
    %v2733 = vunpack.c.h.b16 %v744
    %v2734 = vunpack.c.l.b16 %v745
    %v2735 = vunpack.c.h.b16 %v745
    %v2736 = vunpack.c.l.b16 %v746
    %v2737 = vunpack.c.h.b16 %v746
    %v2738 = vunpack.c.l.b16 %v747
    %v2739 = vunpack.c.h.b16 %v747
    %v2740 = vunpack.c.l.b16 %v748
    %v2741 = vunpack.c.h.b16 %v748
    %v2742 = vunpack.c.l.b16 %v749
    %v2743 = vunpack.c.l.b16 %v750
    %v2744 = vunpack.c.h.b16 %v750
    %v2745 = vunpack.c.l.b16 %v751
    %v2746 = vunpack.c.h.b16 %v751
    %v2747 = vunpack.c.l.b16 %v752
    %v2748 = vunpack.c.h.b16 %v752
    %v2749 = vunpack.c.l.b16 %v753
    %v2750 = vunpack.c.h.b16 %v753
    %v2751 = vunpack.c.l.b16 %v754
    %v2752 = vunpack.c.h.b16 %v754
    %v2753 = vunpack.c.l.b16 %v755
    %v2754 = vunpack.c.h.b16 %v755
    %v2755 = vunpack.c.l.b16 %v756
    %v2756 = vunpack.c.l.b16 %v757
    %v2757 = vunpack.c.h.b16 %v757
    %v2758 = vunpack.c.l.b16 %v758
    %v2759 = vunpack.c.h.b16 %v758
    %v2760 = vunpack.c.l.b16 %v759
    %v2761 = vunpack.c.h.b16 %v759
    %v2762 = vunpack.c.l.b16 %v760
    %v2763 = vunpack.c.h.b16 %v760
    %v2764 = vunpack.c.l.b16 %v761
    %v2765 = vunpack.c.h.b16 %v761
    %v2766 = vunpack.c.l.b16 %v762
    %v2767 = vunpack.c.h.b16 %v762
    %v2768 = vunpack.c.l.b16 %v763
    %v2769 = vunpack.c.l.b16 %v764
    %v2770 = vunpack.c.h.b16 %v764
    %v2771 = vunpack.c.l.b16 %v765
    %v2772 = vunpack.c.h.b16 %v765
    %v2773 = vunpack.c.l.b16 %v766
    %v2774 = vunpack.c.h.b16 %v766
    %v2775 = vunpack.c.l.b16 %v767
    %v2776 = vunpack.c.h.b16 %v767
    %v2777 = vunpack.c.l.b16 %v768
    %v2778 = vunpack.c.h.b16 %v768
    %v2779 = vunpack.c.l.b16 %v769
    %v2780 = vunpack.c.h.b16 %v769
    %v2781 = vunpack.c.l.b16 %v770
    %v2782 = vunpack.c.l.b16 %v771
    %v2783 = vunpack.c.h.b16 %v771
    %v2784 = vunpack.c.l.b16 %v772
    %v2785 = vunpack.c.h.b16 %v772
    %v2786 = vunpack.c.l.b16 %v773
    %v2787 = vunpack.c.h.b16 %v773
    %v2788 = vunpack.c.l.b16 %v774
    %v2789 = vunpack.c.h.b16 %v774
    %v2790 = vunpack.c.l.b16 %v775
    %v2791 = vunpack.c.h.b16 %v775
    %v2792 = vunpack.c.l.b16 %v776
    %v2793 = vunpack.c.h.b16 %v776
    %v2794 = vunpack.c.l.b16 %v777
    %v2795 = vunpack.c.l.b16 %v778
    %v2796 = vunpack.c.h.b16 %v778
    %v2797 = vunpack.c.l.b16 %v779
    %v2798 = vunpack.c.h.b16 %v779
    %v2799 = vunpack.c.l.b16 %v780
    %v2800 = vunpack.c.h.b16 %v780
    %v2801 = vunpack.c.l.b16 %v781
    %v2802 = vunpack.c.h.b16 %v781
    %v2803 = vunpack.c.l.b16 %v782
    %v2804 = vunpack.c.h.b16 %v782
    %v2805 = vunpack.c.l.b16 %v783
    %v2806 = vunpack.c.h.b16 %v783
    %v2807 = vunpack.c.l.b16 %v784
    %v2808 = vunpack.c.l.b16 %v785
    %v2809 = vunpack.c.h.b16 %v785
    %v2810 = vunpack.c.l.b16 %v786
    %v2811 = vunpack.c.h.b16 %v786
    %v2812 = vunpack.c.l.b16 %v787
    %v2813 = vunpack.c.h.b16 %v787
    %v2814 = vunpack.c.l.b16 %v788
    %v2815 = vunpack.c.h.b16 %v788
    %v2816 = vunpack.c.l.b16 %v789
    %v2817 = vunpack.c.h.b16 %v789
    %v2818 = vunpack.c.l.b16 %v790
    %v2819 = vunpack.c.h.b16 %v790
    %v2820 = vunpack.c.l.b16 %v791
    %v2821 = vpack.c.b16 %v1560, %v1547
    %v2822 = vpack.c.b16 %v1561, %v1548
    %v2823 = vpack.c.b16 %v1562, %v1549
    %v2824 = vpack.c.b16 %v1563, %v1550
    %v2825 = vpack.c.b16 %v1564, %v1551
    %v2826 = vpack.c.b16 %v1565, %v1552
    %v2827 = vpack.c.b16 %v1566, %v1553
    %v2828 = vpack.c.b16 %v1567, %v1554
    %v2829 = vpack.c.b16 %v1568, %v1555
    %v2830 = vpack.c.b16 %v1569, %v1556
    %v2831 = vpack.c.b16 %v1570, %v1557
    %v2832 = vpack.c.b16 %v1571, %v1558
    %v2833 = vpack.c.b16 %v1572, %v1559
    %v2834 = vpack.c.b16 %v1586, %v1573
    %v2835 = vpack.c.b16 %v1587, %v1574
    %v2836 = vpack.c.b16 %v1588, %v1575
    %v2837 = vpack.c.b16 %v1589, %v1576
    %v2838 = vpack.c.b16 %v1590, %v1577
    %v2839 = vpack.c.b16 %v1591, %v1578
    %v2840 = vpack.c.b16 %v1592, %v1579
    %v2841 = vpack.c.b16 %v1593, %v1580
    %v2842 = vpack.c.b16 %v1594, %v1581
    %v2843 = vpack.c.b16 %v1595, %v1582
    %v2844 = vpack.c.b16 %v1596, %v1583
    %v2845 = vpack.c.b16 %v1597, %v1584
    %v2846 = vpack.c.b16 %v1598, %v1585
    %v2847 = vpack.c.b16 %v1612, %v1599
    %v2848 = vpack.c.b16 %v1613, %v1600
    %v2849 = vpack.c.b16 %v1614, %v1601
    %v2850 = vpack.c.b16 %v1615, %v1602
    %v2851 = vpack.c.b16 %v1616, %v1603
    %v2852 = vpack.c.b16 %v1617, %v1604
    %v2853 = vpack.c.b16 %v1618, %v1605
    %v2854 = vpack.c.b16 %v1619, %v1606
    %v2855 = vpack.c.b16 %v1620, %v1607
    %v2856 = vpack.c.b16 %v1621, %v1608
    %v2857 = vpack.c.b16 %v1622, %v1609
    %v2858 = vpack.c.b16 %v1623, %v1610
    %v2859 = vpack.c.b16 %v1624, %v1611
    %v2860 = vpack.c.b16 %v1638, %v1625
    %v2861 = vpack.c.b16 %v1639, %v1626
    %v2862 = vpack.c.b16 %v1640, %v1627
    %v2863 = vpack.c.b16 %v1641, %v1628
    %v2864 = vpack.c.b16 %v1642, %v1629
    %v2865 = vpack.c.b16 %v1643, %v1630
    %v2866 = vpack.c.b16 %v1644, %v1631
    %v2867 = vpack.c.b16 %v1645, %v1632
    %v2868 = vpack.c.b16 %v1646, %v1633
    %v2869 = vpack.c.b16 %v1647, %v1634
    %v2870 = vpack.c.b16 %v1648, %v1635
    %v2871 = vpack.c.b16 %v1649, %v1636
    %v2872 = vpack.c.b16 %v1650, %v1637
    %v2873 = vpack.c.b16 %v1664, %v1651
    %v2874 = vpack.c.b16 %v1665, %v1652
    %v2875 = vpack.c.b16 %v1666, %v1653
    %v2876 = vpack.c.b16 %v1667, %v1654
    %v2877 = vpack.c.b16 %v1668, %v1655
    %v2878 = vpack.c.b16 %v1669, %v1656
    %v2879 = vpack.c.b16 %v1670, %v1657
    %v2880 = vpack.c.b16 %v1671, %v1658
    %v2881 = vpack.c.b16 %v1672, %v1659
    %v2882 = vpack.c.b16 %v1673, %v1660
    %v2883 = vpack.c.b16 %v1674, %v1661
    %v2884 = vpack.c.b16 %v1675, %v1662
    %v2885 = vpack.c.b16 %v1676, %v1663
    %v2886 = vpack.c.b16 %v1690, %v1677
    %v2887 = vpack.c.b16 %v1691, %v1678
    %v2888 = vpack.c.b16 %v1692, %v1679
    %v2889 = vpack.c.b16 %v1693, %v1680
    %v2890 = vpack.c.b16 %v1694, %v1681
    %v2891 = vpack.c.b16 %v1695, %v1682
    %v2892 = vpack.c.b16 %v1696, %v1683
    %v2893 = vpack.c.b16 %v1697, %v1684
    %v2894 = vpack.c.b16 %v1698, %v1685
    %v2895 = vpack.c.b16 %v1699, %v1686
    %v2896 = vpack.c.b16 %v1700, %v1687
    %v2897 = vpack.c.b16 %v1701, %v1688
    %v2898 = vpack.c.b16 %v1702, %v1689
    %v2899 = vpack.c.b16 %v1716, %v1703
    %v2900 = vpack.c.b16 %v1717, %v1704
    %v2901 = vpack.c.b16 %v1718, %v1705
    %v2902 = vpack.c.b16 %v1719, %v1706
    %v2903 = vpack.c.b16 %v1720, %v1707
    %v2904 = vpack.c.b16 %v1721, %v1708
    %v2905 = vpack.c.b16 %v1722, %v1709
    %v2906 = vpack.c.b16 %v1723, %v1710
    %v2907 = vpack.c.b16 %v1724, %v1711
    %v2908 = vpack.c.b16 %v1725, %v1712
    %v2909 = vpack.c.b16 %v1726, %v1713
    %v2910 = vpack.c.b16 %v1727, %v1714
    %v2911 = vpack.c.b16 %v1728, %v1715
    %v2912 = vpack.c.b16 %v1742, %v1729
    %v2913 = vpack.c.b16 %v1743, %v1730
    %v2914 = vpack.c.b16 %v1744, %v1731
    %v2915 = vpack.c.b16 %v1745, %v1732
    %v2916 = vpack.c.b16 %v1746, %v1733
    %v2917 = vpack.c.b16 %v1747, %v1734
    %v2918 = vpack.c.b16 %v1748, %v1735
    %v2919 = vpack.c.b16 %v1749, %v1736
    %v2920 = vpack.c.b16 %v1750, %v1737
    %v2921 = vpack.c.b16 %v1751, %v1738
    %v2922 = vpack.c.b16 %v1752, %v1739
    %v2923 = vpack.c.b16 %v1753, %v1740
    %v2924 = vpack.c.b16 %v1754, %v1741
    %v2925 = vpack.c.b16 %v1768, %v1755
    %v2926 = vpack.c.b16 %v1769, %v1756
    %v2927 = vpack.c.b16 %v1770, %v1757
    %v2928 = vpack.c.b16 %v1771, %v1758
    %v2929 = vpack.c.b16 %v1772, %v1759
    %v2930 = vpack.c.b16 %v1773, %v1760
    %v2931 = vpack.c.b16 %v1774, %v1761
    %v2932 = vpack.c.b16 %v1775, %v1762
    %v2933 = vpack.c.b16 %v1776, %v1763
    %v2934 = vpack.c.b16 %v1777, %v1764
    %v2935 = vpack.c.b16 %v1778, %v1765
    %v2936 = vpack.c.b16 %v1779, %v1766
    %v2937 = vpack.c.b16 %v1780, %v1767
    %v2938 = vpack.c.b16 %v1794, %v1781
    %v2939 = vpack.c.b16 %v1795, %v1782
    %v2940 = vpack.c.b16 %v1796, %v1783
    %v2941 = vpack.c.b16 %v1797, %v1784
    %v2942 = vpack.c.b16 %v1798, %v1785
    %v2943 = vpack.c.b16 %v1799, %v1786
    %v2944 = vpack.c.b16 %v1800, %v1787
    %v2945 = vpack.c.b16 %v1801, %v1788
    %v2946 = vpack.c.b16 %v1802, %v1789
    %v2947 = vpack.c.b16 %v1803, %v1790
    %v2948 = vpack.c.b16 %v1804, %v1791
    %v2949 = vpack.c.b16 %v1805, %v1792
    %v2950 = vpack.c.b16 %v1806, %v1793
    %v2951 = vpack.c.b16 %v1820, %v1807
    %v2952 = vpack.c.b16 %v1821, %v1808
    %v2953 = vpack.c.b16 %v1822, %v1809
    %v2954 = vpack.c.b16 %v1823, %v1810
    %v2955 = vpack.c.b16 %v1824, %v1811
    %v2956 = vpack.c.b16 %v1825, %v1812
    %v2957 = vpack.c.b16 %v1826, %v1813
    %v2958 = vpack.c.b16 %v1827, %v1814
    %v2959 = vpack.c.b16 %v1828, %v1815
    %v2960 = vpack.c.b16 %v1829, %v1816
    %v2961 = vpack.c.b16 %v1830, %v1817
    %v2962 = vpack.c.b16 %v1831, %v1818
    %v2963 = vpack.c.b16 %v1832, %v1819
    %v2964 = vpack.c.b16 %v1846, %v1833
    %v2965 = vpack.c.b16 %v1847, %v1834
    %v2966 = vpack.c.b16 %v1848, %v1835
    %v2967 = vpack.c.b16 %v1849, %v1836
    %v2968 = vpack.c.b16 %v1850, %v1837
    %v2969 = vpack.c.b16 %v1851, %v1838
    %v2970 = vpack.c.b16 %v1852, %v1839
    %v2971 = vpack.c.b16 %v1853, %v1840
    %v2972 = vpack.c.b16 %v1854, %v1841
    %v2973 = vpack.c.b16 %v1855, %v1842
    %v2974 = vpack.c.b16 %v1856, %v1843
    %v2975 = vpack.c.b16 %v1857, %v1844
    %v2976 = vpack.c.b16 %v1858, %v1845
    %v2977 = vpack.c.b16 %v1872, %v1859
    %v2978 = vpack.c.b16 %v1873, %v1860
    %v2979 = vpack.c.b16 %v1874, %v1861
    %v2980 = vpack.c.b16 %v1875, %v1862
    %v2981 = vpack.c.b16 %v1876, %v1863
    %v2982 = vpack.c.b16 %v1877, %v1864
    %v2983 = vpack.c.b16 %v1878, %v1865
    %v2984 = vpack.c.b16 %v1879, %v1866
    %v2985 = vpack.c.b16 %v1880, %v1867
    %v2986 = vpack.c.b16 %v1881, %v1868
    %v2987 = vpack.c.b16 %v1882, %v1869
    %v2988 = vpack.c.b16 %v1883, %v1870
    %v2989 = vpack.c.b16 %v1884, %v1871
    %v2990 = vpack.c.b16 %v1898, %v1885
    %v2991 = vpack.c.b16 %v1899, %v1886
    %v2992 = vpack.c.b16 %v1900, %v1887
    %v2993 = vpack.c.b16 %v1901, %v1888
    %v2994 = vpack.c.b16 %v1902, %v1889
    %v2995 = vpack.c.b16 %v1903, %v1890
    %v2996 = vpack.c.b16 %v1904, %v1891
    %v2997 = vpack.c.b16 %v1905, %v1892
    %v2998 = vpack.c.b16 %v1906, %v1893
    %v2999 = vpack.c.b16 %v1907, %v1894
    %v3000 = vpack.c.b16 %v1908, %v1895
    %v3001 = vpack.c.b16 %v1909, %v1896
    %v3002 = vpack.c.b16 %v1910, %v1897
    %v3003 = vpack.c.b16 %v1924, %v1911
    %v3004 = vpack.c.b16 %v1925, %v1912
    %v3005 = vpack.c.b16 %v1926, %v1913
    %v3006 = vpack.c.b16 %v1927, %v1914
    %v3007 = vpack.c.b16 %v1928, %v1915
    %v3008 = vpack.c.b16 %v1929, %v1916
    %v3009 = vpack.c.b16 %v1930, %v1917
    %v3010 = vpack.c.b16 %v1931, %v1918
    %v3011 = vpack.c.b16 %v1932, %v1919
    %v3012 = vpack.c.b16 %v1933, %v1920
    %v3013 = vpack.c.b16 %v1934, %v1921
    %v3014 = vpack.c.b16 %v1935, %v1922
    %v3015 = vpack.c.b16 %v1936, %v1923
    %v3016 = vpack.c.b16 %v1950, %v1937
    %v3017 = vpack.c.b16 %v1951, %v1938
    %v3018 = vpack.c.b16 %v1952, %v1939
    %v3019 = vpack.c.b16 %v1953, %v1940
    %v3020 = vpack.c.b16 %v1954, %v1941
    %v3021 = vpack.c.b16 %v1955, %v1942
    %v3022 = vpack.c.b16 %v1956, %v1943
    %v3023 = vpack.c.b16 %v1957, %v1944
    %v3024 = vpack.c.b16 %v1958, %v1945
    %v3025 = vpack.c.b16 %v1959, %v1946
    %v3026 = vpack.c.b16 %v1960, %v1947
    %v3027 = vpack.c.b16 %v1961, %v1948
    %v3028 = vpack.c.b16 %v1962, %v1949
    %v3029 = vpack.c.b16 %v1976, %v1963
    %v3030 = vpack.c.b16 %v1977, %v1964
    %v3031 = vpack.c.b16 %v1978, %v1965
    %v3032 = vpack.c.b16 %v1979, %v1966
    %v3033 = vpack.c.b16 %v1980, %v1967
    %v3034 = vpack.c.b16 %v1981, %v1968
    %v3035 = vpack.c.b16 %v1982, %v1969
    %v3036 = vpack.c.b16 %v1983, %v1970
    %v3037 = vpack.c.b16 %v1984, %v1971
    %v3038 = vpack.c.b16 %v1985, %v1972
    %v3039 = vpack.c.b16 %v1986, %v1973
    %v3040 = vpack.c.b16 %v1987, %v1974
    %v3041 = vpack.c.b16 %v1988, %v1975
    %v3042 = vpack.c.b16 %v2002, %v1989
    %v3043 = vpack.c.b16 %v2003, %v1990
    %v3044 = vpack.c.b16 %v2004, %v1991
    %v3045 = vpack.c.b16 %v2005, %v1992
    %v3046 = vpack.c.b16 %v2006, %v1993
    %v3047 = vpack.c.b16 %v2007, %v1994
    %v3048 = vpack.c.b16 %v2008, %v1995
    %v3049 = vpack.c.b16 %v2009, %v1996
    %v3050 = vpack.c.b16 %v2010, %v1997
    %v3051 = vpack.c.b16 %v2011, %v1998
    %v3052 = vpack.c.b16 %v2012, %v1999
    %v3053 = vpack.c.b16 %v2013, %v2000
    %v3054 = vpack.c.b16 %v2014, %v2001
    %v3055 = vpack.c.b16 %v2028, %v2015
    %v3056 = vpack.c.b16 %v2029, %v2016
    %v3057 = vpack.c.b16 %v2030, %v2017
    %v3058 = vpack.c.b16 %v2031, %v2018
    %v3059 = vpack.c.b16 %v2032, %v2019
    %v3060 = vpack.c.b16 %v2033, %v2020
    %v3061 = vpack.c.b16 %v2034, %v2021
    %v3062 = vpack.c.b16 %v2035, %v2022
    %v3063 = vpack.c.b16 %v2036, %v2023
    %v3064 = vpack.c.b16 %v2037, %v2024
    %v3065 = vpack.c.b16 %v2038, %v2025
    %v3066 = vpack.c.b16 %v2039, %v2026
    %v3067 = vpack.c.b16 %v2040, %v2027
    %v3068 = vpack.c.b16 %v2054, %v2041
    %v3069 = vpack.c.b16 %v2055, %v2042
    %v3070 = vpack.c.b16 %v2056, %v2043
    %v3071 = vpack.c.b16 %v2057, %v2044
    %v3072 = vpack.c.b16 %v2058, %v2045
    %v3073 = vpack.c.b16 %v2059, %v2046
    %v3074 = vpack.c.b16 %v2060, %v2047
    %v3075 = vpack.c.b16 %v2061, %v2048
    %v3076 = vpack.c.b16 %v2062, %v2049
    %v3077 = vpack.c.b16 %v2063, %v2050
    %v3078 = vpack.c.b16 %v2064, %v2051
    %v3079 = vpack.c.b16 %v2065, %v2052
    %v3080 = vpack.c.b16 %v2066, %v2053
    %v3081 = vpack.c.b16 %v2080, %v2067
    %v3082 = vpack.c.b16 %v2081, %v2068
    %v3083 = vpack.c.b16 %v2082, %v2069
    %v3084 = vpack.c.b16 %v2083, %v2070
    %v3085 = vpack.c.b16 %v2084, %v2071
    %v3086 = vpack.c.b16 %v2085, %v2072
    %v3087 = vpack.c.b16 %v2086, %v2073
    %v3088 = vpack.c.b16 %v2087, %v2074
    %v3089 = vpack.c.b16 %v2088, %v2075
    %v3090 = vpack.c.b16 %v2089, %v2076
    %v3091 = vpack.c.b16 %v2090, %v2077
    %v3092 = vpack.c.b16 %v2091, %v2078
    %v3093 = vpack.c.b16 %v2092, %v2079
    %v3094 = vpack.c.b16 %v2106, %v2093
    %v3095 = vpack.c.b16 %v2107, %v2094
    %v3096 = vpack.c.b16 %v2108, %v2095
    %v3097 = vpack.c.b16 %v2109, %v2096
    %v3098 = vpack.c.b16 %v2110, %v2097
    %v3099 = vpack.c.b16 %v2111, %v2098
    %v3100 = vpack.c.b16 %v2112, %v2099
    %v3101 = vpack.c.b16 %v2113, %v2100
    %v3102 = vpack.c.b16 %v2114, %v2101
    %v3103 = vpack.c.b16 %v2115, %v2102
    %v3104 = vpack.c.b16 %v2116, %v2103
    %v3105 = vpack.c.b16 %v2117, %v2104
    %v3106 = vpack.c.b16 %v2118, %v2105
    %v3107 = vpack.c.b16 %v2132, %v2119
    %v3108 = vpack.c.b16 %v2133, %v2120
    %v3109 = vpack.c.b16 %v2134, %v2121
    %v3110 = vpack.c.b16 %v2135, %v2122
    %v3111 = vpack.c.b16 %v2136, %v2123
    %v3112 = vpack.c.b16 %v2137, %v2124
    %v3113 = vpack.c.b16 %v2138, %v2125
    %v3114 = vpack.c.b16 %v2139, %v2126
    %v3115 = vpack.c.b16 %v2140, %v2127
    %v3116 = vpack.c.b16 %v2141, %v2128
    %v3117 = vpack.c.b16 %v2142, %v2129
    %v3118 = vpack.c.b16 %v2143, %v2130
    %v3119 = vpack.c.b16 %v2144, %v2131
    %v3120 = vpack.c.b16 %v2158, %v2145
    %v3121 = vpack.c.b16 %v2159, %v2146
    %v3122 = vpack.c.b16 %v2160, %v2147
    %v3123 = vpack.c.b16 %v2161, %v2148
    %v3124 = vpack.c.b16 %v2162, %v2149
    %v3125 = vpack.c.b16 %v2163, %v2150
    %v3126 = vpack.c.b16 %v2164, %v2151
    %v3127 = vpack.c.b16 %v2165, %v2152
    %v3128 = vpack.c.b16 %v2166, %v2153
    %v3129 = vpack.c.b16 %v2167, %v2154
    %v3130 = vpack.c.b16 %v2168, %v2155
    %v3131 = vpack.c.b16 %v2169, %v2156
    %v3132 = vpack.c.b16 %v2170, %v2157
    %v3133 = vpack.c.b16 %v2184, %v2171
    %v3134 = vpack.c.b16 %v2185, %v2172
    %v3135 = vpack.c.b16 %v2186, %v2173
    %v3136 = vpack.c.b16 %v2187, %v2174
    %v3137 = vpack.c.b16 %v2188, %v2175
    %v3138 = vpack.c.b16 %v2189, %v2176
    %v3139 = vpack.c.b16 %v2190, %v2177
    %v3140 = vpack.c.b16 %v2191, %v2178
    %v3141 = vpack.c.b16 %v2192, %v2179
    %v3142 = vpack.c.b16 %v2193, %v2180
    %v3143 = vpack.c.b16 %v2194, %v2181
    %v3144 = vpack.c.b16 %v2195, %v2182
    %v3145 = vpack.c.b16 %v2196, %v2183
    %v3146 = vpack.c.b16 %v2210, %v2197
    %v3147 = vpack.c.b16 %v2211, %v2198
    %v3148 = vpack.c.b16 %v2212, %v2199
    %v3149 = vpack.c.b16 %v2213, %v2200
    %v3150 = vpack.c.b16 %v2214, %v2201
    %v3151 = vpack.c.b16 %v2215, %v2202
    %v3152 = vpack.c.b16 %v2216, %v2203
    %v3153 = vpack.c.b16 %v2217, %v2204
    %v3154 = vpack.c.b16 %v2218, %v2205
    %v3155 = vpack.c.b16 %v2219, %v2206
    %v3156 = vpack.c.b16 %v2220, %v2207
    %v3157 = vpack.c.b16 %v2221, %v2208
    %v3158 = vpack.c.b16 %v2222, %v2209
    %v3159 = vpack.c.b16 %v2236, %v2223
    %v3160 = vpack.c.b16 %v2237, %v2224
    %v3161 = vpack.c.b16 %v2238, %v2225
    %v3162 = vpack.c.b16 %v2239, %v2226
    %v3163 = vpack.c.b16 %v2240, %v2227
    %v3164 = vpack.c.b16 %v2241, %v2228
    %v3165 = vpack.c.b16 %v2242, %v2229
    %v3166 = vpack.c.b16 %v2243, %v2230
    %v3167 = vpack.c.b16 %v2244, %v2231
    %v3168 = vpack.c.b16 %v2245, %v2232
    %v3169 = vpack.c.b16 %v2246, %v2233
    %v3170 = vpack.c.b16 %v2247, %v2234
    %v3171 = vpack.c.b16 %v2248, %v2235
    %v3172 = vpack.c.b16 %v2262, %v2249
    %v3173 = vpack.c.b16 %v2263, %v2250
    %v3174 = vpack.c.b16 %v2264, %v2251
    %v3175 = vpack.c.b16 %v2265, %v2252
    %v3176 = vpack.c.b16 %v2266, %v2253
    %v3177 = vpack.c.b16 %v2267, %v2254
    %v3178 = vpack.c.b16 %v2268, %v2255
    %v3179 = vpack.c.b16 %v2269, %v2256
    %v3180 = vpack.c.b16 %v2270, %v2257
    %v3181 = vpack.c.b16 %v2271, %v2258
    %v3182 = vpack.c.b16 %v2272, %v2259
    %v3183 = vpack.c.b16 %v2273, %v2260
    %v3184 = vpack.c.b16 %v2274, %v2261
    %v3185 = vpack.c.b16 %v2288, %v2275
    %v3186 = vpack.c.b16 %v2289, %v2276
    %v3187 = vpack.c.b16 %v2290, %v2277
    %v3188 = vpack.c.b16 %v2291, %v2278
    %v3189 = vpack.c.b16 %v2292, %v2279
    %v3190 = vpack.c.b16 %v2293, %v2280
    %v3191 = vpack.c.b16 %v2294, %v2281
    %v3192 = vpack.c.b16 %v2295, %v2282
    %v3193 = vpack.c.b16 %v2296, %v2283
    %v3194 = vpack.c.b16 %v2297, %v2284
    %v3195 = vpack.c.b16 %v2298, %v2285
    %v3196 = vpack.c.b16 %v2299, %v2286
    %v3197 = vpack.c.b16 %v2300, %v2287
    %v3198 = vpack.c.b16 %v2314, %v2301
    %v3199 = vpack.c.b16 %v2315, %v2302
    %v3200 = vpack.c.b16 %v2316, %v2303
    %v3201 = vpack.c.b16 %v2317, %v2304
    %v3202 = vpack.c.b16 %v2318, %v2305
    %v3203 = vpack.c.b16 %v2319, %v2306
    %v3204 = vpack.c.b16 %v2320, %v2307
    %v3205 = vpack.c.b16 %v2321, %v2308
    %v3206 = vpack.c.b16 %v2322, %v2309
    %v3207 = vpack.c.b16 %v2323, %v2310
    %v3208 = vpack.c.b16 %v2324, %v2311
    %v3209 = vpack.c.b16 %v2325, %v2312
    %v3210 = vpack.c.b16 %v2326, %v2313
    %v3211 = vpack.c.b16 %v2340, %v2327
    %v3212 = vpack.c.b16 %v2341, %v2328
    %v3213 = vpack.c.b16 %v2342, %v2329
    %v3214 = vpack.c.b16 %v2343, %v2330
    %v3215 = vpack.c.b16 %v2344, %v2331
    %v3216 = vpack.c.b16 %v2345, %v2332
    %v3217 = vpack.c.b16 %v2346, %v2333
    %v3218 = vpack.c.b16 %v2347, %v2334
    %v3219 = vpack.c.b16 %v2348, %v2335
    %v3220 = vpack.c.b16 %v2349, %v2336
    %v3221 = vpack.c.b16 %v2350, %v2337
    %v3222 = vpack.c.b16 %v2351, %v2338
    %v3223 = vpack.c.b16 %v2352, %v2339
    %v3224 = vpack.c.b16 %v2366, %v2353
    %v3225 = vpack.c.b16 %v2367, %v2354
    %v3226 = vpack.c.b16 %v2368, %v2355
    %v3227 = vpack.c.b16 %v2369, %v2356
    %v3228 = vpack.c.b16 %v2370, %v2357
    %v3229 = vpack.c.b16 %v2371, %v2358
    %v3230 = vpack.c.b16 %v2372, %v2359
    %v3231 = vpack.c.b16 %v2373, %v2360
    %v3232 = vpack.c.b16 %v2374, %v2361
    %v3233 = vpack.c.b16 %v2375, %v2362
    %v3234 = vpack.c.b16 %v2376, %v2363
    %v3235 = vpack.c.b16 %v2377, %v2364
    %v3236 = vpack.c.b16 %v2378, %v2365
    %v3237 = vpack.c.b16 %v2392, %v2379
    %v3238 = vpack.c.b16 %v2393, %v2380
    %v3239 = vpack.c.b16 %v2394, %v2381
    %v3240 = vpack.c.b16 %v2395, %v2382
    %v3241 = vpack.c.b16 %v2396, %v2383
    %v3242 = vpack.c.b16 %v2397, %v2384
    %v3243 = vpack.c.b16 %v2398, %v2385
    %v3244 = vpack.c.b16 %v2399, %v2386
    %v3245 = vpack.c.b16 %v2400, %v2387
    %v3246 = vpack.c.b16 %v2401, %v2388
    %v3247 = vpack.c.b16 %v2402, %v2389
    %v3248 = vpack.c.b16 %v2403, %v2390
    %v3249 = vpack.c.b16 %v2404, %v2391
    %v3250 = vpack.c.b16 %v2418, %v2405
    %v3251 = vpack.c.b16 %v2419, %v2406
    %v3252 = vpack.c.b16 %v2420, %v2407
    %v3253 = vpack.c.b16 %v2421, %v2408
    %v3254 = vpack.c.b16 %v2422, %v2409
    %v3255 = vpack.c.b16 %v2423, %v2410
    %v3256 = vpack.c.b16 %v2424, %v2411
    %v3257 = vpack.c.b16 %v2425, %v2412
    %v3258 = vpack.c.b16 %v2426, %v2413
    %v3259 = vpack.c.b16 %v2427, %v2414
    %v3260 = vpack.c.b16 %v2428, %v2415
    %v3261 = vpack.c.b16 %v2429, %v2416
    %v3262 = vpack.c.b16 %v2430, %v2417
    %v3263 = vpack.c.b16 %v2444, %v2431
    %v3264 = vpack.c.b16 %v2445, %v2432
    %v3265 = vpack.c.b16 %v2446, %v2433
    %v3266 = vpack.c.b16 %v2447, %v2434
    %v3267 = vpack.c.b16 %v2448, %v2435
    %v3268 = vpack.c.b16 %v2449, %v2436
    %v3269 = vpack.c.b16 %v2450, %v2437
    %v3270 = vpack.c.b16 %v2451, %v2438
    %v3271 = vpack.c.b16 %v2452, %v2439
    %v3272 = vpack.c.b16 %v2453, %v2440
    %v3273 = vpack.c.b16 %v2454, %v2441
    %v3274 = vpack.c.b16 %v2455, %v2442
    %v3275 = vpack.c.b16 %v2456, %v2443
    %v3276 = vpack.c.b16 %v2470, %v2457
    %v3277 = vpack.c.b16 %v2471, %v2458
    %v3278 = vpack.c.b16 %v2472, %v2459
    %v3279 = vpack.c.b16 %v2473, %v2460
    %v3280 = vpack.c.b16 %v2474, %v2461
    %v3281 = vpack.c.b16 %v2475, %v2462
    %v3282 = vpack.c.b16 %v2476, %v2463
    %v3283 = vpack.c.b16 %v2477, %v2464
    %v3284 = vpack.c.b16 %v2478, %v2465
    %v3285 = vpack.c.b16 %v2479, %v2466
    %v3286 = vpack.c.b16 %v2480, %v2467
    %v3287 = vpack.c.b16 %v2481, %v2468
    %v3288 = vpack.c.b16 %v2482, %v2469
    %v3289 = vpack.c.b16 %v2496, %v2483
    %v3290 = vpack.c.b16 %v2497, %v2484
    %v3291 = vpack.c.b16 %v2498, %v2485
    %v3292 = vpack.c.b16 %v2499, %v2486
    %v3293 = vpack.c.b16 %v2500, %v2487
    %v3294 = vpack.c.b16 %v2501, %v2488
    %v3295 = vpack.c.b16 %v2502, %v2489
    %v3296 = vpack.c.b16 %v2503, %v2490
    %v3297 = vpack.c.b16 %v2504, %v2491
    %v3298 = vpack.c.b16 %v2505, %v2492
    %v3299 = vpack.c.b16 %v2506, %v2493
    %v3300 = vpack.c.b16 %v2507, %v2494
    %v3301 = vpack.c.b16 %v2508, %v2495
    %v3302 = vpack.c.b16 %v2522, %v2509
    %v3303 = vpack.c.b16 %v2523, %v2510
    %v3304 = vpack.c.b16 %v2524, %v2511
    %v3305 = vpack.c.b16 %v2525, %v2512
    %v3306 = vpack.c.b16 %v2526, %v2513
    %v3307 = vpack.c.b16 %v2527, %v2514
    %v3308 = vpack.c.b16 %v2528, %v2515
    %v3309 = vpack.c.b16 %v2529, %v2516
    %v3310 = vpack.c.b16 %v2530, %v2517
    %v3311 = vpack.c.b16 %v2531, %v2518
    %v3312 = vpack.c.b16 %v2532, %v2519
    %v3313 = vpack.c.b16 %v2533, %v2520
    %v3314 = vpack.c.b16 %v2534, %v2521
    %v3315 = vpack.c.b16 %v2548, %v2535
    %v3316 = vpack.c.b16 %v2549, %v2536
    %v3317 = vpack.c.b16 %v2550, %v2537
    %v3318 = vpack.c.b16 %v2551, %v2538
    %v3319 = vpack.c.b16 %v2552, %v2539
    %v3320 = vpack.c.b16 %v2553, %v2540
    %v3321 = vpack.c.b16 %v2554, %v2541
    %v3322 = vpack.c.b16 %v2555, %v2542
    %v3323 = vpack.c.b16 %v2556, %v2543
    %v3324 = vpack.c.b16 %v2557, %v2544
    %v3325 = vpack.c.b16 %v2558, %v2545
    %v3326 = vpack.c.b16 %v2559, %v2546
    %v3327 = vpack.c.b16 %v2560, %v2547
    %v3328 = vpack.c.b16 %v2574, %v2561
    %v3329 = vpack.c.b16 %v2575, %v2562
    %v3330 = vpack.c.b16 %v2576, %v2563
    %v3331 = vpack.c.b16 %v2577, %v2564
    %v3332 = vpack.c.b16 %v2578, %v2565
    %v3333 = vpack.c.b16 %v2579, %v2566
    %v3334 = vpack.c.b16 %v2580, %v2567
    %v3335 = vpack.c.b16 %v2581, %v2568
    %v3336 = vpack.c.b16 %v2582, %v2569
    %v3337 = vpack.c.b16 %v2583, %v2570
    %v3338 = vpack.c.b16 %v2584, %v2571
    %v3339 = vpack.c.b16 %v2585, %v2572
    %v3340 = vpack.c.b16 %v2586, %v2573
    %v3341 = vpack.c.b16 %v2600, %v2587
    %v3342 = vpack.c.b16 %v2601, %v2588
    %v3343 = vpack.c.b16 %v2602, %v2589
    %v3344 = vpack.c.b16 %v2603, %v2590
    %v3345 = vpack.c.b16 %v2604, %v2591
    %v3346 = vpack.c.b16 %v2605, %v2592
    %v3347 = vpack.c.b16 %v2606, %v2593
    %v3348 = vpack.c.b16 %v2607, %v2594
    %v3349 = vpack.c.b16 %v2608, %v2595
    %v3350 = vpack.c.b16 %v2609, %v2596
    %v3351 = vpack.c.b16 %v2610, %v2597
    %v3352 = vpack.c.b16 %v2611, %v2598
    %v3353 = vpack.c.b16 %v2612, %v2599
    %v3354 = vpack.c.b16 %v2626, %v2613
    %v3355 = vpack.c.b16 %v2627, %v2614
    %v3356 = vpack.c.b16 %v2628, %v2615
    %v3357 = vpack.c.b16 %v2629, %v2616
    %v3358 = vpack.c.b16 %v2630, %v2617
    %v3359 = vpack.c.b16 %v2631, %v2618
    %v3360 = vpack.c.b16 %v2632, %v2619
    %v3361 = vpack.c.b16 %v2633, %v2620
    %v3362 = vpack.c.b16 %v2634, %v2621
    %v3363 = vpack.c.b16 %v2635, %v2622
    %v3364 = vpack.c.b16 %v2636, %v2623
    %v3365 = vpack.c.b16 %v2637, %v2624
    %v3366 = vpack.c.b16 %v2638, %v2625
    %v3367 = vpack.c.b16 %v2652, %v2639
    %v3368 = vpack.c.b16 %v2653, %v2640
    %v3369 = vpack.c.b16 %v2654, %v2641
    %v3370 = vpack.c.b16 %v2655, %v2642
    %v3371 = vpack.c.b16 %v2656, %v2643
    %v3372 = vpack.c.b16 %v2657, %v2644
    %v3373 = vpack.c.b16 %v2658, %v2645
    %v3374 = vpack.c.b16 %v2659, %v2646
    %v3375 = vpack.c.b16 %v2660, %v2647
    %v3376 = vpack.c.b16 %v2661, %v2648
    %v3377 = vpack.c.b16 %v2662, %v2649
    %v3378 = vpack.c.b16 %v2663, %v2650
    %v3379 = vpack.c.b16 %v2664, %v2651
    %v3380 = vpack.c.b16 %v2678, %v2665
    %v3381 = vpack.c.b16 %v2679, %v2666
    %v3382 = vpack.c.b16 %v2680, %v2667
    %v3383 = vpack.c.b16 %v2681, %v2668
    %v3384 = vpack.c.b16 %v2682, %v2669
    %v3385 = vpack.c.b16 %v2683, %v2670
    %v3386 = vpack.c.b16 %v2684, %v2671
    %v3387 = vpack.c.b16 %v2685, %v2672
    %v3388 = vpack.c.b16 %v2686, %v2673
    %v3389 = vpack.c.b16 %v2687, %v2674
    %v3390 = vpack.c.b16 %v2688, %v2675
    %v3391 = vpack.c.b16 %v2689, %v2676
    %v3392 = vpack.c.b16 %v2690, %v2677
    %v3393 = vpack.c.b16 %v2704, %v2691
    %v3394 = vpack.c.b16 %v2705, %v2692
    %v3395 = vpack.c.b16 %v2706, %v2693
    %v3396 = vpack.c.b16 %v2707, %v2694
    %v3397 = vpack.c.b16 %v2708, %v2695
    %v3398 = vpack.c.b16 %v2709, %v2696
    %v3399 = vpack.c.b16 %v2710, %v2697
    %v3400 = vpack.c.b16 %v2711, %v2698
    %v3401 = vpack.c.b16 %v2712, %v2699
    %v3402 = vpack.c.b16 %v2713, %v2700
    %v3403 = vpack.c.b16 %v2714, %v2701
    %v3404 = vpack.c.b16 %v2715, %v2702
    %v3405 = vpack.c.b16 %v2716, %v2703
    %v3406 = vpack.c.b16 %v2730, %v2717
    %v3407 = vpack.c.b16 %v2731, %v2718
    %v3408 = vpack.c.b16 %v2732, %v2719
    %v3409 = vpack.c.b16 %v2733, %v2720
    %v3410 = vpack.c.b16 %v2734, %v2721
    %v3411 = vpack.c.b16 %v2735, %v2722
    %v3412 = vpack.c.b16 %v2736, %v2723
    %v3413 = vpack.c.b16 %v2737, %v2724
    %v3414 = vpack.c.b16 %v2738, %v2725
    %v3415 = vpack.c.b16 %v2739, %v2726
    %v3416 = vpack.c.b16 %v2740, %v2727
    %v3417 = vpack.c.b16 %v2741, %v2728
    %v3418 = vpack.c.b16 %v2742, %v2729
    %v3419 = vpack.c.b16 %v2756, %v2743
    %v3420 = vpack.c.b16 %v2757, %v2744
    %v3421 = vpack.c.b16 %v2758, %v2745
    %v3422 = vpack.c.b16 %v2759, %v2746
    %v3423 = vpack.c.b16 %v2760, %v2747
    %v3424 = vpack.c.b16 %v2761, %v2748
    %v3425 = vpack.c.b16 %v2762, %v2749
    %v3426 = vpack.c.b16 %v2763, %v2750
    %v3427 = vpack.c.b16 %v2764, %v2751
    %v3428 = vpack.c.b16 %v2765, %v2752
    %v3429 = vpack.c.b16 %v2766, %v2753
    %v3430 = vpack.c.b16 %v2767, %v2754
    %v3431 = vpack.c.b16 %v2768, %v2755
    %v3432 = vpack.c.b16 %v2782, %v2769
    %v3433 = vpack.c.b16 %v2783, %v2770
    %v3434 = vpack.c.b16 %v2784, %v2771
    %v3435 = vpack.c.b16 %v2785, %v2772
    %v3436 = vpack.c.b16 %v2786, %v2773
    %v3437 = vpack.c.b16 %v2787, %v2774
    %v3438 = vpack.c.b16 %v2788, %v2775
    %v3439 = vpack.c.b16 %v2789, %v2776
    %v3440 = vpack.c.b16 %v2790, %v2777
    %v3441 = vpack.c.b16 %v2791, %v2778
    %v3442 = vpack.c.b16 %v2792, %v2779
    %v3443 = vpack.c.b16 %v2793, %v2780
    %v3444 = vpack.c.b16 %v2794, %v2781
    %v3445 = vpack.c.b16 %v2808, %v2795
    %v3446 = vpack.c.b16 %v2809, %v2796
    %v3447 = vpack.c.b16 %v2810, %v2797
    %v3448 = vpack.c.b16 %v2811, %v2798
    %v3449 = vpack.c.b16 %v2812, %v2799
    %v3450 = vpack.c.b16 %v2813, %v2800
    %v3451 = vpack.c.b16 %v2814, %v2801
    %v3452 = vpack.c.b16 %v2815, %v2802
    %v3453 = vpack.c.b16 %v2816, %v2803
    %v3454 = vpack.c.b16 %v2817, %v2804
    %v3455 = vpack.c.b16 %v2818, %v2805
    %v3456 = vpack.c.b16 %v2819, %v2806
    %v3457 = vpack.c.b16 %v2820, %v2807
    %vm4095 = vcmask 130048
    %v4097 = vsel %vm4095, %v105, 0
    %4099 = vmatprep.subr.bf16.mxu0 %v2822
    %4100 = vmatpush1.bf16.msra.mxu0 %v2821
    %4101 = vmatprep.subr.bf16.mxu0 %v2835
    %4102 = vmatpush1.bf16.msra.mxu0 %v2834
    %4103 = vmatprep.subr.bf16.mxu0 %v2848
    %4104 = vmatpush1.bf16.msra.mxu0 %v2847
    %4105 = vmatprep.subr.bf16.mxu0 %v2861
    %4106 = vmatpush1.bf16.msra.mxu0 %v2860
    %4107 = vmatprep.subr.bf16.mxu0 %v2874
    %4108 = vmatpush1.bf16.msra.mxu0 %v2873
    %4109 = vmatprep.subr.bf16.mxu0 %v2887
    %4110 = vmatpush1.bf16.msra.mxu0 %v2886
    %4111 = vmatprep.subr.bf16.mxu0 %v2900
    %4112 = vmatpush1.bf16.msra.mxu0 %v2899
    %4113 = vmatprep.subr.bf16.mxu0 %v2913
    %4114 = vmatpush1.bf16.msra.mxu0 %v2912
    %4115 = vmatprep.subr.bf16.mxu0 %v2926
    %4116 = vmatpush1.bf16.msra.mxu0 %v2925
    %4117 = vmatprep.subr.bf16.mxu0 %v2939
    %4118 = vmatpush1.bf16.msra.mxu0 %v2938
    %4119 = vmatprep.subr.bf16.mxu0 %v2952
    %4120 = vmatpush1.bf16.msra.mxu0 %v2951
    %4121 = vmatprep.subr.bf16.mxu0 %v2965
    %4122 = vmatpush1.bf16.msra.mxu0 %v2964
    %4123 = vmatprep.subr.bf16.mxu0 %v2978
    %4124 = vmatpush1.bf16.msra.mxu0 %v2977
    %4125 = vmatprep.subr.bf16.mxu0 %v2991
    %4126 = vmatpush1.bf16.msra.mxu0 %v2990
    %4127 = vmatprep.subr.bf16.mxu0 %v3004
    %4128 = vmatpush1.bf16.msra.mxu0 %v3003
    %4129 = vmatprep.subr.bf16.mxu0 %v3017
    %4130 = vmatpush1.bf16.msra.mxu0 %v3016
    %4131 = vmatprep.mubr.bf16.mxu0 %v100
    %4132 = vmatmul.mubr.bf16.gmra.mrb[0].mxu0 %v99
    %v4133 = vpop.f32.mrb[0].mxu0
    %v4134 = vadd.f32 %v799, %v4133
    %v4135 = vpop.f32.mrb[0].mxu0
    %v4136 = vadd.f32 %v803, %v4135
    %v4137 = vpop.f32.mrb[0].mxu0
    %v4138 = vpop.f32.mrb[0].mxu0
    %4139 = vdwg.mxu0
    %4140 = vmatprep.subr.bf16.mxu0 %v3030
    %4141 = vmatpush1.bf16.msra.mxu0 %v3029
    %4142 = vmatprep.subr.bf16.mxu0 %v3043
    %4143 = vmatpush1.bf16.msra.mxu0 %v3042
    %4144 = vmatprep.subr.bf16.mxu0 %v3056
    %4145 = vmatpush1.bf16.msra.mxu0 %v3055
    %4146 = vmatprep.subr.bf16.mxu0 %v3069
    %4147 = vmatpush1.bf16.msra.mxu0 %v3068
    %4148 = vmatprep.subr.bf16.mxu0 %v3082
    %4149 = vmatpush1.bf16.msra.mxu0 %v3081
    %4150 = vmatprep.subr.bf16.mxu0 %v3095
    %4151 = vmatpush1.bf16.msra.mxu0 %v3094
    %4152 = vmatprep.subr.bf16.mxu0 %v3108
    %4153 = vmatpush1.bf16.msra.mxu0 %v3107
    %4154 = vmatprep.subr.bf16.mxu0 %v3121
    %4155 = vmatpush1.bf16.msra.mxu0 %v3120
    %4156 = vmatprep.subr.bf16.mxu0 %v3134
    %4157 = vmatpush1.bf16.msra.mxu0 %v3133
    %4158 = vmatprep.subr.bf16.mxu0 %v3147
    %4159 = vmatpush1.bf16.msra.mxu0 %v3146
    %4160 = vmatprep.subr.bf16.mxu0 %v3160
    %4161 = vmatpush1.bf16.msra.mxu0 %v3159
    %4162 = vmatprep.subr.bf16.mxu0 %v3173
    %4163 = vmatpush1.bf16.msra.mxu0 %v3172
    %4164 = vmatprep.subr.bf16.mxu0 %v3186
    %4165 = vmatpush1.bf16.msra.mxu0 %v3185
    %4166 = vmatprep.subr.bf16.mxu0 %v3199
    %4167 = vmatpush1.bf16.msra.mxu0 %v3198
    %4168 = vmatprep.subr.bf16.mxu0 %v3212
    %4169 = vmatpush1.bf16.msra.mxu0 %v3211
    %4170 = vmatprep.subr.bf16.mxu0 %v3225
    %4171 = vmatpush1.bf16.msra.mxu0 %v3224
    %4172 = vmatprep.mubr.bf16.mxu0 %v102
    %4173 = vmatmul.mubr.bf16.gmra.mrb[0].mxu0 %v101
    %v4174 = vpop.f32.mrb[0].mxu0
    %v4175 = vadd.f32 %v4134, %v4174
    %v4176 = vpop.f32.mrb[0].mxu0
    %v4177 = vadd.f32 %v4136, %v4176
    %v4178 = vpop.f32.mrb[0].mxu0
    %v4179 = vpop.f32.mrb[0].mxu0
    %4180 = vdwg.mxu0
    %4181 = vmatprep.subr.bf16.mxu0 %v3238
    %4182 = vmatpush1.bf16.msra.mxu0 %v3237
    %4183 = vmatprep.subr.bf16.mxu0 %v3251
    %4184 = vmatpush1.bf16.msra.mxu0 %v3250
    %4185 = vmatprep.subr.bf16.mxu0 %v3264
    %4186 = vmatpush1.bf16.msra.mxu0 %v3263
    %4187 = vmatprep.subr.bf16.mxu0 %v3277
    %4188 = vmatpush1.bf16.msra.mxu0 %v3276
    %4189 = vmatprep.subr.bf16.mxu0 %v3290
    %4190 = vmatpush1.bf16.msra.mxu0 %v3289
    %4191 = vmatprep.subr.bf16.mxu0 %v3303
    %4192 = vmatpush1.bf16.msra.mxu0 %v3302
    %4193 = vmatprep.subr.bf16.mxu0 %v3316
    %4194 = vmatpush1.bf16.msra.mxu0 %v3315
    %4195 = vmatprep.subr.bf16.mxu0 %v3329
    %4196 = vmatpush1.bf16.msra.mxu0 %v3328
    %4197 = vmatprep.subr.bf16.mxu0 %v3342
    %4198 = vmatpush1.bf16.msra.mxu0 %v3341
    %4199 = vmatprep.subr.bf16.mxu0 %v3355
    %4200 = vmatpush1.bf16.msra.mxu0 %v3354
    %4201 = vmatprep.subr.bf16.mxu0 %v3368
    %4202 = vmatpush1.bf16.msra.mxu0 %v3367
    %4203 = vmatprep.subr.bf16.mxu0 %v3381
    %4204 = vmatpush1.bf16.msra.mxu0 %v3380
    %4205 = vmatprep.subr.bf16.mxu0 %v3394
    %4206 = vmatpush1.bf16.msra.mxu0 %v3393
    %4207 = vmatprep.subr.bf16.mxu0 %v3407
    %4208 = vmatpush1.bf16.msra.mxu0 %v3406
    %4209 = vmatprep.subr.bf16.mxu0 %v3420
    %4210 = vmatpush1.bf16.msra.mxu0 %v3419
    %4211 = vmatprep.subr.bf16.mxu0 %v3433
    %4212 = vmatpush1.bf16.msra.mxu0 %v3432
    %4213 = vmatprep.mubr.bf16.mxu0 %v104
    %4214 = vmatmul.mubr.bf16.gmra.mrb[0].mxu0 %v103
    %v4215 = vpop.f32.mrb[0].mxu0
    %v4216 = vadd.f32 %v4175, %v4215
    %v4217 = vpop.f32.mrb[0].mxu0
    %v4218 = vadd.f32 %v4177, %v4217
    %v4219 = vpop.f32.mrb[0].mxu0
    %v4220 = vpop.f32.mrb[0].mxu0
    %4221 = vdwg.mxu0
    %4222 = vmatprep.subr.bf16.mxu0 %v3446
    %4223 = vmatpush1.bf16.msra.mxu0 %v3445
    %4224 = vmatprep.subr.bf16.mxu0 0
    %4225 = vmatpush1.bf16.msra.mxu0 0
    %4226 = vmatprep.subr.bf16.mxu0 0
    %4227 = vmatpush1.bf16.msra.mxu0 0
    %4228 = vmatprep.subr.bf16.mxu0 0
    %4229 = vmatpush1.bf16.msra.mxu0 0
    %4230 = vmatprep.subr.bf16.mxu0 0
    %4231 = vmatpush1.bf16.msra.mxu0 0
    %4232 = vmatprep.subr.bf16.mxu0 0
    %4233 = vmatpush1.bf16.msra.mxu0 0
    %4234 = vmatprep.subr.bf16.mxu0 0
    %4235 = vmatpush1.bf16.msra.mxu0 0
    %4236 = vmatprep.subr.bf16.mxu0 0
    %4237 = vmatpush1.bf16.msra.mxu0 0
    %4238 = vmatprep.subr.bf16.mxu0 0
    %4239 = vmatpush1.bf16.msra.mxu0 0
    %4240 = vmatprep.subr.bf16.mxu0 0
    %4241 = vmatpush1.bf16.msra.mxu0 0
    %4242 = vmatprep.subr.bf16.mxu0 0
    %4243 = vmatpush1.bf16.msra.mxu0 0
    %4244 = vmatprep.subr.bf16.mxu0 0
    %4245 = vmatpush1.bf16.msra.mxu0 0
    %4246 = vmatprep.subr.bf16.mxu0 0
    %4247 = vmatpush1.bf16.msra.mxu0 0
    %4248 = vmatprep.subr.bf16.mxu0 0
    %4249 = vmatpush1.bf16.msra.mxu0 0
    %4250 = vmatprep.subr.bf16.mxu0 0
    %4251 = vmatpush1.bf16.msra.mxu0 0
    %4252 = vmatprep.subr.bf16.mxu0 0
    %4253 = vmatpush1.bf16.msra.mxu0 0
    %4254 = vmatprep.mubr.bf16.mxu0 0
    %4255 = vmatmul.mubr.bf16.gmra.mrb[0].mxu0 %v4097
    %v4256 = vpop.f32.mrb[0].mxu0
    %v4257 = vadd.f32 %v4216, %v4256
    %v4258 = vpop.f32.mrb[0].mxu0
    %v4259 = vadd.f32 %v4218, %v4258
    %v4260 = vpop.f32.mrb[0].mxu0
    %v4261 = vpop.f32.mrb[0].mxu0
    %4262 = vdwg.mxu0
    %4263 = vmatprep.subr.bf16.mxu0 %v2824
    %4264 = vmatpush1.bf16.msra.mxu0 %v2823
    %4265 = vmatprep.subr.bf16.mxu0 %v2837
    %4266 = vmatpush1.bf16.msra.mxu0 %v2836
    %4267 = vmatprep.subr.bf16.mxu0 %v2850
    %4268 = vmatpush1.bf16.msra.mxu0 %v2849
    %4269 = vmatprep.subr.bf16.mxu0 %v2863
    %4270 = vmatpush1.bf16.msra.mxu0 %v2862
    %4271 = vmatprep.subr.bf16.mxu0 %v2876
    %4272 = vmatpush1.bf16.msra.mxu0 %v2875
    %4273 = vmatprep.subr.bf16.mxu0 %v2889
    %4274 = vmatpush1.bf16.msra.mxu0 %v2888
    %4275 = vmatprep.subr.bf16.mxu0 %v2902
    %4276 = vmatpush1.bf16.msra.mxu0 %v2901
    %4277 = vmatprep.subr.bf16.mxu0 %v2915
    %4278 = vmatpush1.bf16.msra.mxu0 %v2914
    %4279 = vmatprep.subr.bf16.mxu0 %v2928
    %4280 = vmatpush1.bf16.msra.mxu0 %v2927
    %4281 = vmatprep.subr.bf16.mxu0 %v2941
    %4282 = vmatpush1.bf16.msra.mxu0 %v2940
    %4283 = vmatprep.subr.bf16.mxu0 %v2954
    %4284 = vmatpush1.bf16.msra.mxu0 %v2953
    %4285 = vmatprep.subr.bf16.mxu0 %v2967
    %4286 = vmatpush1.bf16.msra.mxu0 %v2966
    %4287 = vmatprep.subr.bf16.mxu0 %v2980
    %4288 = vmatpush1.bf16.msra.mxu0 %v2979
    %4289 = vmatprep.subr.bf16.mxu0 %v2993
    %4290 = vmatpush1.bf16.msra.mxu0 %v2992
    %4291 = vmatprep.subr.bf16.mxu0 %v3006
    %4292 = vmatpush1.bf16.msra.mxu0 %v3005
    %4293 = vmatprep.subr.bf16.mxu0 %v3019
    %4294 = vmatpush1.bf16.msra.mxu0 %v3018
    %4295 = vmatprep.mubr.bf16.mxu0 %v100
    %4296 = vmatmul.mubr.bf16.gmra.mrb[0].mxu0 %v99
    %v4297 = vpop.f32.mrb[0].mxu0
    %v4298 = vadd.f32 %v807, %v4297
    %v4299 = vpop.f32.mrb[0].mxu0
    %v4300 = vadd.f32 %v811, %v4299
    %v4301 = vpop.f32.mrb[0].mxu0
    %v4302 = vpop.f32.mrb[0].mxu0
    %4303 = vdwg.mxu0
    %4304 = vmatprep.subr.bf16.mxu0 %v3032
    %4305 = vmatpush1.bf16.msra.mxu0 %v3031
    %4306 = vmatprep.subr.bf16.mxu0 %v3045
    %4307 = vmatpush1.bf16.msra.mxu0 %v3044
    %4308 = vmatprep.subr.bf16.mxu0 %v3058
    %4309 = vmatpush1.bf16.msra.mxu0 %v3057
    %4310 = vmatprep.subr.bf16.mxu0 %v3071
    %4311 = vmatpush1.bf16.msra.mxu0 %v3070
    %4312 = vmatprep.subr.bf16.mxu0 %v3084
    %4313 = vmatpush1.bf16.msra.mxu0 %v3083
    %4314 = vmatprep.subr.bf16.mxu0 %v3097
    %4315 = vmatpush1.bf16.msra.mxu0 %v3096
    %4316 = vmatprep.subr.bf16.mxu0 %v3110
    %4317 = vmatpush1.bf16.msra.mxu0 %v3109
    %4318 = vmatprep.subr.bf16.mxu0 %v3123
    %4319 = vmatpush1.bf16.msra.mxu0 %v3122
    %4320 = vmatprep.subr.bf16.mxu0 %v3136
    %4321 = vmatpush1.bf16.msra.mxu0 %v3135
    %4322 = vmatprep.subr.bf16.mxu0 %v3149
    %4323 = vmatpush1.bf16.msra.mxu0 %v3148
    %4324 = vmatprep.subr.bf16.mxu0 %v3162
    %4325 = vmatpush1.bf16.msra.mxu0 %v3161
    %4326 = vmatprep.subr.bf16.mxu0 %v3175
    %4327 = vmatpush1.bf16.msra.mxu0 %v3174
    %4328 = vmatprep.subr.bf16.mxu0 %v3188
    %4329 = vmatpush1.bf16.msra.mxu0 %v3187
    %4330 = vmatprep.subr.bf16.mxu0 %v3201
    %4331 = vmatpush1.bf16.msra.mxu0 %v3200
    %4332 = vmatprep.subr.bf16.mxu0 %v3214
    %4333 = vmatpush1.bf16.msra.mxu0 %v3213
    %4334 = vmatprep.subr.bf16.mxu0 %v3227
    %4335 = vmatpush1.bf16.msra.mxu0 %v3226
    %4336 = vmatprep.mubr.bf16.mxu0 %v102
    %4337 = vmatmul.mubr.bf16.gmra.mrb[0].mxu0 %v101
    %v4338 = vpop.f32.mrb[0].mxu0
    %v4339 = vadd.f32 %v4298, %v4338
    %v4340 = vpop.f32.mrb[0].mxu0
    %v4341 = vadd.f32 %v4300, %v4340
    %v4342 = vpop.f32.mrb[0].mxu0
    %v4343 = vpop.f32.mrb[0].mxu0
    %4344 = vdwg.mxu0
    %4345 = vmatprep.subr.bf16.mxu0 %v3240
    %4346 = vmatpush1.bf16.msra.mxu0 %v3239
    %4347 = vmatprep.subr.bf16.mxu0 %v3253
    %4348 = vmatpush1.bf16.msra.mxu0 %v3252
    %4349 = vmatprep.subr.bf16.mxu0 %v3266
    %4350 = vmatpush1.bf16.msra.mxu0 %v3265
    %4351 = vmatprep.subr.bf16.mxu0 %v3279
    %4352 = vmatpush1.bf16.msra.mxu0 %v3278
    %4353 = vmatprep.subr.bf16.mxu0 %v3292
    %4354 = vmatpush1.bf16.msra.mxu0 %v3291
    %4355 = vmatprep.subr.bf16.mxu0 %v3305
    %4356 = vmatpush1.bf16.msra.mxu0 %v3304
    %4357 = vmatprep.subr.bf16.mxu0 %v3318
    %4358 = vmatpush1.bf16.msra.mxu0 %v3317
    %4359 = vmatprep.subr.bf16.mxu0 %v3331
    %4360 = vmatpush1.bf16.msra.mxu0 %v3330
    %4361 = vmatprep.subr.bf16.mxu0 %v3344
    %4362 = vmatpush1.bf16.msra.mxu0 %v3343
    %4363 = vmatprep.subr.bf16.mxu0 %v3357
    %4364 = vmatpush1.bf16.msra.mxu0 %v3356
    %4365 = vmatprep.subr.bf16.mxu0 %v3370
    %4366 = vmatpush1.bf16.msra.mxu0 %v3369
    %4367 = vmatprep.subr.bf16.mxu0 %v3383
    %4368 = vmatpush1.bf16.msra.mxu0 %v3382
    %4369 = vmatprep.subr.bf16.mxu0 %v3396
    %4370 = vmatpush1.bf16.msra.mxu0 %v3395
    %4371 = vmatprep.subr.bf16.mxu0 %v3409
    %4372 = vmatpush1.bf16.msra.mxu0 %v3408
    %4373 = vmatprep.subr.bf16.mxu0 %v3422
    %4374 = vmatpush1.bf16.msra.mxu0 %v3421
    %4375 = vmatprep.subr.bf16.mxu0 %v3435
    %4376 = vmatpush1.bf16.msra.mxu0 %v3434
    %4377 = vmatprep.mubr.bf16.mxu0 %v104
    %4378 = vmatmul.mubr.bf16.gmra.mrb[0].mxu0 %v103
    %v4379 = vpop.f32.mrb[0].mxu0
    %v4380 = vadd.f32 %v4339, %v4379
    %v4381 = vpop.f32.mrb[0].mxu0
    %v4382 = vadd.f32 %v4341, %v4381
    %v4383 = vpop.f32.mrb[0].mxu0
    %v4384 = vpop.f32.mrb[0].mxu0
    %4385 = vdwg.mxu0
    %4386 = vmatprep.subr.bf16.mxu0 %v3448
    %4387 = vmatpush1.bf16.msra.mxu0 %v3447
    %4388 = vmatprep.subr.bf16.mxu0 0
    %4389 = vmatpush1.bf16.msra.mxu0 0
    %4390 = vmatprep.subr.bf16.mxu0 0
    %4391 = vmatpush1.bf16.msra.mxu0 0
    %4392 = vmatprep.subr.bf16.mxu0 0
    %4393 = vmatpush1.bf16.msra.mxu0 0
    %4394 = vmatprep.subr.bf16.mxu0 0
    %4395 = vmatpush1.bf16.msra.mxu0 0
    %4396 = vmatprep.subr.bf16.mxu0 0
    %4397 = vmatpush1.bf16.msra.mxu0 0
    %4398 = vmatprep.subr.bf16.mxu0 0
    %4399 = vmatpush1.bf16.msra.mxu0 0
    %4400 = vmatprep.subr.bf16.mxu0 0
    %4401 = vmatpush1.bf16.msra.mxu0 0
    %4402 = vmatprep.subr.bf16.mxu0 0
    %4403 = vmatpush1.bf16.msra.mxu0 0
    %4404 = vmatprep.subr.bf16.mxu0 0
    %4405 = vmatpush1.bf16.msra.mxu0 0
    %4406 = vmatprep.subr.bf16.mxu0 0
    %4407 = vmatpush1.bf16.msra.mxu0 0
    %4408 = vmatprep.subr.bf16.mxu0 0
    %4409 = vmatpush1.bf16.msra.mxu0 0
    %4410 = vmatprep.subr.bf16.mxu0 0
    %4411 = vmatpush1.bf16.msra.mxu0 0
    %4412 = vmatprep.subr.bf16.mxu0 0
    %4413 = vmatpush1.bf16.msra.mxu0 0
    %4414 = vmatprep.subr.bf16.mxu0 0
    %4415 = vmatpush1.bf16.msra.mxu0 0
    %4416 = vmatprep.subr.bf16.mxu0 0
    %4417 = vmatpush1.bf16.msra.mxu0 0
    %4418 = vmatprep.mubr.bf16.mxu0 0
    %4419 = vmatmul.mubr.bf16.gmra.mrb[0].mxu0 %v4097
    %v4420 = vpop.f32.mrb[0].mxu0
    %v4421 = vadd.f32 %v4380, %v4420
    %v4422 = vpop.f32.mrb[0].mxu0
    %v4423 = vadd.f32 %v4382, %v4422
    %v4424 = vpop.f32.mrb[0].mxu0
    %v4425 = vpop.f32.mrb[0].mxu0
    %4426 = vdwg.mxu0
    %4427 = vmatprep.subr.bf16.mxu0 %v2826
    %4428 = vmatpush1.bf16.msra.mxu0 %v2825
    %4429 = vmatprep.subr.bf16.mxu0 %v2839
    %4430 = vmatpush1.bf16.msra.mxu0 %v2838
    %4431 = vmatprep.subr.bf16.mxu0 %v2852
    %4432 = vmatpush1.bf16.msra.mxu0 %v2851
    %4433 = vmatprep.subr.bf16.mxu0 %v2865
    %4434 = vmatpush1.bf16.msra.mxu0 %v2864
    %4435 = vmatprep.subr.bf16.mxu0 %v2878
    %4436 = vmatpush1.bf16.msra.mxu0 %v2877
    %4437 = vmatprep.subr.bf16.mxu0 %v2891
    %4438 = vmatpush1.bf16.msra.mxu0 %v2890
    %4439 = vmatprep.subr.bf16.mxu0 %v2904
    %4440 = vmatpush1.bf16.msra.mxu0 %v2903
    %4441 = vmatprep.subr.bf16.mxu0 %v2917
    %4442 = vmatpush1.bf16.msra.mxu0 %v2916
    %4443 = vmatprep.subr.bf16.mxu0 %v2930
    %4444 = vmatpush1.bf16.msra.mxu0 %v2929
    %4445 = vmatprep.subr.bf16.mxu0 %v2943
    %4446 = vmatpush1.bf16.msra.mxu0 %v2942
    %4447 = vmatprep.subr.bf16.mxu0 %v2956
    %4448 = vmatpush1.bf16.msra.mxu0 %v2955
    %4449 = vmatprep.subr.bf16.mxu0 %v2969
    %4450 = vmatpush1.bf16.msra.mxu0 %v2968
    %4451 = vmatprep.subr.bf16.mxu0 %v2982
    %4452 = vmatpush1.bf16.msra.mxu0 %v2981
    %4453 = vmatprep.subr.bf16.mxu0 %v2995
    %4454 = vmatpush1.bf16.msra.mxu0 %v2994
    %4455 = vmatprep.subr.bf16.mxu0 %v3008
    %4456 = vmatpush1.bf16.msra.mxu0 %v3007
    %4457 = vmatprep.subr.bf16.mxu0 %v3021
    %4458 = vmatpush1.bf16.msra.mxu0 %v3020
    %4459 = vmatprep.mubr.bf16.mxu0 %v100
    %4460 = vmatmul.mubr.bf16.gmra.mrb[0].mxu0 %v99
    %v4461 = vpop.f32.mrb[0].mxu0
    %v4462 = vadd.f32 %v815, %v4461
    %v4463 = vpop.f32.mrb[0].mxu0
    %v4464 = vadd.f32 %v819, %v4463
    %v4465 = vpop.f32.mrb[0].mxu0
    %v4466 = vpop.f32.mrb[0].mxu0
    %4467 = vdwg.mxu0
    %4468 = vmatprep.subr.bf16.mxu0 %v3034
    %4469 = vmatpush1.bf16.msra.mxu0 %v3033
    %4470 = vmatprep.subr.bf16.mxu0 %v3047
    %4471 = vmatpush1.bf16.msra.mxu0 %v3046
    %4472 = vmatprep.subr.bf16.mxu0 %v3060
    %4473 = vmatpush1.bf16.msra.mxu0 %v3059
    %4474 = vmatprep.subr.bf16.mxu0 %v3073
    %4475 = vmatpush1.bf16.msra.mxu0 %v3072
    %4476 = vmatprep.subr.bf16.mxu0 %v3086
    %4477 = vmatpush1.bf16.msra.mxu0 %v3085
    %4478 = vmatprep.subr.bf16.mxu0 %v3099
    %4479 = vmatpush1.bf16.msra.mxu0 %v3098
    %4480 = vmatprep.subr.bf16.mxu0 %v3112
    %4481 = vmatpush1.bf16.msra.mxu0 %v3111
    %4482 = vmatprep.subr.bf16.mxu0 %v3125
    %4483 = vmatpush1.bf16.msra.mxu0 %v3124
    %4484 = vmatprep.subr.bf16.mxu0 %v3138
    %4485 = vmatpush1.bf16.msra.mxu0 %v3137
    %4486 = vmatprep.subr.bf16.mxu0 %v3151
    %4487 = vmatpush1.bf16.msra.mxu0 %v3150
    %4488 = vmatprep.subr.bf16.mxu0 %v3164
    %4489 = vmatpush1.bf16.msra.mxu0 %v3163
    %4490 = vmatprep.subr.bf16.mxu0 %v3177
    %4491 = vmatpush1.bf16.msra.mxu0 %v3176
    %4492 = vmatprep.subr.bf16.mxu0 %v3190
    %4493 = vmatpush1.bf16.msra.mxu0 %v3189
    %4494 = vmatprep.subr.bf16.mxu0 %v3203
    %4495 = vmatpush1.bf16.msra.mxu0 %v3202
    %4496 = vmatprep.subr.bf16.mxu0 %v3216
    %4497 = vmatpush1.bf16.msra.mxu0 %v3215
    %4498 = vmatprep.subr.bf16.mxu0 %v3229
    %4499 = vmatpush1.bf16.msra.mxu0 %v3228
    %4500 = vmatprep.mubr.bf16.mxu0 %v102
    %4501 = vmatmul.mubr.bf16.gmra.mrb[0].mxu0 %v101
    %v4502 = vpop.f32.mrb[0].mxu0
    %v4503 = vadd.f32 %v4462, %v4502
    %v4504 = vpop.f32.mrb[0].mxu0
    %v4505 = vadd.f32 %v4464, %v4504
    %v4506 = vpop.f32.mrb[0].mxu0
    %v4507 = vpop.f32.mrb[0].mxu0
    %4508 = vdwg.mxu0
    %4509 = vmatprep.subr.bf16.mxu0 %v3242
    %4510 = vmatpush1.bf16.msra.mxu0 %v3241
    %4511 = vmatprep.subr.bf16.mxu0 %v3255
    %4512 = vmatpush1.bf16.msra.mxu0 %v3254
    %4513 = vmatprep.subr.bf16.mxu0 %v3268
    %4514 = vmatpush1.bf16.msra.mxu0 %v3267
    %4515 = vmatprep.subr.bf16.mxu0 %v3281
    %4516 = vmatpush1.bf16.msra.mxu0 %v3280
    %4517 = vmatprep.subr.bf16.mxu0 %v3294
    %4518 = vmatpush1.bf16.msra.mxu0 %v3293
    %4519 = vmatprep.subr.bf16.mxu0 %v3307
    %4520 = vmatpush1.bf16.msra.mxu0 %v3306
    %4521 = vmatprep.subr.bf16.mxu0 %v3320
    %4522 = vmatpush1.bf16.msra.mxu0 %v3319
    %4523 = vmatprep.subr.bf16.mxu0 %v3333
    %4524 = vmatpush1.bf16.msra.mxu0 %v3332
    %4525 = vmatprep.subr.bf16.mxu0 %v3346
    %4526 = vmatpush1.bf16.msra.mxu0 %v3345
    %4527 = vmatprep.subr.bf16.mxu0 %v3359
    %4528 = vmatpush1.bf16.msra.mxu0 %v3358
    %4529 = vmatprep.subr.bf16.mxu0 %v3372
    %4530 = vmatpush1.bf16.msra.mxu0 %v3371
    %4531 = vmatprep.subr.bf16.mxu0 %v3385
    %4532 = vmatpush1.bf16.msra.mxu0 %v3384
    %4533 = vmatprep.subr.bf16.mxu0 %v3398
    %4534 = vmatpush1.bf16.msra.mxu0 %v3397
    %4535 = vmatprep.subr.bf16.mxu0 %v3411
    %4536 = vmatpush1.bf16.msra.mxu0 %v3410
    %4537 = vmatprep.subr.bf16.mxu0 %v3424
    %4538 = vmatpush1.bf16.msra.mxu0 %v3423
    %4539 = vmatprep.subr.bf16.mxu0 %v3437
    %4540 = vmatpush1.bf16.msra.mxu0 %v3436
    %4541 = vmatprep.mubr.bf16.mxu0 %v104
    %4542 = vmatmul.mubr.bf16.gmra.mrb[0].mxu0 %v103
    %v4543 = vpop.f32.mrb[0].mxu0
    %v4544 = vadd.f32 %v4503, %v4543
    %v4545 = vpop.f32.mrb[0].mxu0
    %v4546 = vadd.f32 %v4505, %v4545
    %v4547 = vpop.f32.mrb[0].mxu0
    %v4548 = vpop.f32.mrb[0].mxu0
    %4549 = vdwg.mxu0
    %4550 = vmatprep.subr.bf16.mxu0 %v3450
    %4551 = vmatpush1.bf16.msra.mxu0 %v3449
    %4552 = vmatprep.subr.bf16.mxu0 0
    %4553 = vmatpush1.bf16.msra.mxu0 0
    %4554 = vmatprep.subr.bf16.mxu0 0
    %4555 = vmatpush1.bf16.msra.mxu0 0
    %4556 = vmatprep.subr.bf16.mxu0 0
    %4557 = vmatpush1.bf16.msra.mxu0 0
    %4558 = vmatprep.subr.bf16.mxu0 0
    %4559 = vmatpush1.bf16.msra.mxu0 0
    %4560 = vmatprep.subr.bf16.mxu0 0
    %4561 = vmatpush1.bf16.msra.mxu0 0
    %4562 = vmatprep.subr.bf16.mxu0 0
    %4563 = vmatpush1.bf16.msra.mxu0 0
    %4564 = vmatprep.subr.bf16.mxu0 0
    %4565 = vmatpush1.bf16.msra.mxu0 0
    %4566 = vmatprep.subr.bf16.mxu0 0
    %4567 = vmatpush1.bf16.msra.mxu0 0
    %4568 = vmatprep.subr.bf16.mxu0 0
    %4569 = vmatpush1.bf16.msra.mxu0 0
    %4570 = vmatprep.subr.bf16.mxu0 0
    %4571 = vmatpush1.bf16.msra.mxu0 0
    %4572 = vmatprep.subr.bf16.mxu0 0
    %4573 = vmatpush1.bf16.msra.mxu0 0
    %4574 = vmatprep.subr.bf16.mxu0 0
    %4575 = vmatpush1.bf16.msra.mxu0 0
    %4576 = vmatprep.subr.bf16.mxu0 0
    %4577 = vmatpush1.bf16.msra.mxu0 0
    %4578 = vmatprep.subr.bf16.mxu0 0
    %4579 = vmatpush1.bf16.msra.mxu0 0
    %4580 = vmatprep.subr.bf16.mxu0 0
    %4581 = vmatpush1.bf16.msra.mxu0 0
    %4582 = vmatprep.mubr.bf16.mxu0 0
    %4583 = vmatmul.mubr.bf16.gmra.mrb[0].mxu0 %v4097
    %v4584 = vpop.f32.mrb[0].mxu0
    %v4585 = vadd.f32 %v4544, %v4584
    %v4586 = vpop.f32.mrb[0].mxu0
    %v4587 = vadd.f32 %v4546, %v4586
    %v4588 = vpop.f32.mrb[0].mxu0
    %v4589 = vpop.f32.mrb[0].mxu0
    %4590 = vdwg.mxu0
    %4591 = vmatprep.subr.bf16.mxu0 %v2828
    %4592 = vmatpush1.bf16.msra.mxu0 %v2827
    %4593 = vmatprep.subr.bf16.mxu0 %v2841
    %4594 = vmatpush1.bf16.msra.mxu0 %v2840
    %4595 = vmatprep.subr.bf16.mxu0 %v2854
    %4596 = vmatpush1.bf16.msra.mxu0 %v2853
    %4597 = vmatprep.subr.bf16.mxu0 %v2867
    %4598 = vmatpush1.bf16.msra.mxu0 %v2866
    %4599 = vmatprep.subr.bf16.mxu0 %v2880
    %4600 = vmatpush1.bf16.msra.mxu0 %v2879
    %4601 = vmatprep.subr.bf16.mxu0 %v2893
    %4602 = vmatpush1.bf16.msra.mxu0 %v2892
    %4603 = vmatprep.subr.bf16.mxu0 %v2906
    %4604 = vmatpush1.bf16.msra.mxu0 %v2905
    %4605 = vmatprep.subr.bf16.mxu0 %v2919
    %4606 = vmatpush1.bf16.msra.mxu0 %v2918
    %4607 = vmatprep.subr.bf16.mxu0 %v2932
    %4608 = vmatpush1.bf16.msra.mxu0 %v2931
    %4609 = vmatprep.subr.bf16.mxu0 %v2945
    %4610 = vmatpush1.bf16.msra.mxu0 %v2944
    %4611 = vmatprep.subr.bf16.mxu0 %v2958
    %4612 = vmatpush1.bf16.msra.mxu0 %v2957
    %4613 = vmatprep.subr.bf16.mxu0 %v2971
    %4614 = vmatpush1.bf16.msra.mxu0 %v2970
    %4615 = vmatprep.subr.bf16.mxu0 %v2984
    %4616 = vmatpush1.bf16.msra.mxu0 %v2983
    %4617 = vmatprep.subr.bf16.mxu0 %v2997
    %4618 = vmatpush1.bf16.msra.mxu0 %v2996
    %4619 = vmatprep.subr.bf16.mxu0 %v3010
    %4620 = vmatpush1.bf16.msra.mxu0 %v3009
    %4621 = vmatprep.subr.bf16.mxu0 %v3023
    %4622 = vmatpush1.bf16.msra.mxu0 %v3022
    %4623 = vmatprep.mubr.bf16.mxu0 %v100
    %4624 = vmatmul.mubr.bf16.gmra.mrb[0].mxu0 %v99
    %v4625 = vpop.f32.mrb[0].mxu0
    %v4626 = vadd.f32 %v823, %v4625
    %v4627 = vpop.f32.mrb[0].mxu0
    %v4628 = vadd.f32 %v827, %v4627
    %v4629 = vpop.f32.mrb[0].mxu0
    %v4630 = vpop.f32.mrb[0].mxu0
    %4631 = vdwg.mxu0
    %4632 = vmatprep.subr.bf16.mxu0 %v3036
    %4633 = vmatpush1.bf16.msra.mxu0 %v3035
    %4634 = vmatprep.subr.bf16.mxu0 %v3049
    %4635 = vmatpush1.bf16.msra.mxu0 %v3048
    %4636 = vmatprep.subr.bf16.mxu0 %v3062
    %4637 = vmatpush1.bf16.msra.mxu0 %v3061
    %4638 = vmatprep.subr.bf16.mxu0 %v3075
    %4639 = vmatpush1.bf16.msra.mxu0 %v3074
    %4640 = vmatprep.subr.bf16.mxu0 %v3088
    %4641 = vmatpush1.bf16.msra.mxu0 %v3087
    %4642 = vmatprep.subr.bf16.mxu0 %v3101
    %4643 = vmatpush1.bf16.msra.mxu0 %v3100
    %4644 = vmatprep.subr.bf16.mxu0 %v3114
    %4645 = vmatpush1.bf16.msra.mxu0 %v3113
    %4646 = vmatprep.subr.bf16.mxu0 %v3127
    %4647 = vmatpush1.bf16.msra.mxu0 %v3126
    %4648 = vmatprep.subr.bf16.mxu0 %v3140
    %4649 = vmatpush1.bf16.msra.mxu0 %v3139
    %4650 = vmatprep.subr.bf16.mxu0 %v3153
    %4651 = vmatpush1.bf16.msra.mxu0 %v3152
    %4652 = vmatprep.subr.bf16.mxu0 %v3166
    %4653 = vmatpush1.bf16.msra.mxu0 %v3165
    %4654 = vmatprep.subr.bf16.mxu0 %v3179
    %4655 = vmatpush1.bf16.msra.mxu0 %v3178
    %4656 = vmatprep.subr.bf16.mxu0 %v3192
    %4657 = vmatpush1.bf16.msra.mxu0 %v3191
    %4658 = vmatprep.subr.bf16.mxu0 %v3205
    %4659 = vmatpush1.bf16.msra.mxu0 %v3204
    %4660 = vmatprep.subr.bf16.mxu0 %v3218
    %4661 = vmatpush1.bf16.msra.mxu0 %v3217
    %4662 = vmatprep.subr.bf16.mxu0 %v3231
    %4663 = vmatpush1.bf16.msra.mxu0 %v3230
    %4664 = vmatprep.mubr.bf16.mxu0 %v102
    %4665 = vmatmul.mubr.bf16.gmra.mrb[0].mxu0 %v101
    %v4666 = vpop.f32.mrb[0].mxu0
    %v4667 = vadd.f32 %v4626, %v4666
    %v4668 = vpop.f32.mrb[0].mxu0
    %v4669 = vadd.f32 %v4628, %v4668
    %v4670 = vpop.f32.mrb[0].mxu0
    %v4671 = vpop.f32.mrb[0].mxu0
    %4672 = vdwg.mxu0
    %4673 = vmatprep.subr.bf16.mxu0 %v3244
    %4674 = vmatpush1.bf16.msra.mxu0 %v3243
    %4675 = vmatprep.subr.bf16.mxu0 %v3257
    %4676 = vmatpush1.bf16.msra.mxu0 %v3256
    %4677 = vmatprep.subr.bf16.mxu0 %v3270
    %4678 = vmatpush1.bf16.msra.mxu0 %v3269
    %4679 = vmatprep.subr.bf16.mxu0 %v3283
    %4680 = vmatpush1.bf16.msra.mxu0 %v3282
    %4681 = vmatprep.subr.bf16.mxu0 %v3296
    %4682 = vmatpush1.bf16.msra.mxu0 %v3295
    %4683 = vmatprep.subr.bf16.mxu0 %v3309
    %4684 = vmatpush1.bf16.msra.mxu0 %v3308
    %4685 = vmatprep.subr.bf16.mxu0 %v3322
    %4686 = vmatpush1.bf16.msra.mxu0 %v3321
    %4687 = vmatprep.subr.bf16.mxu0 %v3335
    %4688 = vmatpush1.bf16.msra.mxu0 %v3334
    %4689 = vmatprep.subr.bf16.mxu0 %v3348
    %4690 = vmatpush1.bf16.msra.mxu0 %v3347
    %4691 = vmatprep.subr.bf16.mxu0 %v3361
    %4692 = vmatpush1.bf16.msra.mxu0 %v3360
    %4693 = vmatprep.subr.bf16.mxu0 %v3374
    %4694 = vmatpush1.bf16.msra.mxu0 %v3373
    %4695 = vmatprep.subr.bf16.mxu0 %v3387
    %4696 = vmatpush1.bf16.msra.mxu0 %v3386
    %4697 = vmatprep.subr.bf16.mxu0 %v3400
    %4698 = vmatpush1.bf16.msra.mxu0 %v3399
    %4699 = vmatprep.subr.bf16.mxu0 %v3413
    %4700 = vmatpush1.bf16.msra.mxu0 %v3412
    %4701 = vmatprep.subr.bf16.mxu0 %v3426
    %4702 = vmatpush1.bf16.msra.mxu0 %v3425
    %4703 = vmatprep.subr.bf16.mxu0 %v3439
    %4704 = vmatpush1.bf16.msra.mxu0 %v3438
    %4705 = vmatprep.mubr.bf16.mxu0 %v104
    %4706 = vmatmul.mubr.bf16.gmra.mrb[0].mxu0 %v103
    %v4707 = vpop.f32.mrb[0].mxu0
    %v4708 = vadd.f32 %v4667, %v4707
    %v4709 = vpop.f32.mrb[0].mxu0
    %v4710 = vadd.f32 %v4669, %v4709
    %v4711 = vpop.f32.mrb[0].mxu0
    %v4712 = vpop.f32.mrb[0].mxu0
    %4713 = vdwg.mxu0
    %4714 = vmatprep.subr.bf16.mxu0 %v3452
    %4715 = vmatpush1.bf16.msra.mxu0 %v3451
    %4716 = vmatprep.subr.bf16.mxu0 0
    %4717 = vmatpush1.bf16.msra.mxu0 0
    %4718 = vmatprep.subr.bf16.mxu0 0
    %4719 = vmatpush1.bf16.msra.mxu0 0
    %4720 = vmatprep.subr.bf16.mxu0 0
    %4721 = vmatpush1.bf16.msra.mxu0 0
    %4722 = vmatprep.subr.bf16.mxu0 0
    %4723 = vmatpush1.bf16.msra.mxu0 0
    %4724 = vmatprep.subr.bf16.mxu0 0
    %4725 = vmatpush1.bf16.msra.mxu0 0
    %4726 = vmatprep.subr.bf16.mxu0 0
    %4727 = vmatpush1.bf16.msra.mxu0 0
    %4728 = vmatprep.subr.bf16.mxu0 0
    %4729 = vmatpush1.bf16.msra.mxu0 0
    %4730 = vmatprep.subr.bf16.mxu0 0
    %4731 = vmatpush1.bf16.msra.mxu0 0
    %4732 = vmatprep.subr.bf16.mxu0 0
    %4733 = vmatpush1.bf16.msra.mxu0 0
    %4734 = vmatprep.subr.bf16.mxu0 0
    %4735 = vmatpush1.bf16.msra.mxu0 0
    %4736 = vmatprep.subr.bf16.mxu0 0
    %4737 = vmatpush1.bf16.msra.mxu0 0
    %4738 = vmatprep.subr.bf16.mxu0 0
    %4739 = vmatpush1.bf16.msra.mxu0 0
    %4740 = vmatprep.subr.bf16.mxu0 0
    %4741 = vmatpush1.bf16.msra.mxu0 0
    %4742 = vmatprep.subr.bf16.mxu0 0
    %4743 = vmatpush1.bf16.msra.mxu0 0
    %4744 = vmatprep.subr.bf16.mxu0 0
    %4745 = vmatpush1.bf16.msra.mxu0 0
    %4746 = vmatprep.mubr.bf16.mxu0 0
    %4747 = vmatmul.mubr.bf16.gmra.mrb[0].mxu0 %v4097
    %v4748 = vpop.f32.mrb[0].mxu0
    %v4749 = vadd.f32 %v4708, %v4748
    %v4750 = vpop.f32.mrb[0].mxu0
    %v4751 = vadd.f32 %v4710, %v4750
    %v4752 = vpop.f32.mrb[0].mxu0
    %v4753 = vpop.f32.mrb[0].mxu0
    %4754 = vdwg.mxu0
    %4755 = vmatprep.subr.bf16.mxu0 %v2830
    %4756 = vmatpush1.bf16.msra.mxu0 %v2829
    %4757 = vmatprep.subr.bf16.mxu0 %v2843
    %4758 = vmatpush1.bf16.msra.mxu0 %v2842
    %4759 = vmatprep.subr.bf16.mxu0 %v2856
    %4760 = vmatpush1.bf16.msra.mxu0 %v2855
    %4761 = vmatprep.subr.bf16.mxu0 %v2869
    %4762 = vmatpush1.bf16.msra.mxu0 %v2868
    %4763 = vmatprep.subr.bf16.mxu0 %v2882
    %4764 = vmatpush1.bf16.msra.mxu0 %v2881
    %4765 = vmatprep.subr.bf16.mxu0 %v2895
    %4766 = vmatpush1.bf16.msra.mxu0 %v2894
    %4767 = vmatprep.subr.bf16.mxu0 %v2908
    %4768 = vmatpush1.bf16.msra.mxu0 %v2907
    %4769 = vmatprep.subr.bf16.mxu0 %v2921
    %4770 = vmatpush1.bf16.msra.mxu0 %v2920
    %4771 = vmatprep.subr.bf16.mxu0 %v2934
    %4772 = vmatpush1.bf16.msra.mxu0 %v2933
    %4773 = vmatprep.subr.bf16.mxu0 %v2947
    %4774 = vmatpush1.bf16.msra.mxu0 %v2946
    %4775 = vmatprep.subr.bf16.mxu0 %v2960
    %4776 = vmatpush1.bf16.msra.mxu0 %v2959
    %4777 = vmatprep.subr.bf16.mxu0 %v2973
    %4778 = vmatpush1.bf16.msra.mxu0 %v2972
    %4779 = vmatprep.subr.bf16.mxu0 %v2986
    %4780 = vmatpush1.bf16.msra.mxu0 %v2985
    %4781 = vmatprep.subr.bf16.mxu0 %v2999
    %4782 = vmatpush1.bf16.msra.mxu0 %v2998
    %4783 = vmatprep.subr.bf16.mxu0 %v3012
    %4784 = vmatpush1.bf16.msra.mxu0 %v3011
    %4785 = vmatprep.subr.bf16.mxu0 %v3025
    %4786 = vmatpush1.bf16.msra.mxu0 %v3024
    %4787 = vmatprep.mubr.bf16.mxu0 %v100
    %4788 = vmatmul.mubr.bf16.gmra.mrb[0].mxu0 %v99
    %v4789 = vpop.f32.mrb[0].mxu0
    %v4790 = vadd.f32 %v831, %v4789
    %v4791 = vpop.f32.mrb[0].mxu0
    %v4792 = vadd.f32 %v835, %v4791
    %v4793 = vpop.f32.mrb[0].mxu0
    %v4794 = vpop.f32.mrb[0].mxu0
    %4795 = vdwg.mxu0
    %4796 = vmatprep.subr.bf16.mxu0 %v3038
    %4797 = vmatpush1.bf16.msra.mxu0 %v3037
    %4798 = vmatprep.subr.bf16.mxu0 %v3051
    %4799 = vmatpush1.bf16.msra.mxu0 %v3050
    %4800 = vmatprep.subr.bf16.mxu0 %v3064
    %4801 = vmatpush1.bf16.msra.mxu0 %v3063
    %4802 = vmatprep.subr.bf16.mxu0 %v3077
    %4803 = vmatpush1.bf16.msra.mxu0 %v3076
    %4804 = vmatprep.subr.bf16.mxu0 %v3090
    %4805 = vmatpush1.bf16.msra.mxu0 %v3089
    %4806 = vmatprep.subr.bf16.mxu0 %v3103
    %4807 = vmatpush1.bf16.msra.mxu0 %v3102
    %4808 = vmatprep.subr.bf16.mxu0 %v3116
    %4809 = vmatpush1.bf16.msra.mxu0 %v3115
    %4810 = vmatprep.subr.bf16.mxu0 %v3129
    %4811 = vmatpush1.bf16.msra.mxu0 %v3128
    %4812 = vmatprep.subr.bf16.mxu0 %v3142
    %4813 = vmatpush1.bf16.msra.mxu0 %v3141
    %4814 = vmatprep.subr.bf16.mxu0 %v3155
    %4815 = vmatpush1.bf16.msra.mxu0 %v3154
    %4816 = vmatprep.subr.bf16.mxu0 %v3168
    %4817 = vmatpush1.bf16.msra.mxu0 %v3167
    %4818 = vmatprep.subr.bf16.mxu0 %v3181
    %4819 = vmatpush1.bf16.msra.mxu0 %v3180
    %4820 = vmatprep.subr.bf16.mxu0 %v3194
    %4821 = vmatpush1.bf16.msra.mxu0 %v3193
    %4822 = vmatprep.subr.bf16.mxu0 %v3207
    %4823 = vmatpush1.bf16.msra.mxu0 %v3206
    %4824 = vmatprep.subr.bf16.mxu0 %v3220
    %4825 = vmatpush1.bf16.msra.mxu0 %v3219
    %4826 = vmatprep.subr.bf16.mxu0 %v3233
    %4827 = vmatpush1.bf16.msra.mxu0 %v3232
    %4828 = vmatprep.mubr.bf16.mxu0 %v102
    %4829 = vmatmul.mubr.bf16.gmra.mrb[0].mxu0 %v101
    %v4830 = vpop.f32.mrb[0].mxu0
    %v4831 = vadd.f32 %v4790, %v4830
    %v4832 = vpop.f32.mrb[0].mxu0
    %v4833 = vadd.f32 %v4792, %v4832
    %v4834 = vpop.f32.mrb[0].mxu0
    %v4835 = vpop.f32.mrb[0].mxu0
    %4836 = vdwg.mxu0
    %4837 = vmatprep.subr.bf16.mxu0 %v3246
    %4838 = vmatpush1.bf16.msra.mxu0 %v3245
    %4839 = vmatprep.subr.bf16.mxu0 %v3259
    %4840 = vmatpush1.bf16.msra.mxu0 %v3258
    %4841 = vmatprep.subr.bf16.mxu0 %v3272
    %4842 = vmatpush1.bf16.msra.mxu0 %v3271
    %4843 = vmatprep.subr.bf16.mxu0 %v3285
    %4844 = vmatpush1.bf16.msra.mxu0 %v3284
    %4845 = vmatprep.subr.bf16.mxu0 %v3298
    %4846 = vmatpush1.bf16.msra.mxu0 %v3297
    %4847 = vmatprep.subr.bf16.mxu0 %v3311
    %4848 = vmatpush1.bf16.msra.mxu0 %v3310
    %4849 = vmatprep.subr.bf16.mxu0 %v3324
    %4850 = vmatpush1.bf16.msra.mxu0 %v3323
    %4851 = vmatprep.subr.bf16.mxu0 %v3337
    %4852 = vmatpush1.bf16.msra.mxu0 %v3336
    %4853 = vmatprep.subr.bf16.mxu0 %v3350
    %4854 = vmatpush1.bf16.msra.mxu0 %v3349
    %4855 = vmatprep.subr.bf16.mxu0 %v3363
    %4856 = vmatpush1.bf16.msra.mxu0 %v3362
    %4857 = vmatprep.subr.bf16.mxu0 %v3376
    %4858 = vmatpush1.bf16.msra.mxu0 %v3375
    %4859 = vmatprep.subr.bf16.mxu0 %v3389
    %4860 = vmatpush1.bf16.msra.mxu0 %v3388
    %4861 = vmatprep.subr.bf16.mxu0 %v3402
    %4862 = vmatpush1.bf16.msra.mxu0 %v3401
    %4863 = vmatprep.subr.bf16.mxu0 %v3415
    %4864 = vmatpush1.bf16.msra.mxu0 %v3414
    %4865 = vmatprep.subr.bf16.mxu0 %v3428
    %4866 = vmatpush1.bf16.msra.mxu0 %v3427
    %4867 = vmatprep.subr.bf16.mxu0 %v3441
    %4868 = vmatpush1.bf16.msra.mxu0 %v3440
    %4869 = vmatprep.mubr.bf16.mxu0 %v104
    %4870 = vmatmul.mubr.bf16.gmra.mrb[0].mxu0 %v103
    %v4871 = vpop.f32.mrb[0].mxu0
    %v4872 = vadd.f32 %v4831, %v4871
    %v4873 = vpop.f32.mrb[0].mxu0
    %v4874 = vadd.f32 %v4833, %v4873
    %v4875 = vpop.f32.mrb[0].mxu0
    %v4876 = vpop.f32.mrb[0].mxu0
    %4877 = vdwg.mxu0
    %4878 = vmatprep.subr.bf16.mxu0 %v3454
    %4879 = vmatpush1.bf16.msra.mxu0 %v3453
    %4880 = vmatprep.subr.bf16.mxu0 0
    %4881 = vmatpush1.bf16.msra.mxu0 0
    %4882 = vmatprep.subr.bf16.mxu0 0
    %4883 = vmatpush1.bf16.msra.mxu0 0
    %4884 = vmatprep.subr.bf16.mxu0 0
    %4885 = vmatpush1.bf16.msra.mxu0 0
    %4886 = vmatprep.subr.bf16.mxu0 0
    %4887 = vmatpush1.bf16.msra.mxu0 0
    %4888 = vmatprep.subr.bf16.mxu0 0
    %4889 = vmatpush1.bf16.msra.mxu0 0
    %4890 = vmatprep.subr.bf16.mxu0 0
    %4891 = vmatpush1.bf16.msra.mxu0 0
    %4892 = vmatprep.subr.bf16.mxu0 0
    %4893 = vmatpush1.bf16.msra.mxu0 0
    %4894 = vmatprep.subr.bf16.mxu0 0
    %4895 = vmatpush1.bf16.msra.mxu0 0
    %4896 = vmatprep.subr.bf16.mxu0 0
    %4897 = vmatpush1.bf16.msra.mxu0 0
    %4898 = vmatprep.subr.bf16.mxu0 0
    %4899 = vmatpush1.bf16.msra.mxu0 0
    %4900 = vmatprep.subr.bf16.mxu0 0
    %4901 = vmatpush1.bf16.msra.mxu0 0
    %4902 = vmatprep.subr.bf16.mxu0 0
    %4903 = vmatpush1.bf16.msra.mxu0 0
    %4904 = vmatprep.subr.bf16.mxu0 0
    %4905 = vmatpush1.bf16.msra.mxu0 0
    %4906 = vmatprep.subr.bf16.mxu0 0
    %4907 = vmatpush1.bf16.msra.mxu0 0
    %4908 = vmatprep.subr.bf16.mxu0 0
    %4909 = vmatpush1.bf16.msra.mxu0 0
    %4910 = vmatprep.mubr.bf16.mxu0 0
    %4911 = vmatmul.mubr.bf16.gmra.mrb[0].mxu0 %v4097
    %v4912 = vpop.f32.mrb[0].mxu0
    %v4913 = vadd.f32 %v4872, %v4912
    %v4914 = vpop.f32.mrb[0].mxu0
    %v4915 = vadd.f32 %v4874, %v4914
    %v4916 = vpop.f32.mrb[0].mxu0
    %v4917 = vpop.f32.mrb[0].mxu0
    %4918 = vdwg.mxu0
    %4919 = vmatprep.subr.bf16.mxu0 %v2832
    %4920 = vmatpush1.bf16.msra.mxu0 %v2831
    %4921 = vmatprep.subr.bf16.mxu0 %v2845
    %4922 = vmatpush1.bf16.msra.mxu0 %v2844
    %4923 = vmatprep.subr.bf16.mxu0 %v2858
    %4924 = vmatpush1.bf16.msra.mxu0 %v2857
    %4925 = vmatprep.subr.bf16.mxu0 %v2871
    %4926 = vmatpush1.bf16.msra.mxu0 %v2870
    %4927 = vmatprep.subr.bf16.mxu0 %v2884
    %4928 = vmatpush1.bf16.msra.mxu0 %v2883
    %4929 = vmatprep.subr.bf16.mxu0 %v2897
    %4930 = vmatpush1.bf16.msra.mxu0 %v2896
    %4931 = vmatprep.subr.bf16.mxu0 %v2910
    %4932 = vmatpush1.bf16.msra.mxu0 %v2909
    %4933 = vmatprep.subr.bf16.mxu0 %v2923
    %4934 = vmatpush1.bf16.msra.mxu0 %v2922
    %4935 = vmatprep.subr.bf16.mxu0 %v2936
    %4936 = vmatpush1.bf16.msra.mxu0 %v2935
    %4937 = vmatprep.subr.bf16.mxu0 %v2949
    %4938 = vmatpush1.bf16.msra.mxu0 %v2948
    %4939 = vmatprep.subr.bf16.mxu0 %v2962
    %4940 = vmatpush1.bf16.msra.mxu0 %v2961
    %4941 = vmatprep.subr.bf16.mxu0 %v2975
    %4942 = vmatpush1.bf16.msra.mxu0 %v2974
    %4943 = vmatprep.subr.bf16.mxu0 %v2988
    %4944 = vmatpush1.bf16.msra.mxu0 %v2987
    %4945 = vmatprep.subr.bf16.mxu0 %v3001
    %4946 = vmatpush1.bf16.msra.mxu0 %v3000
    %4947 = vmatprep.subr.bf16.mxu0 %v3014
    %4948 = vmatpush1.bf16.msra.mxu0 %v3013
    %4949 = vmatprep.subr.bf16.mxu0 %v3027
    %4950 = vmatpush1.bf16.msra.mxu0 %v3026
    %4951 = vmatprep.mubr.bf16.mxu0 %v100
    %4952 = vmatmul.mubr.bf16.gmra.mrb[0].mxu0 %v99
    %v4953 = vpop.f32.mrb[0].mxu0
    %v4954 = vadd.f32 %v839, %v4953
    %v4955 = vpop.f32.mrb[0].mxu0
    %v4956 = vadd.f32 %v843, %v4955
    %v4957 = vpop.f32.mrb[0].mxu0
    %v4958 = vpop.f32.mrb[0].mxu0
    %4959 = vdwg.mxu0
    %4960 = vmatprep.subr.bf16.mxu0 %v3040
    %4961 = vmatpush1.bf16.msra.mxu0 %v3039
    %4962 = vmatprep.subr.bf16.mxu0 %v3053
    %4963 = vmatpush1.bf16.msra.mxu0 %v3052
    %4964 = vmatprep.subr.bf16.mxu0 %v3066
    %4965 = vmatpush1.bf16.msra.mxu0 %v3065
    %4966 = vmatprep.subr.bf16.mxu0 %v3079
    %4967 = vmatpush1.bf16.msra.mxu0 %v3078
    %4968 = vmatprep.subr.bf16.mxu0 %v3092
    %4969 = vmatpush1.bf16.msra.mxu0 %v3091
    %4970 = vmatprep.subr.bf16.mxu0 %v3105
    %4971 = vmatpush1.bf16.msra.mxu0 %v3104
    %4972 = vmatprep.subr.bf16.mxu0 %v3118
    %4973 = vmatpush1.bf16.msra.mxu0 %v3117
    %4974 = vmatprep.subr.bf16.mxu0 %v3131
    %4975 = vmatpush1.bf16.msra.mxu0 %v3130
    %4976 = vmatprep.subr.bf16.mxu0 %v3144
    %4977 = vmatpush1.bf16.msra.mxu0 %v3143
    %4978 = vmatprep.subr.bf16.mxu0 %v3157
    %4979 = vmatpush1.bf16.msra.mxu0 %v3156
    %4980 = vmatprep.subr.bf16.mxu0 %v3170
    %4981 = vmatpush1.bf16.msra.mxu0 %v3169
    %4982 = vmatprep.subr.bf16.mxu0 %v3183
    %4983 = vmatpush1.bf16.msra.mxu0 %v3182
    %4984 = vmatprep.subr.bf16.mxu0 %v3196
    %4985 = vmatpush1.bf16.msra.mxu0 %v3195
    %4986 = vmatprep.subr.bf16.mxu0 %v3209
    %4987 = vmatpush1.bf16.msra.mxu0 %v3208
    %4988 = vmatprep.subr.bf16.mxu0 %v3222
    %4989 = vmatpush1.bf16.msra.mxu0 %v3221
    %4990 = vmatprep.subr.bf16.mxu0 %v3235
    %4991 = vmatpush1.bf16.msra.mxu0 %v3234
    %4992 = vmatprep.mubr.bf16.mxu0 %v102
    %4993 = vmatmul.mubr.bf16.gmra.mrb[0].mxu0 %v101
    %v4994 = vpop.f32.mrb[0].mxu0
    %v4995 = vadd.f32 %v4954, %v4994
    %v4996 = vpop.f32.mrb[0].mxu0
    %v4997 = vadd.f32 %v4956, %v4996
    %v4998 = vpop.f32.mrb[0].mxu0
    %v4999 = vpop.f32.mrb[0].mxu0
    %5000 = vdwg.mxu0
    %5001 = vmatprep.subr.bf16.mxu0 %v3248
    %5002 = vmatpush1.bf16.msra.mxu0 %v3247
    %5003 = vmatprep.subr.bf16.mxu0 %v3261
    %5004 = vmatpush1.bf16.msra.mxu0 %v3260
    %5005 = vmatprep.subr.bf16.mxu0 %v3274
    %5006 = vmatpush1.bf16.msra.mxu0 %v3273
    %5007 = vmatprep.subr.bf16.mxu0 %v3287
    %5008 = vmatpush1.bf16.msra.mxu0 %v3286
    %5009 = vmatprep.subr.bf16.mxu0 %v3300
    %5010 = vmatpush1.bf16.msra.mxu0 %v3299
    %5011 = vmatprep.subr.bf16.mxu0 %v3313
    %5012 = vmatpush1.bf16.msra.mxu0 %v3312
    %5013 = vmatprep.subr.bf16.mxu0 %v3326
    %5014 = vmatpush1.bf16.msra.mxu0 %v3325
    %5015 = vmatprep.subr.bf16.mxu0 %v3339
    %5016 = vmatpush1.bf16.msra.mxu0 %v3338
    %5017 = vmatprep.subr.bf16.mxu0 %v3352
    %5018 = vmatpush1.bf16.msra.mxu0 %v3351
    %5019 = vmatprep.subr.bf16.mxu0 %v3365
    %5020 = vmatpush1.bf16.msra.mxu0 %v3364
    %5021 = vmatprep.subr.bf16.mxu0 %v3378
    %5022 = vmatpush1.bf16.msra.mxu0 %v3377
    %5023 = vmatprep.subr.bf16.mxu0 %v3391
    %5024 = vmatpush1.bf16.msra.mxu0 %v3390
    %5025 = vmatprep.subr.bf16.mxu0 %v3404
    %5026 = vmatpush1.bf16.msra.mxu0 %v3403
    %5027 = vmatprep.subr.bf16.mxu0 %v3417
    %5028 = vmatpush1.bf16.msra.mxu0 %v3416
    %5029 = vmatprep.subr.bf16.mxu0 %v3430
    %5030 = vmatpush1.bf16.msra.mxu0 %v3429
    %5031 = vmatprep.subr.bf16.mxu0 %v3443
    %5032 = vmatpush1.bf16.msra.mxu0 %v3442
    %5033 = vmatprep.mubr.bf16.mxu0 %v104
    %5034 = vmatmul.mubr.bf16.gmra.mrb[0].mxu0 %v103
    %v5035 = vpop.f32.mrb[0].mxu0
    %v5036 = vadd.f32 %v4995, %v5035
    %v5037 = vpop.f32.mrb[0].mxu0
    %v5038 = vadd.f32 %v4997, %v5037
    %v5039 = vpop.f32.mrb[0].mxu0
    %v5040 = vpop.f32.mrb[0].mxu0
    %5041 = vdwg.mxu0
    %5042 = vmatprep.subr.bf16.mxu0 %v3456
    %5043 = vmatpush1.bf16.msra.mxu0 %v3455
    %5044 = vmatprep.subr.bf16.mxu0 0
    %5045 = vmatpush1.bf16.msra.mxu0 0
    %5046 = vmatprep.subr.bf16.mxu0 0
    %5047 = vmatpush1.bf16.msra.mxu0 0
    %5048 = vmatprep.subr.bf16.mxu0 0
    %5049 = vmatpush1.bf16.msra.mxu0 0
    %5050 = vmatprep.subr.bf16.mxu0 0
    %5051 = vmatpush1.bf16.msra.mxu0 0
    %5052 = vmatprep.subr.bf16.mxu0 0
    %5053 = vmatpush1.bf16.msra.mxu0 0
    %5054 = vmatprep.subr.bf16.mxu0 0
    %5055 = vmatpush1.bf16.msra.mxu0 0
    %5056 = vmatprep.subr.bf16.mxu0 0
    %5057 = vmatpush1.bf16.msra.mxu0 0
    %5058 = vmatprep.subr.bf16.mxu0 0
    %5059 = vmatpush1.bf16.msra.mxu0 0
    %5060 = vmatprep.subr.bf16.mxu0 0
    %5061 = vmatpush1.bf16.msra.mxu0 0
    %5062 = vmatprep.subr.bf16.mxu0 0
    %5063 = vmatpush1.bf16.msra.mxu0 0
    %5064 = vmatprep.subr.bf16.mxu0 0
    %5065 = vmatpush1.bf16.msra.mxu0 0
    %5066 = vmatprep.subr.bf16.mxu0 0
    %5067 = vmatpush1.bf16.msra.mxu0 0
    %5068 = vmatprep.subr.bf16.mxu0 0
    %5069 = vmatpush1.bf16.msra.mxu0 0
    %5070 = vmatprep.subr.bf16.mxu0 0
    %5071 = vmatpush1.bf16.msra.mxu0 0
    %5072 = vmatprep.subr.bf16.mxu0 0
    %5073 = vmatpush1.bf16.msra.mxu0 0
    %5074 = vmatprep.mubr.bf16.mxu0 0
    %5075 = vmatmul.mubr.bf16.gmra.mrb[0].mxu0 %v4097
    %v5076 = vpop.f32.mrb[0].mxu0
    %v5077 = vadd.f32 %v5036, %v5076
    %v5078 = vpop.f32.mrb[0].mxu0
    %v5079 = vadd.f32 %v5038, %v5078
    %v5080 = vpop.f32.mrb[0].mxu0
    %v5081 = vpop.f32.mrb[0].mxu0
    %5082 = vdwg.mxu0
    %5083 = vmatprep.subr.bf16.mxu0 0
    %5084 = vmatpush1.bf16.msra.mxu0 %v2833
    %5085 = vmatprep.subr.bf16.mxu0 0
    %5086 = vmatpush1.bf16.msra.mxu0 %v2846
    %5087 = vmatprep.subr.bf16.mxu0 0
    %5088 = vmatpush1.bf16.msra.mxu0 %v2859
    %5089 = vmatprep.subr.bf16.mxu0 0
    %5090 = vmatpush1.bf16.msra.mxu0 %v2872
    %5091 = vmatprep.subr.bf16.mxu0 0
    %5092 = vmatpush1.bf16.msra.mxu0 %v2885
    %5093 = vmatprep.subr.bf16.mxu0 0
    %5094 = vmatpush1.bf16.msra.mxu0 %v2898
    %5095 = vmatprep.subr.bf16.mxu0 0
    %5096 = vmatpush1.bf16.msra.mxu0 %v2911
    %5097 = vmatprep.subr.bf16.mxu0 0
    %5098 = vmatpush1.bf16.msra.mxu0 %v2924
    %5099 = vmatprep.subr.bf16.mxu0 0
    %5100 = vmatpush1.bf16.msra.mxu0 %v2937
    %5101 = vmatprep.subr.bf16.mxu0 0
    %5102 = vmatpush1.bf16.msra.mxu0 %v2950
    %5103 = vmatprep.subr.bf16.mxu0 0
    %5104 = vmatpush1.bf16.msra.mxu0 %v2963
    %5105 = vmatprep.subr.bf16.mxu0 0
    %5106 = vmatpush1.bf16.msra.mxu0 %v2976
    %5107 = vmatprep.subr.bf16.mxu0 0
    %5108 = vmatpush1.bf16.msra.mxu0 %v2989
    %5109 = vmatprep.subr.bf16.mxu0 0
    %5110 = vmatpush1.bf16.msra.mxu0 %v3002
    %5111 = vmatprep.subr.bf16.mxu0 0
    %5112 = vmatpush1.bf16.msra.mxu0 %v3015
    %5113 = vmatprep.subr.bf16.mxu0 0
    %5114 = vmatpush1.bf16.msra.mxu0 %v3028
    %5115 = vmatprep.mubr.bf16.mxu0 %v100
    %5116 = vmatmul.mubr.bf16.gmra.mrb[0].mxu0 %v99
    %v5117 = vpop.f32.mrb[0].mxu0
    %v5118 = vadd.f32 %v847, %v5117
    %v5119 = vpop.f32.mrb[0].mxu0
    %v5120 = vpop.f32.mrb[0].mxu0
    %v5121 = vpop.f32.mrb[0].mxu0
    %5122 = vdwg.mxu0
    %5123 = vmatprep.subr.bf16.mxu0 0
    %5124 = vmatpush1.bf16.msra.mxu0 %v3041
    %5125 = vmatprep.subr.bf16.mxu0 0
    %5126 = vmatpush1.bf16.msra.mxu0 %v3054
    %5127 = vmatprep.subr.bf16.mxu0 0
    %5128 = vmatpush1.bf16.msra.mxu0 %v3067
    %5129 = vmatprep.subr.bf16.mxu0 0
    %5130 = vmatpush1.bf16.msra.mxu0 %v3080
    %5131 = vmatprep.subr.bf16.mxu0 0
    %5132 = vmatpush1.bf16.msra.mxu0 %v3093
    %5133 = vmatprep.subr.bf16.mxu0 0
    %5134 = vmatpush1.bf16.msra.mxu0 %v3106
    %5135 = vmatprep.subr.bf16.mxu0 0
    %5136 = vmatpush1.bf16.msra.mxu0 %v3119
    %5137 = vmatprep.subr.bf16.mxu0 0
    %5138 = vmatpush1.bf16.msra.mxu0 %v3132
    %5139 = vmatprep.subr.bf16.mxu0 0
    %5140 = vmatpush1.bf16.msra.mxu0 %v3145
    %5141 = vmatprep.subr.bf16.mxu0 0
    %5142 = vmatpush1.bf16.msra.mxu0 %v3158
    %5143 = vmatprep.subr.bf16.mxu0 0
    %5144 = vmatpush1.bf16.msra.mxu0 %v3171
    %5145 = vmatprep.subr.bf16.mxu0 0
    %5146 = vmatpush1.bf16.msra.mxu0 %v3184
    %5147 = vmatprep.subr.bf16.mxu0 0
    %5148 = vmatpush1.bf16.msra.mxu0 %v3197
    %5149 = vmatprep.subr.bf16.mxu0 0
    %5150 = vmatpush1.bf16.msra.mxu0 %v3210
    %5151 = vmatprep.subr.bf16.mxu0 0
    %5152 = vmatpush1.bf16.msra.mxu0 %v3223
    %5153 = vmatprep.subr.bf16.mxu0 0
    %5154 = vmatpush1.bf16.msra.mxu0 %v3236
    %5155 = vmatprep.mubr.bf16.mxu0 %v102
    %5156 = vmatmul.mubr.bf16.gmra.mrb[0].mxu0 %v101
    %v5157 = vpop.f32.mrb[0].mxu0
    %v5158 = vadd.f32 %v5118, %v5157
    %v5159 = vpop.f32.mrb[0].mxu0
    %v5160 = vpop.f32.mrb[0].mxu0
    %v5161 = vpop.f32.mrb[0].mxu0
    %5162 = vdwg.mxu0
    %5163 = vmatprep.subr.bf16.mxu0 0
    %5164 = vmatpush1.bf16.msra.mxu0 %v3249
    %5165 = vmatprep.subr.bf16.mxu0 0
    %5166 = vmatpush1.bf16.msra.mxu0 %v3262
    %5167 = vmatprep.subr.bf16.mxu0 0
    %5168 = vmatpush1.bf16.msra.mxu0 %v3275
    %5169 = vmatprep.subr.bf16.mxu0 0
    %5170 = vmatpush1.bf16.msra.mxu0 %v3288
    %5171 = vmatprep.subr.bf16.mxu0 0
    %5172 = vmatpush1.bf16.msra.mxu0 %v3301
    %5173 = vmatprep.subr.bf16.mxu0 0
    %5174 = vmatpush1.bf16.msra.mxu0 %v3314
    %5175 = vmatprep.subr.bf16.mxu0 0
    %5176 = vmatpush1.bf16.msra.mxu0 %v3327
    %5177 = vmatprep.subr.bf16.mxu0 0
    %5178 = vmatpush1.bf16.msra.mxu0 %v3340
    %5179 = vmatprep.subr.bf16.mxu0 0
    %5180 = vmatpush1.bf16.msra.mxu0 %v3353
    %5181 = vmatprep.subr.bf16.mxu0 0
    %5182 = vmatpush1.bf16.msra.mxu0 %v3366
    %5183 = vmatprep.subr.bf16.mxu0 0
    %5184 = vmatpush1.bf16.msra.mxu0 %v3379
    %5185 = vmatprep.subr.bf16.mxu0 0
    %5186 = vmatpush1.bf16.msra.mxu0 %v3392
    %5187 = vmatprep.subr.bf16.mxu0 0
    %5188 = vmatpush1.bf16.msra.mxu0 %v3405
    %5189 = vmatprep.subr.bf16.mxu0 0
    %5190 = vmatpush1.bf16.msra.mxu0 %v3418
    %5191 = vmatprep.subr.bf16.mxu0 0
    %5192 = vmatpush1.bf16.msra.mxu0 %v3431
    %5193 = vmatprep.subr.bf16.mxu0 0
    %5194 = vmatpush1.bf16.msra.mxu0 %v3444
    %5195 = vmatprep.mubr.bf16.mxu0 %v104
    %5196 = vmatmul.mubr.bf16.gmra.mrb[0].mxu0 %v103
    %v5197 = vpop.f32.mrb[0].mxu0
    %v5198 = vadd.f32 %v5158, %v5197
    %v5199 = vpop.f32.mrb[0].mxu0
    %v5200 = vpop.f32.mrb[0].mxu0
    %v5201 = vpop.f32.mrb[0].mxu0
    %5202 = vdwg.mxu0
    %5203 = vmatprep.subr.bf16.mxu0 0
    %5204 = vmatpush1.bf16.msra.mxu0 %v3457
    %5205 = vmatprep.subr.bf16.mxu0 0
    %5206 = vmatpush1.bf16.msra.mxu0 0
    %5207 = vmatprep.subr.bf16.mxu0 0
    %5208 = vmatpush1.bf16.msra.mxu0 0
    %5209 = vmatprep.subr.bf16.mxu0 0
    %5210 = vmatpush1.bf16.msra.mxu0 0
    %5211 = vmatprep.subr.bf16.mxu0 0
    %5212 = vmatpush1.bf16.msra.mxu0 0
    %5213 = vmatprep.subr.bf16.mxu0 0
    %5214 = vmatpush1.bf16.msra.mxu0 0
    %5215 = vmatprep.subr.bf16.mxu0 0
    %5216 = vmatpush1.bf16.msra.mxu0 0
    %5217 = vmatprep.subr.bf16.mxu0 0
    %5218 = vmatpush1.bf16.msra.mxu0 0
    %5219 = vmatprep.subr.bf16.mxu0 0
    %5220 = vmatpush1.bf16.msra.mxu0 0
    %5221 = vmatprep.subr.bf16.mxu0 0
    %5222 = vmatpush1.bf16.msra.mxu0 0
    %5223 = vmatprep.subr.bf16.mxu0 0
    %5224 = vmatpush1.bf16.msra.mxu0 0
    %5225 = vmatprep.subr.bf16.mxu0 0
    %5226 = vmatpush1.bf16.msra.mxu0 0
    %5227 = vmatprep.subr.bf16.mxu0 0
    %5228 = vmatpush1.bf16.msra.mxu0 0
    %5229 = vmatprep.subr.bf16.mxu0 0
    %5230 = vmatpush1.bf16.msra.mxu0 0
    %5231 = vmatprep.subr.bf16.mxu0 0
    %5232 = vmatpush1.bf16.msra.mxu0 0
    %5233 = vmatprep.subr.bf16.mxu0 0
    %5234 = vmatpush1.bf16.msra.mxu0 0
    %5235 = vmatprep.mubr.bf16.mxu0 0
    %5236 = vmatmul.mubr.bf16.gmra.mrb[0].mxu0 %v4097
    %v5237 = vpop.f32.mrb[0].mxu0
    %v5238 = vadd.f32 %v5198, %v5237
    %v5239 = vpop.f32.mrb[0].mxu0
    %v5240 = vpop.f32.mrb[0].mxu0
    %v5241 = vpop.f32.mrb[0].mxu0
    %5242 = vdwg.mxu0
    %v5243 = vmax.f32 %v4257, 0.0
    %v5244 = vmax.f32 %v4259, 0.0
    %v5245 = vmax.f32 %v4421, 0.0
    %v5246 = vmax.f32 %v4423, 0.0
    %v5247 = vmax.f32 %v4585, 0.0
    %v5248 = vmax.f32 %v4587, 0.0
    %v5249 = vmax.f32 %v4749, 0.0
    %v5250 = vmax.f32 %v4751, 0.0
    %v5251 = vmax.f32 %v4913, 0.0
    %v5252 = vmax.f32 %v4915, 0.0
    %v5253 = vmax.f32 %v5077, 0.0
    %v5254 = vmax.f32 %v5079, 0.0
    %v5255 = vmax.f32 %v5238, 0.0
    %v5256 = vpack.c.bf16 %v5243, %v5243
    %v5257 = vpack.c.bf16 %v5244, %v5244
    %v5258 = vpack.c.bf16 %v5245, %v5245
    %v5259 = vpack.c.bf16 %v5246, %v5246
    %v5260 = vpack.c.bf16 %v5247, %v5247
    %v5261 = vpack.c.bf16 %v5248, %v5248
    %v5262 = vpack.c.bf16 %v5249, %v5249
    %v5263 = vpack.c.bf16 %v5250, %v5250
    %v5264 = vpack.c.bf16 %v5251, %v5251
    %v5265 = vpack.c.bf16 %v5252, %v5252
    %v5266 = vpack.c.bf16 %v5253, %v5253
    %v5267 = vpack.c.bf16 %v5254, %v5254
    %v5268 = vpack.c.bf16 %v5255, %v5255
    %v5269 = vld [vmem:[%s3] sm:$0xff]
    %v5270 = vld [vmem:[%s3 + $0x8] sm:$0xff]
    %v5271 = vld [vmem:[%s3 + $0x10] sm:$0xff]
    %v5272 = vld [vmem:[%s3 + $0x18] sm:$0xf]
    %v5273 = vld [vmem:[%s3 + $0x1c] sm:$0xff]
    %v5274 = vld [vmem:[%s3 + $0x24] sm:$0xff]
    %v5275 = vld [vmem:[%s3 + $0x2c] sm:$0xff]
    %v5276 = vld [vmem:[%s3 + $0x34] sm:$0xf]
    %v5277 = vld [vmem:[%s3 + $0x38] sm:$0xff]
    %v5278 = vld [vmem:[%s3 + $0x40] sm:$0xff]
    %v5279 = vld [vmem:[%s3 + $0x48] sm:$0xff]
    %v5280 = vld [vmem:[%s3 + $0x50] sm:$0xf]
    %v5281 = vld [vmem:[%s3 + $0x54] sm:$0xff]
    %v5282 = vld [vmem:[%s3 + $0x5c] sm:$0xff]
    %v5283 = vld [vmem:[%s3 + $0x64] sm:$0xff]
    %v5284 = vld [vmem:[%s3 + $0x6c] sm:$0xf]
    %v5285 = vld [vmem:[%s3 + $0x70] sm:$0xff]
    %v5286 = vld [vmem:[%s3 + $0x78] sm:$0xff]
    %v5287 = vld [vmem:[%s3 + $0x80] sm:$0xff]
    %v5288 = vld [vmem:[%s3 + $0x88] sm:$0xf]
    %v5289 = vld [vmem:[%s3 + $0x8c] sm:$0xff]
    %v5290 = vld [vmem:[%s3 + $0x94] sm:$0xff]
    %v5291 = vld [vmem:[%s3 + $0x9c] sm:$0xff]
    %v5292 = vld [vmem:[%s3 + $0xa4] sm:$0xf]
    %v5293 = vld [vmem:[%s3 + $0xa8] sm:$0xff]
    %v5294 = vld [vmem:[%s3 + $0xb0] sm:$0xff]
    %v5295 = vld [vmem:[%s3 + $0xb8] sm:$0xff]
    %v5296 = vld [vmem:[%s3 + $0xc0] sm:$0xf]
    %v5297 = vld [vmem:[%s3 + $0xc4] sm:$0xff]
    %v5298 = vld [vmem:[%s3 + $0xcc] sm:$0xff]
    %v5299 = vld [vmem:[%s3 + $0xd4] sm:$0xff]
    %v5300 = vld [vmem:[%s3 + $0xdc] sm:$0xf]
    %v5301 = vld [vmem:[%s3 + $0xe0] sm:$0xff]
    %v5302 = vld [vmem:[%s3 + $0xe8] sm:$0xff]
    %v5303 = vld [vmem:[%s3 + $0xf0] sm:$0xff]
    %v5304 = vld [vmem:[%s3 + $0xf8] sm:$0xf]
    %v5305 = vld [vmem:[%s3 + $0xfc] sm:$0xff]
    %v5306 = vld [vmem:[%s3 + $0x104] sm:$0xff]
    %v5307 = vld [vmem:[%s3 + $0x10c] sm:$0xff]
    %v5308 = vld [vmem:[%s3 + $0x114] sm:$0xf]
    %v5309 = vld [vmem:[%s3 + $0x118] sm:$0xff]
    %v5310 = vld [vmem:[%s3 + $0x120] sm:$0xff]
    %v5311 = vld [vmem:[%s3 + $0x128] sm:$0xff]
    %v5312 = vld [vmem:[%s3 + $0x130] sm:$0xf]
    %v5313 = vld [vmem:[%s3 + $0x134] sm:$0xff]
    %v5314 = vld [vmem:[%s3 + $0x13c] sm:$0xff]
    %v5315 = vld [vmem:[%s3 + $0x144] sm:$0xff]
    %v5316 = vld [vmem:[%s3 + $0x14c] sm:$0xf]
    %v5317 = vld [vmem:[%s3 + $0x150] sm:$0xff]
    %v5318 = vld [vmem:[%s3 + $0x158] sm:$0xff]
    %v5319 = vld [vmem:[%s3 + $0x160] sm:$0xff]
    %v5320 = vld [vmem:[%s3 + $0x168] sm:$0xf]
    %v5321 = vld [vmem:[%s3 + $0x16c] sm:$0xff]
    %v5322 = vld [vmem:[%s3 + $0x174] sm:$0xff]
    %v5323 = vld [vmem:[%s3 + $0x17c] sm:$0xff]
    %v5324 = vld [vmem:[%s3 + $0x184] sm:$0xf]
    %v5325 = vld [vmem:[%s3 + $0x188] sm:$0xff]
    %v5326 = vld [vmem:[%s3 + $0x190] sm:$0xff]
    %v5327 = vld [vmem:[%s3 + $0x198] sm:$0xff]
    %v5328 = vld [vmem:[%s3 + $0x1a0] sm:$0xf]
    %v5329 = vld [vmem:[%s3 + $0x1a4] sm:$0xff]
    %v5330 = vld [vmem:[%s3 + $0x1ac] sm:$0xff]
    %v5331 = vld [vmem:[%s3 + $0x1b4] sm:$0xff]
    %v5332 = vld [vmem:[%s3 + $0x1bc] sm:$0xf]
    %v5333 = vld [vmem:[%s3 + $0x1c0] sm:$0xff]
    %v5334 = vld [vmem:[%s3 + $0x1c8] sm:$0xff]
    %v5335 = vld [vmem:[%s3 + $0x1d0] sm:$0xff]
    %v5336 = vld [vmem:[%s3 + $0x1d8] sm:$0xf]
    %v5337 = vld [vmem:[%s3 + $0x1dc] sm:$0xff]
    %v5338 = vld [vmem:[%s3 + $0x1e4] sm:$0xff]
    %v5339 = vld [vmem:[%s3 + $0x1ec] sm:$0xff]
    %v5340 = vld [vmem:[%s3 + $0x1f4] sm:$0xf]
    %v5341 = vld [vmem:[%s3 + $0x1f8] sm:$0xff]
    %v5342 = vld [vmem:[%s3 + $0x200] sm:$0xff]
    %v5343 = vld [vmem:[%s3 + $0x208] sm:$0xff]
    %v5344 = vld [vmem:[%s3 + $0x210] sm:$0xf]
    %v5345 = vld [vmem:[%s3 + $0x214] sm:$0xff]
    %v5346 = vld [vmem:[%s3 + $0x21c] sm:$0xff]
    %v5347 = vld [vmem:[%s3 + $0x224] sm:$0xff]
    %v5348 = vld [vmem:[%s3 + $0x22c] sm:$0xf]
    %v5349 = vld [vmem:[%s3 + $0x230] sm:$0xff]
    %v5350 = vld [vmem:[%s3 + $0x238] sm:$0xff]
    %v5351 = vld [vmem:[%s3 + $0x240] sm:$0xff]
    %v5352 = vld [vmem:[%s3 + $0x248] sm:$0xf]
    %v5353 = vld [vmem:[%s3 + $0x24c] sm:$0xff]
    %v5354 = vld [vmem:[%s3 + $0x254] sm:$0xff]
    %v5355 = vld [vmem:[%s3 + $0x25c] sm:$0xff]
    %v5356 = vld [vmem:[%s3 + $0x264] sm:$0xf]
    %v5357 = vld [vmem:[%s3 + $0x268] sm:$0xff]
    %v5358 = vld [vmem:[%s3 + $0x270] sm:$0xff]
    %v5359 = vld [vmem:[%s3 + $0x278] sm:$0xff]
    %v5360 = vld [vmem:[%s3 + $0x280] sm:$0xf]
    %v5361 = vld [vmem:[%s3 + $0x284] sm:$0xff]
    %v5362 = vld [vmem:[%s3 + $0x28c] sm:$0xff]
    %v5363 = vld [vmem:[%s3 + $0x294] sm:$0xff]
    %v5364 = vld [vmem:[%s3 + $0x29c] sm:$0xf]
    %v5365 = vld [vmem:[%s3 + $0x2a0] sm:$0xff]
    %v5366 = vld [vmem:[%s3 + $0x2a8] sm:$0xff]
    %v5367 = vld [vmem:[%s3 + $0x2b0] sm:$0xff]
    %v5368 = vld [vmem:[%s3 + $0x2b8] sm:$0xf]
    %v5369 = vld [vmem:[%s3 + $0x2bc] sm:$0xff]
    %v5370 = vld [vmem:[%s3 + $0x2c4] sm:$0xff]
    %v5371 = vld [vmem:[%s3 + $0x2cc] sm:$0xff]
    %v5372 = vld [vmem:[%s3 + $0x2d4] sm:$0xf]
    %v5373 = vld [vmem:[%s3 + $0x2d8] sm:$0xff]
    %v5374 = vld [vmem:[%s3 + $0x2e0] sm:$0xff]
    %v5375 = vld [vmem:[%s3 + $0x2e8] sm:$0xff]
    %v5376 = vld [vmem:[%s3 + $0x2f0] sm:$0xf]
    %v5377 = vld [vmem:[%s3 + $0x2f4] sm:$0xff]
    %v5378 = vld [vmem:[%s3 + $0x2fc] sm:$0xff]
    %v5379 = vld [vmem:[%s3 + $0x304] sm:$0xff]
    %v5380 = vld [vmem:[%s3 + $0x30c] sm:$0xf]
    %v5381 = vld [vmem:[%s3 + $0x310] sm:$0xff]
    %v5382 = vld [vmem:[%s3 + $0x318] sm:$0xff]
    %v5383 = vld [vmem:[%s3 + $0x320] sm:$0xff]
    %v5384 = vld [vmem:[%s3 + $0x328] sm:$0xf]
    %v5385 = vld [vmem:[%s3 + $0x32c] sm:$0xff]
    %v5386 = vld [vmem:[%s3 + $0x334] sm:$0xff]
    %v5387 = vld [vmem:[%s3 + $0x33c] sm:$0xff]
    %v5388 = vld [vmem:[%s3 + $0x344] sm:$0xf]
    %v5389 = vld [vmem:[%s3 + $0x348] sm:$0xff]
    %v5390 = vld [vmem:[%s3 + $0x350] sm:$0xff]
    %v5391 = vld [vmem:[%s3 + $0x358] sm:$0xff]
    %v5392 = vld [vmem:[%s3 + $0x360] sm:$0xf]
    %v5393 = vld [vmem:[%s3 + $0x364] sm:$0xff]
    %v5394 = vld [vmem:[%s3 + $0x36c] sm:$0xff]
    %v5395 = vld [vmem:[%s3 + $0x374] sm:$0xff]
    %v5396 = vld [vmem:[%s3 + $0x37c] sm:$0xf]
    %v5397 = vld [vmem:[%s3 + $0x380] sm:$0xff]
    %v5398 = vld [vmem:[%s3 + $0x388] sm:$0xff]
    %v5399 = vld [vmem:[%s3 + $0x390] sm:$0xff]
    %v5400 = vld [vmem:[%s3 + $0x398] sm:$0xf]
    %v5401 = vld [vmem:[%s3 + $0x39c] sm:$0xff]
    %v5402 = vld [vmem:[%s3 + $0x3a4] sm:$0xff]
    %v5403 = vld [vmem:[%s3 + $0x3ac] sm:$0xff]
    %v5404 = vld [vmem:[%s3 + $0x3b4] sm:$0xf]
    %v5405 = vld [vmem:[%s3 + $0x3b8] sm:$0xff]
    %v5406 = vld [vmem:[%s3 + $0x3c0] sm:$0xff]
    %v5407 = vld [vmem:[%s3 + $0x3c8] sm:$0xff]
    %v5408 = vld [vmem:[%s3 + $0x3d0] sm:$0xf]
    %v5409 = vld [vmem:[%s3 + $0x3d4] sm:$0xff]
    %v5410 = vld [vmem:[%s3 + $0x3dc] sm:$0xff]
    %v5411 = vld [vmem:[%s3 + $0x3e4] sm:$0xff]
    %v5412 = vld [vmem:[%s3 + $0x3ec] sm:$0xf]
    %v5413 = vld [vmem:[%s3 + $0x3f0] sm:$0xff]
    %v5414 = vld [vmem:[%s3 + $0x3f8] sm:$0xff]
    %v5415 = vld [vmem:[%s3 + $0x400] sm:$0xff]
    %v5416 = vld [vmem:[%s3 + $0x408] sm:$0xf]
    %v5417 = vld [vmem:[%s3 + $0x40c] sm:$0xff]
    %v5418 = vld [vmem:[%s3 + $0x414] sm:$0xff]
    %v5419 = vld [vmem:[%s3 + $0x41c] sm:$0xff]
    %v5420 = vld [vmem:[%s3 + $0x424] sm:$0xf]
    %v5421 = vld [vmem:[%s3 + $0x428] sm:$0xff]
    %v5422 = vld [vmem:[%s3 + $0x430] sm:$0xff]
    %v5423 = vld [vmem:[%s3 + $0x438] sm:$0xff]
    %v5424 = vld [vmem:[%s3 + $0x440] sm:$0xf]
    %v5425 = vld [vmem:[%s3 + $0x444] sm:$0xff]
    %v5426 = vld [vmem:[%s3 + $0x44c] sm:$0xff]
    %v5427 = vld [vmem:[%s3 + $0x454] sm:$0xff]
    %v5428 = vld [vmem:[%s3 + $0x45c] sm:$0xf]
    %v5429 = vld [vmem:[%s3 + $0x460] sm:$0xff]
    %v5430 = vld [vmem:[%s3 + $0x468] sm:$0xff]
    %v5431 = vld [vmem:[%s3 + $0x470] sm:$0xff]
    %v5432 = vld [vmem:[%s3 + $0x478] sm:$0xf]
    %v5433 = vld [vmem:[%s3 + $0x47c] sm:$0xff]
    %v5434 = vld [vmem:[%s3 + $0x484] sm:$0xff]
    %v5435 = vld [vmem:[%s3 + $0x48c] sm:$0xff]
    %v5436 = vld [vmem:[%s3 + $0x494] sm:$0xf]
    %v5437 = vld [vmem:[%s3 + $0x498] sm:$0xff]
    %v5438 = vld [vmem:[%s3 + $0x4a0] sm:$0xff]
    %v5439 = vld [vmem:[%s3 + $0x4a8] sm:$0xff]
    %v5440 = vld [vmem:[%s3 + $0x4b0] sm:$0xf]
    %v5441 = vld [vmem:[%s3 + $0x4b4] sm:$0xff]
    %v5442 = vld [vmem:[%s3 + $0x4bc] sm:$0xff]
    %v5443 = vld [vmem:[%s3 + $0x4c4] sm:$0xff]
    %v5444 = vld [vmem:[%s3 + $0x4cc] sm:$0xf]
    %v5445 = vld [vmem:[%s3 + $0x4d0] sm:$0xff]
    %v5446 = vld [vmem:[%s3 + $0x4d8] sm:$0xff]
    %v5447 = vld [vmem:[%s3 + $0x4e0] sm:$0xff]
    %v5448 = vld [vmem:[%s3 + $0x4e8] sm:$0xf]
    %v5449 = vld [vmem:[%s3 + $0x4ec] sm:$0xff]
    %v5450 = vld [vmem:[%s3 + $0x4f4] sm:$0xff]
    %v5451 = vld [vmem:[%s3 + $0x4fc] sm:$0xff]
    %v5452 = vld [vmem:[%s3 + $0x504] sm:$0xf]
    %v5453 = vld [vmem:[%s3 + $0x508] sm:$0xff]
    %v5454 = vld [vmem:[%s3 + $0x510] sm:$0xff]
    %v5455 = vld [vmem:[%s3 + $0x518] sm:$0xff]
    %v5456 = vld [vmem:[%s3 + $0x520] sm:$0xf]
    %v5457 = vld [vmem:[%s3 + $0x524] sm:$0xff]
    %v5458 = vld [vmem:[%s3 + $0x52c] sm:$0xff]
    %v5459 = vld [vmem:[%s3 + $0x534] sm:$0xff]
    %v5460 = vld [vmem:[%s3 + $0x53c] sm:$0xf]
    %v5461 = vld [vmem:[%s3 + $0x540] sm:$0xff]
    %v5462 = vld [vmem:[%s3 + $0x548] sm:$0xff]
    %v5463 = vld [vmem:[%s3 + $0x550] sm:$0xff]
    %v5464 = vld [vmem:[%s3 + $0x558] sm:$0xf]
    %v5465 = vld [vmem:[%s3 + $0x55c] sm:$0xff]
    %v5466 = vld [vmem:[%s3 + $0x564] sm:$0xff]
    %v5467 = vld [vmem:[%s3 + $0x56c] sm:$0xff]
    %v5468 = vld [vmem:[%s3 + $0x574] sm:$0xf]
    %v5469 = vld [vmem:[%s3 + $0x578] sm:$0xff]
    %v5470 = vld [vmem:[%s3 + $0x580] sm:$0xff]
    %v5471 = vld [vmem:[%s3 + $0x588] sm:$0xff]
    %v5472 = vld [vmem:[%s3 + $0x590] sm:$0xf]
    %v5473 = vld [vmem:[%s3 + $0x594] sm:$0xff]
    %v5474 = vld [vmem:[%s3 + $0x59c] sm:$0xff]
    %v5475 = vld [vmem:[%s3 + $0x5a4] sm:$0xff]
    %v5476 = vld [vmem:[%s3 + $0x5ac] sm:$0xf]
    %v5477 = vld [vmem:[%s3 + $0x5b0] sm:$0xff]
    %v5478 = vld [vmem:[%s3 + $0x5b8] sm:$0xff]
    %v5479 = vld [vmem:[%s3 + $0x5c0] sm:$0xff]
    %v5480 = vld [vmem:[%s3 + $0x5c8] sm:$0xf]
    %v5481 = vld [vmem:[%s3 + $0x5cc] sm:$0xff]
    %v5482 = vld [vmem:[%s3 + $0x5d4] sm:$0xff]
    %v5483 = vld [vmem:[%s3 + $0x5dc] sm:$0xff]
    %v5484 = vld [vmem:[%s3 + $0x5e4] sm:$0xf]
    %v5485 = vld [vmem:[%s3 + $0x5e8] sm:$0xff]
    %v5486 = vld [vmem:[%s3 + $0x5f0] sm:$0xff]
    %v5487 = vld [vmem:[%s3 + $0x5f8] sm:$0xff]
    %v5488 = vld [vmem:[%s3 + $0x600] sm:$0xf]
    %v5489 = vld [vmem:[%s3 + $0x604] sm:$0xff]
    %v5490 = vld [vmem:[%s3 + $0x60c] sm:$0xff]
    %v5491 = vld [vmem:[%s3 + $0x614] sm:$0xff]
    %v5492 = vld [vmem:[%s3 + $0x61c] sm:$0xf]
    %v5493 = vld [vmem:[%s3 + $0x620] sm:$0xff]
    %v5494 = vld [vmem:[%s3 + $0x628] sm:$0xff]
    %v5495 = vld [vmem:[%s3 + $0x630] sm:$0xff]
    %v5496 = vld [vmem:[%s3 + $0x638] sm:$0xf]
    %v5497 = vld [vmem:[%s3 + $0x63c] sm:$0xff]
    %v5498 = vld [vmem:[%s3 + $0x644] sm:$0xff]
    %v5499 = vld [vmem:[%s3 + $0x64c] sm:$0xff]
    %v5500 = vld [vmem:[%s3 + $0x654] sm:$0xf]
    %v5501 = vld [vmem:[%s3 + $0x658] sm:$0xff]
    %v5502 = vld [vmem:[%s3 + $0x660] sm:$0xff]
    %v5503 = vld [vmem:[%s3 + $0x668] sm:$0xff]
    %v5504 = vld [vmem:[%s3 + $0x670] sm:$0xf]
    %v5505 = vld [vmem:[%s3 + $0x674] sm:$0xff]
    %v5506 = vld [vmem:[%s3 + $0x67c] sm:$0xff]
    %v5507 = vld [vmem:[%s3 + $0x684] sm:$0xff]
    %v5508 = vld [vmem:[%s3 + $0x68c] sm:$0xf]
    %v5509 = vld [vmem:[%s3 + $0x690] sm:$0xff]
    %v5510 = vld [vmem:[%s3 + $0x698] sm:$0xff]
    %v5511 = vld [vmem:[%s3 + $0x6a0] sm:$0xff]
    %v5512 = vld [vmem:[%s3 + $0x6a8] sm:$0xf]
    %v5513 = vld [vmem:[%s3 + $0x6ac] sm:$0xff]
    %v5514 = vld [vmem:[%s3 + $0x6b4] sm:$0xff]
    %v5515 = vld [vmem:[%s3 + $0x6bc] sm:$0xff]
    %v5516 = vld [vmem:[%s3 + $0x6c4] sm:$0xf]
    %v5517 = vld [vmem:[%s3 + $0x6c8] sm:$0xff]
    %v5518 = vld [vmem:[%s3 + $0x6d0] sm:$0xff]
    %v5519 = vld [vmem:[%s3 + $0x6d8] sm:$0xff]
    %v5520 = vld [vmem:[%s3 + $0x6e0] sm:$0xf]
    %v5521 = vld [vmem:[%s3 + $0x6e4] sm:$0xff]
    %v5522 = vld [vmem:[%s3 + $0x6ec] sm:$0xff]
    %v5523 = vld [vmem:[%s3 + $0x6f4] sm:$0xff]
    %v5524 = vld [vmem:[%s3 + $0x6fc] sm:$0xf]
    %v5525 = vld [vmem:[%s3 + $0x700] sm:$0xff]
    %v5526 = vld [vmem:[%s3 + $0x708] sm:$0xff]
    %v5527 = vld [vmem:[%s3 + $0x710] sm:$0xff]
    %v5528 = vld [vmem:[%s3 + $0x718] sm:$0xf]
    %v5529 = vld [vmem:[%s3 + $0x71c] sm:$0xff]
    %v5530 = vld [vmem:[%s3 + $0x724] sm:$0xff]
    %v5531 = vld [vmem:[%s3 + $0x72c] sm:$0xff]
    %v5532 = vld [vmem:[%s3 + $0x734] sm:$0xf]
    %v5533 = vld [vmem:[%s3 + $0x738] sm:$0xff]
    %v5534 = vld [vmem:[%s3 + $0x740] sm:$0xff]
    %v5535 = vld [vmem:[%s3 + $0x748] sm:$0xff]
    %v5536 = vld [vmem:[%s3 + $0x750] sm:$0xf]
    %v5537 = vld [vmem:[%s3 + $0x754] sm:$0xff]
    %v5538 = vld [vmem:[%s3 + $0x75c] sm:$0xff]
    %v5539 = vld [vmem:[%s3 + $0x764] sm:$0xff]
    %v5540 = vld [vmem:[%s3 + $0x76c] sm:$0xf]
    %v5541 = vld [vmem:[%s3 + $0x770] sm:$0xff]
    %v5542 = vld [vmem:[%s3 + $0x778] sm:$0xff]
    %v5543 = vld [vmem:[%s3 + $0x780] sm:$0xff]
    %v5544 = vld [vmem:[%s3 + $0x788] sm:$0xf]
    %v5545 = vld [vmem:[%s3 + $0x78c] sm:$0xff]
    %v5546 = vld [vmem:[%s3 + $0x794] sm:$0xff]
    %v5547 = vld [vmem:[%s3 + $0x79c] sm:$0xff]
    %v5548 = vld [vmem:[%s3 + $0x7a4] sm:$0xf]
    %v5549 = vld [vmem:[%s3 + $0x7a8] sm:$0xff]
    %v5550 = vld [vmem:[%s3 + $0x7b0] sm:$0xff]
    %v5551 = vld [vmem:[%s3 + $0x7b8] sm:$0xff]
    %v5552 = vld [vmem:[%s3 + $0x7c0] sm:$0xf]
    %v5553 = vld [vmem:[%s3 + $0x7c4] sm:$0xff]
    %v5554 = vld [vmem:[%s3 + $0x7cc] sm:$0xff]
    %v5555 = vld [vmem:[%s3 + $0x7d4] sm:$0xff]
    %v5556 = vld [vmem:[%s3 + $0x7dc] sm:$0xf]
    %v5557 = vld [vmem:[%s3 + $0x7e0] sm:$0xff]
    %v5558 = vld [vmem:[%s3 + $0x7e8] sm:$0xff]
    %v5559 = vld [vmem:[%s3 + $0x7f0] sm:$0xff]
    %v5560 = vld [vmem:[%s3 + $0x7f8] sm:$0xf]
    %v5561 = vld [vmem:[%s3 + $0x7fc] sm:$0xff]
    %v5562 = vld [vmem:[%s3 + $0x804] sm:$0xff]
    %v5563 = vld [vmem:[%s3 + $0x80c] sm:$0xff]
    %v5564 = vld [vmem:[%s3 + $0x814] sm:$0xf]
    %v5565 = vld [vmem:[%s3 + $0x818] sm:$0xff]
    %v5566 = vld [vmem:[%s3 + $0x820] sm:$0xff]
    %v5567 = vld [vmem:[%s3 + $0x828] sm:$0xff]
    %v5568 = vld [vmem:[%s3 + $0x830] sm:$0xf]
    %v5569 = vld [vmem:[%s3 + $0x834] sm:$0xff]
    %v5570 = vld [vmem:[%s3 + $0x83c] sm:$0xff]
    %v5571 = vld [vmem:[%s3 + $0x844] sm:$0xff]
    %v5572 = vld [vmem:[%s3 + $0x84c] sm:$0xf]
    %v5573 = vld [vmem:[%s3 + $0x850] sm:$0xff]
    %v5574 = vld [vmem:[%s3 + $0x858] sm:$0xff]
    %v5575 = vld [vmem:[%s3 + $0x860] sm:$0xff]
    %v5576 = vld [vmem:[%s3 + $0x868] sm:$0xf]
    %v5577 = vld [vmem:[%s3 + $0x86c] sm:$0xff]
    %v5578 = vld [vmem:[%s3 + $0x874] sm:$0xff]
    %v5579 = vld [vmem:[%s3 + $0x87c] sm:$0xff]
    %v5580 = vld [vmem:[%s3 + $0x884] sm:$0xf]
    %v5581 = vld [vmem:[%s3 + $0x888] sm:$0xff]
    %v5582 = vld [vmem:[%s3 + $0x890] sm:$0xff]
    %v5583 = vld [vmem:[%s3 + $0x898] sm:$0xff]
    %v5584 = vld [vmem:[%s3 + $0x8a0] sm:$0xf]
    %v5585 = vld [vmem:[%s3 + $0x8a4] sm:$0xff]
    %v5586 = vld [vmem:[%s3 + $0x8ac] sm:$0xff]
    %v5587 = vld [vmem:[%s3 + $0x8b4] sm:$0xff]
    %v5588 = vld [vmem:[%s3 + $0x8bc] sm:$0xf]
    %v5589 = vld [vmem:[%s3 + $0x8c0] sm:$0xff]
    %v5590 = vld [vmem:[%s3 + $0x8c8] sm:$0xff]
    %v5591 = vld [vmem:[%s3 + $0x8d0] sm:$0xff]
    %v5592 = vld [vmem:[%s3 + $0x8d8] sm:$0xf]
    %v5593 = vld [vmem:[%s3 + $0x8dc] sm:$0xff]
    %v5594 = vld [vmem:[%s3 + $0x8e4] sm:$0xff]
    %v5595 = vld [vmem:[%s3 + $0x8ec] sm:$0xff]
    %v5596 = vld [vmem:[%s3 + $0x8f4] sm:$0xf]
    %v5597 = vld [vmem:[%s3 + $0x8f8] sm:$0xff]
    %v5598 = vld [vmem:[%s3 + $0x900] sm:$0xff]
    %v5599 = vld [vmem:[%s3 + $0x908] sm:$0xff]
    %v5600 = vld [vmem:[%s3 + $0x910] sm:$0xf]
    %v5601 = vld [vmem:[%s3 + $0x914] sm:$0xff]
    %v5602 = vld [vmem:[%s3 + $0x91c] sm:$0xff]
    %v5603 = vld [vmem:[%s3 + $0x924] sm:$0xff]
    %v5604 = vld [vmem:[%s3 + $0x92c] sm:$0xf]
    %v5605 = vld [vmem:[%s3 + $0x930] sm:$0xff]
    %v5606 = vld [vmem:[%s3 + $0x938] sm:$0xff]
    %v5607 = vld [vmem:[%s3 + $0x940] sm:$0xff]
    %v5608 = vld [vmem:[%s3 + $0x948] sm:$0xf]
    %v5609 = vld [vmem:[%s3 + $0x94c] sm:$0xff]
    %v5610 = vld [vmem:[%s3 + $0x954] sm:$0xff]
    %v5611 = vld [vmem:[%s3 + $0x95c] sm:$0xff]
    %v5612 = vld [vmem:[%s3 + $0x964] sm:$0xf]
    %v5613 = vld [vmem:[%s3 + $0x968] sm:$0xff]
    %v5614 = vld [vmem:[%s3 + $0x970] sm:$0xff]
    %v5615 = vld [vmem:[%s3 + $0x978] sm:$0xff]
    %v5616 = vld [vmem:[%s3 + $0x980] sm:$0xf]
    %v5617 = vld [vmem:[%s3 + $0x984] sm:$0xff]
    %v5618 = vld [vmem:[%s3 + $0x98c] sm:$0xff]
    %v5619 = vld [vmem:[%s3 + $0x994] sm:$0xff]
    %v5620 = vld [vmem:[%s3 + $0x99c] sm:$0xf]
    %v5621 = vld [vmem:[%s3 + $0x9a0] sm:$0xff]
    %v5622 = vld [vmem:[%s3 + $0x9a8] sm:$0xff]
    %v5623 = vld [vmem:[%s3 + $0x9b0] sm:$0xff]
    %v5624 = vld [vmem:[%s3 + $0x9b8] sm:$0xf]
    %v5625 = vld [vmem:[%s3 + $0x9bc] sm:$0xff]
    %v5626 = vld [vmem:[%s3 + $0x9c4] sm:$0xff]
    %v5627 = vld [vmem:[%s3 + $0x9cc] sm:$0xff]
    %v5628 = vld [vmem:[%s3 + $0x9d4] sm:$0xf]
    %v5629 = vld [vmem:[%s3 + $0x9d8] sm:$0xff]
    %v5630 = vld [vmem:[%s3 + $0x9e0] sm:$0xff]
    %v5631 = vld [vmem:[%s3 + $0x9e8] sm:$0xff]
    %v5632 = vld [vmem:[%s3 + $0x9f0] sm:$0xf]
    %v5633 = vld [vmem:[%s3 + $0x9f4] sm:$0xff]
    %v5634 = vld [vmem:[%s3 + $0x9fc] sm:$0xff]
    %v5635 = vld [vmem:[%s3 + $0xa04] sm:$0xff]
    %v5636 = vld [vmem:[%s3 + $0xa0c] sm:$0xf]
    %v5637 = vld [vmem:[%s3 + $0xa10] sm:$0xff]
    %v5638 = vld [vmem:[%s3 + $0xa18] sm:$0xff]
    %v5639 = vld [vmem:[%s3 + $0xa20] sm:$0xff]
    %v5640 = vld [vmem:[%s3 + $0xa28] sm:$0xf]
    %v5641 = vld [vmem:[%s3 + $0xa2c] sm:$0xff]
    %v5642 = vld [vmem:[%s3 + $0xa34] sm:$0xff]
    %v5643 = vld [vmem:[%s3 + $0xa3c] sm:$0xff]
    %v5644 = vld [vmem:[%s3 + $0xa44] sm:$0xf]
    %v5645 = vld [vmem:[%s3 + $0xa48] sm:$0xff]
    %v5646 = vld [vmem:[%s3 + $0xa50] sm:$0xff]
    %v5647 = vld [vmem:[%s3 + $0xa58] sm:$0xff]
    %v5648 = vld [vmem:[%s3 + $0xa60] sm:$0xf]
    %v5649 = vld [vmem:[%s3 + $0xa64] sm:$0xff]
    %v5650 = vld [vmem:[%s3 + $0xa6c] sm:$0xff]
    %v5651 = vld [vmem:[%s3 + $0xa74] sm:$0xff]
    %v5652 = vld [vmem:[%s3 + $0xa7c] sm:$0xf]
    %v5653 = vld [vmem:[%s3 + $0xa80] sm:$0xff]
    %v5654 = vld [vmem:[%s3 + $0xa88] sm:$0xff]
    %v5655 = vld [vmem:[%s3 + $0xa90] sm:$0xff]
    %v5656 = vld [vmem:[%s3 + $0xa98] sm:$0xf]
    %v5657 = vld [vmem:[%s3 + $0xa9c] sm:$0xff]
    %v5658 = vld [vmem:[%s3 + $0xaa4] sm:$0xff]
    %v5659 = vld [vmem:[%s3 + $0xaac] sm:$0xff]
    %v5660 = vld [vmem:[%s3 + $0xab4] sm:$0xf]
    %v5661 = vld [vmem:[%s3 + $0xab8] sm:$0xff]
    %v5662 = vld [vmem:[%s3 + $0xac0] sm:$0xff]
    %v5663 = vld [vmem:[%s3 + $0xac8] sm:$0xff]
    %v5664 = vld [vmem:[%s3 + $0xad0] sm:$0xf]
    %v5665 = vld [vmem:[%s3 + $0xad4] sm:$0xff]
    %v5666 = vld [vmem:[%s3 + $0xadc] sm:$0xff]
    %v5667 = vld [vmem:[%s3 + $0xae4] sm:$0xff]
    %v5668 = vld [vmem:[%s3 + $0xaec] sm:$0xf]
    %v5669 = vld [vmem:[%s3 + $0xaf0] sm:$0xff]
    %v5670 = vld [vmem:[%s3 + $0xaf8] sm:$0xff]
    %v5671 = vld [vmem:[%s3 + $0xb00] sm:$0xff]
    %v5672 = vld [vmem:[%s3 + $0xb08] sm:$0xf]
    %v5673 = vld [vmem:[%s3 + $0xb0c] sm:$0xff]
    %v5674 = vld [vmem:[%s3 + $0xb14] sm:$0xff]
    %v5675 = vld [vmem:[%s3 + $0xb1c] sm:$0xff]
    %v5676 = vld [vmem:[%s3 + $0xb24] sm:$0xf]
    %v5677 = vld [vmem:[%s3 + $0xb28] sm:$0xff]
    %v5678 = vld [vmem:[%s3 + $0xb30] sm:$0xff]
    %v5679 = vld [vmem:[%s3 + $0xb38] sm:$0xff]
    %v5680 = vld [vmem:[%s3 + $0xb40] sm:$0xf]
    %v5681 = vld [vmem:[%s3 + $0xb44] sm:$0xff]
    %v5682 = vld [vmem:[%s3 + $0xb4c] sm:$0xff]
    %v5683 = vld [vmem:[%s3 + $0xb54] sm:$0xff]
    %v5684 = vld [vmem:[%s3 + $0xb5c] sm:$0xf]
    %v5685 = vld [vmem:[%s3 + $0xb60] sm:$0xff]
    %v5686 = vld [vmem:[%s3 + $0xb68] sm:$0xff]
    %v5687 = vld [vmem:[%s3 + $0xb70] sm:$0xff]
    %v5688 = vld [vmem:[%s3 + $0xb78] sm:$0xf]
    %v5689 = vld [vmem:[%s3 + $0xb7c] sm:$0xff]
    %v5690 = vld [vmem:[%s3 + $0xb84] sm:$0xff]
    %v5691 = vld [vmem:[%s3 + $0xb8c] sm:$0xff]
    %v5692 = vld [vmem:[%s3 + $0xb94] sm:$0xf]
    %v5693 = vld [vmem:[%s3 + $0xb98] sm:$0xff]
    %v5694 = vld [vmem:[%s3 + $0xba0] sm:$0xff]
    %v5695 = vld [vmem:[%s3 + $0xba8] sm:$0xff]
    %v5696 = vld [vmem:[%s3 + $0xbb0] sm:$0xf]
    %v5697 = vld [vmem:[%s3 + $0xbb4] sm:$0xff]
    %v5698 = vld [vmem:[%s3 + $0xbbc] sm:$0xff]
    %v5699 = vld [vmem:[%s3 + $0xbc4] sm:$0xff]
    %v5700 = vld [vmem:[%s3 + $0xbcc] sm:$0xf]
    %v5701 = vld [vmem:[%s3 + $0xbd0] sm:$0xff]
    %v5702 = vld [vmem:[%s3 + $0xbd8] sm:$0xff]
    %v5703 = vld [vmem:[%s3 + $0xbe0] sm:$0xff]
    %v5704 = vld [vmem:[%s3 + $0xbe8] sm:$0xf]
    %v5705 = vld [vmem:[%s3 + $0xbec] sm:$0xff]
    %v5706 = vld [vmem:[%s3 + $0xbf4] sm:$0xff]
    %v5707 = vld [vmem:[%s3 + $0xbfc] sm:$0xff]
    %v5708 = vld [vmem:[%s3 + $0xc04] sm:$0xf]
    %v5709 = vld [vmem:[%s3 + $0xc08] sm:$0xff]
    %v5710 = vld [vmem:[%s3 + $0xc10] sm:$0xff]
    %v5711 = vld [vmem:[%s3 + $0xc18] sm:$0xff]
    %v5712 = vld [vmem:[%s3 + $0xc20] sm:$0xf]
    %v5713 = vld [vmem:[%s3 + $0xc24] sm:$0xff]
    %v5714 = vld [vmem:[%s3 + $0xc2c] sm:$0xff]
    %v5715 = vld [vmem:[%s3 + $0xc34] sm:$0xff]
    %v5716 = vld [vmem:[%s3 + $0xc3c] sm:$0xf]
    %v5717 = vld [vmem:[%s3 + $0xc40] sm:$0xff]
    %v5718 = vld [vmem:[%s3 + $0xc48] sm:$0xff]
    %v5719 = vld [vmem:[%s3 + $0xc50] sm:$0xff]
    %v5720 = vld [vmem:[%s3 + $0xc58] sm:$0xf]
    %v5721 = vld [vmem:[%s3 + $0xc5c] sm:$0xff]
    %v5722 = vld [vmem:[%s3 + $0xc64] sm:$0xff]
    %v5723 = vld [vmem:[%s3 + $0xc6c] sm:$0xff]
    %v5724 = vld [vmem:[%s3 + $0xc74] sm:$0xf]
    %v5725 = vld [vmem:[%s3 + $0xc78] sm:$0xff]
    %v5726 = vld [vmem:[%s3 + $0xc80] sm:$0xff]
    %v5727 = vld [vmem:[%s3 + $0xc88] sm:$0xff]
    %v5728 = vld [vmem:[%s3 + $0xc90] sm:$0xf]
    %v5729 = vld [vmem:[%s3 + $0xc94] sm:$0xff]
    %v5730 = vld [vmem:[%s3 + $0xc9c] sm:$0xff]
    %v5731 = vld [vmem:[%s3 + $0xca4] sm:$0xff]
    %v5732 = vld [vmem:[%s3 + $0xcac] sm:$0xf]
    %v5733 = vld [vmem:[%s3 + $0xcb0] sm:$0xff]
    %v5734 = vld [vmem:[%s3 + $0xcb8] sm:$0xff]
    %v5735 = vld [vmem:[%s3 + $0xcc0] sm:$0xff]
    %v5736 = vld [vmem:[%s3 + $0xcc8] sm:$0xf]
    %v5737 = vld [vmem:[%s3 + $0xccc] sm:$0xff]
    %v5738 = vld [vmem:[%s3 + $0xcd4] sm:$0xff]
    %v5739 = vld [vmem:[%s3 + $0xcdc] sm:$0xff]
    %v5740 = vld [vmem:[%s3 + $0xce4] sm:$0xf]
    %v5741 = vld [vmem:[%s3 + $0xce8] sm:$0xff]
    %v5742 = vld [vmem:[%s3 + $0xcf0] sm:$0xff]
    %v5743 = vld [vmem:[%s3 + $0xcf8] sm:$0xff]
    %v5744 = vld [vmem:[%s3 + $0xd00] sm:$0xf]
    %v5745 = vld [vmem:[%s3 + $0xd04] sm:$0xff]
    %v5746 = vld [vmem:[%s3 + $0xd0c] sm:$0xff]
    %v5747 = vld [vmem:[%s3 + $0xd14] sm:$0xff]
    %v5748 = vld [vmem:[%s3 + $0xd1c] sm:$0xf]
    %v5749 = vld [vmem:[%s3 + $0xd20] sm:$0xff]
    %v5750 = vld [vmem:[%s3 + $0xd28] sm:$0xff]
    %v5751 = vld [vmem:[%s3 + $0xd30] sm:$0xff]
    %v5752 = vld [vmem:[%s3 + $0xd38] sm:$0xf]
    %v5753 = vld [vmem:[%s3 + $0xd3c] sm:$0xff]
    %v5754 = vld [vmem:[%s3 + $0xd44] sm:$0xff]
    %v5755 = vld [vmem:[%s3 + $0xd4c] sm:$0xff]
    %v5756 = vld [vmem:[%s3 + $0xd54] sm:$0xf]
    %v5757 = vld [vmem:[%s3 + $0xd58] sm:$0xff]
    %v5758 = vld [vmem:[%s3 + $0xd60] sm:$0xff]
    %v5759 = vld [vmem:[%s3 + $0xd68] sm:$0xff]
    %v5760 = vld [vmem:[%s3 + $0xd70] sm:$0xf]
    %v5761 = vld [vmem:[%s3 + $0xd74] sm:$0xff]
    %v5762 = vld [vmem:[%s3 + $0xd7c] sm:$0xff]
    %v5763 = vld [vmem:[%s3 + $0xd84] sm:$0xff]
    %v5764 = vld [vmem:[%s3 + $0xd8c] sm:$0xf]
    %v5765 = vld [vmem:[%s3 + $0xd90] sm:$0xff]
    %v5766 = vld [vmem:[%s3 + $0xd98] sm:$0xff]
    %v5767 = vld [vmem:[%s3 + $0xda0] sm:$0xff]
    %v5768 = vld [vmem:[%s3 + $0xda8] sm:$0xf]
    %v5769 = vld [vmem:[%s3 + $0xdac] sm:$0xff]
    %v5770 = vld [vmem:[%s3 + $0xdb4] sm:$0xff]
    %v5771 = vld [vmem:[%s3 + $0xdbc] sm:$0xff]
    %v5772 = vld [vmem:[%s3 + $0xdc4] sm:$0xf]
    %v5773 = vld [vmem:[%s3 + $0xdc8] sm:$0xff]
    %v5774 = vld [vmem:[%s3 + $0xdd0] sm:$0xff]
    %v5775 = vld [vmem:[%s3 + $0xdd8] sm:$0xff]
    %v5776 = vld [vmem:[%s3 + $0xde0] sm:$0xf]
    %v5777 = vld [vmem:[%s3 + $0xde4] sm:$0xff]
    %v5778 = vld [vmem:[%s3 + $0xdec] sm:$0xff]
    %v5779 = vld [vmem:[%s3 + $0xdf4] sm:$0xff]
    %v5780 = vld [vmem:[%s3 + $0xdfc] sm:$0xf]
    %v5781 = vld [vmem:[%s3 + $0xe00] sm:$0xff]
    %v5782 = vld [vmem:[%s3 + $0xe08] sm:$0xff]
    %v5783 = vld [vmem:[%s3 + $0xe10] sm:$0xff]
    %v5784 = vld [vmem:[%s3 + $0xe18] sm:$0xf]
    %v5785 = vld [vmem:[%s3 + $0xe1c] sm:$0xff]
    %v5786 = vld [vmem:[%s3 + $0xe24] sm:$0xff]
    %v5787 = vld [vmem:[%s3 + $0xe2c] sm:$0xff]
    %v5788 = vld [vmem:[%s3 + $0xe34] sm:$0xf]
    %v5789 = vld [vmem:[%s3 + $0xe38] sm:$0xff]
    %v5790 = vld [vmem:[%s3 + $0xe40] sm:$0xff]
    %v5791 = vld [vmem:[%s3 + $0xe48] sm:$0xff]
    %v5792 = vld [vmem:[%s3 + $0xe50] sm:$0xf]
    %v5793 = vld [vmem:[%s3 + $0xe54] sm:$0xff]
    %v5794 = vld [vmem:[%s3 + $0xe5c] sm:$0xff]
    %v5795 = vld [vmem:[%s3 + $0xe64] sm:$0xff]
    %v5796 = vld [vmem:[%s3 + $0xe6c] sm:$0xf]
    %v5797 = vld [vmem:[%s3 + $0xe70] sm:$0xff]
    %v5798 = vld [vmem:[%s3 + $0xe78] sm:$0xff]
    %v5799 = vld [vmem:[%s3 + $0xe80] sm:$0xff]
    %v5800 = vld [vmem:[%s3 + $0xe88] sm:$0xf]
    %v5801 = vld [vmem:[%s3 + $0xe8c] sm:$0xff]
    %v5802 = vld [vmem:[%s3 + $0xe94] sm:$0xff]
    %v5803 = vld [vmem:[%s3 + $0xe9c] sm:$0xff]
    %v5804 = vld [vmem:[%s3 + $0xea4] sm:$0xf]
    %v5805 = vld [vmem:[%s3 + $0xea8] sm:$0xff]
    %v5806 = vld [vmem:[%s3 + $0xeb0] sm:$0xff]
    %v5807 = vld [vmem:[%s3 + $0xeb8] sm:$0xff]
    %v5808 = vld [vmem:[%s3 + $0xec0] sm:$0xf]
    %v5809 = vld [vmem:[%s3 + $0xec4] sm:$0xff]
    %v5810 = vld [vmem:[%s3 + $0xecc] sm:$0xff]
    %v5811 = vld [vmem:[%s3 + $0xed4] sm:$0xff]
    %v5812 = vld [vmem:[%s3 + $0xedc] sm:$0xf]
    %v5813 = vld [vmem:[%s3 + $0xee0] sm:$0xff]
    %v5814 = vld [vmem:[%s3 + $0xee8] sm:$0xff]
    %v5815 = vld [vmem:[%s3 + $0xef0] sm:$0xff]
    %v5816 = vld [vmem:[%s3 + $0xef8] sm:$0xf]
    %v5817 = vld [vmem:[%s3 + $0xefc] sm:$0xff]
    %v5818 = vld [vmem:[%s3 + $0xf04] sm:$0xff]
    %v5819 = vld [vmem:[%s3 + $0xf0c] sm:$0xff]
    %v5820 = vld [vmem:[%s3 + $0xf14] sm:$0xf]
    %v5821 = vld [vmem:[%s3 + $0xf18] sm:$0xff]
    %v5822 = vld [vmem:[%s3 + $0xf20] sm:$0xff]
    %v5823 = vld [vmem:[%s3 + $0xf28] sm:$0xff]
    %v5824 = vld [vmem:[%s3 + $0xf30] sm:$0xf]
    %v5825 = vld [vmem:[%s3 + $0xf34] sm:$0xff]
    %v5826 = vld [vmem:[%s3 + $0xf3c] sm:$0xff]
    %v5827 = vld [vmem:[%s3 + $0xf44] sm:$0xff]
    %v5828 = vld [vmem:[%s3 + $0xf4c] sm:$0xf]
    %v5829 = vld [vmem:[%s3 + $0xf50] sm:$0xff]
    %v5830 = vld [vmem:[%s3 + $0xf58] sm:$0xff]
    %v5831 = vld [vmem:[%s3 + $0xf60] sm:$0xff]
    %v5832 = vld [vmem:[%s3 + $0xf68] sm:$0xf]
    %v5833 = vld [vmem:[%s3 + $0xf6c] sm:$0xff]
    %v5834 = vld [vmem:[%s3 + $0xf74] sm:$0xff]
    %v5835 = vld [vmem:[%s3 + $0xf7c] sm:$0xff]
    %v5836 = vld [vmem:[%s3 + $0xf84] sm:$0xf]
    %v5837 = vld [vmem:[%s3 + $0xf88] sm:$0xff]
    %v5838 = vld [vmem:[%s3 + $0xf90] sm:$0xff]
    %v5839 = vld [vmem:[%s3 + $0xf98] sm:$0xff]
    %v5840 = vld [vmem:[%s3 + $0xfa0] sm:$0xf]
    %v5841 = vld [vmem:[%s3 + $0xfa4] sm:$0xff]
    %v5842 = vld [vmem:[%s3 + $0xfac] sm:$0xff]
    %v5843 = vld [vmem:[%s3 + $0xfb4] sm:$0xff]
    %v5844 = vld [vmem:[%s3 + $0xfbc] sm:$0xf]
    %v5845 = vld [vmem:[%s3 + $0xfc0] sm:$0xff]
    %v5846 = vld [vmem:[%s3 + $0xfc8] sm:$0xff]
    %v5847 = vld [vmem:[%s3 + $0xfd0] sm:$0xff]
    %v5848 = vld [vmem:[%s3 + $0xfd8] sm:$0xf]
    %v5849 = vld [vmem:[%s3 + $0xfdc] sm:$0xff]
    %v5850 = vld [vmem:[%s3 + $0xfe4] sm:$0xff]
    %v5851 = vld [vmem:[%s3 + $0xfec] sm:$0xff]
    %v5852 = vld [vmem:[%s3 + $0xff4] sm:$0xf]
    %v5853 = vld [vmem:[%s3 + $0xff8] sm:$0xff]
    %v5854 = vld [vmem:[%s3 + $0x1000] sm:$0xff]
    %v5855 = vld [vmem:[%s3 + $0x1008] sm:$0xff]
    %v5856 = vld [vmem:[%s3 + $0x1010] sm:$0xf]
    %v5857 = vld [vmem:[%s3 + $0x1014] sm:$0xff]
    %v5858 = vld [vmem:[%s3 + $0x101c] sm:$0xff]
    %v5859 = vld [vmem:[%s3 + $0x1024] sm:$0xff]
    %v5860 = vld [vmem:[%s3 + $0x102c] sm:$0xf]
    %v5861 = vld [vmem:[%s3 + $0x1030] sm:$0xff]
    %v5862 = vld [vmem:[%s3 + $0x1038] sm:$0xff]
    %v5863 = vld [vmem:[%s3 + $0x1040] sm:$0xff]
    %v5864 = vld [vmem:[%s3 + $0x1048] sm:$0xf]
    %v5865 = vld [vmem:[%s3 + $0x104c] sm:$0xff]
    %v5866 = vld [vmem:[%s3 + $0x1054] sm:$0xff]
    %v5867 = vld [vmem:[%s3 + $0x105c] sm:$0xff]
    %v5868 = vld [vmem:[%s3 + $0x1064] sm:$0xf]
    %v5869 = vld [vmem:[%s3 + $0x1068] sm:$0xff]
    %v5870 = vld [vmem:[%s3 + $0x1070] sm:$0xff]
    %v5871 = vld [vmem:[%s3 + $0x1078] sm:$0xff]
    %v5872 = vld [vmem:[%s3 + $0x1080] sm:$0xf]
    %v5873 = vld [vmem:[%s3 + $0x1084] sm:$0xff]
    %v5874 = vld [vmem:[%s3 + $0x108c] sm:$0xff]
    %v5875 = vld [vmem:[%s3 + $0x1094] sm:$0xff]
    %v5876 = vld [vmem:[%s3 + $0x109c] sm:$0xf]
    %v5877 = vld [vmem:[%s3 + $0x10a0] sm:$0xff]
    %v5878 = vld [vmem:[%s3 + $0x10a8] sm:$0xff]
    %v5879 = vld [vmem:[%s3 + $0x10b0] sm:$0xff]
    %v5880 = vld [vmem:[%s3 + $0x10b8] sm:$0xf]
    %v5881 = vld [vmem:[%s3 + $0x10bc] sm:$0xff]
    %v5882 = vld [vmem:[%s3 + $0x10c4] sm:$0xff]
    %v5883 = vld [vmem:[%s3 + $0x10cc] sm:$0xff]
    %v5884 = vld [vmem:[%s3 + $0x10d4] sm:$0xf]
    %v5885 = vld [vmem:[%s3 + $0x10d8] sm:$0xff]
    %v5886 = vld [vmem:[%s3 + $0x10e0] sm:$0xff]
    %v5887 = vld [vmem:[%s3 + $0x10e8] sm:$0xff]
    %v5888 = vld [vmem:[%s3 + $0x10f0] sm:$0xf]
    %v5889 = vld [vmem:[%s3 + $0x10f4] sm:$0xff]
    %v5890 = vld [vmem:[%s3 + $0x10fc] sm:$0xff]
    %v5891 = vld [vmem:[%s3 + $0x1104] sm:$0xff]
    %v5892 = vld [vmem:[%s3 + $0x110c] sm:$0xf]
    %v5893 = vld [vmem:[%s3 + $0x1110] sm:$0xff]
    %v5894 = vld [vmem:[%s3 + $0x1118] sm:$0xff]
    %v5895 = vld [vmem:[%s3 + $0x1120] sm:$0xff]
    %v5896 = vld [vmem:[%s3 + $0x1128] sm:$0xf]
    %v5897 = vld [vmem:[%s3 + $0x112c] sm:$0xff]
    %v5898 = vld [vmem:[%s3 + $0x1134] sm:$0xff]
    %v5899 = vld [vmem:[%s3 + $0x113c] sm:$0xff]
    %v5900 = vld [vmem:[%s3 + $0x1144] sm:$0xf]
    %v5901 = vld [vmem:[%s3 + $0x1148] sm:$0xff]
    %v5902 = vld [vmem:[%s3 + $0x1150] sm:$0xff]
    %v5903 = vld [vmem:[%s3 + $0x1158] sm:$0xff]
    %v5904 = vld [vmem:[%s3 + $0x1160] sm:$0xf]
    %v5905 = vld [vmem:[%s3 + $0x1164] sm:$0xff]
    %v5906 = vld [vmem:[%s3 + $0x116c] sm:$0xff]
    %v5907 = vld [vmem:[%s3 + $0x1174] sm:$0xff]
    %v5908 = vld [vmem:[%s3 + $0x117c] sm:$0xf]
    %v5909 = vld [vmem:[%s3 + $0x1180] sm:$0xff]
    %v5910 = vld [vmem:[%s3 + $0x1188] sm:$0xff]
    %v5911 = vld [vmem:[%s3 + $0x1190] sm:$0xff]
    %v5912 = vld [vmem:[%s3 + $0x1198] sm:$0xf]
    %v5913 = vld [vmem:[%s3 + $0x119c] sm:$0xff]
    %v5914 = vld [vmem:[%s3 + $0x11a4] sm:$0xff]
    %v5915 = vld [vmem:[%s3 + $0x11ac] sm:$0xff]
    %v5916 = vld [vmem:[%s3 + $0x11b4] sm:$0xf]
    %v5917 = vld [vmem:[%s3 + $0x11b8] sm:$0xff]
    %v5918 = vld [vmem:[%s3 + $0x11c0] sm:$0xff]
    %v5919 = vld [vmem:[%s3 + $0x11c8] sm:$0xff]
    %v5920 = vld [vmem:[%s3 + $0x11d0] sm:$0xf]
    %v5921 = vld [vmem:[%s3 + $0x11d4] sm:$0xff]
    %v5922 = vld [vmem:[%s3 + $0x11dc] sm:$0xff]
    %v5923 = vld [vmem:[%s3 + $0x11e4] sm:$0xff]
    %v5924 = vld [vmem:[%s3 + $0x11ec] sm:$0xf]
    %v5925 = vld [vmem:[%s3 + $0x11f0] sm:$0xff]
    %v5926 = vld [vmem:[%s3 + $0x11f8] sm:$0xff]
    %v5927 = vld [vmem:[%s3 + $0x1200] sm:$0xff]
    %v5928 = vld [vmem:[%s3 + $0x1208] sm:$0xf]
    %v5929 = vld [vmem:[%s3 + $0x120c] sm:$0xff]
    %v5930 = vld [vmem:[%s3 + $0x1214] sm:$0xff]
    %v5931 = vld [vmem:[%s3 + $0x121c] sm:$0xff]
    %v5932 = vld [vmem:[%s3 + $0x1224] sm:$0xf]
    %v5933 = vld [vmem:[%s3 + $0x1228] sm:$0xff]
    %v5934 = vld [vmem:[%s3 + $0x1230] sm:$0xff]
    %v5935 = vld [vmem:[%s3 + $0x1238] sm:$0xff]
    %v5936 = vld [vmem:[%s3 + $0x1240] sm:$0xf]
    %v5937 = vld [vmem:[%s3 + $0x1244] sm:$0xff]
    %v5938 = vld [vmem:[%s3 + $0x124c] sm:$0xff]
    %v5939 = vld [vmem:[%s3 + $0x1254] sm:$0xff]
    %v5940 = vld [vmem:[%s3 + $0x125c] sm:$0xf]
    %v5941 = vld [vmem:[%s3 + $0x1260] sm:$0xff]
    %v5942 = vld [vmem:[%s3 + $0x1268] sm:$0xff]
    %v5943 = vld [vmem:[%s3 + $0x1270] sm:$0xff]
    %v5944 = vld [vmem:[%s3 + $0x1278] sm:$0xf]
    %v5945 = vld [vmem:[%s3 + $0x127c] sm:$0xff]
    %v5946 = vld [vmem:[%s3 + $0x1284] sm:$0xff]
    %v5947 = vld [vmem:[%s3 + $0x128c] sm:$0xff]
    %v5948 = vld [vmem:[%s3 + $0x1294] sm:$0xf]
    %v5949 = vld [vmem:[%s3 + $0x1298] sm:$0xff]
    %v5950 = vld [vmem:[%s3 + $0x12a0] sm:$0xff]
    %v5951 = vld [vmem:[%s3 + $0x12a8] sm:$0xff]
    %v5952 = vld [vmem:[%s3 + $0x12b0] sm:$0xf]
    %v5953 = vld [vmem:[%s3 + $0x12b4] sm:$0xff]
    %v5954 = vld [vmem:[%s3 + $0x12bc] sm:$0xff]
    %v5955 = vld [vmem:[%s3 + $0x12c4] sm:$0xff]
    %v5956 = vld [vmem:[%s3 + $0x12cc] sm:$0xf]
    %v5957 = vld [vmem:[%s3 + $0x12d0] sm:$0xff]
    %v5958 = vld [vmem:[%s3 + $0x12d8] sm:$0xff]
    %v5959 = vld [vmem:[%s3 + $0x12e0] sm:$0xff]
    %v5960 = vld [vmem:[%s3 + $0x12e8] sm:$0xf]
    %v5961 = vld [vmem:[%s3 + $0x12ec] sm:$0xff]
    %v5962 = vld [vmem:[%s3 + $0x12f4] sm:$0xff]
    %v5963 = vld [vmem:[%s3 + $0x12fc] sm:$0xff]
    %v5964 = vld [vmem:[%s3 + $0x1304] sm:$0xf]
    %v5965 = vld [vmem:[%s3 + $0x1308] sm:$0xff]
    %v5966 = vld [vmem:[%s3 + $0x1310] sm:$0xff]
    %v5967 = vld [vmem:[%s3 + $0x1318] sm:$0xff]
    %v5968 = vld [vmem:[%s3 + $0x1320] sm:$0xf]
    %v5969 = vld [vmem:[%s3 + $0x1324] sm:$0xff]
    %v5970 = vld [vmem:[%s3 + $0x132c] sm:$0xff]
    %v5971 = vld [vmem:[%s3 + $0x1334] sm:$0xff]
    %v5972 = vld [vmem:[%s3 + $0x133c] sm:$0xf]
    %v5973 = vld [vmem:[%s3 + $0x1340] sm:$0xff]
    %v5974 = vld [vmem:[%s3 + $0x1348] sm:$0xff]
    %v5975 = vld [vmem:[%s3 + $0x1350] sm:$0xff]
    %v5976 = vld [vmem:[%s3 + $0x1358] sm:$0xf]
    %v5977 = vld [vmem:[%s3 + $0x135c] sm:$0xff]
    %v5978 = vld [vmem:[%s3 + $0x1364] sm:$0xff]
    %v5979 = vld [vmem:[%s3 + $0x136c] sm:$0xff]
    %v5980 = vld [vmem:[%s3 + $0x1374] sm:$0xf]
    %v5981 = vld [vmem:[%s3 + $0x1378] sm:$0xff]
    %v5982 = vld [vmem:[%s3 + $0x1380] sm:$0xff]
    %v5983 = vld [vmem:[%s3 + $0x1388] sm:$0xff]
    %v5984 = vld [vmem:[%s3 + $0x1390] sm:$0xf]
    %v5985 = vld [vmem:[%s3 + $0x1394] sm:$0xff]
    %v5986 = vld [vmem:[%s3 + $0x139c] sm:$0xff]
    %v5987 = vld [vmem:[%s3 + $0x13a4] sm:$0xff]
    %v5988 = vld [vmem:[%s3 + $0x13ac] sm:$0xf]
    %v5989 = vld [vmem:[%s3 + $0x13b0] sm:$0xff]
    %v5990 = vld [vmem:[%s3 + $0x13b8] sm:$0xff]
    %v5991 = vld [vmem:[%s3 + $0x13c0] sm:$0xff]
    %v5992 = vld [vmem:[%s3 + $0x13c8] sm:$0xf]
    %v5993 = vld [vmem:[%s3 + $0x13cc] sm:$0xff]
    %v5994 = vld [vmem:[%s3 + $0x13d4] sm:$0xff]
    %v5995 = vld [vmem:[%s3 + $0x13dc] sm:$0xff]
    %v5996 = vld [vmem:[%s3 + $0x13e4] sm:$0xf]
    %v5997 = vld [vmem:[%s3 + $0x13e8] sm:$0xff]
    %v5998 = vld [vmem:[%s3 + $0x13f0] sm:$0xff]
    %v5999 = vld [vmem:[%s3 + $0x13f8] sm:$0xff]
    %v6000 = vld [vmem:[%s3 + $0x1400] sm:$0xf]
    %v6001 = vld [vmem:[%s3 + $0x1404] sm:$0xff]
    %v6002 = vld [vmem:[%s3 + $0x140c] sm:$0xff]
    %v6003 = vld [vmem:[%s3 + $0x1414] sm:$0xff]
    %v6004 = vld [vmem:[%s3 + $0x141c] sm:$0xf]
    %v6005 = vld [vmem:[%s3 + $0x1420] sm:$0xff]
    %v6006 = vld [vmem:[%s3 + $0x1428] sm:$0xff]
    %v6007 = vld [vmem:[%s3 + $0x1430] sm:$0xff]
    %v6008 = vld [vmem:[%s3 + $0x1438] sm:$0xf]
    %v6009 = vld [vmem:[%s3 + $0x143c] sm:$0xff]
    %v6010 = vld [vmem:[%s3 + $0x1444] sm:$0xff]
    %v6011 = vld [vmem:[%s3 + $0x144c] sm:$0xff]
    %v6012 = vld [vmem:[%s3 + $0x1454] sm:$0xf]
    %v6013 = vld [vmem:[%s3 + $0x1458] sm:$0xff]
    %v6014 = vld [vmem:[%s3 + $0x1460] sm:$0xff]
    %v6015 = vld [vmem:[%s3 + $0x1468] sm:$0xff]
    %v6016 = vld [vmem:[%s3 + $0x1470] sm:$0xf]
    %v6017 = vld [vmem:[%s3 + $0x1474] sm:$0xff]
    %v6018 = vld [vmem:[%s3 + $0x147c] sm:$0xff]
    %v6019 = vld [vmem:[%s3 + $0x1484] sm:$0xff]
    %v6020 = vld [vmem:[%s3 + $0x148c] sm:$0xf]
    %v6021 = vld [vmem:[%s3 + $0x1490] sm:$0xff]
    %v6022 = vld [vmem:[%s3 + $0x1498] sm:$0xff]
    %v6023 = vld [vmem:[%s3 + $0x14a0] sm:$0xff]
    %v6024 = vld [vmem:[%s3 + $0x14a8] sm:$0xf]
    %v6025 = vld [vmem:[%s3 + $0x14ac] sm:$0xff]
    %v6026 = vld [vmem:[%s3 + $0x14b4] sm:$0xff]
    %v6027 = vld [vmem:[%s3 + $0x14bc] sm:$0xff]
    %v6028 = vld [vmem:[%s3 + $0x14c4] sm:$0xf]
    %v6029 = vld [vmem:[%s3 + $0x14c8] sm:$0xff]
    %v6030 = vld [vmem:[%s3 + $0x14d0] sm:$0xff]
    %v6031 = vld [vmem:[%s3 + $0x14d8] sm:$0xff]
    %v6032 = vld [vmem:[%s3 + $0x14e0] sm:$0xf]
    %v6033 = vld [vmem:[%s3 + $0x14e4] sm:$0xff]
    %v6034 = vld [vmem:[%s3 + $0x14ec] sm:$0xff]
    %v6035 = vld [vmem:[%s3 + $0x14f4] sm:$0xff]
    %v6036 = vld [vmem:[%s3 + $0x14fc] sm:$0xf]
    %v6037 = vld [vmem:[%s3 + $0x1500] sm:$0xff]
    %v6038 = vld [vmem:[%s3 + $0x1508] sm:$0xff]
    %v6039 = vld [vmem:[%s3 + $0x1510] sm:$0xff]
    %v6040 = vld [vmem:[%s3 + $0x1518] sm:$0xf]
    %v6041 = vld [vmem:[%s3 + $0x151c] sm:$0xff]
    %v6042 = vld [vmem:[%s3 + $0x1524] sm:$0xff]
    %v6043 = vld [vmem:[%s3 + $0x152c] sm:$0xff]
    %v6044 = vld [vmem:[%s3 + $0x1534] sm:$0xf]
    %v6045 = vld [vmem:[%s3 + $0x1538] sm:$0xff]
    %v6046 = vld [vmem:[%s3 + $0x1540] sm:$0xff]
    %v6047 = vld [vmem:[%s3 + $0x1548] sm:$0xff]
    %v6048 = vld [vmem:[%s3 + $0x1550] sm:$0xf]
    %v6049 = vld [vmem:[%s3 + $0x1554] sm:$0xff]
    %v6050 = vld [vmem:[%s3 + $0x155c] sm:$0xff]
    %v6051 = vld [vmem:[%s3 + $0x1564] sm:$0xff]
    %v6052 = vld [vmem:[%s3 + $0x156c] sm:$0xf]
    %v6837 = vunpack.c.l.b16 %v5269
    %v6838 = vunpack.c.h.b16 %v5269
    %v6839 = vunpack.c.l.b16 %v5270
    %v6840 = vunpack.c.h.b16 %v5270
    %v6841 = vunpack.c.l.b16 %v5271
    %v6842 = vunpack.c.h.b16 %v5271
    %v6843 = vunpack.c.l.b16 %v5272
    %v6844 = vunpack.c.l.b16 %v5273
    %v6845 = vunpack.c.h.b16 %v5273
    %v6846 = vunpack.c.l.b16 %v5274
    %v6847 = vunpack.c.h.b16 %v5274
    %v6848 = vunpack.c.l.b16 %v5275
    %v6849 = vunpack.c.h.b16 %v5275
    %v6850 = vunpack.c.l.b16 %v5276
    %v6851 = vunpack.c.l.b16 %v5277
    %v6852 = vunpack.c.h.b16 %v5277
    %v6853 = vunpack.c.l.b16 %v5278
    %v6854 = vunpack.c.h.b16 %v5278
    %v6855 = vunpack.c.l.b16 %v5279
    %v6856 = vunpack.c.h.b16 %v5279
    %v6857 = vunpack.c.l.b16 %v5280
    %v6858 = vunpack.c.l.b16 %v5281
    %v6859 = vunpack.c.h.b16 %v5281
    %v6860 = vunpack.c.l.b16 %v5282
    %v6861 = vunpack.c.h.b16 %v5282
    %v6862 = vunpack.c.l.b16 %v5283
    %v6863 = vunpack.c.h.b16 %v5283
    %v6864 = vunpack.c.l.b16 %v5284
    %v6865 = vunpack.c.l.b16 %v5285
    %v6866 = vunpack.c.h.b16 %v5285
    %v6867 = vunpack.c.l.b16 %v5286
    %v6868 = vunpack.c.h.b16 %v5286
    %v6869 = vunpack.c.l.b16 %v5287
    %v6870 = vunpack.c.h.b16 %v5287
    %v6871 = vunpack.c.l.b16 %v5288
    %v6872 = vunpack.c.l.b16 %v5289
    %v6873 = vunpack.c.h.b16 %v5289
    %v6874 = vunpack.c.l.b16 %v5290
    %v6875 = vunpack.c.h.b16 %v5290
    %v6876 = vunpack.c.l.b16 %v5291
    %v6877 = vunpack.c.h.b16 %v5291
    %v6878 = vunpack.c.l.b16 %v5292
    %v6879 = vunpack.c.l.b16 %v5293
    %v6880 = vunpack.c.h.b16 %v5293
    %v6881 = vunpack.c.l.b16 %v5294
    %v6882 = vunpack.c.h.b16 %v5294
    %v6883 = vunpack.c.l.b16 %v5295
    %v6884 = vunpack.c.h.b16 %v5295
    %v6885 = vunpack.c.l.b16 %v5296
    %v6886 = vunpack.c.l.b16 %v5297
    %v6887 = vunpack.c.h.b16 %v5297
    %v6888 = vunpack.c.l.b16 %v5298
    %v6889 = vunpack.c.h.b16 %v5298
    %v6890 = vunpack.c.l.b16 %v5299
    %v6891 = vunpack.c.h.b16 %v5299
    %v6892 = vunpack.c.l.b16 %v5300
    %v6893 = vunpack.c.l.b16 %v5301
    %v6894 = vunpack.c.h.b16 %v5301
    %v6895 = vunpack.c.l.b16 %v5302
    %v6896 = vunpack.c.h.b16 %v5302
    %v6897 = vunpack.c.l.b16 %v5303
    %v6898 = vunpack.c.h.b16 %v5303
    %v6899 = vunpack.c.l.b16 %v5304
    %v6900 = vunpack.c.l.b16 %v5305
    %v6901 = vunpack.c.h.b16 %v5305
    %v6902 = vunpack.c.l.b16 %v5306
    %v6903 = vunpack.c.h.b16 %v5306
    %v6904 = vunpack.c.l.b16 %v5307
    %v6905 = vunpack.c.h.b16 %v5307
    %v6906 = vunpack.c.l.b16 %v5308
    %v6907 = vunpack.c.l.b16 %v5309
    %v6908 = vunpack.c.h.b16 %v5309
    %v6909 = vunpack.c.l.b16 %v5310
    %v6910 = vunpack.c.h.b16 %v5310
    %v6911 = vunpack.c.l.b16 %v5311
    %v6912 = vunpack.c.h.b16 %v5311
    %v6913 = vunpack.c.l.b16 %v5312
    %v6914 = vunpack.c.l.b16 %v5313
    %v6915 = vunpack.c.h.b16 %v5313
    %v6916 = vunpack.c.l.b16 %v5314
    %v6917 = vunpack.c.h.b16 %v5314
    %v6918 = vunpack.c.l.b16 %v5315
    %v6919 = vunpack.c.h.b16 %v5315
    %v6920 = vunpack.c.l.b16 %v5316
    %v6921 = vunpack.c.l.b16 %v5317
    %v6922 = vunpack.c.h.b16 %v5317
    %v6923 = vunpack.c.l.b16 %v5318
    %v6924 = vunpack.c.h.b16 %v5318
    %v6925 = vunpack.c.l.b16 %v5319
    %v6926 = vunpack.c.h.b16 %v5319
    %v6927 = vunpack.c.l.b16 %v5320
    %v6928 = vunpack.c.l.b16 %v5321
    %v6929 = vunpack.c.h.b16 %v5321
    %v6930 = vunpack.c.l.b16 %v5322
    %v6931 = vunpack.c.h.b16 %v5322
    %v6932 = vunpack.c.l.b16 %v5323
    %v6933 = vunpack.c.h.b16 %v5323
    %v6934 = vunpack.c.l.b16 %v5324
    %v6935 = vunpack.c.l.b16 %v5325
    %v6936 = vunpack.c.h.b16 %v5325
    %v6937 = vunpack.c.l.b16 %v5326
    %v6938 = vunpack.c.h.b16 %v5326
    %v6939 = vunpack.c.l.b16 %v5327
    %v6940 = vunpack.c.h.b16 %v5327
    %v6941 = vunpack.c.l.b16 %v5328
    %v6942 = vunpack.c.l.b16 %v5329
    %v6943 = vunpack.c.h.b16 %v5329
    %v6944 = vunpack.c.l.b16 %v5330
    %v6945 = vunpack.c.h.b16 %v5330
    %v6946 = vunpack.c.l.b16 %v5331
    %v6947 = vunpack.c.h.b16 %v5331
    %v6948 = vunpack.c.l.b16 %v5332
    %v6949 = vunpack.c.l.b16 %v5333
    %v6950 = vunpack.c.h.b16 %v5333
    %v6951 = vunpack.c.l.b16 %v5334
    %v6952 = vunpack.c.h.b16 %v5334
    %v6953 = vunpack.c.l.b16 %v5335
    %v6954 = vunpack.c.h.b16 %v5335
    %v6955 = vunpack.c.l.b16 %v5336
    %v6956 = vunpack.c.l.b16 %v5337
    %v6957 = vunpack.c.h.b16 %v5337
    %v6958 = vunpack.c.l.b16 %v5338
    %v6959 = vunpack.c.h.b16 %v5338
    %v6960 = vunpack.c.l.b16 %v5339
    %v6961 = vunpack.c.h.b16 %v5339
    %v6962 = vunpack.c.l.b16 %v5340
    %v6963 = vunpack.c.l.b16 %v5341
    %v6964 = vunpack.c.h.b16 %v5341
    %v6965 = vunpack.c.l.b16 %v5342
    %v6966 = vunpack.c.h.b16 %v5342
    %v6967 = vunpack.c.l.b16 %v5343
    %v6968 = vunpack.c.h.b16 %v5343
    %v6969 = vunpack.c.l.b16 %v5344
    %v6970 = vunpack.c.l.b16 %v5345
    %v6971 = vunpack.c.h.b16 %v5345
    %v6972 = vunpack.c.l.b16 %v5346
    %v6973 = vunpack.c.h.b16 %v5346
    %v6974 = vunpack.c.l.b16 %v5347
    %v6975 = vunpack.c.h.b16 %v5347
    %v6976 = vunpack.c.l.b16 %v5348
    %v6977 = vunpack.c.l.b16 %v5349
    %v6978 = vunpack.c.h.b16 %v5349
    %v6979 = vunpack.c.l.b16 %v5350
    %v6980 = vunpack.c.h.b16 %v5350
    %v6981 = vunpack.c.l.b16 %v5351
    %v6982 = vunpack.c.h.b16 %v5351
    %v6983 = vunpack.c.l.b16 %v5352
    %v6984 = vunpack.c.l.b16 %v5353
    %v6985 = vunpack.c.h.b16 %v5353
    %v6986 = vunpack.c.l.b16 %v5354
    %v6987 = vunpack.c.h.b16 %v5354
    %v6988 = vunpack.c.l.b16 %v5355
    %v6989 = vunpack.c.h.b16 %v5355
    %v6990 = vunpack.c.l.b16 %v5356
    %v6991 = vunpack.c.l.b16 %v5357
    %v6992 = vunpack.c.h.b16 %v5357
    %v6993 = vunpack.c.l.b16 %v5358
    %v6994 = vunpack.c.h.b16 %v5358
    %v6995 = vunpack.c.l.b16 %v5359
    %v6996 = vunpack.c.h.b16 %v5359
    %v6997 = vunpack.c.l.b16 %v5360
    %v6998 = vunpack.c.l.b16 %v5361
    %v6999 = vunpack.c.h.b16 %v5361
    %v7000 = vunpack.c.l.b16 %v5362
    %v7001 = vunpack.c.h.b16 %v5362
    %v7002 = vunpack.c.l.b16 %v5363
    %v7003 = vunpack.c.h.b16 %v5363
    %v7004 = vunpack.c.l.b16 %v5364
    %v7005 = vunpack.c.l.b16 %v5365
    %v7006 = vunpack.c.h.b16 %v5365
    %v7007 = vunpack.c.l.b16 %v5366
    %v7008 = vunpack.c.h.b16 %v5366
    %v7009 = vunpack.c.l.b16 %v5367
    %v7010 = vunpack.c.h.b16 %v5367
    %v7011 = vunpack.c.l.b16 %v5368
    %v7012 = vunpack.c.l.b16 %v5369
    %v7013 = vunpack.c.h.b16 %v5369
    %v7014 = vunpack.c.l.b16 %v5370
    %v7015 = vunpack.c.h.b16 %v5370
    %v7016 = vunpack.c.l.b16 %v5371
    %v7017 = vunpack.c.h.b16 %v5371
    %v7018 = vunpack.c.l.b16 %v5372
    %v7019 = vunpack.c.l.b16 %v5373
    %v7020 = vunpack.c.h.b16 %v5373
    %v7021 = vunpack.c.l.b16 %v5374
    %v7022 = vunpack.c.h.b16 %v5374
    %v7023 = vunpack.c.l.b16 %v5375
    %v7024 = vunpack.c.h.b16 %v5375
    %v7025 = vunpack.c.l.b16 %v5376
    %v7026 = vunpack.c.l.b16 %v5377
    %v7027 = vunpack.c.h.b16 %v5377
    %v7028 = vunpack.c.l.b16 %v5378
    %v7029 = vunpack.c.h.b16 %v5378
    %v7030 = vunpack.c.l.b16 %v5379
    %v7031 = vunpack.c.h.b16 %v5379
    %v7032 = vunpack.c.l.b16 %v5380
    %v7033 = vunpack.c.l.b16 %v5381
    %v7034 = vunpack.c.h.b16 %v5381
    %v7035 = vunpack.c.l.b16 %v5382
    %v7036 = vunpack.c.h.b16 %v5382
    %v7037 = vunpack.c.l.b16 %v5383
    %v7038 = vunpack.c.h.b16 %v5383
    %v7039 = vunpack.c.l.b16 %v5384
    %v7040 = vunpack.c.l.b16 %v5385
    %v7041 = vunpack.c.h.b16 %v5385
    %v7042 = vunpack.c.l.b16 %v5386
    %v7043 = vunpack.c.h.b16 %v5386
    %v7044 = vunpack.c.l.b16 %v5387
    %v7045 = vunpack.c.h.b16 %v5387
    %v7046 = vunpack.c.l.b16 %v5388
    %v7047 = vunpack.c.l.b16 %v5389
    %v7048 = vunpack.c.h.b16 %v5389
    %v7049 = vunpack.c.l.b16 %v5390
    %v7050 = vunpack.c.h.b16 %v5390
    %v7051 = vunpack.c.l.b16 %v5391
    %v7052 = vunpack.c.h.b16 %v5391
    %v7053 = vunpack.c.l.b16 %v5392
    %v7054 = vunpack.c.l.b16 %v5393
    %v7055 = vunpack.c.h.b16 %v5393
    %v7056 = vunpack.c.l.b16 %v5394
    %v7057 = vunpack.c.h.b16 %v5394
    %v7058 = vunpack.c.l.b16 %v5395
    %v7059 = vunpack.c.h.b16 %v5395
    %v7060 = vunpack.c.l.b16 %v5396
    %v7061 = vunpack.c.l.b16 %v5397
    %v7062 = vunpack.c.h.b16 %v5397
    %v7063 = vunpack.c.l.b16 %v5398
    %v7064 = vunpack.c.h.b16 %v5398
    %v7065 = vunpack.c.l.b16 %v5399
    %v7066 = vunpack.c.h.b16 %v5399
    %v7067 = vunpack.c.l.b16 %v5400
    %v7068 = vunpack.c.l.b16 %v5401
    %v7069 = vunpack.c.h.b16 %v5401
    %v7070 = vunpack.c.l.b16 %v5402
    %v7071 = vunpack.c.h.b16 %v5402
    %v7072 = vunpack.c.l.b16 %v5403
    %v7073 = vunpack.c.h.b16 %v5403
    %v7074 = vunpack.c.l.b16 %v5404
    %v7075 = vunpack.c.l.b16 %v5405
    %v7076 = vunpack.c.h.b16 %v5405
    %v7077 = vunpack.c.l.b16 %v5406
    %v7078 = vunpack.c.h.b16 %v5406
    %v7079 = vunpack.c.l.b16 %v5407
    %v7080 = vunpack.c.h.b16 %v5407
    %v7081 = vunpack.c.l.b16 %v5408
    %v7082 = vunpack.c.l.b16 %v5409
    %v7083 = vunpack.c.h.b16 %v5409
    %v7084 = vunpack.c.l.b16 %v5410
    %v7085 = vunpack.c.h.b16 %v5410
    %v7086 = vunpack.c.l.b16 %v5411
    %v7087 = vunpack.c.h.b16 %v5411
    %v7088 = vunpack.c.l.b16 %v5412
    %v7089 = vunpack.c.l.b16 %v5413
    %v7090 = vunpack.c.h.b16 %v5413
    %v7091 = vunpack.c.l.b16 %v5414
    %v7092 = vunpack.c.h.b16 %v5414
    %v7093 = vunpack.c.l.b16 %v5415
    %v7094 = vunpack.c.h.b16 %v5415
    %v7095 = vunpack.c.l.b16 %v5416
    %v7096 = vunpack.c.l.b16 %v5417
    %v7097 = vunpack.c.h.b16 %v5417
    %v7098 = vunpack.c.l.b16 %v5418
    %v7099 = vunpack.c.h.b16 %v5418
    %v7100 = vunpack.c.l.b16 %v5419
    %v7101 = vunpack.c.h.b16 %v5419
    %v7102 = vunpack.c.l.b16 %v5420
    %v7103 = vunpack.c.l.b16 %v5421
    %v7104 = vunpack.c.h.b16 %v5421
    %v7105 = vunpack.c.l.b16 %v5422
    %v7106 = vunpack.c.h.b16 %v5422
    %v7107 = vunpack.c.l.b16 %v5423
    %v7108 = vunpack.c.h.b16 %v5423
    %v7109 = vunpack.c.l.b16 %v5424
    %v7110 = vunpack.c.l.b16 %v5425
    %v7111 = vunpack.c.h.b16 %v5425
    %v7112 = vunpack.c.l.b16 %v5426
    %v7113 = vunpack.c.h.b16 %v5426
    %v7114 = vunpack.c.l.b16 %v5427
    %v7115 = vunpack.c.h.b16 %v5427
    %v7116 = vunpack.c.l.b16 %v5428
    %v7117 = vunpack.c.l.b16 %v5429
    %v7118 = vunpack.c.h.b16 %v5429
    %v7119 = vunpack.c.l.b16 %v5430
    %v7120 = vunpack.c.h.b16 %v5430
    %v7121 = vunpack.c.l.b16 %v5431
    %v7122 = vunpack.c.h.b16 %v5431
    %v7123 = vunpack.c.l.b16 %v5432
    %v7124 = vunpack.c.l.b16 %v5433
    %v7125 = vunpack.c.h.b16 %v5433
    %v7126 = vunpack.c.l.b16 %v5434
    %v7127 = vunpack.c.h.b16 %v5434
    %v7128 = vunpack.c.l.b16 %v5435
    %v7129 = vunpack.c.h.b16 %v5435
    %v7130 = vunpack.c.l.b16 %v5436
    %v7131 = vunpack.c.l.b16 %v5437
    %v7132 = vunpack.c.h.b16 %v5437
    %v7133 = vunpack.c.l.b16 %v5438
    %v7134 = vunpack.c.h.b16 %v5438
    %v7135 = vunpack.c.l.b16 %v5439
    %v7136 = vunpack.c.h.b16 %v5439
    %v7137 = vunpack.c.l.b16 %v5440
    %v7138 = vunpack.c.l.b16 %v5441
    %v7139 = vunpack.c.h.b16 %v5441
    %v7140 = vunpack.c.l.b16 %v5442
    %v7141 = vunpack.c.h.b16 %v5442
    %v7142 = vunpack.c.l.b16 %v5443
    %v7143 = vunpack.c.h.b16 %v5443
    %v7144 = vunpack.c.l.b16 %v5444
    %v7145 = vunpack.c.l.b16 %v5445
    %v7146 = vunpack.c.h.b16 %v5445
    %v7147 = vunpack.c.l.b16 %v5446
    %v7148 = vunpack.c.h.b16 %v5446
    %v7149 = vunpack.c.l.b16 %v5447
    %v7150 = vunpack.c.h.b16 %v5447
    %v7151 = vunpack.c.l.b16 %v5448
    %v7152 = vunpack.c.l.b16 %v5449
    %v7153 = vunpack.c.h.b16 %v5449
    %v7154 = vunpack.c.l.b16 %v5450
    %v7155 = vunpack.c.h.b16 %v5450
    %v7156 = vunpack.c.l.b16 %v5451
    %v7157 = vunpack.c.h.b16 %v5451
    %v7158 = vunpack.c.l.b16 %v5452
    %v7159 = vunpack.c.l.b16 %v5453
    %v7160 = vunpack.c.h.b16 %v5453
    %v7161 = vunpack.c.l.b16 %v5454
    %v7162 = vunpack.c.h.b16 %v5454
    %v7163 = vunpack.c.l.b16 %v5455
    %v7164 = vunpack.c.h.b16 %v5455
    %v7165 = vunpack.c.l.b16 %v5456
    %v7166 = vunpack.c.l.b16 %v5457
    %v7167 = vunpack.c.h.b16 %v5457
    %v7168 = vunpack.c.l.b16 %v5458
    %v7169 = vunpack.c.h.b16 %v5458
    %v7170 = vunpack.c.l.b16 %v5459
    %v7171 = vunpack.c.h.b16 %v5459
    %v7172 = vunpack.c.l.b16 %v5460
    %v7173 = vunpack.c.l.b16 %v5461
    %v7174 = vunpack.c.h.b16 %v5461
    %v7175 = vunpack.c.l.b16 %v5462
    %v7176 = vunpack.c.h.b16 %v5462
    %v7177 = vunpack.c.l.b16 %v5463
    %v7178 = vunpack.c.h.b16 %v5463
    %v7179 = vunpack.c.l.b16 %v5464
    %v7180 = vunpack.c.l.b16 %v5465
    %v7181 = vunpack.c.h.b16 %v5465
    %v7182 = vunpack.c.l.b16 %v5466
    %v7183 = vunpack.c.h.b16 %v5466
    %v7184 = vunpack.c.l.b16 %v5467
    %v7185 = vunpack.c.h.b16 %v5467
    %v7186 = vunpack.c.l.b16 %v5468
    %v7187 = vunpack.c.l.b16 %v5469
    %v7188 = vunpack.c.h.b16 %v5469
    %v7189 = vunpack.c.l.b16 %v5470
    %v7190 = vunpack.c.h.b16 %v5470
    %v7191 = vunpack.c.l.b16 %v5471
    %v7192 = vunpack.c.h.b16 %v5471
    %v7193 = vunpack.c.l.b16 %v5472
    %v7194 = vunpack.c.l.b16 %v5473
    %v7195 = vunpack.c.h.b16 %v5473
    %v7196 = vunpack.c.l.b16 %v5474
    %v7197 = vunpack.c.h.b16 %v5474
    %v7198 = vunpack.c.l.b16 %v5475
    %v7199 = vunpack.c.h.b16 %v5475
    %v7200 = vunpack.c.l.b16 %v5476
    %v7201 = vunpack.c.l.b16 %v5477
    %v7202 = vunpack.c.h.b16 %v5477
    %v7203 = vunpack.c.l.b16 %v5478
    %v7204 = vunpack.c.h.b16 %v5478
    %v7205 = vunpack.c.l.b16 %v5479
    %v7206 = vunpack.c.h.b16 %v5479
    %v7207 = vunpack.c.l.b16 %v5480
    %v7208 = vunpack.c.l.b16 %v5481
    %v7209 = vunpack.c.h.b16 %v5481
    %v7210 = vunpack.c.l.b16 %v5482
    %v7211 = vunpack.c.h.b16 %v5482
    %v7212 = vunpack.c.l.b16 %v5483
    %v7213 = vunpack.c.h.b16 %v5483
    %v7214 = vunpack.c.l.b16 %v5484
    %v7215 = vunpack.c.l.b16 %v5485
    %v7216 = vunpack.c.h.b16 %v5485
    %v7217 = vunpack.c.l.b16 %v5486
    %v7218 = vunpack.c.h.b16 %v5486
    %v7219 = vunpack.c.l.b16 %v5487
    %v7220 = vunpack.c.h.b16 %v5487
    %v7221 = vunpack.c.l.b16 %v5488
    %v7222 = vunpack.c.l.b16 %v5489
    %v7223 = vunpack.c.h.b16 %v5489
    %v7224 = vunpack.c.l.b16 %v5490
    %v7225 = vunpack.c.h.b16 %v5490
    %v7226 = vunpack.c.l.b16 %v5491
    %v7227 = vunpack.c.h.b16 %v5491
    %v7228 = vunpack.c.l.b16 %v5492
    %v7229 = vunpack.c.l.b16 %v5493
    %v7230 = vunpack.c.h.b16 %v5493
    %v7231 = vunpack.c.l.b16 %v5494
    %v7232 = vunpack.c.h.b16 %v5494
    %v7233 = vunpack.c.l.b16 %v5495
    %v7234 = vunpack.c.h.b16 %v5495
    %v7235 = vunpack.c.l.b16 %v5496
    %v7236 = vunpack.c.l.b16 %v5497
    %v7237 = vunpack.c.h.b16 %v5497
    %v7238 = vunpack.c.l.b16 %v5498
    %v7239 = vunpack.c.h.b16 %v5498
    %v7240 = vunpack.c.l.b16 %v5499
    %v7241 = vunpack.c.h.b16 %v5499
    %v7242 = vunpack.c.l.b16 %v5500
    %v7243 = vunpack.c.l.b16 %v5501
    %v7244 = vunpack.c.h.b16 %v5501
    %v7245 = vunpack.c.l.b16 %v5502
    %v7246 = vunpack.c.h.b16 %v5502
    %v7247 = vunpack.c.l.b16 %v5503
    %v7248 = vunpack.c.h.b16 %v5503
    %v7249 = vunpack.c.l.b16 %v5504
    %v7250 = vunpack.c.l.b16 %v5505
    %v7251 = vunpack.c.h.b16 %v5505
    %v7252 = vunpack.c.l.b16 %v5506
    %v7253 = vunpack.c.h.b16 %v5506
    %v7254 = vunpack.c.l.b16 %v5507
    %v7255 = vunpack.c.h.b16 %v5507
    %v7256 = vunpack.c.l.b16 %v5508
    %v7257 = vunpack.c.l.b16 %v5509
    %v7258 = vunpack.c.h.b16 %v5509
    %v7259 = vunpack.c.l.b16 %v5510
    %v7260 = vunpack.c.h.b16 %v5510
    %v7261 = vunpack.c.l.b16 %v5511
    %v7262 = vunpack.c.h.b16 %v5511
    %v7263 = vunpack.c.l.b16 %v5512
    %v7264 = vunpack.c.l.b16 %v5513
    %v7265 = vunpack.c.h.b16 %v5513
    %v7266 = vunpack.c.l.b16 %v5514
    %v7267 = vunpack.c.h.b16 %v5514
    %v7268 = vunpack.c.l.b16 %v5515
    %v7269 = vunpack.c.h.b16 %v5515
    %v7270 = vunpack.c.l.b16 %v5516
    %v7271 = vunpack.c.l.b16 %v5517
    %v7272 = vunpack.c.h.b16 %v5517
    %v7273 = vunpack.c.l.b16 %v5518
    %v7274 = vunpack.c.h.b16 %v5518
    %v7275 = vunpack.c.l.b16 %v5519
    %v7276 = vunpack.c.h.b16 %v5519
    %v7277 = vunpack.c.l.b16 %v5520
    %v7278 = vunpack.c.l.b16 %v5521
    %v7279 = vunpack.c.h.b16 %v5521
    %v7280 = vunpack.c.l.b16 %v5522
    %v7281 = vunpack.c.h.b16 %v5522
    %v7282 = vunpack.c.l.b16 %v5523
    %v7283 = vunpack.c.h.b16 %v5523
    %v7284 = vunpack.c.l.b16 %v5524
    %v7285 = vunpack.c.l.b16 %v5525
    %v7286 = vunpack.c.h.b16 %v5525
    %v7287 = vunpack.c.l.b16 %v5526
    %v7288 = vunpack.c.h.b16 %v5526
    %v7289 = vunpack.c.l.b16 %v5527
    %v7290 = vunpack.c.h.b16 %v5527
    %v7291 = vunpack.c.l.b16 %v5528
    %v7292 = vunpack.c.l.b16 %v5529
    %v7293 = vunpack.c.h.b16 %v5529
    %v7294 = vunpack.c.l.b16 %v5530
    %v7295 = vunpack.c.h.b16 %v5530
    %v7296 = vunpack.c.l.b16 %v5531
    %v7297 = vunpack.c.h.b16 %v5531
    %v7298 = vunpack.c.l.b16 %v5532
    %v7299 = vunpack.c.l.b16 %v5533
    %v7300 = vunpack.c.h.b16 %v5533
    %v7301 = vunpack.c.l.b16 %v5534
    %v7302 = vunpack.c.h.b16 %v5534
    %v7303 = vunpack.c.l.b16 %v5535
    %v7304 = vunpack.c.h.b16 %v5535
    %v7305 = vunpack.c.l.b16 %v5536
    %v7306 = vunpack.c.l.b16 %v5537
    %v7307 = vunpack.c.h.b16 %v5537
    %v7308 = vunpack.c.l.b16 %v5538
    %v7309 = vunpack.c.h.b16 %v5538
    %v7310 = vunpack.c.l.b16 %v5539
    %v7311 = vunpack.c.h.b16 %v5539
    %v7312 = vunpack.c.l.b16 %v5540
    %v7313 = vunpack.c.l.b16 %v5541
    %v7314 = vunpack.c.h.b16 %v5541
    %v7315 = vunpack.c.l.b16 %v5542
    %v7316 = vunpack.c.h.b16 %v5542
    %v7317 = vunpack.c.l.b16 %v5543
    %v7318 = vunpack.c.h.b16 %v5543
    %v7319 = vunpack.c.l.b16 %v5544
    %v7320 = vunpack.c.l.b16 %v5545
    %v7321 = vunpack.c.h.b16 %v5545
    %v7322 = vunpack.c.l.b16 %v5546
    %v7323 = vunpack.c.h.b16 %v5546
    %v7324 = vunpack.c.l.b16 %v5547
    %v7325 = vunpack.c.h.b16 %v5547
    %v7326 = vunpack.c.l.b16 %v5548
    %v7327 = vunpack.c.l.b16 %v5549
    %v7328 = vunpack.c.h.b16 %v5549
    %v7329 = vunpack.c.l.b16 %v5550
    %v7330 = vunpack.c.h.b16 %v5550
    %v7331 = vunpack.c.l.b16 %v5551
    %v7332 = vunpack.c.h.b16 %v5551
    %v7333 = vunpack.c.l.b16 %v5552
    %v7334 = vunpack.c.l.b16 %v5553
    %v7335 = vunpack.c.h.b16 %v5553
    %v7336 = vunpack.c.l.b16 %v5554
    %v7337 = vunpack.c.h.b16 %v5554
    %v7338 = vunpack.c.l.b16 %v5555
    %v7339 = vunpack.c.h.b16 %v5555
    %v7340 = vunpack.c.l.b16 %v5556
    %v7341 = vunpack.c.l.b16 %v5557
    %v7342 = vunpack.c.h.b16 %v5557
    %v7343 = vunpack.c.l.b16 %v5558
    %v7344 = vunpack.c.h.b16 %v5558
    %v7345 = vunpack.c.l.b16 %v5559
    %v7346 = vunpack.c.h.b16 %v5559
    %v7347 = vunpack.c.l.b16 %v5560
    %v7348 = vunpack.c.l.b16 %v5561
    %v7349 = vunpack.c.h.b16 %v5561
    %v7350 = vunpack.c.l.b16 %v5562
    %v7351 = vunpack.c.h.b16 %v5562
    %v7352 = vunpack.c.l.b16 %v5563
    %v7353 = vunpack.c.h.b16 %v5563
    %v7354 = vunpack.c.l.b16 %v5564
    %v7355 = vunpack.c.l.b16 %v5565
    %v7356 = vunpack.c.h.b16 %v5565
    %v7357 = vunpack.c.l.b16 %v5566
    %v7358 = vunpack.c.h.b16 %v5566
    %v7359 = vunpack.c.l.b16 %v5567
    %v7360 = vunpack.c.h.b16 %v5567
    %v7361 = vunpack.c.l.b16 %v5568
    %v7362 = vunpack.c.l.b16 %v5569
    %v7363 = vunpack.c.h.b16 %v5569
    %v7364 = vunpack.c.l.b16 %v5570
    %v7365 = vunpack.c.h.b16 %v5570
    %v7366 = vunpack.c.l.b16 %v5571
    %v7367 = vunpack.c.h.b16 %v5571
    %v7368 = vunpack.c.l.b16 %v5572
    %v7369 = vunpack.c.l.b16 %v5573
    %v7370 = vunpack.c.h.b16 %v5573
    %v7371 = vunpack.c.l.b16 %v5574
    %v7372 = vunpack.c.h.b16 %v5574
    %v7373 = vunpack.c.l.b16 %v5575
    %v7374 = vunpack.c.h.b16 %v5575
    %v7375 = vunpack.c.l.b16 %v5576
    %v7376 = vunpack.c.l.b16 %v5577
    %v7377 = vunpack.c.h.b16 %v5577
    %v7378 = vunpack.c.l.b16 %v5578
    %v7379 = vunpack.c.h.b16 %v5578
    %v7380 = vunpack.c.l.b16 %v5579
    %v7381 = vunpack.c.h.b16 %v5579
    %v7382 = vunpack.c.l.b16 %v5580
    %v7383 = vunpack.c.l.b16 %v5581
    %v7384 = vunpack.c.h.b16 %v5581
    %v7385 = vunpack.c.l.b16 %v5582
    %v7386 = vunpack.c.h.b16 %v5582
    %v7387 = vunpack.c.l.b16 %v5583
    %v7388 = vunpack.c.h.b16 %v5583
    %v7389 = vunpack.c.l.b16 %v5584
    %v7390 = vunpack.c.l.b16 %v5585
    %v7391 = vunpack.c.h.b16 %v5585
    %v7392 = vunpack.c.l.b16 %v5586
    %v7393 = vunpack.c.h.b16 %v5586
    %v7394 = vunpack.c.l.b16 %v5587
    %v7395 = vunpack.c.h.b16 %v5587
    %v7396 = vunpack.c.l.b16 %v5588
    %v7397 = vunpack.c.l.b16 %v5589
    %v7398 = vunpack.c.h.b16 %v5589
    %v7399 = vunpack.c.l.b16 %v5590
    %v7400 = vunpack.c.h.b16 %v5590
    %v7401 = vunpack.c.l.b16 %v5591
    %v7402 = vunpack.c.h.b16 %v5591
    %v7403 = vunpack.c.l.b16 %v5592
    %v7404 = vunpack.c.l.b16 %v5593
    %v7405 = vunpack.c.h.b16 %v5593
    %v7406 = vunpack.c.l.b16 %v5594
    %v7407 = vunpack.c.h.b16 %v5594
    %v7408 = vunpack.c.l.b16 %v5595
    %v7409 = vunpack.c.h.b16 %v5595
    %v7410 = vunpack.c.l.b16 %v5596
    %v7411 = vunpack.c.l.b16 %v5597
    %v7412 = vunpack.c.h.b16 %v5597
    %v7413 = vunpack.c.l.b16 %v5598
    %v7414 = vunpack.c.h.b16 %v5598
    %v7415 = vunpack.c.l.b16 %v5599
    %v7416 = vunpack.c.h.b16 %v5599
    %v7417 = vunpack.c.l.b16 %v5600
    %v7418 = vunpack.c.l.b16 %v5601
    %v7419 = vunpack.c.h.b16 %v5601
    %v7420 = vunpack.c.l.b16 %v5602
    %v7421 = vunpack.c.h.b16 %v5602
    %v7422 = vunpack.c.l.b16 %v5603
    %v7423 = vunpack.c.h.b16 %v5603
    %v7424 = vunpack.c.l.b16 %v5604
    %v7425 = vunpack.c.l.b16 %v5605
    %v7426 = vunpack.c.h.b16 %v5605
    %v7427 = vunpack.c.l.b16 %v5606
    %v7428 = vunpack.c.h.b16 %v5606
    %v7429 = vunpack.c.l.b16 %v5607
    %v7430 = vunpack.c.h.b16 %v5607
    %v7431 = vunpack.c.l.b16 %v5608
    %v7432 = vunpack.c.l.b16 %v5609
    %v7433 = vunpack.c.h.b16 %v5609
    %v7434 = vunpack.c.l.b16 %v5610
    %v7435 = vunpack.c.h.b16 %v5610
    %v7436 = vunpack.c.l.b16 %v5611
    %v7437 = vunpack.c.h.b16 %v5611
    %v7438 = vunpack.c.l.b16 %v5612
    %v7439 = vunpack.c.l.b16 %v5613
    %v7440 = vunpack.c.h.b16 %v5613
    %v7441 = vunpack.c.l.b16 %v5614
    %v7442 = vunpack.c.h.b16 %v5614
    %v7443 = vunpack.c.l.b16 %v5615
    %v7444 = vunpack.c.h.b16 %v5615
    %v7445 = vunpack.c.l.b16 %v5616
    %v7446 = vunpack.c.l.b16 %v5617
    %v7447 = vunpack.c.h.b16 %v5617
    %v7448 = vunpack.c.l.b16 %v5618
    %v7449 = vunpack.c.h.b16 %v5618
    %v7450 = vunpack.c.l.b16 %v5619
    %v7451 = vunpack.c.h.b16 %v5619
    %v7452 = vunpack.c.l.b16 %v5620
    %v7453 = vunpack.c.l.b16 %v5621
    %v7454 = vunpack.c.h.b16 %v5621
    %v7455 = vunpack.c.l.b16 %v5622
    %v7456 = vunpack.c.h.b16 %v5622
    %v7457 = vunpack.c.l.b16 %v5623
    %v7458 = vunpack.c.h.b16 %v5623
    %v7459 = vunpack.c.l.b16 %v5624
    %v7460 = vunpack.c.l.b16 %v5625
    %v7461 = vunpack.c.h.b16 %v5625
    %v7462 = vunpack.c.l.b16 %v5626
    %v7463 = vunpack.c.h.b16 %v5626
    %v7464 = vunpack.c.l.b16 %v5627
    %v7465 = vunpack.c.h.b16 %v5627
    %v7466 = vunpack.c.l.b16 %v5628
    %v7467 = vunpack.c.l.b16 %v5629
    %v7468 = vunpack.c.h.b16 %v5629
    %v7469 = vunpack.c.l.b16 %v5630
    %v7470 = vunpack.c.h.b16 %v5630
    %v7471 = vunpack.c.l.b16 %v5631
    %v7472 = vunpack.c.h.b16 %v5631
    %v7473 = vunpack.c.l.b16 %v5632
    %v7474 = vunpack.c.l.b16 %v5633
    %v7475 = vunpack.c.h.b16 %v5633
    %v7476 = vunpack.c.l.b16 %v5634
    %v7477 = vunpack.c.h.b16 %v5634
    %v7478 = vunpack.c.l.b16 %v5635
    %v7479 = vunpack.c.h.b16 %v5635
    %v7480 = vunpack.c.l.b16 %v5636
    %v7481 = vunpack.c.l.b16 %v5637
    %v7482 = vunpack.c.h.b16 %v5637
    %v7483 = vunpack.c.l.b16 %v5638
    %v7484 = vunpack.c.h.b16 %v5638
    %v7485 = vunpack.c.l.b16 %v5639
    %v7486 = vunpack.c.h.b16 %v5639
    %v7487 = vunpack.c.l.b16 %v5640
    %v7488 = vunpack.c.l.b16 %v5641
    %v7489 = vunpack.c.h.b16 %v5641
    %v7490 = vunpack.c.l.b16 %v5642
    %v7491 = vunpack.c.h.b16 %v5642
    %v7492 = vunpack.c.l.b16 %v5643
    %v7493 = vunpack.c.h.b16 %v5643
    %v7494 = vunpack.c.l.b16 %v5644
    %v7495 = vunpack.c.l.b16 %v5645
    %v7496 = vunpack.c.h.b16 %v5645
    %v7497 = vunpack.c.l.b16 %v5646
    %v7498 = vunpack.c.h.b16 %v5646
    %v7499 = vunpack.c.l.b16 %v5647
    %v7500 = vunpack.c.h.b16 %v5647
    %v7501 = vunpack.c.l.b16 %v5648
    %v7502 = vunpack.c.l.b16 %v5649
    %v7503 = vunpack.c.h.b16 %v5649
    %v7504 = vunpack.c.l.b16 %v5650
    %v7505 = vunpack.c.h.b16 %v5650
    %v7506 = vunpack.c.l.b16 %v5651
    %v7507 = vunpack.c.h.b16 %v5651
    %v7508 = vunpack.c.l.b16 %v5652
    %v7509 = vunpack.c.l.b16 %v5653
    %v7510 = vunpack.c.h.b16 %v5653
    %v7511 = vunpack.c.l.b16 %v5654
    %v7512 = vunpack.c.h.b16 %v5654
    %v7513 = vunpack.c.l.b16 %v5655
    %v7514 = vunpack.c.h.b16 %v5655
    %v7515 = vunpack.c.l.b16 %v5656
    %v7516 = vunpack.c.l.b16 %v5657
    %v7517 = vunpack.c.h.b16 %v5657
    %v7518 = vunpack.c.l.b16 %v5658
    %v7519 = vunpack.c.h.b16 %v5658
    %v7520 = vunpack.c.l.b16 %v5659
    %v7521 = vunpack.c.h.b16 %v5659
    %v7522 = vunpack.c.l.b16 %v5660
    %v7523 = vunpack.c.l.b16 %v5661
    %v7524 = vunpack.c.h.b16 %v5661
    %v7525 = vunpack.c.l.b16 %v5662
    %v7526 = vunpack.c.h.b16 %v5662
    %v7527 = vunpack.c.l.b16 %v5663
    %v7528 = vunpack.c.h.b16 %v5663
    %v7529 = vunpack.c.l.b16 %v5664
    %v7530 = vunpack.c.l.b16 %v5665
    %v7531 = vunpack.c.h.b16 %v5665
    %v7532 = vunpack.c.l.b16 %v5666
    %v7533 = vunpack.c.h.b16 %v5666
    %v7534 = vunpack.c.l.b16 %v5667
    %v7535 = vunpack.c.h.b16 %v5667
    %v7536 = vunpack.c.l.b16 %v5668
    %v7537 = vunpack.c.l.b16 %v5669
    %v7538 = vunpack.c.h.b16 %v5669
    %v7539 = vunpack.c.l.b16 %v5670
    %v7540 = vunpack.c.h.b16 %v5670
    %v7541 = vunpack.c.l.b16 %v5671
    %v7542 = vunpack.c.h.b16 %v5671
    %v7543 = vunpack.c.l.b16 %v5672
    %v7544 = vunpack.c.l.b16 %v5673
    %v7545 = vunpack.c.h.b16 %v5673
    %v7546 = vunpack.c.l.b16 %v5674
    %v7547 = vunpack.c.h.b16 %v5674
    %v7548 = vunpack.c.l.b16 %v5675
    %v7549 = vunpack.c.h.b16 %v5675
    %v7550 = vunpack.c.l.b16 %v5676
    %v7551 = vunpack.c.l.b16 %v5677
    %v7552 = vunpack.c.h.b16 %v5677
    %v7553 = vunpack.c.l.b16 %v5678
    %v7554 = vunpack.c.h.b16 %v5678
    %v7555 = vunpack.c.l.b16 %v5679
    %v7556 = vunpack.c.h.b16 %v5679
    %v7557 = vunpack.c.l.b16 %v5680
    %v7558 = vunpack.c.l.b16 %v5681
    %v7559 = vunpack.c.h.b16 %v5681
    %v7560 = vunpack.c.l.b16 %v5682
    %v7561 = vunpack.c.h.b16 %v5682
    %v7562 = vunpack.c.l.b16 %v5683
    %v7563 = vunpack.c.h.b16 %v5683
    %v7564 = vunpack.c.l.b16 %v5684
    %v7565 = vunpack.c.l.b16 %v5685
    %v7566 = vunpack.c.h.b16 %v5685
    %v7567 = vunpack.c.l.b16 %v5686
    %v7568 = vunpack.c.h.b16 %v5686
    %v7569 = vunpack.c.l.b16 %v5687
    %v7570 = vunpack.c.h.b16 %v5687
    %v7571 = vunpack.c.l.b16 %v5688
    %v7572 = vunpack.c.l.b16 %v5689
    %v7573 = vunpack.c.h.b16 %v5689
    %v7574 = vunpack.c.l.b16 %v5690
    %v7575 = vunpack.c.h.b16 %v5690
    %v7576 = vunpack.c.l.b16 %v5691
    %v7577 = vunpack.c.h.b16 %v5691
    %v7578 = vunpack.c.l.b16 %v5692
    %v7579 = vunpack.c.l.b16 %v5693
    %v7580 = vunpack.c.h.b16 %v5693
    %v7581 = vunpack.c.l.b16 %v5694
    %v7582 = vunpack.c.h.b16 %v5694
    %v7583 = vunpack.c.l.b16 %v5695
    %v7584 = vunpack.c.h.b16 %v5695
    %v7585 = vunpack.c.l.b16 %v5696
    %v7586 = vunpack.c.l.b16 %v5697
    %v7587 = vunpack.c.h.b16 %v5697
    %v7588 = vunpack.c.l.b16 %v5698
    %v7589 = vunpack.c.h.b16 %v5698
    %v7590 = vunpack.c.l.b16 %v5699
    %v7591 = vunpack.c.h.b16 %v5699
    %v7592 = vunpack.c.l.b16 %v5700
    %v7593 = vunpack.c.l.b16 %v5701
    %v7594 = vunpack.c.h.b16 %v5701
    %v7595 = vunpack.c.l.b16 %v5702
    %v7596 = vunpack.c.h.b16 %v5702
    %v7597 = vunpack.c.l.b16 %v5703
    %v7598 = vunpack.c.h.b16 %v5703
    %v7599 = vunpack.c.l.b16 %v5704
    %v7600 = vunpack.c.l.b16 %v5705
    %v7601 = vunpack.c.h.b16 %v5705
    %v7602 = vunpack.c.l.b16 %v5706
    %v7603 = vunpack.c.h.b16 %v5706
    %v7604 = vunpack.c.l.b16 %v5707
    %v7605 = vunpack.c.h.b16 %v5707
    %v7606 = vunpack.c.l.b16 %v5708
    %v7607 = vunpack.c.l.b16 %v5709
    %v7608 = vunpack.c.h.b16 %v5709
    %v7609 = vunpack.c.l.b16 %v5710
    %v7610 = vunpack.c.h.b16 %v5710
    %v7611 = vunpack.c.l.b16 %v5711
    %v7612 = vunpack.c.h.b16 %v5711
    %v7613 = vunpack.c.l.b16 %v5712
    %v7614 = vunpack.c.l.b16 %v5713
    %v7615 = vunpack.c.h.b16 %v5713
    %v7616 = vunpack.c.l.b16 %v5714
    %v7617 = vunpack.c.h.b16 %v5714
    %v7618 = vunpack.c.l.b16 %v5715
    %v7619 = vunpack.c.h.b16 %v5715
    %v7620 = vunpack.c.l.b16 %v5716
    %v7621 = vunpack.c.l.b16 %v5717
    %v7622 = vunpack.c.h.b16 %v5717
    %v7623 = vunpack.c.l.b16 %v5718
    %v7624 = vunpack.c.h.b16 %v5718
    %v7625 = vunpack.c.l.b16 %v5719
    %v7626 = vunpack.c.h.b16 %v5719
    %v7627 = vunpack.c.l.b16 %v5720
    %v7628 = vunpack.c.l.b16 %v5721
    %v7629 = vunpack.c.h.b16 %v5721
    %v7630 = vunpack.c.l.b16 %v5722
    %v7631 = vunpack.c.h.b16 %v5722
    %v7632 = vunpack.c.l.b16 %v5723
    %v7633 = vunpack.c.h.b16 %v5723
    %v7634 = vunpack.c.l.b16 %v5724
    %v7635 = vunpack.c.l.b16 %v5725
    %v7636 = vunpack.c.h.b16 %v5725
    %v7637 = vunpack.c.l.b16 %v5726
    %v7638 = vunpack.c.h.b16 %v5726
    %v7639 = vunpack.c.l.b16 %v5727
    %v7640 = vunpack.c.h.b16 %v5727
    %v7641 = vunpack.c.l.b16 %v5728
    %v7642 = vunpack.c.l.b16 %v5729
    %v7643 = vunpack.c.h.b16 %v5729
    %v7644 = vunpack.c.l.b16 %v5730
    %v7645 = vunpack.c.h.b16 %v5730
    %v7646 = vunpack.c.l.b16 %v5731
    %v7647 = vunpack.c.h.b16 %v5731
    %v7648 = vunpack.c.l.b16 %v5732
    %v7649 = vunpack.c.l.b16 %v5733
    %v7650 = vunpack.c.h.b16 %v5733
    %v7651 = vunpack.c.l.b16 %v5734
    %v7652 = vunpack.c.h.b16 %v5734
    %v7653 = vunpack.c.l.b16 %v5735
    %v7654 = vunpack.c.h.b16 %v5735
    %v7655 = vunpack.c.l.b16 %v5736
    %v7656 = vunpack.c.l.b16 %v5737
    %v7657 = vunpack.c.h.b16 %v5737
    %v7658 = vunpack.c.l.b16 %v5738
    %v7659 = vunpack.c.h.b16 %v5738
    %v7660 = vunpack.c.l.b16 %v5739
    %v7661 = vunpack.c.h.b16 %v5739
    %v7662 = vunpack.c.l.b16 %v5740
    %v7663 = vunpack.c.l.b16 %v5741
    %v7664 = vunpack.c.h.b16 %v5741
    %v7665 = vunpack.c.l.b16 %v5742
    %v7666 = vunpack.c.h.b16 %v5742
    %v7667 = vunpack.c.l.b16 %v5743
    %v7668 = vunpack.c.h.b16 %v5743
    %v7669 = vunpack.c.l.b16 %v5744
    %v7670 = vunpack.c.l.b16 %v5745
    %v7671 = vunpack.c.h.b16 %v5745
    %v7672 = vunpack.c.l.b16 %v5746
    %v7673 = vunpack.c.h.b16 %v5746
    %v7674 = vunpack.c.l.b16 %v5747
    %v7675 = vunpack.c.h.b16 %v5747
    %v7676 = vunpack.c.l.b16 %v5748
    %v7677 = vunpack.c.l.b16 %v5749
    %v7678 = vunpack.c.h.b16 %v5749
    %v7679 = vunpack.c.l.b16 %v5750
    %v7680 = vunpack.c.h.b16 %v5750
    %v7681 = vunpack.c.l.b16 %v5751
    %v7682 = vunpack.c.h.b16 %v5751
    %v7683 = vunpack.c.l.b16 %v5752
    %v7684 = vunpack.c.l.b16 %v5753
    %v7685 = vunpack.c.h.b16 %v5753
    %v7686 = vunpack.c.l.b16 %v5754
    %v7687 = vunpack.c.h.b16 %v5754
    %v7688 = vunpack.c.l.b16 %v5755
    %v7689 = vunpack.c.h.b16 %v5755
    %v7690 = vunpack.c.l.b16 %v5756
    %v7691 = vunpack.c.l.b16 %v5757
    %v7692 = vunpack.c.h.b16 %v5757
    %v7693 = vunpack.c.l.b16 %v5758
    %v7694 = vunpack.c.h.b16 %v5758
    %v7695 = vunpack.c.l.b16 %v5759
    %v7696 = vunpack.c.h.b16 %v5759
    %v7697 = vunpack.c.l.b16 %v5760
    %v7698 = vunpack.c.l.b16 %v5761
    %v7699 = vunpack.c.h.b16 %v5761
    %v7700 = vunpack.c.l.b16 %v5762
    %v7701 = vunpack.c.h.b16 %v5762
    %v7702 = vunpack.c.l.b16 %v5763
    %v7703 = vunpack.c.h.b16 %v5763
    %v7704 = vunpack.c.l.b16 %v5764
    %v7705 = vunpack.c.l.b16 %v5765
    %v7706 = vunpack.c.h.b16 %v5765
    %v7707 = vunpack.c.l.b16 %v5766
    %v7708 = vunpack.c.h.b16 %v5766
    %v7709 = vunpack.c.l.b16 %v5767
    %v7710 = vunpack.c.h.b16 %v5767
    %v7711 = vunpack.c.l.b16 %v5768
    %v7712 = vunpack.c.l.b16 %v5769
    %v7713 = vunpack.c.h.b16 %v5769
    %v7714 = vunpack.c.l.b16 %v5770
    %v7715 = vunpack.c.h.b16 %v5770
    %v7716 = vunpack.c.l.b16 %v5771
    %v7717 = vunpack.c.h.b16 %v5771
    %v7718 = vunpack.c.l.b16 %v5772
    %v7719 = vunpack.c.l.b16 %v5773
    %v7720 = vunpack.c.h.b16 %v5773
    %v7721 = vunpack.c.l.b16 %v5774
    %v7722 = vunpack.c.h.b16 %v5774
    %v7723 = vunpack.c.l.b16 %v5775
    %v7724 = vunpack.c.h.b16 %v5775
    %v7725 = vunpack.c.l.b16 %v5776
    %v7726 = vunpack.c.l.b16 %v5777
    %v7727 = vunpack.c.h.b16 %v5777
    %v7728 = vunpack.c.l.b16 %v5778
    %v7729 = vunpack.c.h.b16 %v5778
    %v7730 = vunpack.c.l.b16 %v5779
    %v7731 = vunpack.c.h.b16 %v5779
    %v7732 = vunpack.c.l.b16 %v5780
    %v7733 = vunpack.c.l.b16 %v5781
    %v7734 = vunpack.c.h.b16 %v5781
    %v7735 = vunpack.c.l.b16 %v5782
    %v7736 = vunpack.c.h.b16 %v5782
    %v7737 = vunpack.c.l.b16 %v5783
    %v7738 = vunpack.c.h.b16 %v5783
    %v7739 = vunpack.c.l.b16 %v5784
    %v7740 = vunpack.c.l.b16 %v5785
    %v7741 = vunpack.c.h.b16 %v5785
    %v7742 = vunpack.c.l.b16 %v5786
    %v7743 = vunpack.c.h.b16 %v5786
    %v7744 = vunpack.c.l.b16 %v5787
    %v7745 = vunpack.c.h.b16 %v5787
    %v7746 = vunpack.c.l.b16 %v5788
    %v7747 = vunpack.c.l.b16 %v5789
    %v7748 = vunpack.c.h.b16 %v5789
    %v7749 = vunpack.c.l.b16 %v5790
    %v7750 = vunpack.c.h.b16 %v5790
    %v7751 = vunpack.c.l.b16 %v5791
    %v7752 = vunpack.c.h.b16 %v5791
    %v7753 = vunpack.c.l.b16 %v5792
    %v7754 = vunpack.c.l.b16 %v5793
    %v7755 = vunpack.c.h.b16 %v5793
    %v7756 = vunpack.c.l.b16 %v5794
    %v7757 = vunpack.c.h.b16 %v5794
    %v7758 = vunpack.c.l.b16 %v5795
    %v7759 = vunpack.c.h.b16 %v5795
    %v7760 = vunpack.c.l.b16 %v5796
    %v7761 = vunpack.c.l.b16 %v5797
    %v7762 = vunpack.c.h.b16 %v5797
    %v7763 = vunpack.c.l.b16 %v5798
    %v7764 = vunpack.c.h.b16 %v5798
    %v7765 = vunpack.c.l.b16 %v5799
    %v7766 = vunpack.c.h.b16 %v5799
    %v7767 = vunpack.c.l.b16 %v5800
    %v7768 = vunpack.c.l.b16 %v5801
    %v7769 = vunpack.c.h.b16 %v5801
    %v7770 = vunpack.c.l.b16 %v5802
    %v7771 = vunpack.c.h.b16 %v5802
    %v7772 = vunpack.c.l.b16 %v5803
    %v7773 = vunpack.c.h.b16 %v5803
    %v7774 = vunpack.c.l.b16 %v5804
    %v7775 = vunpack.c.l.b16 %v5805
    %v7776 = vunpack.c.h.b16 %v5805
    %v7777 = vunpack.c.l.b16 %v5806
    %v7778 = vunpack.c.h.b16 %v5806
    %v7779 = vunpack.c.l.b16 %v5807
    %v7780 = vunpack.c.h.b16 %v5807
    %v7781 = vunpack.c.l.b16 %v5808
    %v7782 = vunpack.c.l.b16 %v5809
    %v7783 = vunpack.c.h.b16 %v5809
    %v7784 = vunpack.c.l.b16 %v5810
    %v7785 = vunpack.c.h.b16 %v5810
    %v7786 = vunpack.c.l.b16 %v5811
    %v7787 = vunpack.c.h.b16 %v5811
    %v7788 = vunpack.c.l.b16 %v5812
    %v7789 = vunpack.c.l.b16 %v5813
    %v7790 = vunpack.c.h.b16 %v5813
    %v7791 = vunpack.c.l.b16 %v5814
    %v7792 = vunpack.c.h.b16 %v5814
    %v7793 = vunpack.c.l.b16 %v5815
    %v7794 = vunpack.c.h.b16 %v5815
    %v7795 = vunpack.c.l.b16 %v5816
    %v7796 = vunpack.c.l.b16 %v5817
    %v7797 = vunpack.c.h.b16 %v5817
    %v7798 = vunpack.c.l.b16 %v5818
    %v7799 = vunpack.c.h.b16 %v5818
    %v7800 = vunpack.c.l.b16 %v5819
    %v7801 = vunpack.c.h.b16 %v5819
    %v7802 = vunpack.c.l.b16 %v5820
    %v7803 = vunpack.c.l.b16 %v5821
    %v7804 = vunpack.c.h.b16 %v5821
    %v7805 = vunpack.c.l.b16 %v5822
    %v7806 = vunpack.c.h.b16 %v5822
    %v7807 = vunpack.c.l.b16 %v5823
    %v7808 = vunpack.c.h.b16 %v5823
    %v7809 = vunpack.c.l.b16 %v5824
    %v7810 = vunpack.c.l.b16 %v5825
    %v7811 = vunpack.c.h.b16 %v5825
    %v7812 = vunpack.c.l.b16 %v5826
    %v7813 = vunpack.c.h.b16 %v5826
    %v7814 = vunpack.c.l.b16 %v5827
    %v7815 = vunpack.c.h.b16 %v5827
    %v7816 = vunpack.c.l.b16 %v5828
    %v7817 = vunpack.c.l.b16 %v5829
    %v7818 = vunpack.c.h.b16 %v5829
    %v7819 = vunpack.c.l.b16 %v5830
    %v7820 = vunpack.c.h.b16 %v5830
    %v7821 = vunpack.c.l.b16 %v5831
    %v7822 = vunpack.c.h.b16 %v5831
    %v7823 = vunpack.c.l.b16 %v5832
    %v7824 = vunpack.c.l.b16 %v5833
    %v7825 = vunpack.c.h.b16 %v5833
    %v7826 = vunpack.c.l.b16 %v5834
    %v7827 = vunpack.c.h.b16 %v5834
    %v7828 = vunpack.c.l.b16 %v5835
    %v7829 = vunpack.c.h.b16 %v5835
    %v7830 = vunpack.c.l.b16 %v5836
    %v7831 = vunpack.c.l.b16 %v5837
    %v7832 = vunpack.c.h.b16 %v5837
    %v7833 = vunpack.c.l.b16 %v5838
    %v7834 = vunpack.c.h.b16 %v5838
    %v7835 = vunpack.c.l.b16 %v5839
    %v7836 = vunpack.c.h.b16 %v5839
    %v7837 = vunpack.c.l.b16 %v5840
    %v7838 = vunpack.c.l.b16 %v5841
    %v7839 = vunpack.c.h.b16 %v5841
    %v7840 = vunpack.c.l.b16 %v5842
    %v7841 = vunpack.c.h.b16 %v5842
    %v7842 = vunpack.c.l.b16 %v5843
    %v7843 = vunpack.c.h.b16 %v5843
    %v7844 = vunpack.c.l.b16 %v5844
    %v7845 = vunpack.c.l.b16 %v5845
    %v7846 = vunpack.c.h.b16 %v5845
    %v7847 = vunpack.c.l.b16 %v5846
    %v7848 = vunpack.c.h.b16 %v5846
    %v7849 = vunpack.c.l.b16 %v5847
    %v7850 = vunpack.c.h.b16 %v5847
    %v7851 = vunpack.c.l.b16 %v5848
    %v7852 = vunpack.c.l.b16 %v5849
    %v7853 = vunpack.c.h.b16 %v5849
    %v7854 = vunpack.c.l.b16 %v5850
    %v7855 = vunpack.c.h.b16 %v5850
    %v7856 = vunpack.c.l.b16 %v5851
    %v7857 = vunpack.c.h.b16 %v5851
    %v7858 = vunpack.c.l.b16 %v5852
    %v7859 = vunpack.c.l.b16 %v5853
    %v7860 = vunpack.c.h.b16 %v5853
    %v7861 = vunpack.c.l.b16 %v5854
    %v7862 = vunpack.c.h.b16 %v5854
    %v7863 = vunpack.c.l.b16 %v5855
    %v7864 = vunpack.c.h.b16 %v5855
    %v7865 = vunpack.c.l.b16 %v5856
    %v7866 = vunpack.c.l.b16 %v5857
    %v7867 = vunpack.c.h.b16 %v5857
    %v7868 = vunpack.c.l.b16 %v5858
    %v7869 = vunpack.c.h.b16 %v5858
    %v7870 = vunpack.c.l.b16 %v5859
    %v7871 = vunpack.c.h.b16 %v5859
    %v7872 = vunpack.c.l.b16 %v5860
    %v7873 = vunpack.c.l.b16 %v5861
    %v7874 = vunpack.c.h.b16 %v5861
    %v7875 = vunpack.c.l.b16 %v5862
    %v7876 = vunpack.c.h.b16 %v5862
    %v7877 = vunpack.c.l.b16 %v5863
    %v7878 = vunpack.c.h.b16 %v5863
    %v7879 = vunpack.c.l.b16 %v5864
    %v7880 = vunpack.c.l.b16 %v5865
    %v7881 = vunpack.c.h.b16 %v5865
    %v7882 = vunpack.c.l.b16 %v5866
    %v7883 = vunpack.c.h.b16 %v5866
    %v7884 = vunpack.c.l.b16 %v5867
    %v7885 = vunpack.c.h.b16 %v5867
    %v7886 = vunpack.c.l.b16 %v5868
    %v7887 = vunpack.c.l.b16 %v5869
    %v7888 = vunpack.c.h.b16 %v5869
    %v7889 = vunpack.c.l.b16 %v5870
    %v7890 = vunpack.c.h.b16 %v5870
    %v7891 = vunpack.c.l.b16 %v5871
    %v7892 = vunpack.c.h.b16 %v5871
    %v7893 = vunpack.c.l.b16 %v5872
    %v7894 = vunpack.c.l.b16 %v5873
    %v7895 = vunpack.c.h.b16 %v5873
    %v7896 = vunpack.c.l.b16 %v5874
    %v7897 = vunpack.c.h.b16 %v5874
    %v7898 = vunpack.c.l.b16 %v5875
    %v7899 = vunpack.c.h.b16 %v5875
    %v7900 = vunpack.c.l.b16 %v5876
    %v7901 = vunpack.c.l.b16 %v5877
    %v7902 = vunpack.c.h.b16 %v5877
    %v7903 = vunpack.c.l.b16 %v5878
    %v7904 = vunpack.c.h.b16 %v5878
    %v7905 = vunpack.c.l.b16 %v5879
    %v7906 = vunpack.c.h.b16 %v5879
    %v7907 = vunpack.c.l.b16 %v5880
    %v7908 = vunpack.c.l.b16 %v5881
    %v7909 = vunpack.c.h.b16 %v5881
    %v7910 = vunpack.c.l.b16 %v5882
    %v7911 = vunpack.c.h.b16 %v5882
    %v7912 = vunpack.c.l.b16 %v5883
    %v7913 = vunpack.c.h.b16 %v5883
    %v7914 = vunpack.c.l.b16 %v5884
    %v7915 = vunpack.c.l.b16 %v5885
    %v7916 = vunpack.c.h.b16 %v5885
    %v7917 = vunpack.c.l.b16 %v5886
    %v7918 = vunpack.c.h.b16 %v5886
    %v7919 = vunpack.c.l.b16 %v5887
    %v7920 = vunpack.c.h.b16 %v5887
    %v7921 = vunpack.c.l.b16 %v5888
    %v7922 = vunpack.c.l.b16 %v5889
    %v7923 = vunpack.c.h.b16 %v5889
    %v7924 = vunpack.c.l.b16 %v5890
    %v7925 = vunpack.c.h.b16 %v5890
    %v7926 = vunpack.c.l.b16 %v5891
    %v7927 = vunpack.c.h.b16 %v5891
    %v7928 = vunpack.c.l.b16 %v5892
    %v7929 = vunpack.c.l.b16 %v5893
    %v7930 = vunpack.c.h.b16 %v5893
    %v7931 = vunpack.c.l.b16 %v5894
    %v7932 = vunpack.c.h.b16 %v5894
    %v7933 = vunpack.c.l.b16 %v5895
    %v7934 = vunpack.c.h.b16 %v5895
    %v7935 = vunpack.c.l.b16 %v5896
    %v7936 = vunpack.c.l.b16 %v5897
    %v7937 = vunpack.c.h.b16 %v5897
    %v7938 = vunpack.c.l.b16 %v5898
    %v7939 = vunpack.c.h.b16 %v5898
    %v7940 = vunpack.c.l.b16 %v5899
    %v7941 = vunpack.c.h.b16 %v5899
    %v7942 = vunpack.c.l.b16 %v5900
    %v7943 = vunpack.c.l.b16 %v5901
    %v7944 = vunpack.c.h.b16 %v5901
    %v7945 = vunpack.c.l.b16 %v5902
    %v7946 = vunpack.c.h.b16 %v5902
    %v7947 = vunpack.c.l.b16 %v5903
    %v7948 = vunpack.c.h.b16 %v5903
    %v7949 = vunpack.c.l.b16 %v5904
    %v7950 = vunpack.c.l.b16 %v5905
    %v7951 = vunpack.c.h.b16 %v5905
    %v7952 = vunpack.c.l.b16 %v5906
    %v7953 = vunpack.c.h.b16 %v5906
    %v7954 = vunpack.c.l.b16 %v5907
    %v7955 = vunpack.c.h.b16 %v5907
    %v7956 = vunpack.c.l.b16 %v5908
    %v7957 = vunpack.c.l.b16 %v5909
    %v7958 = vunpack.c.h.b16 %v5909
    %v7959 = vunpack.c.l.b16 %v5910
    %v7960 = vunpack.c.h.b16 %v5910
    %v7961 = vunpack.c.l.b16 %v5911
    %v7962 = vunpack.c.h.b16 %v5911
    %v7963 = vunpack.c.l.b16 %v5912
    %v7964 = vunpack.c.l.b16 %v5913
    %v7965 = vunpack.c.h.b16 %v5913
    %v7966 = vunpack.c.l.b16 %v5914
    %v7967 = vunpack.c.h.b16 %v5914
    %v7968 = vunpack.c.l.b16 %v5915
    %v7969 = vunpack.c.h.b16 %v5915
    %v7970 = vunpack.c.l.b16 %v5916
    %v7971 = vunpack.c.l.b16 %v5917
    %v7972 = vunpack.c.h.b16 %v5917
    %v7973 = vunpack.c.l.b16 %v5918
    %v7974 = vunpack.c.h.b16 %v5918
    %v7975 = vunpack.c.l.b16 %v5919
    %v7976 = vunpack.c.h.b16 %v5919
    %v7977 = vunpack.c.l.b16 %v5920
    %v7978 = vunpack.c.l.b16 %v5921
    %v7979 = vunpack.c.h.b16 %v5921
    %v7980 = vunpack.c.l.b16 %v5922
    %v7981 = vunpack.c.h.b16 %v5922
    %v7982 = vunpack.c.l.b16 %v5923
    %v7983 = vunpack.c.h.b16 %v5923
    %v7984 = vunpack.c.l.b16 %v5924
    %v7985 = vunpack.c.l.b16 %v5925
    %v7986 = vunpack.c.h.b16 %v5925
    %v7987 = vunpack.c.l.b16 %v5926
    %v7988 = vunpack.c.h.b16 %v5926
    %v7989 = vunpack.c.l.b16 %v5927
    %v7990 = vunpack.c.h.b16 %v5927
    %v7991 = vunpack.c.l.b16 %v5928
    %v7992 = vunpack.c.l.b16 %v5929
    %v7993 = vunpack.c.h.b16 %v5929
    %v7994 = vunpack.c.l.b16 %v5930
    %v7995 = vunpack.c.h.b16 %v5930
    %v7996 = vunpack.c.l.b16 %v5931
    %v7997 = vunpack.c.h.b16 %v5931
    %v7998 = vunpack.c.l.b16 %v5932
    %v7999 = vunpack.c.l.b16 %v5933
    %v8000 = vunpack.c.h.b16 %v5933
    %v8001 = vunpack.c.l.b16 %v5934
    %v8002 = vunpack.c.h.b16 %v5934
    %v8003 = vunpack.c.l.b16 %v5935
    %v8004 = vunpack.c.h.b16 %v5935
    %v8005 = vunpack.c.l.b16 %v5936
    %v8006 = vunpack.c.l.b16 %v5937
    %v8007 = vunpack.c.h.b16 %v5937
    %v8008 = vunpack.c.l.b16 %v5938
    %v8009 = vunpack.c.h.b16 %v5938
    %v8010 = vunpack.c.l.b16 %v5939
    %v8011 = vunpack.c.h.b16 %v5939
    %v8012 = vunpack.c.l.b16 %v5940
    %v8013 = vunpack.c.l.b16 %v5941
    %v8014 = vunpack.c.h.b16 %v5941
    %v8015 = vunpack.c.l.b16 %v5942
    %v8016 = vunpack.c.h.b16 %v5942
    %v8017 = vunpack.c.l.b16 %v5943
    %v8018 = vunpack.c.h.b16 %v5943
    %v8019 = vunpack.c.l.b16 %v5944
    %v8020 = vunpack.c.l.b16 %v5945
    %v8021 = vunpack.c.h.b16 %v5945
    %v8022 = vunpack.c.l.b16 %v5946
    %v8023 = vunpack.c.h.b16 %v5946
    %v8024 = vunpack.c.l.b16 %v5947
    %v8025 = vunpack.c.h.b16 %v5947
    %v8026 = vunpack.c.l.b16 %v5948
    %v8027 = vunpack.c.l.b16 %v5949
    %v8028 = vunpack.c.h.b16 %v5949
    %v8029 = vunpack.c.l.b16 %v5950
    %v8030 = vunpack.c.h.b16 %v5950
    %v8031 = vunpack.c.l.b16 %v5951
    %v8032 = vunpack.c.h.b16 %v5951
    %v8033 = vunpack.c.l.b16 %v5952
    %v8034 = vunpack.c.l.b16 %v5953
    %v8035 = vunpack.c.h.b16 %v5953
    %v8036 = vunpack.c.l.b16 %v5954
    %v8037 = vunpack.c.h.b16 %v5954
    %v8038 = vunpack.c.l.b16 %v5955
    %v8039 = vunpack.c.h.b16 %v5955
    %v8040 = vunpack.c.l.b16 %v5956
    %v8041 = vunpack.c.l.b16 %v5957
    %v8042 = vunpack.c.h.b16 %v5957
    %v8043 = vunpack.c.l.b16 %v5958
    %v8044 = vunpack.c.h.b16 %v5958
    %v8045 = vunpack.c.l.b16 %v5959
    %v8046 = vunpack.c.h.b16 %v5959
    %v8047 = vunpack.c.l.b16 %v5960
    %v8048 = vunpack.c.l.b16 %v5961
    %v8049 = vunpack.c.h.b16 %v5961
    %v8050 = vunpack.c.l.b16 %v5962
    %v8051 = vunpack.c.h.b16 %v5962
    %v8052 = vunpack.c.l.b16 %v5963
    %v8053 = vunpack.c.h.b16 %v5963
    %v8054 = vunpack.c.l.b16 %v5964
    %v8055 = vunpack.c.l.b16 %v5965
    %v8056 = vunpack.c.h.b16 %v5965
    %v8057 = vunpack.c.l.b16 %v5966
    %v8058 = vunpack.c.h.b16 %v5966
    %v8059 = vunpack.c.l.b16 %v5967
    %v8060 = vunpack.c.h.b16 %v5967
    %v8061 = vunpack.c.l.b16 %v5968
    %v8062 = vunpack.c.l.b16 %v5969
    %v8063 = vunpack.c.h.b16 %v5969
    %v8064 = vunpack.c.l.b16 %v5970
    %v8065 = vunpack.c.h.b16 %v5970
    %v8066 = vunpack.c.l.b16 %v5971
    %v8067 = vunpack.c.h.b16 %v5971
    %v8068 = vunpack.c.l.b16 %v5972
    %v8069 = vunpack.c.l.b16 %v5973
    %v8070 = vunpack.c.h.b16 %v5973
    %v8071 = vunpack.c.l.b16 %v5974
    %v8072 = vunpack.c.h.b16 %v5974
    %v8073 = vunpack.c.l.b16 %v5975
    %v8074 = vunpack.c.h.b16 %v5975
    %v8075 = vunpack.c.l.b16 %v5976
    %v8076 = vunpack.c.l.b16 %v5977
    %v8077 = vunpack.c.h.b16 %v5977
    %v8078 = vunpack.c.l.b16 %v5978
    %v8079 = vunpack.c.h.b16 %v5978
    %v8080 = vunpack.c.l.b16 %v5979
    %v8081 = vunpack.c.h.b16 %v5979
    %v8082 = vunpack.c.l.b16 %v5980
    %v8083 = vunpack.c.l.b16 %v5981
    %v8084 = vunpack.c.h.b16 %v5981
    %v8085 = vunpack.c.l.b16 %v5982
    %v8086 = vunpack.c.h.b16 %v5982
    %v8087 = vunpack.c.l.b16 %v5983
    %v8088 = vunpack.c.h.b16 %v5983
    %v8089 = vunpack.c.l.b16 %v5984
    %v8090 = vunpack.c.l.b16 %v5985
    %v8091 = vunpack.c.h.b16 %v5985
    %v8092 = vunpack.c.l.b16 %v5986
    %v8093 = vunpack.c.h.b16 %v5986
    %v8094 = vunpack.c.l.b16 %v5987
    %v8095 = vunpack.c.h.b16 %v5987
    %v8096 = vunpack.c.l.b16 %v5988
    %v8097 = vunpack.c.l.b16 %v5989
    %v8098 = vunpack.c.h.b16 %v5989
    %v8099 = vunpack.c.l.b16 %v5990
    %v8100 = vunpack.c.h.b16 %v5990
    %v8101 = vunpack.c.l.b16 %v5991
    %v8102 = vunpack.c.h.b16 %v5991
    %v8103 = vunpack.c.l.b16 %v5992
    %v8104 = vunpack.c.l.b16 %v5993
    %v8105 = vunpack.c.h.b16 %v5993
    %v8106 = vunpack.c.l.b16 %v5994
    %v8107 = vunpack.c.h.b16 %v5994
    %v8108 = vunpack.c.l.b16 %v5995
    %v8109 = vunpack.c.h.b16 %v5995
    %v8110 = vunpack.c.l.b16 %v5996
    %v8111 = vunpack.c.l.b16 %v5997
    %v8112 = vunpack.c.h.b16 %v5997
    %v8113 = vunpack.c.l.b16 %v5998
    %v8114 = vunpack.c.h.b16 %v5998
    %v8115 = vunpack.c.l.b16 %v5999
    %v8116 = vunpack.c.h.b16 %v5999
    %v8117 = vunpack.c.l.b16 %v6000
    %v8118 = vunpack.c.l.b16 %v6001
    %v8119 = vunpack.c.h.b16 %v6001
    %v8120 = vunpack.c.l.b16 %v6002
    %v8121 = vunpack.c.h.b16 %v6002
    %v8122 = vunpack.c.l.b16 %v6003
    %v8123 = vunpack.c.h.b16 %v6003
    %v8124 = vunpack.c.l.b16 %v6004
    %v8125 = vunpack.c.l.b16 %v6005
    %v8126 = vunpack.c.h.b16 %v6005
    %v8127 = vunpack.c.l.b16 %v6006
    %v8128 = vunpack.c.h.b16 %v6006
    %v8129 = vunpack.c.l.b16 %v6007
    %v8130 = vunpack.c.h.b16 %v6007
    %v8131 = vunpack.c.l.b16 %v6008
    %v8132 = vunpack.c.l.b16 %v6009
    %v8133 = vunpack.c.h.b16 %v6009
    %v8134 = vunpack.c.l.b16 %v6010
    %v8135 = vunpack.c.h.b16 %v6010
    %v8136 = vunpack.c.l.b16 %v6011
    %v8137 = vunpack.c.h.b16 %v6011
    %v8138 = vunpack.c.l.b16 %v6012
    %v8139 = vunpack.c.l.b16 %v6013
    %v8140 = vunpack.c.h.b16 %v6013
    %v8141 = vunpack.c.l.b16 %v6014
    %v8142 = vunpack.c.h.b16 %v6014
    %v8143 = vunpack.c.l.b16 %v6015
    %v8144 = vunpack.c.h.b16 %v6015
    %v8145 = vunpack.c.l.b16 %v6016
    %v8146 = vunpack.c.l.b16 %v6017
    %v8147 = vunpack.c.h.b16 %v6017
    %v8148 = vunpack.c.l.b16 %v6018
    %v8149 = vunpack.c.h.b16 %v6018
    %v8150 = vunpack.c.l.b16 %v6019
    %v8151 = vunpack.c.h.b16 %v6019
    %v8152 = vunpack.c.l.b16 %v6020
    %v8153 = vunpack.c.l.b16 %v6021
    %v8154 = vunpack.c.h.b16 %v6021
    %v8155 = vunpack.c.l.b16 %v6022
    %v8156 = vunpack.c.h.b16 %v6022
    %v8157 = vunpack.c.l.b16 %v6023
    %v8158 = vunpack.c.h.b16 %v6023
    %v8159 = vunpack.c.l.b16 %v6024
    %v8160 = vunpack.c.l.b16 %v6025
    %v8161 = vunpack.c.h.b16 %v6025
    %v8162 = vunpack.c.l.b16 %v6026
    %v8163 = vunpack.c.h.b16 %v6026
    %v8164 = vunpack.c.l.b16 %v6027
    %v8165 = vunpack.c.h.b16 %v6027
    %v8166 = vunpack.c.l.b16 %v6028
    %v8167 = vunpack.c.l.b16 %v6029
    %v8168 = vunpack.c.h.b16 %v6029
    %v8169 = vunpack.c.l.b16 %v6030
    %v8170 = vunpack.c.h.b16 %v6030
    %v8171 = vunpack.c.l.b16 %v6031
    %v8172 = vunpack.c.h.b16 %v6031
    %v8173 = vunpack.c.l.b16 %v6032
    %v8174 = vunpack.c.l.b16 %v6033
    %v8175 = vunpack.c.h.b16 %v6033
    %v8176 = vunpack.c.l.b16 %v6034
    %v8177 = vunpack.c.h.b16 %v6034
    %v8178 = vunpack.c.l.b16 %v6035
    %v8179 = vunpack.c.h.b16 %v6035
    %v8180 = vunpack.c.l.b16 %v6036
    %v8181 = vunpack.c.l.b16 %v6037
    %v8182 = vunpack.c.h.b16 %v6037
    %v8183 = vunpack.c.l.b16 %v6038
    %v8184 = vunpack.c.h.b16 %v6038
    %v8185 = vunpack.c.l.b16 %v6039
    %v8186 = vunpack.c.h.b16 %v6039
    %v8187 = vunpack.c.l.b16 %v6040
    %v8188 = vunpack.c.l.b16 %v6041
    %v8189 = vunpack.c.h.b16 %v6041
    %v8190 = vunpack.c.l.b16 %v6042
    %v8191 = vunpack.c.h.b16 %v6042
    %v8192 = vunpack.c.l.b16 %v6043
    %v8193 = vunpack.c.h.b16 %v6043
    %v8194 = vunpack.c.l.b16 %v6044
    %v8195 = vunpack.c.l.b16 %v6045
    %v8196 = vunpack.c.h.b16 %v6045
    %v8197 = vunpack.c.l.b16 %v6046
    %v8198 = vunpack.c.h.b16 %v6046
    %v8199 = vunpack.c.l.b16 %v6047
    %v8200 = vunpack.c.h.b16 %v6047
    %v8201 = vunpack.c.l.b16 %v6048
    %v8202 = vunpack.c.l.b16 %v6049
    %v8203 = vunpack.c.h.b16 %v6049
    %v8204 = vunpack.c.l.b16 %v6050
    %v8205 = vunpack.c.h.b16 %v6050
    %v8206 = vunpack.c.l.b16 %v6051
    %v8207 = vunpack.c.h.b16 %v6051
    %v8208 = vunpack.c.l.b16 %v6052
    %v8209 = vpack.c.b16 %v6844, %v6837
    %v8210 = vpack.c.b16 %v6845, %v6838
    %v8211 = vpack.c.b16 %v6846, %v6839
    %v8212 = vpack.c.b16 %v6847, %v6840
    %v8213 = vpack.c.b16 %v6848, %v6841
    %v8214 = vpack.c.b16 %v6849, %v6842
    %v8215 = vpack.c.b16 %v6850, %v6843
    %v8216 = vpack.c.b16 %v6858, %v6851
    %v8217 = vpack.c.b16 %v6859, %v6852
    %v8218 = vpack.c.b16 %v6860, %v6853
    %v8219 = vpack.c.b16 %v6861, %v6854
    %v8220 = vpack.c.b16 %v6862, %v6855
    %v8221 = vpack.c.b16 %v6863, %v6856
    %v8222 = vpack.c.b16 %v6864, %v6857
    %v8223 = vpack.c.b16 %v6872, %v6865
    %v8224 = vpack.c.b16 %v6873, %v6866
    %v8225 = vpack.c.b16 %v6874, %v6867
    %v8226 = vpack.c.b16 %v6875, %v6868
    %v8227 = vpack.c.b16 %v6876, %v6869
    %v8228 = vpack.c.b16 %v6877, %v6870
    %v8229 = vpack.c.b16 %v6878, %v6871
    %v8230 = vpack.c.b16 %v6886, %v6879
    %v8231 = vpack.c.b16 %v6887, %v6880
    %v8232 = vpack.c.b16 %v6888, %v6881
    %v8233 = vpack.c.b16 %v6889, %v6882
    %v8234 = vpack.c.b16 %v6890, %v6883
    %v8235 = vpack.c.b16 %v6891, %v6884
    %v8236 = vpack.c.b16 %v6892, %v6885
    %v8237 = vpack.c.b16 %v6900, %v6893
    %v8238 = vpack.c.b16 %v6901, %v6894
    %v8239 = vpack.c.b16 %v6902, %v6895
    %v8240 = vpack.c.b16 %v6903, %v6896
    %v8241 = vpack.c.b16 %v6904, %v6897
    %v8242 = vpack.c.b16 %v6905, %v6898
    %v8243 = vpack.c.b16 %v6906, %v6899
    %v8244 = vpack.c.b16 %v6914, %v6907
    %v8245 = vpack.c.b16 %v6915, %v6908
    %v8246 = vpack.c.b16 %v6916, %v6909
    %v8247 = vpack.c.b16 %v6917, %v6910
    %v8248 = vpack.c.b16 %v6918, %v6911
    %v8249 = vpack.c.b16 %v6919, %v6912
    %v8250 = vpack.c.b16 %v6920, %v6913
    %v8251 = vpack.c.b16 %v6928, %v6921
    %v8252 = vpack.c.b16 %v6929, %v6922
    %v8253 = vpack.c.b16 %v6930, %v6923
    %v8254 = vpack.c.b16 %v6931, %v6924
    %v8255 = vpack.c.b16 %v6932, %v6925
    %v8256 = vpack.c.b16 %v6933, %v6926
    %v8257 = vpack.c.b16 %v6934, %v6927
    %v8258 = vpack.c.b16 %v6942, %v6935
    %v8259 = vpack.c.b16 %v6943, %v6936
    %v8260 = vpack.c.b16 %v6944, %v6937
    %v8261 = vpack.c.b16 %v6945, %v6938
    %v8262 = vpack.c.b16 %v6946, %v6939
    %v8263 = vpack.c.b16 %v6947, %v6940
    %v8264 = vpack.c.b16 %v6948, %v6941
    %v8265 = vpack.c.b16 %v6956, %v6949
    %v8266 = vpack.c.b16 %v6957, %v6950
    %v8267 = vpack.c.b16 %v6958, %v6951
    %v8268 = vpack.c.b16 %v6959, %v6952
    %v8269 = vpack.c.b16 %v6960, %v6953
    %v8270 = vpack.c.b16 %v6961, %v6954
    %v8271 = vpack.c.b16 %v6962, %v6955
    %v8272 = vpack.c.b16 %v6970, %v6963
    %v8273 = vpack.c.b16 %v6971, %v6964
    %v8274 = vpack.c.b16 %v6972, %v6965
    %v8275 = vpack.c.b16 %v6973, %v6966
    %v8276 = vpack.c.b16 %v6974, %v6967
    %v8277 = vpack.c.b16 %v6975, %v6968
    %v8278 = vpack.c.b16 %v6976, %v6969
    %v8279 = vpack.c.b16 %v6984, %v6977
    %v8280 = vpack.c.b16 %v6985, %v6978
    %v8281 = vpack.c.b16 %v6986, %v6979
    %v8282 = vpack.c.b16 %v6987, %v6980
    %v8283 = vpack.c.b16 %v6988, %v6981
    %v8284 = vpack.c.b16 %v6989, %v6982
    %v8285 = vpack.c.b16 %v6990, %v6983
    %v8286 = vpack.c.b16 %v6998, %v6991
    %v8287 = vpack.c.b16 %v6999, %v6992
    %v8288 = vpack.c.b16 %v7000, %v6993
    %v8289 = vpack.c.b16 %v7001, %v6994
    %v8290 = vpack.c.b16 %v7002, %v6995
    %v8291 = vpack.c.b16 %v7003, %v6996
    %v8292 = vpack.c.b16 %v7004, %v6997
    %v8293 = vpack.c.b16 %v7012, %v7005
    %v8294 = vpack.c.b16 %v7013, %v7006
    %v8295 = vpack.c.b16 %v7014, %v7007
    %v8296 = vpack.c.b16 %v7015, %v7008
    %v8297 = vpack.c.b16 %v7016, %v7009
    %v8298 = vpack.c.b16 %v7017, %v7010
    %v8299 = vpack.c.b16 %v7018, %v7011
    %v8300 = vpack.c.b16 %v7026, %v7019
    %v8301 = vpack.c.b16 %v7027, %v7020
    %v8302 = vpack.c.b16 %v7028, %v7021
    %v8303 = vpack.c.b16 %v7029, %v7022
    %v8304 = vpack.c.b16 %v7030, %v7023
    %v8305 = vpack.c.b16 %v7031, %v7024
    %v8306 = vpack.c.b16 %v7032, %v7025
    %v8307 = vpack.c.b16 %v7040, %v7033
    %v8308 = vpack.c.b16 %v7041, %v7034
    %v8309 = vpack.c.b16 %v7042, %v7035
    %v8310 = vpack.c.b16 %v7043, %v7036
    %v8311 = vpack.c.b16 %v7044, %v7037
    %v8312 = vpack.c.b16 %v7045, %v7038
    %v8313 = vpack.c.b16 %v7046, %v7039
    %v8314 = vpack.c.b16 %v7054, %v7047
    %v8315 = vpack.c.b16 %v7055, %v7048
    %v8316 = vpack.c.b16 %v7056, %v7049
    %v8317 = vpack.c.b16 %v7057, %v7050
    %v8318 = vpack.c.b16 %v7058, %v7051
    %v8319 = vpack.c.b16 %v7059, %v7052
    %v8320 = vpack.c.b16 %v7060, %v7053
    %v8321 = vpack.c.b16 %v7068, %v7061
    %v8322 = vpack.c.b16 %v7069, %v7062
    %v8323 = vpack.c.b16 %v7070, %v7063
    %v8324 = vpack.c.b16 %v7071, %v7064
    %v8325 = vpack.c.b16 %v7072, %v7065
    %v8326 = vpack.c.b16 %v7073, %v7066
    %v8327 = vpack.c.b16 %v7074, %v7067
    %v8328 = vpack.c.b16 %v7082, %v7075
    %v8329 = vpack.c.b16 %v7083, %v7076
    %v8330 = vpack.c.b16 %v7084, %v7077
    %v8331 = vpack.c.b16 %v7085, %v7078
    %v8332 = vpack.c.b16 %v7086, %v7079
    %v8333 = vpack.c.b16 %v7087, %v7080
    %v8334 = vpack.c.b16 %v7088, %v7081
    %v8335 = vpack.c.b16 %v7096, %v7089
    %v8336 = vpack.c.b16 %v7097, %v7090
    %v8337 = vpack.c.b16 %v7098, %v7091
    %v8338 = vpack.c.b16 %v7099, %v7092
    %v8339 = vpack.c.b16 %v7100, %v7093
    %v8340 = vpack.c.b16 %v7101, %v7094
    %v8341 = vpack.c.b16 %v7102, %v7095
    %v8342 = vpack.c.b16 %v7110, %v7103
    %v8343 = vpack.c.b16 %v7111, %v7104
    %v8344 = vpack.c.b16 %v7112, %v7105
    %v8345 = vpack.c.b16 %v7113, %v7106
    %v8346 = vpack.c.b16 %v7114, %v7107
    %v8347 = vpack.c.b16 %v7115, %v7108
    %v8348 = vpack.c.b16 %v7116, %v7109
    %v8349 = vpack.c.b16 %v7124, %v7117
    %v8350 = vpack.c.b16 %v7125, %v7118
    %v8351 = vpack.c.b16 %v7126, %v7119
    %v8352 = vpack.c.b16 %v7127, %v7120
    %v8353 = vpack.c.b16 %v7128, %v7121
    %v8354 = vpack.c.b16 %v7129, %v7122
    %v8355 = vpack.c.b16 %v7130, %v7123
    %v8356 = vpack.c.b16 %v7138, %v7131
    %v8357 = vpack.c.b16 %v7139, %v7132
    %v8358 = vpack.c.b16 %v7140, %v7133
    %v8359 = vpack.c.b16 %v7141, %v7134
    %v8360 = vpack.c.b16 %v7142, %v7135
    %v8361 = vpack.c.b16 %v7143, %v7136
    %v8362 = vpack.c.b16 %v7144, %v7137
    %v8363 = vpack.c.b16 %v7152, %v7145
    %v8364 = vpack.c.b16 %v7153, %v7146
    %v8365 = vpack.c.b16 %v7154, %v7147
    %v8366 = vpack.c.b16 %v7155, %v7148
    %v8367 = vpack.c.b16 %v7156, %v7149
    %v8368 = vpack.c.b16 %v7157, %v7150
    %v8369 = vpack.c.b16 %v7158, %v7151
    %v8370 = vpack.c.b16 %v7166, %v7159
    %v8371 = vpack.c.b16 %v7167, %v7160
    %v8372 = vpack.c.b16 %v7168, %v7161
    %v8373 = vpack.c.b16 %v7169, %v7162
    %v8374 = vpack.c.b16 %v7170, %v7163
    %v8375 = vpack.c.b16 %v7171, %v7164
    %v8376 = vpack.c.b16 %v7172, %v7165
    %v8377 = vpack.c.b16 %v7180, %v7173
    %v8378 = vpack.c.b16 %v7181, %v7174
    %v8379 = vpack.c.b16 %v7182, %v7175
    %v8380 = vpack.c.b16 %v7183, %v7176
    %v8381 = vpack.c.b16 %v7184, %v7177
    %v8382 = vpack.c.b16 %v7185, %v7178
    %v8383 = vpack.c.b16 %v7186, %v7179
    %v8384 = vpack.c.b16 %v7194, %v7187
    %v8385 = vpack.c.b16 %v7195, %v7188
    %v8386 = vpack.c.b16 %v7196, %v7189
    %v8387 = vpack.c.b16 %v7197, %v7190
    %v8388 = vpack.c.b16 %v7198, %v7191
    %v8389 = vpack.c.b16 %v7199, %v7192
    %v8390 = vpack.c.b16 %v7200, %v7193
    %v8391 = vpack.c.b16 %v7208, %v7201
    %v8392 = vpack.c.b16 %v7209, %v7202
    %v8393 = vpack.c.b16 %v7210, %v7203
    %v8394 = vpack.c.b16 %v7211, %v7204
    %v8395 = vpack.c.b16 %v7212, %v7205
    %v8396 = vpack.c.b16 %v7213, %v7206
    %v8397 = vpack.c.b16 %v7214, %v7207
    %v8398 = vpack.c.b16 %v7222, %v7215
    %v8399 = vpack.c.b16 %v7223, %v7216
    %v8400 = vpack.c.b16 %v7224, %v7217
    %v8401 = vpack.c.b16 %v7225, %v7218
    %v8402 = vpack.c.b16 %v7226, %v7219
    %v8403 = vpack.c.b16 %v7227, %v7220
    %v8404 = vpack.c.b16 %v7228, %v7221
    %v8405 = vpack.c.b16 %v7236, %v7229
    %v8406 = vpack.c.b16 %v7237, %v7230
    %v8407 = vpack.c.b16 %v7238, %v7231
    %v8408 = vpack.c.b16 %v7239, %v7232
    %v8409 = vpack.c.b16 %v7240, %v7233
    %v8410 = vpack.c.b16 %v7241, %v7234
    %v8411 = vpack.c.b16 %v7242, %v7235
    %v8412 = vpack.c.b16 %v7250, %v7243
    %v8413 = vpack.c.b16 %v7251, %v7244
    %v8414 = vpack.c.b16 %v7252, %v7245
    %v8415 = vpack.c.b16 %v7253, %v7246
    %v8416 = vpack.c.b16 %v7254, %v7247
    %v8417 = vpack.c.b16 %v7255, %v7248
    %v8418 = vpack.c.b16 %v7256, %v7249
    %v8419 = vpack.c.b16 %v7264, %v7257
    %v8420 = vpack.c.b16 %v7265, %v7258
    %v8421 = vpack.c.b16 %v7266, %v7259
    %v8422 = vpack.c.b16 %v7267, %v7260
    %v8423 = vpack.c.b16 %v7268, %v7261
    %v8424 = vpack.c.b16 %v7269, %v7262
    %v8425 = vpack.c.b16 %v7270, %v7263
    %v8426 = vpack.c.b16 %v7278, %v7271
    %v8427 = vpack.c.b16 %v7279, %v7272
    %v8428 = vpack.c.b16 %v7280, %v7273
    %v8429 = vpack.c.b16 %v7281, %v7274
    %v8430 = vpack.c.b16 %v7282, %v7275
    %v8431 = vpack.c.b16 %v7283, %v7276
    %v8432 = vpack.c.b16 %v7284, %v7277
    %v8433 = vpack.c.b16 %v7292, %v7285
    %v8434 = vpack.c.b16 %v7293, %v7286
    %v8435 = vpack.c.b16 %v7294, %v7287
    %v8436 = vpack.c.b16 %v7295, %v7288
    %v8437 = vpack.c.b16 %v7296, %v7289
    %v8438 = vpack.c.b16 %v7297, %v7290
    %v8439 = vpack.c.b16 %v7298, %v7291
    %v8440 = vpack.c.b16 %v7306, %v7299
    %v8441 = vpack.c.b16 %v7307, %v7300
    %v8442 = vpack.c.b16 %v7308, %v7301
    %v8443 = vpack.c.b16 %v7309, %v7302
    %v8444 = vpack.c.b16 %v7310, %v7303
    %v8445 = vpack.c.b16 %v7311, %v7304
    %v8446 = vpack.c.b16 %v7312, %v7305
    %v8447 = vpack.c.b16 %v7320, %v7313
    %v8448 = vpack.c.b16 %v7321, %v7314
    %v8449 = vpack.c.b16 %v7322, %v7315
    %v8450 = vpack.c.b16 %v7323, %v7316
    %v8451 = vpack.c.b16 %v7324, %v7317
    %v8452 = vpack.c.b16 %v7325, %v7318
    %v8453 = vpack.c.b16 %v7326, %v7319
    %v8454 = vpack.c.b16 %v7334, %v7327
    %v8455 = vpack.c.b16 %v7335, %v7328
    %v8456 = vpack.c.b16 %v7336, %v7329
    %v8457 = vpack.c.b16 %v7337, %v7330
    %v8458 = vpack.c.b16 %v7338, %v7331
    %v8459 = vpack.c.b16 %v7339, %v7332
    %v8460 = vpack.c.b16 %v7340, %v7333
    %v8461 = vpack.c.b16 %v7348, %v7341
    %v8462 = vpack.c.b16 %v7349, %v7342
    %v8463 = vpack.c.b16 %v7350, %v7343
    %v8464 = vpack.c.b16 %v7351, %v7344
    %v8465 = vpack.c.b16 %v7352, %v7345
    %v8466 = vpack.c.b16 %v7353, %v7346
    %v8467 = vpack.c.b16 %v7354, %v7347
    %v8468 = vpack.c.b16 %v7362, %v7355
    %v8469 = vpack.c.b16 %v7363, %v7356
    %v8470 = vpack.c.b16 %v7364, %v7357
    %v8471 = vpack.c.b16 %v7365, %v7358
    %v8472 = vpack.c.b16 %v7366, %v7359
    %v8473 = vpack.c.b16 %v7367, %v7360
    %v8474 = vpack.c.b16 %v7368, %v7361
    %v8475 = vpack.c.b16 %v7376, %v7369
    %v8476 = vpack.c.b16 %v7377, %v7370
    %v8477 = vpack.c.b16 %v7378, %v7371
    %v8478 = vpack.c.b16 %v7379, %v7372
    %v8479 = vpack.c.b16 %v7380, %v7373
    %v8480 = vpack.c.b16 %v7381, %v7374
    %v8481 = vpack.c.b16 %v7382, %v7375
    %v8482 = vpack.c.b16 %v7390, %v7383
    %v8483 = vpack.c.b16 %v7391, %v7384
    %v8484 = vpack.c.b16 %v7392, %v7385
    %v8485 = vpack.c.b16 %v7393, %v7386
    %v8486 = vpack.c.b16 %v7394, %v7387
    %v8487 = vpack.c.b16 %v7395, %v7388
    %v8488 = vpack.c.b16 %v7396, %v7389
    %v8489 = vpack.c.b16 %v7404, %v7397
    %v8490 = vpack.c.b16 %v7405, %v7398
    %v8491 = vpack.c.b16 %v7406, %v7399
    %v8492 = vpack.c.b16 %v7407, %v7400
    %v8493 = vpack.c.b16 %v7408, %v7401
    %v8494 = vpack.c.b16 %v7409, %v7402
    %v8495 = vpack.c.b16 %v7410, %v7403
    %v8496 = vpack.c.b16 %v7418, %v7411
    %v8497 = vpack.c.b16 %v7419, %v7412
    %v8498 = vpack.c.b16 %v7420, %v7413
    %v8499 = vpack.c.b16 %v7421, %v7414
    %v8500 = vpack.c.b16 %v7422, %v7415
    %v8501 = vpack.c.b16 %v7423, %v7416
    %v8502 = vpack.c.b16 %v7424, %v7417
    %v8503 = vpack.c.b16 %v7432, %v7425
    %v8504 = vpack.c.b16 %v7433, %v7426
    %v8505 = vpack.c.b16 %v7434, %v7427
    %v8506 = vpack.c.b16 %v7435, %v7428
    %v8507 = vpack.c.b16 %v7436, %v7429
    %v8508 = vpack.c.b16 %v7437, %v7430
    %v8509 = vpack.c.b16 %v7438, %v7431
    %v8510 = vpack.c.b16 %v7446, %v7439
    %v8511 = vpack.c.b16 %v7447, %v7440
    %v8512 = vpack.c.b16 %v7448, %v7441
    %v8513 = vpack.c.b16 %v7449, %v7442
    %v8514 = vpack.c.b16 %v7450, %v7443
    %v8515 = vpack.c.b16 %v7451, %v7444
    %v8516 = vpack.c.b16 %v7452, %v7445
    %v8517 = vpack.c.b16 %v7460, %v7453
    %v8518 = vpack.c.b16 %v7461, %v7454
    %v8519 = vpack.c.b16 %v7462, %v7455
    %v8520 = vpack.c.b16 %v7463, %v7456
    %v8521 = vpack.c.b16 %v7464, %v7457
    %v8522 = vpack.c.b16 %v7465, %v7458
    %v8523 = vpack.c.b16 %v7466, %v7459
    %v8524 = vpack.c.b16 %v7474, %v7467
    %v8525 = vpack.c.b16 %v7475, %v7468
    %v8526 = vpack.c.b16 %v7476, %v7469
    %v8527 = vpack.c.b16 %v7477, %v7470
    %v8528 = vpack.c.b16 %v7478, %v7471
    %v8529 = vpack.c.b16 %v7479, %v7472
    %v8530 = vpack.c.b16 %v7480, %v7473
    %v8531 = vpack.c.b16 %v7488, %v7481
    %v8532 = vpack.c.b16 %v7489, %v7482
    %v8533 = vpack.c.b16 %v7490, %v7483
    %v8534 = vpack.c.b16 %v7491, %v7484
    %v8535 = vpack.c.b16 %v7492, %v7485
    %v8536 = vpack.c.b16 %v7493, %v7486
    %v8537 = vpack.c.b16 %v7494, %v7487
    %v8538 = vpack.c.b16 %v7502, %v7495
    %v8539 = vpack.c.b16 %v7503, %v7496
    %v8540 = vpack.c.b16 %v7504, %v7497
    %v8541 = vpack.c.b16 %v7505, %v7498
    %v8542 = vpack.c.b16 %v7506, %v7499
    %v8543 = vpack.c.b16 %v7507, %v7500
    %v8544 = vpack.c.b16 %v7508, %v7501
    %v8545 = vpack.c.b16 %v7516, %v7509
    %v8546 = vpack.c.b16 %v7517, %v7510
    %v8547 = vpack.c.b16 %v7518, %v7511
    %v8548 = vpack.c.b16 %v7519, %v7512
    %v8549 = vpack.c.b16 %v7520, %v7513
    %v8550 = vpack.c.b16 %v7521, %v7514
    %v8551 = vpack.c.b16 %v7522, %v7515
    %v8552 = vpack.c.b16 %v7530, %v7523
    %v8553 = vpack.c.b16 %v7531, %v7524
    %v8554 = vpack.c.b16 %v7532, %v7525
    %v8555 = vpack.c.b16 %v7533, %v7526
    %v8556 = vpack.c.b16 %v7534, %v7527
    %v8557 = vpack.c.b16 %v7535, %v7528
    %v8558 = vpack.c.b16 %v7536, %v7529
    %v8559 = vpack.c.b16 %v7544, %v7537
    %v8560 = vpack.c.b16 %v7545, %v7538
    %v8561 = vpack.c.b16 %v7546, %v7539
    %v8562 = vpack.c.b16 %v7547, %v7540
    %v8563 = vpack.c.b16 %v7548, %v7541
    %v8564 = vpack.c.b16 %v7549, %v7542
    %v8565 = vpack.c.b16 %v7550, %v7543
    %v8566 = vpack.c.b16 %v7558, %v7551
    %v8567 = vpack.c.b16 %v7559, %v7552
    %v8568 = vpack.c.b16 %v7560, %v7553
    %v8569 = vpack.c.b16 %v7561, %v7554
    %v8570 = vpack.c.b16 %v7562, %v7555
    %v8571 = vpack.c.b16 %v7563, %v7556
    %v8572 = vpack.c.b16 %v7564, %v7557
    %v8573 = vpack.c.b16 %v7572, %v7565
    %v8574 = vpack.c.b16 %v7573, %v7566
    %v8575 = vpack.c.b16 %v7574, %v7567
    %v8576 = vpack.c.b16 %v7575, %v7568
    %v8577 = vpack.c.b16 %v7576, %v7569
    %v8578 = vpack.c.b16 %v7577, %v7570
    %v8579 = vpack.c.b16 %v7578, %v7571
    %v8580 = vpack.c.b16 %v7586, %v7579
    %v8581 = vpack.c.b16 %v7587, %v7580
    %v8582 = vpack.c.b16 %v7588, %v7581
    %v8583 = vpack.c.b16 %v7589, %v7582
    %v8584 = vpack.c.b16 %v7590, %v7583
    %v8585 = vpack.c.b16 %v7591, %v7584
    %v8586 = vpack.c.b16 %v7592, %v7585
    %v8587 = vpack.c.b16 %v7600, %v7593
    %v8588 = vpack.c.b16 %v7601, %v7594
    %v8589 = vpack.c.b16 %v7602, %v7595
    %v8590 = vpack.c.b16 %v7603, %v7596
    %v8591 = vpack.c.b16 %v7604, %v7597
    %v8592 = vpack.c.b16 %v7605, %v7598
    %v8593 = vpack.c.b16 %v7606, %v7599
    %v8594 = vpack.c.b16 %v7614, %v7607
    %v8595 = vpack.c.b16 %v7615, %v7608
    %v8596 = vpack.c.b16 %v7616, %v7609
    %v8597 = vpack.c.b16 %v7617, %v7610
    %v8598 = vpack.c.b16 %v7618, %v7611
    %v8599 = vpack.c.b16 %v7619, %v7612
    %v8600 = vpack.c.b16 %v7620, %v7613
    %v8601 = vpack.c.b16 %v7628, %v7621
    %v8602 = vpack.c.b16 %v7629, %v7622
    %v8603 = vpack.c.b16 %v7630, %v7623
    %v8604 = vpack.c.b16 %v7631, %v7624
    %v8605 = vpack.c.b16 %v7632, %v7625
    %v8606 = vpack.c.b16 %v7633, %v7626
    %v8607 = vpack.c.b16 %v7634, %v7627
    %v8608 = vpack.c.b16 %v7642, %v7635
    %v8609 = vpack.c.b16 %v7643, %v7636
    %v8610 = vpack.c.b16 %v7644, %v7637
    %v8611 = vpack.c.b16 %v7645, %v7638
    %v8612 = vpack.c.b16 %v7646, %v7639
    %v8613 = vpack.c.b16 %v7647, %v7640
    %v8614 = vpack.c.b16 %v7648, %v7641
    %v8615 = vpack.c.b16 %v7656, %v7649
    %v8616 = vpack.c.b16 %v7657, %v7650
    %v8617 = vpack.c.b16 %v7658, %v7651
    %v8618 = vpack.c.b16 %v7659, %v7652
    %v8619 = vpack.c.b16 %v7660, %v7653
    %v8620 = vpack.c.b16 %v7661, %v7654
    %v8621 = vpack.c.b16 %v7662, %v7655
    %v8622 = vpack.c.b16 %v7670, %v7663
    %v8623 = vpack.c.b16 %v7671, %v7664
    %v8624 = vpack.c.b16 %v7672, %v7665
    %v8625 = vpack.c.b16 %v7673, %v7666
    %v8626 = vpack.c.b16 %v7674, %v7667
    %v8627 = vpack.c.b16 %v7675, %v7668
    %v8628 = vpack.c.b16 %v7676, %v7669
    %v8629 = vpack.c.b16 %v7684, %v7677
    %v8630 = vpack.c.b16 %v7685, %v7678
    %v8631 = vpack.c.b16 %v7686, %v7679
    %v8632 = vpack.c.b16 %v7687, %v7680
    %v8633 = vpack.c.b16 %v7688, %v7681
    %v8634 = vpack.c.b16 %v7689, %v7682
    %v8635 = vpack.c.b16 %v7690, %v7683
    %v8636 = vpack.c.b16 %v7698, %v7691
    %v8637 = vpack.c.b16 %v7699, %v7692
    %v8638 = vpack.c.b16 %v7700, %v7693
    %v8639 = vpack.c.b16 %v7701, %v7694
    %v8640 = vpack.c.b16 %v7702, %v7695
    %v8641 = vpack.c.b16 %v7703, %v7696
    %v8642 = vpack.c.b16 %v7704, %v7697
    %v8643 = vpack.c.b16 %v7712, %v7705
    %v8644 = vpack.c.b16 %v7713, %v7706
    %v8645 = vpack.c.b16 %v7714, %v7707
    %v8646 = vpack.c.b16 %v7715, %v7708
    %v8647 = vpack.c.b16 %v7716, %v7709
    %v8648 = vpack.c.b16 %v7717, %v7710
    %v8649 = vpack.c.b16 %v7718, %v7711
    %v8650 = vpack.c.b16 %v7726, %v7719
    %v8651 = vpack.c.b16 %v7727, %v7720
    %v8652 = vpack.c.b16 %v7728, %v7721
    %v8653 = vpack.c.b16 %v7729, %v7722
    %v8654 = vpack.c.b16 %v7730, %v7723
    %v8655 = vpack.c.b16 %v7731, %v7724
    %v8656 = vpack.c.b16 %v7732, %v7725
    %v8657 = vpack.c.b16 %v7740, %v7733
    %v8658 = vpack.c.b16 %v7741, %v7734
    %v8659 = vpack.c.b16 %v7742, %v7735
    %v8660 = vpack.c.b16 %v7743, %v7736
    %v8661 = vpack.c.b16 %v7744, %v7737
    %v8662 = vpack.c.b16 %v7745, %v7738
    %v8663 = vpack.c.b16 %v7746, %v7739
    %v8664 = vpack.c.b16 %v7754, %v7747
    %v8665 = vpack.c.b16 %v7755, %v7748
    %v8666 = vpack.c.b16 %v7756, %v7749
    %v8667 = vpack.c.b16 %v7757, %v7750
    %v8668 = vpack.c.b16 %v7758, %v7751
    %v8669 = vpack.c.b16 %v7759, %v7752
    %v8670 = vpack.c.b16 %v7760, %v7753
    %v8671 = vpack.c.b16 %v7768, %v7761
    %v8672 = vpack.c.b16 %v7769, %v7762
    %v8673 = vpack.c.b16 %v7770, %v7763
    %v8674 = vpack.c.b16 %v7771, %v7764
    %v8675 = vpack.c.b16 %v7772, %v7765
    %v8676 = vpack.c.b16 %v7773, %v7766
    %v8677 = vpack.c.b16 %v7774, %v7767
    %v8678 = vpack.c.b16 %v7782, %v7775
    %v8679 = vpack.c.b16 %v7783, %v7776
    %v8680 = vpack.c.b16 %v7784, %v7777
    %v8681 = vpack.c.b16 %v7785, %v7778
    %v8682 = vpack.c.b16 %v7786, %v7779
    %v8683 = vpack.c.b16 %v7787, %v7780
    %v8684 = vpack.c.b16 %v7788, %v7781
    %v8685 = vpack.c.b16 %v7796, %v7789
    %v8686 = vpack.c.b16 %v7797, %v7790
    %v8687 = vpack.c.b16 %v7798, %v7791
    %v8688 = vpack.c.b16 %v7799, %v7792
    %v8689 = vpack.c.b16 %v7800, %v7793
    %v8690 = vpack.c.b16 %v7801, %v7794
    %v8691 = vpack.c.b16 %v7802, %v7795
    %v8692 = vpack.c.b16 %v7810, %v7803
    %v8693 = vpack.c.b16 %v7811, %v7804
    %v8694 = vpack.c.b16 %v7812, %v7805
    %v8695 = vpack.c.b16 %v7813, %v7806
    %v8696 = vpack.c.b16 %v7814, %v7807
    %v8697 = vpack.c.b16 %v7815, %v7808
    %v8698 = vpack.c.b16 %v7816, %v7809
    %v8699 = vpack.c.b16 %v7824, %v7817
    %v8700 = vpack.c.b16 %v7825, %v7818
    %v8701 = vpack.c.b16 %v7826, %v7819
    %v8702 = vpack.c.b16 %v7827, %v7820
    %v8703 = vpack.c.b16 %v7828, %v7821
    %v8704 = vpack.c.b16 %v7829, %v7822
    %v8705 = vpack.c.b16 %v7830, %v7823
    %v8706 = vpack.c.b16 %v7838, %v7831
    %v8707 = vpack.c.b16 %v7839, %v7832
    %v8708 = vpack.c.b16 %v7840, %v7833
    %v8709 = vpack.c.b16 %v7841, %v7834
    %v8710 = vpack.c.b16 %v7842, %v7835
    %v8711 = vpack.c.b16 %v7843, %v7836
    %v8712 = vpack.c.b16 %v7844, %v7837
    %v8713 = vpack.c.b16 %v7852, %v7845
    %v8714 = vpack.c.b16 %v7853, %v7846
    %v8715 = vpack.c.b16 %v7854, %v7847
    %v8716 = vpack.c.b16 %v7855, %v7848
    %v8717 = vpack.c.b16 %v7856, %v7849
    %v8718 = vpack.c.b16 %v7857, %v7850
    %v8719 = vpack.c.b16 %v7858, %v7851
    %v8720 = vpack.c.b16 %v7866, %v7859
    %v8721 = vpack.c.b16 %v7867, %v7860
    %v8722 = vpack.c.b16 %v7868, %v7861
    %v8723 = vpack.c.b16 %v7869, %v7862
    %v8724 = vpack.c.b16 %v7870, %v7863
    %v8725 = vpack.c.b16 %v7871, %v7864
    %v8726 = vpack.c.b16 %v7872, %v7865
    %v8727 = vpack.c.b16 %v7880, %v7873
    %v8728 = vpack.c.b16 %v7881, %v7874
    %v8729 = vpack.c.b16 %v7882, %v7875
    %v8730 = vpack.c.b16 %v7883, %v7876
    %v8731 = vpack.c.b16 %v7884, %v7877
    %v8732 = vpack.c.b16 %v7885, %v7878
    %v8733 = vpack.c.b16 %v7886, %v7879
    %v8734 = vpack.c.b16 %v7894, %v7887
    %v8735 = vpack.c.b16 %v7895, %v7888
    %v8736 = vpack.c.b16 %v7896, %v7889
    %v8737 = vpack.c.b16 %v7897, %v7890
    %v8738 = vpack.c.b16 %v7898, %v7891
    %v8739 = vpack.c.b16 %v7899, %v7892
    %v8740 = vpack.c.b16 %v7900, %v7893
    %v8741 = vpack.c.b16 %v7908, %v7901
    %v8742 = vpack.c.b16 %v7909, %v7902
    %v8743 = vpack.c.b16 %v7910, %v7903
    %v8744 = vpack.c.b16 %v7911, %v7904
    %v8745 = vpack.c.b16 %v7912, %v7905
    %v8746 = vpack.c.b16 %v7913, %v7906
    %v8747 = vpack.c.b16 %v7914, %v7907
    %v8748 = vpack.c.b16 %v7922, %v7915
    %v8749 = vpack.c.b16 %v7923, %v7916
    %v8750 = vpack.c.b16 %v7924, %v7917
    %v8751 = vpack.c.b16 %v7925, %v7918
    %v8752 = vpack.c.b16 %v7926, %v7919
    %v8753 = vpack.c.b16 %v7927, %v7920
    %v8754 = vpack.c.b16 %v7928, %v7921
    %v8755 = vpack.c.b16 %v7936, %v7929
    %v8756 = vpack.c.b16 %v7937, %v7930
    %v8757 = vpack.c.b16 %v7938, %v7931
    %v8758 = vpack.c.b16 %v7939, %v7932
    %v8759 = vpack.c.b16 %v7940, %v7933
    %v8760 = vpack.c.b16 %v7941, %v7934
    %v8761 = vpack.c.b16 %v7942, %v7935
    %v8762 = vpack.c.b16 %v7950, %v7943
    %v8763 = vpack.c.b16 %v7951, %v7944
    %v8764 = vpack.c.b16 %v7952, %v7945
    %v8765 = vpack.c.b16 %v7953, %v7946
    %v8766 = vpack.c.b16 %v7954, %v7947
    %v8767 = vpack.c.b16 %v7955, %v7948
    %v8768 = vpack.c.b16 %v7956, %v7949
    %v8769 = vpack.c.b16 %v7964, %v7957
    %v8770 = vpack.c.b16 %v7965, %v7958
    %v8771 = vpack.c.b16 %v7966, %v7959
    %v8772 = vpack.c.b16 %v7967, %v7960
    %v8773 = vpack.c.b16 %v7968, %v7961
    %v8774 = vpack.c.b16 %v7969, %v7962
    %v8775 = vpack.c.b16 %v7970, %v7963
    %v8776 = vpack.c.b16 %v7978, %v7971
    %v8777 = vpack.c.b16 %v7979, %v7972
    %v8778 = vpack.c.b16 %v7980, %v7973
    %v8779 = vpack.c.b16 %v7981, %v7974
    %v8780 = vpack.c.b16 %v7982, %v7975
    %v8781 = vpack.c.b16 %v7983, %v7976
    %v8782 = vpack.c.b16 %v7984, %v7977
    %v8783 = vpack.c.b16 %v7992, %v7985
    %v8784 = vpack.c.b16 %v7993, %v7986
    %v8785 = vpack.c.b16 %v7994, %v7987
    %v8786 = vpack.c.b16 %v7995, %v7988
    %v8787 = vpack.c.b16 %v7996, %v7989
    %v8788 = vpack.c.b16 %v7997, %v7990
    %v8789 = vpack.c.b16 %v7998, %v7991
    %v8790 = vpack.c.b16 %v8006, %v7999
    %v8791 = vpack.c.b16 %v8007, %v8000
    %v8792 = vpack.c.b16 %v8008, %v8001
    %v8793 = vpack.c.b16 %v8009, %v8002
    %v8794 = vpack.c.b16 %v8010, %v8003
    %v8795 = vpack.c.b16 %v8011, %v8004
    %v8796 = vpack.c.b16 %v8012, %v8005
    %v8797 = vpack.c.b16 %v8020, %v8013
    %v8798 = vpack.c.b16 %v8021, %v8014
    %v8799 = vpack.c.b16 %v8022, %v8015
    %v8800 = vpack.c.b16 %v8023, %v8016
    %v8801 = vpack.c.b16 %v8024, %v8017
    %v8802 = vpack.c.b16 %v8025, %v8018
    %v8803 = vpack.c.b16 %v8026, %v8019
    %v8804 = vpack.c.b16 %v8034, %v8027
    %v8805 = vpack.c.b16 %v8035, %v8028
    %v8806 = vpack.c.b16 %v8036, %v8029
    %v8807 = vpack.c.b16 %v8037, %v8030
    %v8808 = vpack.c.b16 %v8038, %v8031
    %v8809 = vpack.c.b16 %v8039, %v8032
    %v8810 = vpack.c.b16 %v8040, %v8033
    %v8811 = vpack.c.b16 %v8048, %v8041
    %v8812 = vpack.c.b16 %v8049, %v8042
    %v8813 = vpack.c.b16 %v8050, %v8043
    %v8814 = vpack.c.b16 %v8051, %v8044
    %v8815 = vpack.c.b16 %v8052, %v8045
    %v8816 = vpack.c.b16 %v8053, %v8046
    %v8817 = vpack.c.b16 %v8054, %v8047
    %v8818 = vpack.c.b16 %v8062, %v8055
    %v8819 = vpack.c.b16 %v8063, %v8056
    %v8820 = vpack.c.b16 %v8064, %v8057
    %v8821 = vpack.c.b16 %v8065, %v8058
    %v8822 = vpack.c.b16 %v8066, %v8059
    %v8823 = vpack.c.b16 %v8067, %v8060
    %v8824 = vpack.c.b16 %v8068, %v8061
    %v8825 = vpack.c.b16 %v8076, %v8069
    %v8826 = vpack.c.b16 %v8077, %v8070
    %v8827 = vpack.c.b16 %v8078, %v8071
    %v8828 = vpack.c.b16 %v8079, %v8072
    %v8829 = vpack.c.b16 %v8080, %v8073
    %v8830 = vpack.c.b16 %v8081, %v8074
    %v8831 = vpack.c.b16 %v8082, %v8075
    %v8832 = vpack.c.b16 %v8090, %v8083
    %v8833 = vpack.c.b16 %v8091, %v8084
    %v8834 = vpack.c.b16 %v8092, %v8085
    %v8835 = vpack.c.b16 %v8093, %v8086
    %v8836 = vpack.c.b16 %v8094, %v8087
    %v8837 = vpack.c.b16 %v8095, %v8088
    %v8838 = vpack.c.b16 %v8096, %v8089
    %v8839 = vpack.c.b16 %v8104, %v8097
    %v8840 = vpack.c.b16 %v8105, %v8098
    %v8841 = vpack.c.b16 %v8106, %v8099
    %v8842 = vpack.c.b16 %v8107, %v8100
    %v8843 = vpack.c.b16 %v8108, %v8101
    %v8844 = vpack.c.b16 %v8109, %v8102
    %v8845 = vpack.c.b16 %v8110, %v8103
    %v8846 = vpack.c.b16 %v8118, %v8111
    %v8847 = vpack.c.b16 %v8119, %v8112
    %v8848 = vpack.c.b16 %v8120, %v8113
    %v8849 = vpack.c.b16 %v8121, %v8114
    %v8850 = vpack.c.b16 %v8122, %v8115
    %v8851 = vpack.c.b16 %v8123, %v8116
    %v8852 = vpack.c.b16 %v8124, %v8117
    %v8853 = vpack.c.b16 %v8132, %v8125
    %v8854 = vpack.c.b16 %v8133, %v8126
    %v8855 = vpack.c.b16 %v8134, %v8127
    %v8856 = vpack.c.b16 %v8135, %v8128
    %v8857 = vpack.c.b16 %v8136, %v8129
    %v8858 = vpack.c.b16 %v8137, %v8130
    %v8859 = vpack.c.b16 %v8138, %v8131
    %v8860 = vpack.c.b16 %v8146, %v8139
    %v8861 = vpack.c.b16 %v8147, %v8140
    %v8862 = vpack.c.b16 %v8148, %v8141
    %v8863 = vpack.c.b16 %v8149, %v8142
    %v8864 = vpack.c.b16 %v8150, %v8143
    %v8865 = vpack.c.b16 %v8151, %v8144
    %v8866 = vpack.c.b16 %v8152, %v8145
    %v8867 = vpack.c.b16 %v8160, %v8153
    %v8868 = vpack.c.b16 %v8161, %v8154
    %v8869 = vpack.c.b16 %v8162, %v8155
    %v8870 = vpack.c.b16 %v8163, %v8156
    %v8871 = vpack.c.b16 %v8164, %v8157
    %v8872 = vpack.c.b16 %v8165, %v8158
    %v8873 = vpack.c.b16 %v8166, %v8159
    %v8874 = vpack.c.b16 %v8174, %v8167
    %v8875 = vpack.c.b16 %v8175, %v8168
    %v8876 = vpack.c.b16 %v8176, %v8169
    %v8877 = vpack.c.b16 %v8177, %v8170
    %v8878 = vpack.c.b16 %v8178, %v8171
    %v8879 = vpack.c.b16 %v8179, %v8172
    %v8880 = vpack.c.b16 %v8180, %v8173
    %v8881 = vpack.c.b16 %v8188, %v8181
    %v8882 = vpack.c.b16 %v8189, %v8182
    %v8883 = vpack.c.b16 %v8190, %v8183
    %v8884 = vpack.c.b16 %v8191, %v8184
    %v8885 = vpack.c.b16 %v8192, %v8185
    %v8886 = vpack.c.b16 %v8193, %v8186
    %v8887 = vpack.c.b16 %v8194, %v8187
    %v8888 = vpack.c.b16 %v8202, %v8195
    %v8889 = vpack.c.b16 %v8203, %v8196
    %v8890 = vpack.c.b16 %v8204, %v8197
    %v8891 = vpack.c.b16 %v8205, %v8198
    %v8892 = vpack.c.b16 %v8206, %v8199
    %v8893 = vpack.c.b16 %v8207, %v8200
    %v8894 = vpack.c.b16 %v8208, %v8201
    %vm9581 = vcmask 261120
    %v9583 = vsel %vm9581, %v5268, 0
    %9585 = vmatprep.subr.bf16.mxu0 %v8210
    %9586 = vmatpush1.bf16.msra.mxu0 %v8209
    %9587 = vmatprep.subr.bf16.mxu0 %v8217
    %9588 = vmatpush1.bf16.msra.mxu0 %v8216
    %9589 = vmatprep.subr.bf16.mxu0 %v8224
    %9590 = vmatpush1.bf16.msra.mxu0 %v8223
    %9591 = vmatprep.subr.bf16.mxu0 %v8231
    %9592 = vmatpush1.bf16.msra.mxu0 %v8230
    %9593 = vmatprep.subr.bf16.mxu0 %v8238
    %9594 = vmatpush1.bf16.msra.mxu0 %v8237
    %9595 = vmatprep.subr.bf16.mxu0 %v8245
    %9596 = vmatpush1.bf16.msra.mxu0 %v8244
    %9597 = vmatprep.subr.bf16.mxu0 %v8252
    %9598 = vmatpush1.bf16.msra.mxu0 %v8251
    %9599 = vmatprep.subr.bf16.mxu0 %v8259
    %9600 = vmatpush1.bf16.msra.mxu0 %v8258
    %9601 = vmatprep.subr.bf16.mxu0 %v8266
    %9602 = vmatpush1.bf16.msra.mxu0 %v8265
    %9603 = vmatprep.subr.bf16.mxu0 %v8273
    %9604 = vmatpush1.bf16.msra.mxu0 %v8272
    %9605 = vmatprep.subr.bf16.mxu0 %v8280
    %9606 = vmatpush1.bf16.msra.mxu0 %v8279
    %9607 = vmatprep.subr.bf16.mxu0 %v8287
    %9608 = vmatpush1.bf16.msra.mxu0 %v8286
    %9609 = vmatprep.subr.bf16.mxu0 %v8294
    %9610 = vmatpush1.bf16.msra.mxu0 %v8293
    %9611 = vmatprep.subr.bf16.mxu0 %v8301
    %9612 = vmatpush1.bf16.msra.mxu0 %v8300
    %9613 = vmatprep.subr.bf16.mxu0 %v8308
    %9614 = vmatpush1.bf16.msra.mxu0 %v8307
    %9615 = vmatprep.subr.bf16.mxu0 %v8315
    %9616 = vmatpush1.bf16.msra.mxu0 %v8314
    %9617 = vmatprep.mubr.bf16.mxu0 %v5257
    %9618 = vmatmul.mubr.bf16.gmra.mrb[0].mxu0 %v5256
    %v9619 = vpop.f32.mrb[0].mxu0
    %v9620 = vadd.f32 0.0, %v9619
    %v9621 = vpop.f32.mrb[0].mxu0
    %v9622 = vadd.f32 0.0, %v9621
    %v9623 = vpop.f32.mrb[0].mxu0
    %v9624 = vpop.f32.mrb[0].mxu0
    %9625 = vdwg.mxu0
    %9626 = vmatprep.subr.bf16.mxu0 %v8322
    %9627 = vmatpush1.bf16.msra.mxu0 %v8321
    %9628 = vmatprep.subr.bf16.mxu0 %v8329
    %9629 = vmatpush1.bf16.msra.mxu0 %v8328
    %9630 = vmatprep.subr.bf16.mxu0 %v8336
    %9631 = vmatpush1.bf16.msra.mxu0 %v8335
    %9632 = vmatprep.subr.bf16.mxu0 %v8343
    %9633 = vmatpush1.bf16.msra.mxu0 %v8342
    %9634 = vmatprep.subr.bf16.mxu0 %v8350
    %9635 = vmatpush1.bf16.msra.mxu0 %v8349
    %9636 = vmatprep.subr.bf16.mxu0 %v8357
    %9637 = vmatpush1.bf16.msra.mxu0 %v8356
    %9638 = vmatprep.subr.bf16.mxu0 %v8364
    %9639 = vmatpush1.bf16.msra.mxu0 %v8363
    %9640 = vmatprep.subr.bf16.mxu0 %v8371
    %9641 = vmatpush1.bf16.msra.mxu0 %v8370
    %9642 = vmatprep.subr.bf16.mxu0 %v8378
    %9643 = vmatpush1.bf16.msra.mxu0 %v8377
    %9644 = vmatprep.subr.bf16.mxu0 %v8385
    %9645 = vmatpush1.bf16.msra.mxu0 %v8384
    %9646 = vmatprep.subr.bf16.mxu0 %v8392
    %9647 = vmatpush1.bf16.msra.mxu0 %v8391
    %9648 = vmatprep.subr.bf16.mxu0 %v8399
    %9649 = vmatpush1.bf16.msra.mxu0 %v8398
    %9650 = vmatprep.subr.bf16.mxu0 %v8406
    %9651 = vmatpush1.bf16.msra.mxu0 %v8405
    %9652 = vmatprep.subr.bf16.mxu0 %v8413
    %9653 = vmatpush1.bf16.msra.mxu0 %v8412
    %9654 = vmatprep.subr.bf16.mxu0 %v8420
    %9655 = vmatpush1.bf16.msra.mxu0 %v8419
    %9656 = vmatprep.subr.bf16.mxu0 %v8427
    %9657 = vmatpush1.bf16.msra.mxu0 %v8426
    %9658 = vmatprep.mubr.bf16.mxu0 %v5259
    %9659 = vmatmul.mubr.bf16.gmra.mrb[0].mxu0 %v5258
    %v9660 = vpop.f32.mrb[0].mxu0
    %v9661 = vadd.f32 %v9620, %v9660
    %v9662 = vpop.f32.mrb[0].mxu0
    %v9663 = vadd.f32 %v9622, %v9662
    %v9664 = vpop.f32.mrb[0].mxu0
    %v9665 = vpop.f32.mrb[0].mxu0
    %9666 = vdwg.mxu0
    %9667 = vmatprep.subr.bf16.mxu0 %v8434
    %9668 = vmatpush1.bf16.msra.mxu0 %v8433
    %9669 = vmatprep.subr.bf16.mxu0 %v8441
    %9670 = vmatpush1.bf16.msra.mxu0 %v8440
    %9671 = vmatprep.subr.bf16.mxu0 %v8448
    %9672 = vmatpush1.bf16.msra.mxu0 %v8447
    %9673 = vmatprep.subr.bf16.mxu0 %v8455
    %9674 = vmatpush1.bf16.msra.mxu0 %v8454
    %9675 = vmatprep.subr.bf16.mxu0 %v8462
    %9676 = vmatpush1.bf16.msra.mxu0 %v8461
    %9677 = vmatprep.subr.bf16.mxu0 %v8469
    %9678 = vmatpush1.bf16.msra.mxu0 %v8468
    %9679 = vmatprep.subr.bf16.mxu0 %v8476
    %9680 = vmatpush1.bf16.msra.mxu0 %v8475
    %9681 = vmatprep.subr.bf16.mxu0 %v8483
    %9682 = vmatpush1.bf16.msra.mxu0 %v8482
    %9683 = vmatprep.subr.bf16.mxu0 %v8490
    %9684 = vmatpush1.bf16.msra.mxu0 %v8489
    %9685 = vmatprep.subr.bf16.mxu0 %v8497
    %9686 = vmatpush1.bf16.msra.mxu0 %v8496
    %9687 = vmatprep.subr.bf16.mxu0 %v8504
    %9688 = vmatpush1.bf16.msra.mxu0 %v8503
    %9689 = vmatprep.subr.bf16.mxu0 %v8511
    %9690 = vmatpush1.bf16.msra.mxu0 %v8510
    %9691 = vmatprep.subr.bf16.mxu0 %v8518
    %9692 = vmatpush1.bf16.msra.mxu0 %v8517
    %9693 = vmatprep.subr.bf16.mxu0 %v8525
    %9694 = vmatpush1.bf16.msra.mxu0 %v8524
    %9695 = vmatprep.subr.bf16.mxu0 %v8532
    %9696 = vmatpush1.bf16.msra.mxu0 %v8531
    %9697 = vmatprep.subr.bf16.mxu0 %v8539
    %9698 = vmatpush1.bf16.msra.mxu0 %v8538
    %9699 = vmatprep.mubr.bf16.mxu0 %v5261
    %9700 = vmatmul.mubr.bf16.gmra.mrb[0].mxu0 %v5260
    %v9701 = vpop.f32.mrb[0].mxu0
    %v9702 = vadd.f32 %v9661, %v9701
    %v9703 = vpop.f32.mrb[0].mxu0
    %v9704 = vadd.f32 %v9663, %v9703
    %v9705 = vpop.f32.mrb[0].mxu0
    %v9706 = vpop.f32.mrb[0].mxu0
    %9707 = vdwg.mxu0
    %9708 = vmatprep.subr.bf16.mxu0 %v8546
    %9709 = vmatpush1.bf16.msra.mxu0 %v8545
    %9710 = vmatprep.subr.bf16.mxu0 %v8553
    %9711 = vmatpush1.bf16.msra.mxu0 %v8552
    %9712 = vmatprep.subr.bf16.mxu0 %v8560
    %9713 = vmatpush1.bf16.msra.mxu0 %v8559
    %9714 = vmatprep.subr.bf16.mxu0 %v8567
    %9715 = vmatpush1.bf16.msra.mxu0 %v8566
    %9716 = vmatprep.subr.bf16.mxu0 %v8574
    %9717 = vmatpush1.bf16.msra.mxu0 %v8573
    %9718 = vmatprep.subr.bf16.mxu0 %v8581
    %9719 = vmatpush1.bf16.msra.mxu0 %v8580
    %9720 = vmatprep.subr.bf16.mxu0 %v8588
    %9721 = vmatpush1.bf16.msra.mxu0 %v8587
    %9722 = vmatprep.subr.bf16.mxu0 %v8595
    %9723 = vmatpush1.bf16.msra.mxu0 %v8594
    %9724 = vmatprep.subr.bf16.mxu0 %v8602
    %9725 = vmatpush1.bf16.msra.mxu0 %v8601
    %9726 = vmatprep.subr.bf16.mxu0 %v8609
    %9727 = vmatpush1.bf16.msra.mxu0 %v8608
    %9728 = vmatprep.subr.bf16.mxu0 %v8616
    %9729 = vmatpush1.bf16.msra.mxu0 %v8615
    %9730 = vmatprep.subr.bf16.mxu0 %v8623
    %9731 = vmatpush1.bf16.msra.mxu0 %v8622
    %9732 = vmatprep.subr.bf16.mxu0 %v8630
    %9733 = vmatpush1.bf16.msra.mxu0 %v8629
    %9734 = vmatprep.subr.bf16.mxu0 %v8637
    %9735 = vmatpush1.bf16.msra.mxu0 %v8636
    %9736 = vmatprep.subr.bf16.mxu0 %v8644
    %9737 = vmatpush1.bf16.msra.mxu0 %v8643
    %9738 = vmatprep.subr.bf16.mxu0 %v8651
    %9739 = vmatpush1.bf16.msra.mxu0 %v8650
    %9740 = vmatprep.mubr.bf16.mxu0 %v5263
    %9741 = vmatmul.mubr.bf16.gmra.mrb[0].mxu0 %v5262
    %v9742 = vpop.f32.mrb[0].mxu0
    %v9743 = vadd.f32 %v9702, %v9742
    %v9744 = vpop.f32.mrb[0].mxu0
    %v9745 = vadd.f32 %v9704, %v9744
    %v9746 = vpop.f32.mrb[0].mxu0
    %v9747 = vpop.f32.mrb[0].mxu0
    %9748 = vdwg.mxu0
    %9749 = vmatprep.subr.bf16.mxu0 %v8658
    %9750 = vmatpush1.bf16.msra.mxu0 %v8657
    %9751 = vmatprep.subr.bf16.mxu0 %v8665
    %9752 = vmatpush1.bf16.msra.mxu0 %v8664
    %9753 = vmatprep.subr.bf16.mxu0 %v8672
    %9754 = vmatpush1.bf16.msra.mxu0 %v8671
    %9755 = vmatprep.subr.bf16.mxu0 %v8679
    %9756 = vmatpush1.bf16.msra.mxu0 %v8678
    %9757 = vmatprep.subr.bf16.mxu0 %v8686
    %9758 = vmatpush1.bf16.msra.mxu0 %v8685
    %9759 = vmatprep.subr.bf16.mxu0 %v8693
    %9760 = vmatpush1.bf16.msra.mxu0 %v8692
    %9761 = vmatprep.subr.bf16.mxu0 %v8700
    %9762 = vmatpush1.bf16.msra.mxu0 %v8699
    %9763 = vmatprep.subr.bf16.mxu0 %v8707
    %9764 = vmatpush1.bf16.msra.mxu0 %v8706
    %9765 = vmatprep.subr.bf16.mxu0 %v8714
    %9766 = vmatpush1.bf16.msra.mxu0 %v8713
    %9767 = vmatprep.subr.bf16.mxu0 %v8721
    %9768 = vmatpush1.bf16.msra.mxu0 %v8720
    %9769 = vmatprep.subr.bf16.mxu0 %v8728
    %9770 = vmatpush1.bf16.msra.mxu0 %v8727
    %9771 = vmatprep.subr.bf16.mxu0 %v8735
    %9772 = vmatpush1.bf16.msra.mxu0 %v8734
    %9773 = vmatprep.subr.bf16.mxu0 %v8742
    %9774 = vmatpush1.bf16.msra.mxu0 %v8741
    %9775 = vmatprep.subr.bf16.mxu0 %v8749
    %9776 = vmatpush1.bf16.msra.mxu0 %v8748
    %9777 = vmatprep.subr.bf16.mxu0 %v8756
    %9778 = vmatpush1.bf16.msra.mxu0 %v8755
    %9779 = vmatprep.subr.bf16.mxu0 %v8763
    %9780 = vmatpush1.bf16.msra.mxu0 %v8762
    %9781 = vmatprep.mubr.bf16.mxu0 %v5265
    %9782 = vmatmul.mubr.bf16.gmra.mrb[0].mxu0 %v5264
    %v9783 = vpop.f32.mrb[0].mxu0
    %v9784 = vadd.f32 %v9743, %v9783
    %v9785 = vpop.f32.mrb[0].mxu0
    %v9786 = vadd.f32 %v9745, %v9785
    %v9787 = vpop.f32.mrb[0].mxu0
    %v9788 = vpop.f32.mrb[0].mxu0
    %9789 = vdwg.mxu0
    %9790 = vmatprep.subr.bf16.mxu0 %v8770
    %9791 = vmatpush1.bf16.msra.mxu0 %v8769
    %9792 = vmatprep.subr.bf16.mxu0 %v8777
    %9793 = vmatpush1.bf16.msra.mxu0 %v8776
    %9794 = vmatprep.subr.bf16.mxu0 %v8784
    %9795 = vmatpush1.bf16.msra.mxu0 %v8783
    %9796 = vmatprep.subr.bf16.mxu0 %v8791
    %9797 = vmatpush1.bf16.msra.mxu0 %v8790
    %9798 = vmatprep.subr.bf16.mxu0 %v8798
    %9799 = vmatpush1.bf16.msra.mxu0 %v8797
    %9800 = vmatprep.subr.bf16.mxu0 %v8805
    %9801 = vmatpush1.bf16.msra.mxu0 %v8804
    %9802 = vmatprep.subr.bf16.mxu0 %v8812
    %9803 = vmatpush1.bf16.msra.mxu0 %v8811
    %9804 = vmatprep.subr.bf16.mxu0 %v8819
    %9805 = vmatpush1.bf16.msra.mxu0 %v8818
    %9806 = vmatprep.subr.bf16.mxu0 %v8826
    %9807 = vmatpush1.bf16.msra.mxu0 %v8825
    %9808 = vmatprep.subr.bf16.mxu0 %v8833
    %9809 = vmatpush1.bf16.msra.mxu0 %v8832
    %9810 = vmatprep.subr.bf16.mxu0 %v8840
    %9811 = vmatpush1.bf16.msra.mxu0 %v8839
    %9812 = vmatprep.subr.bf16.mxu0 %v8847
    %9813 = vmatpush1.bf16.msra.mxu0 %v8846
    %9814 = vmatprep.subr.bf16.mxu0 %v8854
    %9815 = vmatpush1.bf16.msra.mxu0 %v8853
    %9816 = vmatprep.subr.bf16.mxu0 %v8861
    %9817 = vmatpush1.bf16.msra.mxu0 %v8860
    %9818 = vmatprep.subr.bf16.mxu0 %v8868
    %9819 = vmatpush1.bf16.msra.mxu0 %v8867
    %9820 = vmatprep.subr.bf16.mxu0 %v8875
    %9821 = vmatpush1.bf16.msra.mxu0 %v8874
    %9822 = vmatprep.mubr.bf16.mxu0 %v5267
    %9823 = vmatmul.mubr.bf16.gmra.mrb[0].mxu0 %v5266
    %v9824 = vpop.f32.mrb[0].mxu0
    %v9825 = vadd.f32 %v9784, %v9824
    %v9826 = vpop.f32.mrb[0].mxu0
    %v9827 = vadd.f32 %v9786, %v9826
    %v9828 = vpop.f32.mrb[0].mxu0
    %v9829 = vpop.f32.mrb[0].mxu0
    %9830 = vdwg.mxu0
    %9831 = vmatprep.subr.bf16.mxu0 %v8882
    %9832 = vmatpush1.bf16.msra.mxu0 %v8881
    %9833 = vmatprep.subr.bf16.mxu0 %v8889
    %9834 = vmatpush1.bf16.msra.mxu0 %v8888
    %9835 = vmatprep.subr.bf16.mxu0 0
    %9836 = vmatpush1.bf16.msra.mxu0 0
    %9837 = vmatprep.subr.bf16.mxu0 0
    %9838 = vmatpush1.bf16.msra.mxu0 0
    %9839 = vmatprep.subr.bf16.mxu0 0
    %9840 = vmatpush1.bf16.msra.mxu0 0
    %9841 = vmatprep.subr.bf16.mxu0 0
    %9842 = vmatpush1.bf16.msra.mxu0 0
    %9843 = vmatprep.subr.bf16.mxu0 0
    %9844 = vmatpush1.bf16.msra.mxu0 0
    %9845 = vmatprep.subr.bf16.mxu0 0
    %9846 = vmatpush1.bf16.msra.mxu0 0
    %9847 = vmatprep.subr.bf16.mxu0 0
    %9848 = vmatpush1.bf16.msra.mxu0 0
    %9849 = vmatprep.subr.bf16.mxu0 0
    %9850 = vmatpush1.bf16.msra.mxu0 0
    %9851 = vmatprep.subr.bf16.mxu0 0
    %9852 = vmatpush1.bf16.msra.mxu0 0
    %9853 = vmatprep.subr.bf16.mxu0 0
    %9854 = vmatpush1.bf16.msra.mxu0 0
    %9855 = vmatprep.subr.bf16.mxu0 0
    %9856 = vmatpush1.bf16.msra.mxu0 0
    %9857 = vmatprep.subr.bf16.mxu0 0
    %9858 = vmatpush1.bf16.msra.mxu0 0
    %9859 = vmatprep.subr.bf16.mxu0 0
    %9860 = vmatpush1.bf16.msra.mxu0 0
    %9861 = vmatprep.subr.bf16.mxu0 0
    %9862 = vmatpush1.bf16.msra.mxu0 0
    %9863 = vmatprep.mubr.bf16.mxu0 0
    %9864 = vmatmul.mubr.bf16.gmra.mrb[0].mxu0 %v9583
    %v9865 = vpop.f32.mrb[0].mxu0
    %v9866 = vadd.f32 %v9825, %v9865
    %v9867 = vpop.f32.mrb[0].mxu0
    %v9868 = vadd.f32 %v9827, %v9867
    %v9869 = vpop.f32.mrb[0].mxu0
    %v9870 = vpop.f32.mrb[0].mxu0
    %9871 = vdwg.mxu0
    %9872 = vmatprep.subr.bf16.mxu0 %v8212
    %9873 = vmatpush1.bf16.msra.mxu0 %v8211
    %9874 = vmatprep.subr.bf16.mxu0 %v8219
    %9875 = vmatpush1.bf16.msra.mxu0 %v8218
    %9876 = vmatprep.subr.bf16.mxu0 %v8226
    %9877 = vmatpush1.bf16.msra.mxu0 %v8225
    %9878 = vmatprep.subr.bf16.mxu0 %v8233
    %9879 = vmatpush1.bf16.msra.mxu0 %v8232
    %9880 = vmatprep.subr.bf16.mxu0 %v8240
    %9881 = vmatpush1.bf16.msra.mxu0 %v8239
    %9882 = vmatprep.subr.bf16.mxu0 %v8247
    %9883 = vmatpush1.bf16.msra.mxu0 %v8246
    %9884 = vmatprep.subr.bf16.mxu0 %v8254
    %9885 = vmatpush1.bf16.msra.mxu0 %v8253
    %9886 = vmatprep.subr.bf16.mxu0 %v8261
    %9887 = vmatpush1.bf16.msra.mxu0 %v8260
    %9888 = vmatprep.subr.bf16.mxu0 %v8268
    %9889 = vmatpush1.bf16.msra.mxu0 %v8267
    %9890 = vmatprep.subr.bf16.mxu0 %v8275
    %9891 = vmatpush1.bf16.msra.mxu0 %v8274
    %9892 = vmatprep.subr.bf16.mxu0 %v8282
    %9893 = vmatpush1.bf16.msra.mxu0 %v8281
    %9894 = vmatprep.subr.bf16.mxu0 %v8289
    %9895 = vmatpush1.bf16.msra.mxu0 %v8288
    %9896 = vmatprep.subr.bf16.mxu0 %v8296
    %9897 = vmatpush1.bf16.msra.mxu0 %v8295
    %9898 = vmatprep.subr.bf16.mxu0 %v8303
    %9899 = vmatpush1.bf16.msra.mxu0 %v8302
    %9900 = vmatprep.subr.bf16.mxu0 %v8310
    %9901 = vmatpush1.bf16.msra.mxu0 %v8309
    %9902 = vmatprep.subr.bf16.mxu0 %v8317
    %9903 = vmatpush1.bf16.msra.mxu0 %v8316
    %9904 = vmatprep.mubr.bf16.mxu0 %v5257
    %9905 = vmatmul.mubr.bf16.gmra.mrb[0].mxu0 %v5256
    %v9906 = vpop.f32.mrb[0].mxu0
    %v9907 = vadd.f32 0.0, %v9906
    %v9908 = vpop.f32.mrb[0].mxu0
    %v9909 = vadd.f32 0.0, %v9908
    %v9910 = vpop.f32.mrb[0].mxu0
    %v9911 = vpop.f32.mrb[0].mxu0
    %9912 = vdwg.mxu0
    %9913 = vmatprep.subr.bf16.mxu0 %v8324
    %9914 = vmatpush1.bf16.msra.mxu0 %v8323
    %9915 = vmatprep.subr.bf16.mxu0 %v8331
    %9916 = vmatpush1.bf16.msra.mxu0 %v8330
    %9917 = vmatprep.subr.bf16.mxu0 %v8338
    %9918 = vmatpush1.bf16.msra.mxu0 %v8337
    %9919 = vmatprep.subr.bf16.mxu0 %v8345
    %9920 = vmatpush1.bf16.msra.mxu0 %v8344
    %9921 = vmatprep.subr.bf16.mxu0 %v8352
    %9922 = vmatpush1.bf16.msra.mxu0 %v8351
    %9923 = vmatprep.subr.bf16.mxu0 %v8359
    %9924 = vmatpush1.bf16.msra.mxu0 %v8358
    %9925 = vmatprep.subr.bf16.mxu0 %v8366
    %9926 = vmatpush1.bf16.msra.mxu0 %v8365
    %9927 = vmatprep.subr.bf16.mxu0 %v8373
    %9928 = vmatpush1.bf16.msra.mxu0 %v8372
    %9929 = vmatprep.subr.bf16.mxu0 %v8380
    %9930 = vmatpush1.bf16.msra.mxu0 %v8379
    %9931 = vmatprep.subr.bf16.mxu0 %v8387
    %9932 = vmatpush1.bf16.msra.mxu0 %v8386
    %9933 = vmatprep.subr.bf16.mxu0 %v8394
    %9934 = vmatpush1.bf16.msra.mxu0 %v8393
    %9935 = vmatprep.subr.bf16.mxu0 %v8401
    %9936 = vmatpush1.bf16.msra.mxu0 %v8400
    %9937 = vmatprep.subr.bf16.mxu0 %v8408
    %9938 = vmatpush1.bf16.msra.mxu0 %v8407
    %9939 = vmatprep.subr.bf16.mxu0 %v8415
    %9940 = vmatpush1.bf16.msra.mxu0 %v8414
    %9941 = vmatprep.subr.bf16.mxu0 %v8422
    %9942 = vmatpush1.bf16.msra.mxu0 %v8421
    %9943 = vmatprep.subr.bf16.mxu0 %v8429
    %9944 = vmatpush1.bf16.msra.mxu0 %v8428
    %9945 = vmatprep.mubr.bf16.mxu0 %v5259
    %9946 = vmatmul.mubr.bf16.gmra.mrb[0].mxu0 %v5258
    %v9947 = vpop.f32.mrb[0].mxu0
    %v9948 = vadd.f32 %v9907, %v9947
    %v9949 = vpop.f32.mrb[0].mxu0
    %v9950 = vadd.f32 %v9909, %v9949
    %v9951 = vpop.f32.mrb[0].mxu0
    %v9952 = vpop.f32.mrb[0].mxu0
    %9953 = vdwg.mxu0
    %9954 = vmatprep.subr.bf16.mxu0 %v8436
    %9955 = vmatpush1.bf16.msra.mxu0 %v8435
    %9956 = vmatprep.subr.bf16.mxu0 %v8443
    %9957 = vmatpush1.bf16.msra.mxu0 %v8442
    %9958 = vmatprep.subr.bf16.mxu0 %v8450
    %9959 = vmatpush1.bf16.msra.mxu0 %v8449
    %9960 = vmatprep.subr.bf16.mxu0 %v8457
    %9961 = vmatpush1.bf16.msra.mxu0 %v8456
    %9962 = vmatprep.subr.bf16.mxu0 %v8464
    %9963 = vmatpush1.bf16.msra.mxu0 %v8463
    %9964 = vmatprep.subr.bf16.mxu0 %v8471
    %9965 = vmatpush1.bf16.msra.mxu0 %v8470
    %9966 = vmatprep.subr.bf16.mxu0 %v8478
    %9967 = vmatpush1.bf16.msra.mxu0 %v8477
    %9968 = vmatprep.subr.bf16.mxu0 %v8485
    %9969 = vmatpush1.bf16.msra.mxu0 %v8484
    %9970 = vmatprep.subr.bf16.mxu0 %v8492
    %9971 = vmatpush1.bf16.msra.mxu0 %v8491
    %9972 = vmatprep.subr.bf16.mxu0 %v8499
    %9973 = vmatpush1.bf16.msra.mxu0 %v8498
    %9974 = vmatprep.subr.bf16.mxu0 %v8506
    %9975 = vmatpush1.bf16.msra.mxu0 %v8505
    %9976 = vmatprep.subr.bf16.mxu0 %v8513
    %9977 = vmatpush1.bf16.msra.mxu0 %v8512
    %9978 = vmatprep.subr.bf16.mxu0 %v8520
    %9979 = vmatpush1.bf16.msra.mxu0 %v8519
    %9980 = vmatprep.subr.bf16.mxu0 %v8527
    %9981 = vmatpush1.bf16.msra.mxu0 %v8526
    %9982 = vmatprep.subr.bf16.mxu0 %v8534
    %9983 = vmatpush1.bf16.msra.mxu0 %v8533
    %9984 = vmatprep.subr.bf16.mxu0 %v8541
    %9985 = vmatpush1.bf16.msra.mxu0 %v8540
    %9986 = vmatprep.mubr.bf16.mxu0 %v5261
    %9987 = vmatmul.mubr.bf16.gmra.mrb[0].mxu0 %v5260
    %v9988 = vpop.f32.mrb[0].mxu0
    %v9989 = vadd.f32 %v9948, %v9988
    %v9990 = vpop.f32.mrb[0].mxu0
    %v9991 = vadd.f32 %v9950, %v9990
    %v9992 = vpop.f32.mrb[0].mxu0
    %v9993 = vpop.f32.mrb[0].mxu0
    %9994 = vdwg.mxu0
    %9995 = vmatprep.subr.bf16.mxu0 %v8548
    %9996 = vmatpush1.bf16.msra.mxu0 %v8547
    %9997 = vmatprep.subr.bf16.mxu0 %v8555
    %9998 = vmatpush1.bf16.msra.mxu0 %v8554
    %9999 = vmatprep.subr.bf16.mxu0 %v8562
    %10000 = vmatpush1.bf16.msra.mxu0 %v8561
    %10001 = vmatprep.subr.bf16.mxu0 %v8569
    %10002 = vmatpush1.bf16.msra.mxu0 %v8568
    %10003 = vmatprep.subr.bf16.mxu0 %v8576
    %10004 = vmatpush1.bf16.msra.mxu0 %v8575
    %10005 = vmatprep.subr.bf16.mxu0 %v8583
    %10006 = vmatpush1.bf16.msra.mxu0 %v8582
    %10007 = vmatprep.subr.bf16.mxu0 %v8590
    %10008 = vmatpush1.bf16.msra.mxu0 %v8589
    %10009 = vmatprep.subr.bf16.mxu0 %v8597
    %10010 = vmatpush1.bf16.msra.mxu0 %v8596
    %10011 = vmatprep.subr.bf16.mxu0 %v8604
    %10012 = vmatpush1.bf16.msra.mxu0 %v8603
    %10013 = vmatprep.subr.bf16.mxu0 %v8611
    %10014 = vmatpush1.bf16.msra.mxu0 %v8610
    %10015 = vmatprep.subr.bf16.mxu0 %v8618
    %10016 = vmatpush1.bf16.msra.mxu0 %v8617
    %10017 = vmatprep.subr.bf16.mxu0 %v8625
    %10018 = vmatpush1.bf16.msra.mxu0 %v8624
    %10019 = vmatprep.subr.bf16.mxu0 %v8632
    %10020 = vmatpush1.bf16.msra.mxu0 %v8631
    %10021 = vmatprep.subr.bf16.mxu0 %v8639
    %10022 = vmatpush1.bf16.msra.mxu0 %v8638
    %10023 = vmatprep.subr.bf16.mxu0 %v8646
    %10024 = vmatpush1.bf16.msra.mxu0 %v8645
    %10025 = vmatprep.subr.bf16.mxu0 %v8653
    %10026 = vmatpush1.bf16.msra.mxu0 %v8652
    %10027 = vmatprep.mubr.bf16.mxu0 %v5263
    %10028 = vmatmul.mubr.bf16.gmra.mrb[0].mxu0 %v5262
    %v10029 = vpop.f32.mrb[0].mxu0
    %v10030 = vadd.f32 %v9989, %v10029
    %v10031 = vpop.f32.mrb[0].mxu0
    %v10032 = vadd.f32 %v9991, %v10031
    %v10033 = vpop.f32.mrb[0].mxu0
    %v10034 = vpop.f32.mrb[0].mxu0
    %10035 = vdwg.mxu0
    %10036 = vmatprep.subr.bf16.mxu0 %v8660
    %10037 = vmatpush1.bf16.msra.mxu0 %v8659
    %10038 = vmatprep.subr.bf16.mxu0 %v8667
    %10039 = vmatpush1.bf16.msra.mxu0 %v8666
    %10040 = vmatprep.subr.bf16.mxu0 %v8674
    %10041 = vmatpush1.bf16.msra.mxu0 %v8673
    %10042 = vmatprep.subr.bf16.mxu0 %v8681
    %10043 = vmatpush1.bf16.msra.mxu0 %v8680
    %10044 = vmatprep.subr.bf16.mxu0 %v8688
    %10045 = vmatpush1.bf16.msra.mxu0 %v8687
    %10046 = vmatprep.subr.bf16.mxu0 %v8695
    %10047 = vmatpush1.bf16.msra.mxu0 %v8694
    %10048 = vmatprep.subr.bf16.mxu0 %v8702
    %10049 = vmatpush1.bf16.msra.mxu0 %v8701
    %10050 = vmatprep.subr.bf16.mxu0 %v8709
    %10051 = vmatpush1.bf16.msra.mxu0 %v8708
    %10052 = vmatprep.subr.bf16.mxu0 %v8716
    %10053 = vmatpush1.bf16.msra.mxu0 %v8715
    %10054 = vmatprep.subr.bf16.mxu0 %v8723
    %10055 = vmatpush1.bf16.msra.mxu0 %v8722
    %10056 = vmatprep.subr.bf16.mxu0 %v8730
    %10057 = vmatpush1.bf16.msra.mxu0 %v8729
    %10058 = vmatprep.subr.bf16.mxu0 %v8737
    %10059 = vmatpush1.bf16.msra.mxu0 %v8736
    %10060 = vmatprep.subr.bf16.mxu0 %v8744
    %10061 = vmatpush1.bf16.msra.mxu0 %v8743
    %10062 = vmatprep.subr.bf16.mxu0 %v8751
    %10063 = vmatpush1.bf16.msra.mxu0 %v8750
    %10064 = vmatprep.subr.bf16.mxu0 %v8758
    %10065 = vmatpush1.bf16.msra.mxu0 %v8757
    %10066 = vmatprep.subr.bf16.mxu0 %v8765
    %10067 = vmatpush1.bf16.msra.mxu0 %v8764
    %10068 = vmatprep.mubr.bf16.mxu0 %v5265
    %10069 = vmatmul.mubr.bf16.gmra.mrb[0].mxu0 %v5264
    %v10070 = vpop.f32.mrb[0].mxu0
    %v10071 = vadd.f32 %v10030, %v10070
    %v10072 = vpop.f32.mrb[0].mxu0
    %v10073 = vadd.f32 %v10032, %v10072
    %v10074 = vpop.f32.mrb[0].mxu0
    %v10075 = vpop.f32.mrb[0].mxu0
    %10076 = vdwg.mxu0
    %10077 = vmatprep.subr.bf16.mxu0 %v8772
    %10078 = vmatpush1.bf16.msra.mxu0 %v8771
    %10079 = vmatprep.subr.bf16.mxu0 %v8779
    %10080 = vmatpush1.bf16.msra.mxu0 %v8778
    %10081 = vmatprep.subr.bf16.mxu0 %v8786
    %10082 = vmatpush1.bf16.msra.mxu0 %v8785
    %10083 = vmatprep.subr.bf16.mxu0 %v8793
    %10084 = vmatpush1.bf16.msra.mxu0 %v8792
    %10085 = vmatprep.subr.bf16.mxu0 %v8800
    %10086 = vmatpush1.bf16.msra.mxu0 %v8799
    %10087 = vmatprep.subr.bf16.mxu0 %v8807
    %10088 = vmatpush1.bf16.msra.mxu0 %v8806
    %10089 = vmatprep.subr.bf16.mxu0 %v8814
    %10090 = vmatpush1.bf16.msra.mxu0 %v8813
    %10091 = vmatprep.subr.bf16.mxu0 %v8821
    %10092 = vmatpush1.bf16.msra.mxu0 %v8820
    %10093 = vmatprep.subr.bf16.mxu0 %v8828
    %10094 = vmatpush1.bf16.msra.mxu0 %v8827
    %10095 = vmatprep.subr.bf16.mxu0 %v8835
    %10096 = vmatpush1.bf16.msra.mxu0 %v8834
    %10097 = vmatprep.subr.bf16.mxu0 %v8842
    %10098 = vmatpush1.bf16.msra.mxu0 %v8841
    %10099 = vmatprep.subr.bf16.mxu0 %v8849
    %10100 = vmatpush1.bf16.msra.mxu0 %v8848
    %10101 = vmatprep.subr.bf16.mxu0 %v8856
    %10102 = vmatpush1.bf16.msra.mxu0 %v8855
    %10103 = vmatprep.subr.bf16.mxu0 %v8863
    %10104 = vmatpush1.bf16.msra.mxu0 %v8862
    %10105 = vmatprep.subr.bf16.mxu0 %v8870
    %10106 = vmatpush1.bf16.msra.mxu0 %v8869
    %10107 = vmatprep.subr.bf16.mxu0 %v8877
    %10108 = vmatpush1.bf16.msra.mxu0 %v8876
    %10109 = vmatprep.mubr.bf16.mxu0 %v5267
    %10110 = vmatmul.mubr.bf16.gmra.mrb[0].mxu0 %v5266
    %v10111 = vpop.f32.mrb[0].mxu0
    %v10112 = vadd.f32 %v10071, %v10111
    %v10113 = vpop.f32.mrb[0].mxu0
    %v10114 = vadd.f32 %v10073, %v10113
    %v10115 = vpop.f32.mrb[0].mxu0
    %v10116 = vpop.f32.mrb[0].mxu0
    %10117 = vdwg.mxu0
    %10118 = vmatprep.subr.bf16.mxu0 %v8884
    %10119 = vmatpush1.bf16.msra.mxu0 %v8883
    %10120 = vmatprep.subr.bf16.mxu0 %v8891
    %10121 = vmatpush1.bf16.msra.mxu0 %v8890
    %10122 = vmatprep.subr.bf16.mxu0 0
    %10123 = vmatpush1.bf16.msra.mxu0 0
    %10124 = vmatprep.subr.bf16.mxu0 0
    %10125 = vmatpush1.bf16.msra.mxu0 0
    %10126 = vmatprep.subr.bf16.mxu0 0
    %10127 = vmatpush1.bf16.msra.mxu0 0
    %10128 = vmatprep.subr.bf16.mxu0 0
    %10129 = vmatpush1.bf16.msra.mxu0 0
    %10130 = vmatprep.subr.bf16.mxu0 0
    %10131 = vmatpush1.bf16.msra.mxu0 0
    %10132 = vmatprep.subr.bf16.mxu0 0
    %10133 = vmatpush1.bf16.msra.mxu0 0
    %10134 = vmatprep.subr.bf16.mxu0 0
    %10135 = vmatpush1.bf16.msra.mxu0 0
    %10136 = vmatprep.subr.bf16.mxu0 0
    %10137 = vmatpush1.bf16.msra.mxu0 0
    %10138 = vmatprep.subr.bf16.mxu0 0
    %10139 = vmatpush1.bf16.msra.mxu0 0
    %10140 = vmatprep.subr.bf16.mxu0 0
    %10141 = vmatpush1.bf16.msra.mxu0 0
    %10142 = vmatprep.subr.bf16.mxu0 0
    %10143 = vmatpush1.bf16.msra.mxu0 0
    %10144 = vmatprep.subr.bf16.mxu0 0
    %10145 = vmatpush1.bf16.msra.mxu0 0
    %10146 = vmatprep.subr.bf16.mxu0 0
    %10147 = vmatpush1.bf16.msra.mxu0 0
    %10148 = vmatprep.subr.bf16.mxu0 0
    %10149 = vmatpush1.bf16.msra.mxu0 0
    %10150 = vmatprep.mubr.bf16.mxu0 0
    %10151 = vmatmul.mubr.bf16.gmra.mrb[0].mxu0 %v9583
    %v10152 = vpop.f32.mrb[0].mxu0
    %v10153 = vadd.f32 %v10112, %v10152
    %v10154 = vpop.f32.mrb[0].mxu0
    %v10155 = vadd.f32 %v10114, %v10154
    %v10156 = vpop.f32.mrb[0].mxu0
    %v10157 = vpop.f32.mrb[0].mxu0
    %10158 = vdwg.mxu0
    %10159 = vmatprep.subr.bf16.mxu0 %v8214
    %10160 = vmatpush1.bf16.msra.mxu0 %v8213
    %10161 = vmatprep.subr.bf16.mxu0 %v8221
    %10162 = vmatpush1.bf16.msra.mxu0 %v8220
    %10163 = vmatprep.subr.bf16.mxu0 %v8228
    %10164 = vmatpush1.bf16.msra.mxu0 %v8227
    %10165 = vmatprep.subr.bf16.mxu0 %v8235
    %10166 = vmatpush1.bf16.msra.mxu0 %v8234
    %10167 = vmatprep.subr.bf16.mxu0 %v8242
    %10168 = vmatpush1.bf16.msra.mxu0 %v8241
    %10169 = vmatprep.subr.bf16.mxu0 %v8249
    %10170 = vmatpush1.bf16.msra.mxu0 %v8248
    %10171 = vmatprep.subr.bf16.mxu0 %v8256
    %10172 = vmatpush1.bf16.msra.mxu0 %v8255
    %10173 = vmatprep.subr.bf16.mxu0 %v8263
    %10174 = vmatpush1.bf16.msra.mxu0 %v8262
    %10175 = vmatprep.subr.bf16.mxu0 %v8270
    %10176 = vmatpush1.bf16.msra.mxu0 %v8269
    %10177 = vmatprep.subr.bf16.mxu0 %v8277
    %10178 = vmatpush1.bf16.msra.mxu0 %v8276
    %10179 = vmatprep.subr.bf16.mxu0 %v8284
    %10180 = vmatpush1.bf16.msra.mxu0 %v8283
    %10181 = vmatprep.subr.bf16.mxu0 %v8291
    %10182 = vmatpush1.bf16.msra.mxu0 %v8290
    %10183 = vmatprep.subr.bf16.mxu0 %v8298
    %10184 = vmatpush1.bf16.msra.mxu0 %v8297
    %10185 = vmatprep.subr.bf16.mxu0 %v8305
    %10186 = vmatpush1.bf16.msra.mxu0 %v8304
    %10187 = vmatprep.subr.bf16.mxu0 %v8312
    %10188 = vmatpush1.bf16.msra.mxu0 %v8311
    %10189 = vmatprep.subr.bf16.mxu0 %v8319
    %10190 = vmatpush1.bf16.msra.mxu0 %v8318
    %10191 = vmatprep.mubr.bf16.mxu0 %v5257
    %10192 = vmatmul.mubr.bf16.gmra.mrb[0].mxu0 %v5256
    %v10193 = vpop.f32.mrb[0].mxu0
    %v10194 = vadd.f32 0.0, %v10193
    %v10195 = vpop.f32.mrb[0].mxu0
    %v10196 = vadd.f32 0.0, %v10195
    %v10197 = vpop.f32.mrb[0].mxu0
    %v10198 = vpop.f32.mrb[0].mxu0
    %10199 = vdwg.mxu0
    %10200 = vmatprep.subr.bf16.mxu0 %v8326
    %10201 = vmatpush1.bf16.msra.mxu0 %v8325
    %10202 = vmatprep.subr.bf16.mxu0 %v8333
    %10203 = vmatpush1.bf16.msra.mxu0 %v8332
    %10204 = vmatprep.subr.bf16.mxu0 %v8340
    %10205 = vmatpush1.bf16.msra.mxu0 %v8339
    %10206 = vmatprep.subr.bf16.mxu0 %v8347
    %10207 = vmatpush1.bf16.msra.mxu0 %v8346
    %10208 = vmatprep.subr.bf16.mxu0 %v8354
    %10209 = vmatpush1.bf16.msra.mxu0 %v8353
    %10210 = vmatprep.subr.bf16.mxu0 %v8361
    %10211 = vmatpush1.bf16.msra.mxu0 %v8360
    %10212 = vmatprep.subr.bf16.mxu0 %v8368
    %10213 = vmatpush1.bf16.msra.mxu0 %v8367
    %10214 = vmatprep.subr.bf16.mxu0 %v8375
    %10215 = vmatpush1.bf16.msra.mxu0 %v8374
    %10216 = vmatprep.subr.bf16.mxu0 %v8382
    %10217 = vmatpush1.bf16.msra.mxu0 %v8381
    %10218 = vmatprep.subr.bf16.mxu0 %v8389
    %10219 = vmatpush1.bf16.msra.mxu0 %v8388
    %10220 = vmatprep.subr.bf16.mxu0 %v8396
    %10221 = vmatpush1.bf16.msra.mxu0 %v8395
    %10222 = vmatprep.subr.bf16.mxu0 %v8403
    %10223 = vmatpush1.bf16.msra.mxu0 %v8402
    %10224 = vmatprep.subr.bf16.mxu0 %v8410
    %10225 = vmatpush1.bf16.msra.mxu0 %v8409
    %10226 = vmatprep.subr.bf16.mxu0 %v8417
    %10227 = vmatpush1.bf16.msra.mxu0 %v8416
    %10228 = vmatprep.subr.bf16.mxu0 %v8424
    %10229 = vmatpush1.bf16.msra.mxu0 %v8423
    %10230 = vmatprep.subr.bf16.mxu0 %v8431
    %10231 = vmatpush1.bf16.msra.mxu0 %v8430
    %10232 = vmatprep.mubr.bf16.mxu0 %v5259
    %10233 = vmatmul.mubr.bf16.gmra.mrb[0].mxu0 %v5258
    %v10234 = vpop.f32.mrb[0].mxu0
    %v10235 = vadd.f32 %v10194, %v10234
    %v10236 = vpop.f32.mrb[0].mxu0
    %v10237 = vadd.f32 %v10196, %v10236
    %v10238 = vpop.f32.mrb[0].mxu0
    %v10239 = vpop.f32.mrb[0].mxu0
    %10240 = vdwg.mxu0
    %10241 = vmatprep.subr.bf16.mxu0 %v8438
    %10242 = vmatpush1.bf16.msra.mxu0 %v8437
    %10243 = vmatprep.subr.bf16.mxu0 %v8445
    %10244 = vmatpush1.bf16.msra.mxu0 %v8444
    %10245 = vmatprep.subr.bf16.mxu0 %v8452
    %10246 = vmatpush1.bf16.msra.mxu0 %v8451
    %10247 = vmatprep.subr.bf16.mxu0 %v8459
    %10248 = vmatpush1.bf16.msra.mxu0 %v8458
    %10249 = vmatprep.subr.bf16.mxu0 %v8466
    %10250 = vmatpush1.bf16.msra.mxu0 %v8465
    %10251 = vmatprep.subr.bf16.mxu0 %v8473
    %10252 = vmatpush1.bf16.msra.mxu0 %v8472
    %10253 = vmatprep.subr.bf16.mxu0 %v8480
    %10254 = vmatpush1.bf16.msra.mxu0 %v8479
    %10255 = vmatprep.subr.bf16.mxu0 %v8487
    %10256 = vmatpush1.bf16.msra.mxu0 %v8486
    %10257 = vmatprep.subr.bf16.mxu0 %v8494
    %10258 = vmatpush1.bf16.msra.mxu0 %v8493
    %10259 = vmatprep.subr.bf16.mxu0 %v8501
    %10260 = vmatpush1.bf16.msra.mxu0 %v8500
    %10261 = vmatprep.subr.bf16.mxu0 %v8508
    %10262 = vmatpush1.bf16.msra.mxu0 %v8507
    %10263 = vmatprep.subr.bf16.mxu0 %v8515
    %10264 = vmatpush1.bf16.msra.mxu0 %v8514
    %10265 = vmatprep.subr.bf16.mxu0 %v8522
    %10266 = vmatpush1.bf16.msra.mxu0 %v8521
    %10267 = vmatprep.subr.bf16.mxu0 %v8529
    %10268 = vmatpush1.bf16.msra.mxu0 %v8528
    %10269 = vmatprep.subr.bf16.mxu0 %v8536
    %10270 = vmatpush1.bf16.msra.mxu0 %v8535
    %10271 = vmatprep.subr.bf16.mxu0 %v8543
    %10272 = vmatpush1.bf16.msra.mxu0 %v8542
    %10273 = vmatprep.mubr.bf16.mxu0 %v5261
    %10274 = vmatmul.mubr.bf16.gmra.mrb[0].mxu0 %v5260
    %v10275 = vpop.f32.mrb[0].mxu0
    %v10276 = vadd.f32 %v10235, %v10275
    %v10277 = vpop.f32.mrb[0].mxu0
    %v10278 = vadd.f32 %v10237, %v10277
    %v10279 = vpop.f32.mrb[0].mxu0
    %v10280 = vpop.f32.mrb[0].mxu0
    %10281 = vdwg.mxu0
    %10282 = vmatprep.subr.bf16.mxu0 %v8550
    %10283 = vmatpush1.bf16.msra.mxu0 %v8549
    %10284 = vmatprep.subr.bf16.mxu0 %v8557
    %10285 = vmatpush1.bf16.msra.mxu0 %v8556
    %10286 = vmatprep.subr.bf16.mxu0 %v8564
    %10287 = vmatpush1.bf16.msra.mxu0 %v8563
    %10288 = vmatprep.subr.bf16.mxu0 %v8571
    %10289 = vmatpush1.bf16.msra.mxu0 %v8570
    %10290 = vmatprep.subr.bf16.mxu0 %v8578
    %10291 = vmatpush1.bf16.msra.mxu0 %v8577
    %10292 = vmatprep.subr.bf16.mxu0 %v8585
    %10293 = vmatpush1.bf16.msra.mxu0 %v8584
    %10294 = vmatprep.subr.bf16.mxu0 %v8592
    %10295 = vmatpush1.bf16.msra.mxu0 %v8591
    %10296 = vmatprep.subr.bf16.mxu0 %v8599
    %10297 = vmatpush1.bf16.msra.mxu0 %v8598
    %10298 = vmatprep.subr.bf16.mxu0 %v8606
    %10299 = vmatpush1.bf16.msra.mxu0 %v8605
    %10300 = vmatprep.subr.bf16.mxu0 %v8613
    %10301 = vmatpush1.bf16.msra.mxu0 %v8612
    %10302 = vmatprep.subr.bf16.mxu0 %v8620
    %10303 = vmatpush1.bf16.msra.mxu0 %v8619
    %10304 = vmatprep.subr.bf16.mxu0 %v8627
    %10305 = vmatpush1.bf16.msra.mxu0 %v8626
    %10306 = vmatprep.subr.bf16.mxu0 %v8634
    %10307 = vmatpush1.bf16.msra.mxu0 %v8633
    %10308 = vmatprep.subr.bf16.mxu0 %v8641
    %10309 = vmatpush1.bf16.msra.mxu0 %v8640
    %10310 = vmatprep.subr.bf16.mxu0 %v8648
    %10311 = vmatpush1.bf16.msra.mxu0 %v8647
    %10312 = vmatprep.subr.bf16.mxu0 %v8655
    %10313 = vmatpush1.bf16.msra.mxu0 %v8654
    %10314 = vmatprep.mubr.bf16.mxu0 %v5263
    %10315 = vmatmul.mubr.bf16.gmra.mrb[0].mxu0 %v5262
    %v10316 = vpop.f32.mrb[0].mxu0
    %v10317 = vadd.f32 %v10276, %v10316
    %v10318 = vpop.f32.mrb[0].mxu0
    %v10319 = vadd.f32 %v10278, %v10318
    %v10320 = vpop.f32.mrb[0].mxu0
    %v10321 = vpop.f32.mrb[0].mxu0
    %10322 = vdwg.mxu0
    %10323 = vmatprep.subr.bf16.mxu0 %v8662
    %10324 = vmatpush1.bf16.msra.mxu0 %v8661
    %10325 = vmatprep.subr.bf16.mxu0 %v8669
    %10326 = vmatpush1.bf16.msra.mxu0 %v8668
    %10327 = vmatprep.subr.bf16.mxu0 %v8676
    %10328 = vmatpush1.bf16.msra.mxu0 %v8675
    %10329 = vmatprep.subr.bf16.mxu0 %v8683
    %10330 = vmatpush1.bf16.msra.mxu0 %v8682
    %10331 = vmatprep.subr.bf16.mxu0 %v8690
    %10332 = vmatpush1.bf16.msra.mxu0 %v8689
    %10333 = vmatprep.subr.bf16.mxu0 %v8697
    %10334 = vmatpush1.bf16.msra.mxu0 %v8696
    %10335 = vmatprep.subr.bf16.mxu0 %v8704
    %10336 = vmatpush1.bf16.msra.mxu0 %v8703
    %10337 = vmatprep.subr.bf16.mxu0 %v8711
    %10338 = vmatpush1.bf16.msra.mxu0 %v8710
    %10339 = vmatprep.subr.bf16.mxu0 %v8718
    %10340 = vmatpush1.bf16.msra.mxu0 %v8717
    %10341 = vmatprep.subr.bf16.mxu0 %v8725
    %10342 = vmatpush1.bf16.msra.mxu0 %v8724
    %10343 = vmatprep.subr.bf16.mxu0 %v8732
    %10344 = vmatpush1.bf16.msra.mxu0 %v8731
    %10345 = vmatprep.subr.bf16.mxu0 %v8739
    %10346 = vmatpush1.bf16.msra.mxu0 %v8738
    %10347 = vmatprep.subr.bf16.mxu0 %v8746
    %10348 = vmatpush1.bf16.msra.mxu0 %v8745
    %10349 = vmatprep.subr.bf16.mxu0 %v8753
    %10350 = vmatpush1.bf16.msra.mxu0 %v8752
    %10351 = vmatprep.subr.bf16.mxu0 %v8760
    %10352 = vmatpush1.bf16.msra.mxu0 %v8759
    %10353 = vmatprep.subr.bf16.mxu0 %v8767
    %10354 = vmatpush1.bf16.msra.mxu0 %v8766
    %10355 = vmatprep.mubr.bf16.mxu0 %v5265
    %10356 = vmatmul.mubr.bf16.gmra.mrb[0].mxu0 %v5264
    %v10357 = vpop.f32.mrb[0].mxu0
    %v10358 = vadd.f32 %v10317, %v10357
    %v10359 = vpop.f32.mrb[0].mxu0
    %v10360 = vadd.f32 %v10319, %v10359
    %v10361 = vpop.f32.mrb[0].mxu0
    %v10362 = vpop.f32.mrb[0].mxu0
    %10363 = vdwg.mxu0
    %10364 = vmatprep.subr.bf16.mxu0 %v8774
    %10365 = vmatpush1.bf16.msra.mxu0 %v8773
    %10366 = vmatprep.subr.bf16.mxu0 %v8781
    %10367 = vmatpush1.bf16.msra.mxu0 %v8780
    %10368 = vmatprep.subr.bf16.mxu0 %v8788
    %10369 = vmatpush1.bf16.msra.mxu0 %v8787
    %10370 = vmatprep.subr.bf16.mxu0 %v8795
    %10371 = vmatpush1.bf16.msra.mxu0 %v8794
    %10372 = vmatprep.subr.bf16.mxu0 %v8802
    %10373 = vmatpush1.bf16.msra.mxu0 %v8801
    %10374 = vmatprep.subr.bf16.mxu0 %v8809
    %10375 = vmatpush1.bf16.msra.mxu0 %v8808
    %10376 = vmatprep.subr.bf16.mxu0 %v8816
    %10377 = vmatpush1.bf16.msra.mxu0 %v8815
    %10378 = vmatprep.subr.bf16.mxu0 %v8823
    %10379 = vmatpush1.bf16.msra.mxu0 %v8822
    %10380 = vmatprep.subr.bf16.mxu0 %v8830
    %10381 = vmatpush1.bf16.msra.mxu0 %v8829
    %10382 = vmatprep.subr.bf16.mxu0 %v8837
    %10383 = vmatpush1.bf16.msra.mxu0 %v8836
    %10384 = vmatprep.subr.bf16.mxu0 %v8844
    %10385 = vmatpush1.bf16.msra.mxu0 %v8843
    %10386 = vmatprep.subr.bf16.mxu0 %v8851
    %10387 = vmatpush1.bf16.msra.mxu0 %v8850
    %10388 = vmatprep.subr.bf16.mxu0 %v8858
    %10389 = vmatpush1.bf16.msra.mxu0 %v8857
    %10390 = vmatprep.subr.bf16.mxu0 %v8865
    %10391 = vmatpush1.bf16.msra.mxu0 %v8864
    %10392 = vmatprep.subr.bf16.mxu0 %v8872
    %10393 = vmatpush1.bf16.msra.mxu0 %v8871
    %10394 = vmatprep.subr.bf16.mxu0 %v8879
    %10395 = vmatpush1.bf16.msra.mxu0 %v8878
    %10396 = vmatprep.mubr.bf16.mxu0 %v5267
    %10397 = vmatmul.mubr.bf16.gmra.mrb[0].mxu0 %v5266
    %v10398 = vpop.f32.mrb[0].mxu0
    %v10399 = vadd.f32 %v10358, %v10398
    %v10400 = vpop.f32.mrb[0].mxu0
    %v10401 = vadd.f32 %v10360, %v10400
    %v10402 = vpop.f32.mrb[0].mxu0
    %v10403 = vpop.f32.mrb[0].mxu0
    %10404 = vdwg.mxu0
    %10405 = vmatprep.subr.bf16.mxu0 %v8886
    %10406 = vmatpush1.bf16.msra.mxu0 %v8885
    %10407 = vmatprep.subr.bf16.mxu0 %v8893
    %10408 = vmatpush1.bf16.msra.mxu0 %v8892
    %10409 = vmatprep.subr.bf16.mxu0 0
    %10410 = vmatpush1.bf16.msra.mxu0 0
    %10411 = vmatprep.subr.bf16.mxu0 0
    %10412 = vmatpush1.bf16.msra.mxu0 0
    %10413 = vmatprep.subr.bf16.mxu0 0
    %10414 = vmatpush1.bf16.msra.mxu0 0
    %10415 = vmatprep.subr.bf16.mxu0 0
    %10416 = vmatpush1.bf16.msra.mxu0 0
    %10417 = vmatprep.subr.bf16.mxu0 0
    %10418 = vmatpush1.bf16.msra.mxu0 0
    %10419 = vmatprep.subr.bf16.mxu0 0
    %10420 = vmatpush1.bf16.msra.mxu0 0
    %10421 = vmatprep.subr.bf16.mxu0 0
    %10422 = vmatpush1.bf16.msra.mxu0 0
    %10423 = vmatprep.subr.bf16.mxu0 0
    %10424 = vmatpush1.bf16.msra.mxu0 0
    %10425 = vmatprep.subr.bf16.mxu0 0
    %10426 = vmatpush1.bf16.msra.mxu0 0
    %10427 = vmatprep.subr.bf16.mxu0 0
    %10428 = vmatpush1.bf16.msra.mxu0 0
    %10429 = vmatprep.subr.bf16.mxu0 0
    %10430 = vmatpush1.bf16.msra.mxu0 0
    %10431 = vmatprep.subr.bf16.mxu0 0
    %10432 = vmatpush1.bf16.msra.mxu0 0
    %10433 = vmatprep.subr.bf16.mxu0 0
    %10434 = vmatpush1.bf16.msra.mxu0 0
    %10435 = vmatprep.subr.bf16.mxu0 0
    %10436 = vmatpush1.bf16.msra.mxu0 0
    %10437 = vmatprep.mubr.bf16.mxu0 0
    %10438 = vmatmul.mubr.bf16.gmra.mrb[0].mxu0 %v9583
    %v10439 = vpop.f32.mrb[0].mxu0
    %v10440 = vadd.f32 %v10399, %v10439
    %v10441 = vpop.f32.mrb[0].mxu0
    %v10442 = vadd.f32 %v10401, %v10441
    %v10443 = vpop.f32.mrb[0].mxu0
    %v10444 = vpop.f32.mrb[0].mxu0
    %10445 = vdwg.mxu0
    %10446 = vmatprep.subr.bf16.mxu0 0
    %10447 = vmatpush1.bf16.msra.mxu0 %v8215
    %10448 = vmatprep.subr.bf16.mxu0 0
    %10449 = vmatpush1.bf16.msra.mxu0 %v8222
    %10450 = vmatprep.subr.bf16.mxu0 0
    %10451 = vmatpush1.bf16.msra.mxu0 %v8229
    %10452 = vmatprep.subr.bf16.mxu0 0
    %10453 = vmatpush1.bf16.msra.mxu0 %v8236
    %10454 = vmatprep.subr.bf16.mxu0 0
    %10455 = vmatpush1.bf16.msra.mxu0 %v8243
    %10456 = vmatprep.subr.bf16.mxu0 0
    %10457 = vmatpush1.bf16.msra.mxu0 %v8250
    %10458 = vmatprep.subr.bf16.mxu0 0
    %10459 = vmatpush1.bf16.msra.mxu0 %v8257
    %10460 = vmatprep.subr.bf16.mxu0 0
    %10461 = vmatpush1.bf16.msra.mxu0 %v8264
    %10462 = vmatprep.subr.bf16.mxu0 0
    %10463 = vmatpush1.bf16.msra.mxu0 %v8271
    %10464 = vmatprep.subr.bf16.mxu0 0
    %10465 = vmatpush1.bf16.msra.mxu0 %v8278
    %10466 = vmatprep.subr.bf16.mxu0 0
    %10467 = vmatpush1.bf16.msra.mxu0 %v8285
    %10468 = vmatprep.subr.bf16.mxu0 0
    %10469 = vmatpush1.bf16.msra.mxu0 %v8292
    %10470 = vmatprep.subr.bf16.mxu0 0
    %10471 = vmatpush1.bf16.msra.mxu0 %v8299
    %10472 = vmatprep.subr.bf16.mxu0 0
    %10473 = vmatpush1.bf16.msra.mxu0 %v8306
    %10474 = vmatprep.subr.bf16.mxu0 0
    %10475 = vmatpush1.bf16.msra.mxu0 %v8313
    %10476 = vmatprep.subr.bf16.mxu0 0
    %10477 = vmatpush1.bf16.msra.mxu0 %v8320
    %10478 = vmatprep.mubr.bf16.mxu0 %v5257
    %10479 = vmatmul.mubr.bf16.gmra.mrb[0].mxu0 %v5256
    %v10480 = vpop.f32.mrb[0].mxu0
    %v10481 = vadd.f32 0.0, %v10480
    %v10482 = vpop.f32.mrb[0].mxu0
    %v10483 = vpop.f32.mrb[0].mxu0
    %v10484 = vpop.f32.mrb[0].mxu0
    %10485 = vdwg.mxu0
    %10486 = vmatprep.subr.bf16.mxu0 0
    %10487 = vmatpush1.bf16.msra.mxu0 %v8327
    %10488 = vmatprep.subr.bf16.mxu0 0
    %10489 = vmatpush1.bf16.msra.mxu0 %v8334
    %10490 = vmatprep.subr.bf16.mxu0 0
    %10491 = vmatpush1.bf16.msra.mxu0 %v8341
    %10492 = vmatprep.subr.bf16.mxu0 0
    %10493 = vmatpush1.bf16.msra.mxu0 %v8348
    %10494 = vmatprep.subr.bf16.mxu0 0
    %10495 = vmatpush1.bf16.msra.mxu0 %v8355
    %10496 = vmatprep.subr.bf16.mxu0 0
    %10497 = vmatpush1.bf16.msra.mxu0 %v8362
    %10498 = vmatprep.subr.bf16.mxu0 0
    %10499 = vmatpush1.bf16.msra.mxu0 %v8369
    %10500 = vmatprep.subr.bf16.mxu0 0
    %10501 = vmatpush1.bf16.msra.mxu0 %v8376
    %10502 = vmatprep.subr.bf16.mxu0 0
    %10503 = vmatpush1.bf16.msra.mxu0 %v8383
    %10504 = vmatprep.subr.bf16.mxu0 0
    %10505 = vmatpush1.bf16.msra.mxu0 %v8390
    %10506 = vmatprep.subr.bf16.mxu0 0
    %10507 = vmatpush1.bf16.msra.mxu0 %v8397
    %10508 = vmatprep.subr.bf16.mxu0 0
    %10509 = vmatpush1.bf16.msra.mxu0 %v8404
    %10510 = vmatprep.subr.bf16.mxu0 0
    %10511 = vmatpush1.bf16.msra.mxu0 %v8411
    %10512 = vmatprep.subr.bf16.mxu0 0
    %10513 = vmatpush1.bf16.msra.mxu0 %v8418
    %10514 = vmatprep.subr.bf16.mxu0 0
    %10515 = vmatpush1.bf16.msra.mxu0 %v8425
    %10516 = vmatprep.subr.bf16.mxu0 0
    %10517 = vmatpush1.bf16.msra.mxu0 %v8432
    %10518 = vmatprep.mubr.bf16.mxu0 %v5259
    %10519 = vmatmul.mubr.bf16.gmra.mrb[0].mxu0 %v5258
    %v10520 = vpop.f32.mrb[0].mxu0
    %v10521 = vadd.f32 %v10481, %v10520
    %v10522 = vpop.f32.mrb[0].mxu0
    %v10523 = vpop.f32.mrb[0].mxu0
    %v10524 = vpop.f32.mrb[0].mxu0
    %10525 = vdwg.mxu0
    %10526 = vmatprep.subr.bf16.mxu0 0
    %10527 = vmatpush1.bf16.msra.mxu0 %v8439
    %10528 = vmatprep.subr.bf16.mxu0 0
    %10529 = vmatpush1.bf16.msra.mxu0 %v8446
    %10530 = vmatprep.subr.bf16.mxu0 0
    %10531 = vmatpush1.bf16.msra.mxu0 %v8453
    %10532 = vmatprep.subr.bf16.mxu0 0
    %10533 = vmatpush1.bf16.msra.mxu0 %v8460
    %10534 = vmatprep.subr.bf16.mxu0 0
    %10535 = vmatpush1.bf16.msra.mxu0 %v8467
    %10536 = vmatprep.subr.bf16.mxu0 0
    %10537 = vmatpush1.bf16.msra.mxu0 %v8474
    %10538 = vmatprep.subr.bf16.mxu0 0
    %10539 = vmatpush1.bf16.msra.mxu0 %v8481
    %10540 = vmatprep.subr.bf16.mxu0 0
    %10541 = vmatpush1.bf16.msra.mxu0 %v8488
    %10542 = vmatprep.subr.bf16.mxu0 0
    %10543 = vmatpush1.bf16.msra.mxu0 %v8495
    %10544 = vmatprep.subr.bf16.mxu0 0
    %10545 = vmatpush1.bf16.msra.mxu0 %v8502
    %10546 = vmatprep.subr.bf16.mxu0 0
    %10547 = vmatpush1.bf16.msra.mxu0 %v8509
    %10548 = vmatprep.subr.bf16.mxu0 0
    %10549 = vmatpush1.bf16.msra.mxu0 %v8516
    %10550 = vmatprep.subr.bf16.mxu0 0
    %10551 = vmatpush1.bf16.msra.mxu0 %v8523
    %10552 = vmatprep.subr.bf16.mxu0 0
    %10553 = vmatpush1.bf16.msra.mxu0 %v8530
    %10554 = vmatprep.subr.bf16.mxu0 0
    %10555 = vmatpush1.bf16.msra.mxu0 %v8537
    %10556 = vmatprep.subr.bf16.mxu0 0
    %10557 = vmatpush1.bf16.msra.mxu0 %v8544
    %10558 = vmatprep.mubr.bf16.mxu0 %v5261
    %10559 = vmatmul.mubr.bf16.gmra.mrb[0].mxu0 %v5260
    %v10560 = vpop.f32.mrb[0].mxu0
    %v10561 = vadd.f32 %v10521, %v10560
    %v10562 = vpop.f32.mrb[0].mxu0
    %v10563 = vpop.f32.mrb[0].mxu0
    %v10564 = vpop.f32.mrb[0].mxu0
    %10565 = vdwg.mxu0
    %10566 = vmatprep.subr.bf16.mxu0 0
    %10567 = vmatpush1.bf16.msra.mxu0 %v8551
    %10568 = vmatprep.subr.bf16.mxu0 0
    %10569 = vmatpush1.bf16.msra.mxu0 %v8558
    %10570 = vmatprep.subr.bf16.mxu0 0
    %10571 = vmatpush1.bf16.msra.mxu0 %v8565
    %10572 = vmatprep.subr.bf16.mxu0 0
    %10573 = vmatpush1.bf16.msra.mxu0 %v8572
    %10574 = vmatprep.subr.bf16.mxu0 0
    %10575 = vmatpush1.bf16.msra.mxu0 %v8579
    %10576 = vmatprep.subr.bf16.mxu0 0
    %10577 = vmatpush1.bf16.msra.mxu0 %v8586
    %10578 = vmatprep.subr.bf16.mxu0 0
    %10579 = vmatpush1.bf16.msra.mxu0 %v8593
    %10580 = vmatprep.subr.bf16.mxu0 0
    %10581 = vmatpush1.bf16.msra.mxu0 %v8600
    %10582 = vmatprep.subr.bf16.mxu0 0
    %10583 = vmatpush1.bf16.msra.mxu0 %v8607
    %10584 = vmatprep.subr.bf16.mxu0 0
    %10585 = vmatpush1.bf16.msra.mxu0 %v8614
    %10586 = vmatprep.subr.bf16.mxu0 0
    %10587 = vmatpush1.bf16.msra.mxu0 %v8621
    %10588 = vmatprep.subr.bf16.mxu0 0
    %10589 = vmatpush1.bf16.msra.mxu0 %v8628
    %10590 = vmatprep.subr.bf16.mxu0 0
    %10591 = vmatpush1.bf16.msra.mxu0 %v8635
    %10592 = vmatprep.subr.bf16.mxu0 0
    %10593 = vmatpush1.bf16.msra.mxu0 %v8642
    %10594 = vmatprep.subr.bf16.mxu0 0
    %10595 = vmatpush1.bf16.msra.mxu0 %v8649
    %10596 = vmatprep.subr.bf16.mxu0 0
    %10597 = vmatpush1.bf16.msra.mxu0 %v8656
    %10598 = vmatprep.mubr.bf16.mxu0 %v5263
    %10599 = vmatmul.mubr.bf16.gmra.mrb[0].mxu0 %v5262
    %v10600 = vpop.f32.mrb[0].mxu0
    %v10601 = vadd.f32 %v10561, %v10600
    %v10602 = vpop.f32.mrb[0].mxu0
    %v10603 = vpop.f32.mrb[0].mxu0
    %v10604 = vpop.f32.mrb[0].mxu0
    %10605 = vdwg.mxu0
    %10606 = vmatprep.subr.bf16.mxu0 0
    %10607 = vmatpush1.bf16.msra.mxu0 %v8663
    %10608 = vmatprep.subr.bf16.mxu0 0
    %10609 = vmatpush1.bf16.msra.mxu0 %v8670
    %10610 = vmatprep.subr.bf16.mxu0 0
    %10611 = vmatpush1.bf16.msra.mxu0 %v8677
    %10612 = vmatprep.subr.bf16.mxu0 0
    %10613 = vmatpush1.bf16.msra.mxu0 %v8684
    %10614 = vmatprep.subr.bf16.mxu0 0
    %10615 = vmatpush1.bf16.msra.mxu0 %v8691
    %10616 = vmatprep.subr.bf16.mxu0 0
    %10617 = vmatpush1.bf16.msra.mxu0 %v8698
    %10618 = vmatprep.subr.bf16.mxu0 0
    %10619 = vmatpush1.bf16.msra.mxu0 %v8705
    %10620 = vmatprep.subr.bf16.mxu0 0
    %10621 = vmatpush1.bf16.msra.mxu0 %v8712
    %10622 = vmatprep.subr.bf16.mxu0 0
    %10623 = vmatpush1.bf16.msra.mxu0 %v8719
    %10624 = vmatprep.subr.bf16.mxu0 0
    %10625 = vmatpush1.bf16.msra.mxu0 %v8726
    %10626 = vmatprep.subr.bf16.mxu0 0
    %10627 = vmatpush1.bf16.msra.mxu0 %v8733
    %10628 = vmatprep.subr.bf16.mxu0 0
    %10629 = vmatpush1.bf16.msra.mxu0 %v8740
    %10630 = vmatprep.subr.bf16.mxu0 0
    %10631 = vmatpush1.bf16.msra.mxu0 %v8747
    %10632 = vmatprep.subr.bf16.mxu0 0
    %10633 = vmatpush1.bf16.msra.mxu0 %v8754
    %10634 = vmatprep.subr.bf16.mxu0 0
    %10635 = vmatpush1.bf16.msra.mxu0 %v8761
    %10636 = vmatprep.subr.bf16.mxu0 0
    %10637 = vmatpush1.bf16.msra.mxu0 %v8768
    %10638 = vmatprep.mubr.bf16.mxu0 %v5265
    %10639 = vmatmul.mubr.bf16.gmra.mrb[0].mxu0 %v5264
    %v10640 = vpop.f32.mrb[0].mxu0
    %v10641 = vadd.f32 %v10601, %v10640
    %v10642 = vpop.f32.mrb[0].mxu0
    %v10643 = vpop.f32.mrb[0].mxu0
    %v10644 = vpop.f32.mrb[0].mxu0
    %10645 = vdwg.mxu0
    %10646 = vmatprep.subr.bf16.mxu0 0
    %10647 = vmatpush1.bf16.msra.mxu0 %v8775
    %10648 = vmatprep.subr.bf16.mxu0 0
    %10649 = vmatpush1.bf16.msra.mxu0 %v8782
    %10650 = vmatprep.subr.bf16.mxu0 0
    %10651 = vmatpush1.bf16.msra.mxu0 %v8789
    %10652 = vmatprep.subr.bf16.mxu0 0
    %10653 = vmatpush1.bf16.msra.mxu0 %v8796
    %10654 = vmatprep.subr.bf16.mxu0 0
    %10655 = vmatpush1.bf16.msra.mxu0 %v8803
    %10656 = vmatprep.subr.bf16.mxu0 0
    %10657 = vmatpush1.bf16.msra.mxu0 %v8810
    %10658 = vmatprep.subr.bf16.mxu0 0
    %10659 = vmatpush1.bf16.msra.mxu0 %v8817
    %10660 = vmatprep.subr.bf16.mxu0 0
    %10661 = vmatpush1.bf16.msra.mxu0 %v8824
    %10662 = vmatprep.subr.bf16.mxu0 0
    %10663 = vmatpush1.bf16.msra.mxu0 %v8831
    %10664 = vmatprep.subr.bf16.mxu0 0
    %10665 = vmatpush1.bf16.msra.mxu0 %v8838
    %10666 = vmatprep.subr.bf16.mxu0 0
    %10667 = vmatpush1.bf16.msra.mxu0 %v8845
    %10668 = vmatprep.subr.bf16.mxu0 0
    %10669 = vmatpush1.bf16.msra.mxu0 %v8852
    %10670 = vmatprep.subr.bf16.mxu0 0
    %10671 = vmatpush1.bf16.msra.mxu0 %v8859
    %10672 = vmatprep.subr.bf16.mxu0 0
    %10673 = vmatpush1.bf16.msra.mxu0 %v8866
    %10674 = vmatprep.subr.bf16.mxu0 0
    %10675 = vmatpush1.bf16.msra.mxu0 %v8873
    %10676 = vmatprep.subr.bf16.mxu0 0
    %10677 = vmatpush1.bf16.msra.mxu0 %v8880
    %10678 = vmatprep.mubr.bf16.mxu0 %v5267
    %10679 = vmatmul.mubr.bf16.gmra.mrb[0].mxu0 %v5266
    %v10680 = vpop.f32.mrb[0].mxu0
    %v10681 = vadd.f32 %v10641, %v10680
    %v10682 = vpop.f32.mrb[0].mxu0
    %v10683 = vpop.f32.mrb[0].mxu0
    %v10684 = vpop.f32.mrb[0].mxu0
    %10685 = vdwg.mxu0
    %10686 = vmatprep.subr.bf16.mxu0 0
    %10687 = vmatpush1.bf16.msra.mxu0 %v8887
    %10688 = vmatprep.subr.bf16.mxu0 0
    %10689 = vmatpush1.bf16.msra.mxu0 %v8894
    %10690 = vmatprep.subr.bf16.mxu0 0
    %10691 = vmatpush1.bf16.msra.mxu0 0
    %10692 = vmatprep.subr.bf16.mxu0 0
    %10693 = vmatpush1.bf16.msra.mxu0 0
    %10694 = vmatprep.subr.bf16.mxu0 0
    %10695 = vmatpush1.bf16.msra.mxu0 0
    %10696 = vmatprep.subr.bf16.mxu0 0
    %10697 = vmatpush1.bf16.msra.mxu0 0
    %10698 = vmatprep.subr.bf16.mxu0 0
    %10699 = vmatpush1.bf16.msra.mxu0 0
    %10700 = vmatprep.subr.bf16.mxu0 0
    %10701 = vmatpush1.bf16.msra.mxu0 0
    %10702 = vmatprep.subr.bf16.mxu0 0
    %10703 = vmatpush1.bf16.msra.mxu0 0
    %10704 = vmatprep.subr.bf16.mxu0 0
    %10705 = vmatpush1.bf16.msra.mxu0 0
    %10706 = vmatprep.subr.bf16.mxu0 0
    %10707 = vmatpush1.bf16.msra.mxu0 0
    %10708 = vmatprep.subr.bf16.mxu0 0
    %10709 = vmatpush1.bf16.msra.mxu0 0
    %10710 = vmatprep.subr.bf16.mxu0 0
    %10711 = vmatpush1.bf16.msra.mxu0 0
    %10712 = vmatprep.subr.bf16.mxu0 0
    %10713 = vmatpush1.bf16.msra.mxu0 0
    %10714 = vmatprep.subr.bf16.mxu0 0
    %10715 = vmatpush1.bf16.msra.mxu0 0
    %10716 = vmatprep.subr.bf16.mxu0 0
    %10717 = vmatpush1.bf16.msra.mxu0 0
    %10718 = vmatprep.mubr.bf16.mxu0 0
    %10719 = vmatmul.mubr.bf16.gmra.mrb[0].mxu0 %v9583
    %v10720 = vpop.f32.mrb[0].mxu0
    %v10721 = vadd.f32 %v10681, %v10720
    %v10722 = vpop.f32.mrb[0].mxu0
    %v10723 = vpop.f32.mrb[0].mxu0
    %v10724 = vpop.f32.mrb[0].mxu0
    %10725 = vdwg.mxu0
    %vm10726 = vcmask 1041408
    %v10727 = vsel %vm10726, %v9866, 0.0
    %v10728 = vrot.slane %v10727, 4
    %v10729 = vadd.f32 %v10727, %v10728
    %v10730 = vrot.slane %v10729, 2
    %v10731 = vadd.f32 %v10729, %v10730
    %v10732 = vrot.slane %v10731, 1
    %v10733 = vadd.f32 %v10731, %v10732
    %v10734 = vsel %vm10726, %v9868, 0.0
    %v10735 = vrot.slane %v10734, 4
    %v10736 = vadd.f32 %v10734, %v10735
    %v10737 = vrot.slane %v10736, 2
    %v10738 = vadd.f32 %v10736, %v10737
    %v10739 = vrot.slane %v10738, 1
    %v10740 = vadd.f32 %v10738, %v10739
    %v10741 = vsel %vm10726, %v10153, 0.0
    %v10742 = vrot.slane %v10741, 4
    %v10743 = vadd.f32 %v10741, %v10742
    %v10744 = vrot.slane %v10743, 2
    %v10745 = vadd.f32 %v10743, %v10744
    %v10746 = vrot.slane %v10745, 1
    %v10747 = vadd.f32 %v10745, %v10746
    %v10748 = vsel %vm10726, %v10155, 0.0
    %v10749 = vrot.slane %v10748, 4
    %v10750 = vadd.f32 %v10748, %v10749
    %v10751 = vrot.slane %v10750, 2
    %v10752 = vadd.f32 %v10750, %v10751
    %v10753 = vrot.slane %v10752, 1
    %v10754 = vadd.f32 %v10752, %v10753
    %v10755 = vsel %vm10726, %v10440, 0.0
    %v10756 = vrot.slane %v10755, 4
    %v10757 = vadd.f32 %v10755, %v10756
    %v10758 = vrot.slane %v10757, 2
    %v10759 = vadd.f32 %v10757, %v10758
    %v10760 = vrot.slane %v10759, 1
    %v10761 = vadd.f32 %v10759, %v10760
    %v10762 = vsel %vm10726, %v10442, 0.0
    %v10763 = vrot.slane %v10762, 4
    %v10764 = vadd.f32 %v10762, %v10763
    %v10765 = vrot.slane %v10764, 2
    %v10766 = vadd.f32 %v10764, %v10765
    %v10767 = vrot.slane %v10766, 1
    %v10768 = vadd.f32 %v10766, %v10767
    %vm10769 = vcmask 123904
    %v10770 = vsel %vm10769, %v10721, 0.0
    %v10771 = vrot.slane %v10770, 4
    %v10772 = vadd.f32 %v10770, %v10771
    %v10773 = vrot.slane %v10772, 2
    %v10774 = vadd.f32 %v10772, %v10773
    %v10775 = vrot.slane %v10774, 1
    %v10776 = vadd.f32 %v10774, %v10775
    %v10777 = vld [vmem:[%s4] sm:$0xff]
    %v10778 = vld [vmem:[%s4 + $0x8] sm:$0xff]
    %v10779 = vld [vmem:[%s4 + $0x10] sm:$0xff]
    %v10780 = vld [vmem:[%s4 + $0x18] sm:$0xff]
    %v10781 = vld [vmem:[%s4 + $0x20] sm:$0xff]
    %v10782 = vld [vmem:[%s4 + $0x28] sm:$0xff]
    %v10783 = vld [vmem:[%s4 + $0x30] sm:$0xff]
    %v10784 = vld [vmem:[%s4 + $0x38] sm:$0xff]
    %v10785 = vld [vmem:[%s4 + $0x40] sm:$0xff]
    %v10786 = vld [vmem:[%s4 + $0x48] sm:$0xff]
    %v10787 = vld [vmem:[%s4 + $0x50] sm:$0xff]
    %v10788 = vld [vmem:[%s4 + $0x58] sm:$0xff]
    %v10789 = vld [vmem:[%s4 + $0x60] sm:$0xff]
    %v10790 = vld [vmem:[%s4 + $0x68] sm:$0xff]
    %v10791 = vld [vmem:[%s4 + $0x70] sm:$0xff]
    %v10792 = vld [vmem:[%s4 + $0x78] sm:$0xff]
    %v10793 = vld [vmem:[%s4 + $0x80] sm:$0xff]
    %v10794 = vld [vmem:[%s4 + $0x88] sm:$0xff]
    %v10795 = vld [vmem:[%s4 + $0x90] sm:$0xff]
    %v10796 = vld [vmem:[%s4 + $0x98] sm:$0xff]
    %v10797 = vld [vmem:[%s4 + $0xa0] sm:$0xff]
    %v10798 = vld [vmem:[%s4 + $0xa8] sm:$0xff]
    %v10799 = vld [vmem:[%s4 + $0xb0] sm:$0xff]
    %v10800 = vld [vmem:[%s4 + $0xb8] sm:$0xff]
    %v10801 = vld [vmem:[%s4 + $0xc0] sm:$0xff]
    %v10802 = vld [vmem:[%s4 + $0xc8] sm:$0xff]
    %v10803 = vld [vmem:[%s4 + $0xd0] sm:$0xff]
    %v10804 = vld [vmem:[%s4 + $0xd8] sm:$0xff]
    %v10805 = vld [vmem:[%s4 + $0xe0] sm:$0xff]
    %v10806 = vld [vmem:[%s4 + $0xe8] sm:$0xff]
    %v10807 = vld [vmem:[%s4 + $0xf0] sm:$0xff]
    %v10808 = vld [vmem:[%s4 + $0xf8] sm:$0xff]
    %v10809 = vld [vmem:[%s4 + $0x100] sm:$0xff]
    %v10810 = vld [vmem:[%s4 + $0x108] sm:$0xff]
    %v10811 = vld [vmem:[%s4 + $0x110] sm:$0xff]
    %v10812 = vld [vmem:[%s4 + $0x118] sm:$0xff]
    %v10813 = vld [vmem:[%s4 + $0x120] sm:$0xff]
    %v10814 = vld [vmem:[%s4 + $0x128] sm:$0xff]
    %v10815 = vld [vmem:[%s4 + $0x130] sm:$0xff]
    %v10816 = vld [vmem:[%s4 + $0x138] sm:$0xff]
    %v10817 = vld [vmem:[%s4 + $0x140] sm:$0xff]
    %v10818 = vld [vmem:[%s4 + $0x148] sm:$0xff]
    %v10819 = vld [vmem:[%s4 + $0x150] sm:$0xff]
    %v10820 = vld [vmem:[%s4 + $0x158] sm:$0xff]
    %v10821 = vld [vmem:[%s4 + $0x160] sm:$0xff]
    %v10822 = vld [vmem:[%s4 + $0x168] sm:$0xff]
    %v10823 = vld [vmem:[%s4 + $0x170] sm:$0xff]
    %v10824 = vld [vmem:[%s4 + $0x178] sm:$0xff]
    %v10825 = vld [vmem:[%s4 + $0x180] sm:$0xff]
    %v10826 = vld [vmem:[%s4 + $0x188] sm:$0xff]
    %v10827 = vld [vmem:[%s4 + $0x190] sm:$0xff]
    %v10828 = vld [vmem:[%s4 + $0x198] sm:$0xff]
    %v10829 = vld [vmem:[%s4 + $0x1a0] sm:$0xff]
    %v10830 = vld [vmem:[%s4 + $0x1a8] sm:$0xff]
    %v10831 = vld [vmem:[%s4 + $0x1b0] sm:$0xff]
    %v10832 = vld [vmem:[%s4 + $0x1b8] sm:$0xff]
    %v10833 = vld [vmem:[%s4 + $0x1c0] sm:$0xff]
    %v10834 = vld [vmem:[%s4 + $0x1c8] sm:$0xff]
    %v10835 = vld [vmem:[%s4 + $0x1d0] sm:$0xff]
    %v10836 = vld [vmem:[%s4 + $0x1d8] sm:$0xff]
    %v10837 = vld [vmem:[%s4 + $0x1e0] sm:$0xff]
    %v10838 = vld [vmem:[%s4 + $0x1e8] sm:$0xff]
    %v10839 = vld [vmem:[%s4 + $0x1f0] sm:$0xff]
    %v10840 = vld [vmem:[%s4 + $0x1f8] sm:$0xff]
    %v10841 = vld [vmem:[%s4 + $0x200] sm:$0xff]
    %v10842 = vld [vmem:[%s4 + $0x208] sm:$0xff]
    %v10843 = vld [vmem:[%s4 + $0x210] sm:$0xff]
    %v10844 = vld [vmem:[%s4 + $0x218] sm:$0xff]
    %v10845 = vld [vmem:[%s4 + $0x220] sm:$0xff]
    %v10846 = vld [vmem:[%s4 + $0x228] sm:$0xff]
    %v10847 = vld [vmem:[%s4 + $0x230] sm:$0xff]
    %v10848 = vld [vmem:[%s4 + $0x238] sm:$0xff]
    %v10849 = vld [vmem:[%s4 + $0x240] sm:$0xff]
    %v10850 = vld [vmem:[%s4 + $0x248] sm:$0xff]
    %v10851 = vld [vmem:[%s4 + $0x250] sm:$0xff]
    %v10852 = vld [vmem:[%s4 + $0x258] sm:$0xff]
    %v10853 = vld [vmem:[%s4 + $0x260] sm:$0xff]
    %v10854 = vld [vmem:[%s4 + $0x268] sm:$0xff]
    %v10855 = vld [vmem:[%s4 + $0x270] sm:$0xff]
    %v10856 = vld [vmem:[%s4 + $0x278] sm:$0xff]
    %v10857 = vld [vmem:[%s4 + $0x280] sm:$0xff]
    %v10858 = vld [vmem:[%s4 + $0x288] sm:$0xff]
    %v10859 = vld [vmem:[%s4 + $0x290] sm:$0xff]
    %v10860 = vld [vmem:[%s4 + $0x298] sm:$0xff]
    %v10861 = vld [vmem:[%s4 + $0x2a0] sm:$0xff]
    %v10862 = vld [vmem:[%s4 + $0x2a8] sm:$0xff]
    %v10863 = vld [vmem:[%s4 + $0x2b0] sm:$0xff]
    %v10864 = vld [vmem:[%s4 + $0x2b8] sm:$0xff]
    %v10865 = vld [vmem:[%s4 + $0x2c0] sm:$0xff]
    %v10866 = vld [vmem:[%s4 + $0x2c8] sm:$0xff]
    %v10867 = vld [vmem:[%s4 + $0x2d0] sm:$0xff]
    %v10868 = vld [vmem:[%s4 + $0x2d8] sm:$0xff]
    %v10869 = vld [vmem:[%s4 + $0x2e0] sm:$0xff]
    %v10870 = vld [vmem:[%s4 + $0x2e8] sm:$0xff]
    %v10871 = vld [vmem:[%s4 + $0x2f0] sm:$0xff]
    %v10872 = vld [vmem:[%s4 + $0x2f8] sm:$0xff]
    %v10873 = vld [vmem:[%s4 + $0x300] sm:$0xff]
    %v10874 = vld [vmem:[%s4 + $0x308] sm:$0xff]
    %v10876 = vsel %vm4095, %v10776, 0
    %10878 = vmatprep.subr.mxu0 0.0
    %10879 = vmatpush1.msra.mxu0 %v10777
    %10880 = vmatprep.subr.mxu0 0.0
    %10881 = vmatpush1.msra.mxu0 %v10778
    %10882 = vmatprep.subr.mxu0 0.0
    %10883 = vmatpush1.msra.mxu0 %v10779
    %10884 = vmatprep.subr.mxu0 0.0
    %10885 = vmatpush1.msra.mxu0 %v10780
    %10886 = vmatprep.subr.mxu0 0.0
    %10887 = vmatpush1.msra.mxu0 %v10781
    %10888 = vmatprep.subr.mxu0 0.0
    %10889 = vmatpush1.msra.mxu0 %v10782
    %10890 = vmatprep.subr.mxu0 0.0
    %10891 = vmatpush1.msra.mxu0 %v10783
    %10892 = vmatprep.subr.mxu0 0.0
    %10893 = vmatpush1.msra.mxu0 %v10784
    %10894 = vmatprep.subr.mxu0 0.0
    %10895 = vmatpush1.msra.mxu0 %v10785
    %10896 = vmatprep.subr.mxu0 0.0
    %10897 = vmatpush1.msra.mxu0 %v10786
    %10898 = vmatprep.subr.mxu0 0.0
    %10899 = vmatpush1.msra.mxu0 %v10787
    %10900 = vmatprep.subr.mxu0 0.0
    %10901 = vmatpush1.msra.mxu0 %v10788
    %10902 = vmatprep.subr.mxu0 0.0
    %10903 = vmatpush1.msra.mxu0 %v10789
    %10904 = vmatprep.subr.mxu0 0.0
    %10905 = vmatpush1.msra.mxu0 %v10790
    %10906 = vmatprep.subr.mxu0 0.0
    %10907 = vmatpush1.msra.mxu0 %v10791
    %10908 = vmatprep.subr.mxu0 0.0
    %10909 = vmatpush1.msra.mxu0 %v10792
    %10910 = vmatprep.subr.mxu0 0.0
    %10911 = vmatpush1.msra.mxu0 %v10793
    %10912 = vmatprep.subr.mxu0 0.0
    %10913 = vmatpush1.msra.mxu0 %v10794
    %10914 = vmatprep.subr.mxu0 0.0
    %10915 = vmatpush1.msra.mxu0 %v10795
    %10916 = vmatprep.subr.mxu0 0.0
    %10917 = vmatpush1.msra.mxu0 %v10796
    %10918 = vmatprep.subr.mxu0 0.0
    %10919 = vmatpush1.msra.mxu0 %v10797
    %10920 = vmatprep.subr.mxu0 0.0
    %10921 = vmatpush1.msra.mxu0 %v10798
    %10922 = vmatprep.subr.mxu0 0.0
    %10923 = vmatpush1.msra.mxu0 %v10799
    %10924 = vmatprep.subr.mxu0 0.0
    %10925 = vmatpush1.msra.mxu0 %v10800
    %10926 = vmatprep.subr.mxu0 0.0
    %10927 = vmatpush1.msra.mxu0 %v10801
    %10928 = vmatprep.subr.mxu0 0.0
    %10929 = vmatpush1.msra.mxu0 %v10802
    %10930 = vmatprep.subr.mxu0 0.0
    %10931 = vmatpush1.msra.mxu0 %v10803
    %10932 = vmatprep.subr.mxu0 0.0
    %10933 = vmatpush1.msra.mxu0 %v10804
    %10934 = vmatprep.subr.mxu0 0.0
    %10935 = vmatpush1.msra.mxu0 %v10805
    %10936 = vmatprep.subr.mxu0 0.0
    %10937 = vmatpush1.msra.mxu0 %v10806
    %10938 = vmatprep.subr.mxu0 0.0
    %10939 = vmatpush1.msra.mxu0 %v10807
    %10940 = vmatprep.subr.mxu0 0.0
    %10941 = vmatpush1.msra.mxu0 %v10808
    %10942 = vmatprep.mubr.f32.mxu0 %v10740
    %10943 = vmatmul.mubr.f32.gmra.mrb[0].mxu0 %v10733
    %v10944 = vpop.f32.mrb[0].mxu0
    %v10945 = vadd.f32 0.0, %v10944
    %v10946 = vpop.f32.mrb[0].mxu0
    %10947 = vdwg.mxu0
    %10948 = vmatprep.subr.mxu0 0.0
    %10949 = vmatpush1.msra.mxu0 %v10809
    %10950 = vmatprep.subr.mxu0 0.0
    %10951 = vmatpush1.msra.mxu0 %v10810
    %10952 = vmatprep.subr.mxu0 0.0
    %10953 = vmatpush1.msra.mxu0 %v10811
    %10954 = vmatprep.subr.mxu0 0.0
    %10955 = vmatpush1.msra.mxu0 %v10812
    %10956 = vmatprep.subr.mxu0 0.0
    %10957 = vmatpush1.msra.mxu0 %v10813
    %10958 = vmatprep.subr.mxu0 0.0
    %10959 = vmatpush1.msra.mxu0 %v10814
    %10960 = vmatprep.subr.mxu0 0.0
    %10961 = vmatpush1.msra.mxu0 %v10815
    %10962 = vmatprep.subr.mxu0 0.0
    %10963 = vmatpush1.msra.mxu0 %v10816
    %10964 = vmatprep.subr.mxu0 0.0
    %10965 = vmatpush1.msra.mxu0 %v10817
    %10966 = vmatprep.subr.mxu0 0.0
    %10967 = vmatpush1.msra.mxu0 %v10818
    %10968 = vmatprep.subr.mxu0 0.0
    %10969 = vmatpush1.msra.mxu0 %v10819
    %10970 = vmatprep.subr.mxu0 0.0
    %10971 = vmatpush1.msra.mxu0 %v10820
    %10972 = vmatprep.subr.mxu0 0.0
    %10973 = vmatpush1.msra.mxu0 %v10821
    %10974 = vmatprep.subr.mxu0 0.0
    %10975 = vmatpush1.msra.mxu0 %v10822
    %10976 = vmatprep.subr.mxu0 0.0
    %10977 = vmatpush1.msra.mxu0 %v10823
    %10978 = vmatprep.subr.mxu0 0.0
    %10979 = vmatpush1.msra.mxu0 %v10824
    %10980 = vmatprep.subr.mxu0 0.0
    %10981 = vmatpush1.msra.mxu0 %v10825
    %10982 = vmatprep.subr.mxu0 0.0
    %10983 = vmatpush1.msra.mxu0 %v10826
    %10984 = vmatprep.subr.mxu0 0.0
    %10985 = vmatpush1.msra.mxu0 %v10827
    %10986 = vmatprep.subr.mxu0 0.0
    %10987 = vmatpush1.msra.mxu0 %v10828
    %10988 = vmatprep.subr.mxu0 0.0
    %10989 = vmatpush1.msra.mxu0 %v10829
    %10990 = vmatprep.subr.mxu0 0.0
    %10991 = vmatpush1.msra.mxu0 %v10830
    %10992 = vmatprep.subr.mxu0 0.0
    %10993 = vmatpush1.msra.mxu0 %v10831
    %10994 = vmatprep.subr.mxu0 0.0
    %10995 = vmatpush1.msra.mxu0 %v10832
    %10996 = vmatprep.subr.mxu0 0.0
    %10997 = vmatpush1.msra.mxu0 %v10833
    %10998 = vmatprep.subr.mxu0 0.0
    %10999 = vmatpush1.msra.mxu0 %v10834
    %11000 = vmatprep.subr.mxu0 0.0
    %11001 = vmatpush1.msra.mxu0 %v10835
    %11002 = vmatprep.subr.mxu0 0.0
    %11003 = vmatpush1.msra.mxu0 %v10836
    %11004 = vmatprep.subr.mxu0 0.0
    %11005 = vmatpush1.msra.mxu0 %v10837
    %11006 = vmatprep.subr.mxu0 0.0
    %11007 = vmatpush1.msra.mxu0 %v10838
    %11008 = vmatprep.subr.mxu0 0.0
    %11009 = vmatpush1.msra.mxu0 %v10839
    %11010 = vmatprep.subr.mxu0 0.0
    %11011 = vmatpush1.msra.mxu0 %v10840
    %11012 = vmatprep.mubr.f32.mxu0 %v10754
    %11013 = vmatmul.mubr.f32.gmra.mrb[0].mxu0 %v10747
    %v11014 = vpop.f32.mrb[0].mxu0
    %v11015 = vadd.f32 %v10945, %v11014
    %v11016 = vpop.f32.mrb[0].mxu0
    %11017 = vdwg.mxu0
    %11018 = vmatprep.subr.mxu0 0.0
    %11019 = vmatpush1.msra.mxu0 %v10841
    %11020 = vmatprep.subr.mxu0 0.0
    %11021 = vmatpush1.msra.mxu0 %v10842
    %11022 = vmatprep.subr.mxu0 0.0
    %11023 = vmatpush1.msra.mxu0 %v10843
    %11024 = vmatprep.subr.mxu0 0.0
    %11025 = vmatpush1.msra.mxu0 %v10844
    %11026 = vmatprep.subr.mxu0 0.0
    %11027 = vmatpush1.msra.mxu0 %v10845
    %11028 = vmatprep.subr.mxu0 0.0
    %11029 = vmatpush1.msra.mxu0 %v10846
    %11030 = vmatprep.subr.mxu0 0.0
    %11031 = vmatpush1.msra.mxu0 %v10847
    %11032 = vmatprep.subr.mxu0 0.0
    %11033 = vmatpush1.msra.mxu0 %v10848
    %11034 = vmatprep.subr.mxu0 0.0
    %11035 = vmatpush1.msra.mxu0 %v10849
    %11036 = vmatprep.subr.mxu0 0.0
    %11037 = vmatpush1.msra.mxu0 %v10850
    %11038 = vmatprep.subr.mxu0 0.0
    %11039 = vmatpush1.msra.mxu0 %v10851
    %11040 = vmatprep.subr.mxu0 0.0
    %11041 = vmatpush1.msra.mxu0 %v10852
    %11042 = vmatprep.subr.mxu0 0.0
    %11043 = vmatpush1.msra.mxu0 %v10853
    %11044 = vmatprep.subr.mxu0 0.0
    %11045 = vmatpush1.msra.mxu0 %v10854
    %11046 = vmatprep.subr.mxu0 0.0
    %11047 = vmatpush1.msra.mxu0 %v10855
    %11048 = vmatprep.subr.mxu0 0.0
    %11049 = vmatpush1.msra.mxu0 %v10856
    %11050 = vmatprep.subr.mxu0 0.0
    %11051 = vmatpush1.msra.mxu0 %v10857
    %11052 = vmatprep.subr.mxu0 0.0
    %11053 = vmatpush1.msra.mxu0 %v10858
    %11054 = vmatprep.subr.mxu0 0.0
    %11055 = vmatpush1.msra.mxu0 %v10859
    %11056 = vmatprep.subr.mxu0 0.0
    %11057 = vmatpush1.msra.mxu0 %v10860
    %11058 = vmatprep.subr.mxu0 0.0
    %11059 = vmatpush1.msra.mxu0 %v10861
    %11060 = vmatprep.subr.mxu0 0.0
    %11061 = vmatpush1.msra.mxu0 %v10862
    %11062 = vmatprep.subr.mxu0 0.0
    %11063 = vmatpush1.msra.mxu0 %v10863
    %11064 = vmatprep.subr.mxu0 0.0
    %11065 = vmatpush1.msra.mxu0 %v10864
    %11066 = vmatprep.subr.mxu0 0.0
    %11067 = vmatpush1.msra.mxu0 %v10865
    %11068 = vmatprep.subr.mxu0 0.0
    %11069 = vmatpush1.msra.mxu0 %v10866
    %11070 = vmatprep.subr.mxu0 0.0
    %11071 = vmatpush1.msra.mxu0 %v10867
    %11072 = vmatprep.subr.mxu0 0.0
    %11073 = vmatpush1.msra.mxu0 %v10868
    %11074 = vmatprep.subr.mxu0 0.0
    %11075 = vmatpush1.msra.mxu0 %v10869
    %11076 = vmatprep.subr.mxu0 0.0
    %11077 = vmatpush1.msra.mxu0 %v10870
    %11078 = vmatprep.subr.mxu0 0.0
    %11079 = vmatpush1.msra.mxu0 %v10871
    %11080 = vmatprep.subr.mxu0 0.0
    %11081 = vmatpush1.msra.mxu0 %v10872
    %11082 = vmatprep.mubr.f32.mxu0 %v10768
    %11083 = vmatmul.mubr.f32.gmra.mrb[0].mxu0 %v10761
    %v11084 = vpop.f32.mrb[0].mxu0
    %v11085 = vadd.f32 %v11015, %v11084
    %v11086 = vpop.f32.mrb[0].mxu0
    %11087 = vdwg.mxu0
    %11088 = vmatprep.subr.mxu0 0.0
    %11089 = vmatpush1.msra.mxu0 %v10873
    %11090 = vmatprep.subr.mxu0 0.0
    %11091 = vmatpush1.msra.mxu0 %v10874
    %11092 = vmatprep.subr.mxu0 0.0
    %11093 = vmatpush1.msra.mxu0 0.0
    %11094 = vmatprep.subr.mxu0 0.0
    %11095 = vmatpush1.msra.mxu0 0.0
    %11096 = vmatprep.subr.mxu0 0.0
    %11097 = vmatpush1.msra.mxu0 0.0
    %11098 = vmatprep.subr.mxu0 0.0
    %11099 = vmatpush1.msra.mxu0 0.0
    %11100 = vmatprep.subr.mxu0 0.0
    %11101 = vmatpush1.msra.mxu0 0.0
    %11102 = vmatprep.subr.mxu0 0.0
    %11103 = vmatpush1.msra.mxu0 0.0
    %11104 = vmatprep.subr.mxu0 0.0
    %11105 = vmatpush1.msra.mxu0 0.0
    %11106 = vmatprep.subr.mxu0 0.0
    %11107 = vmatpush1.msra.mxu0 0.0
    %11108 = vmatprep.subr.mxu0 0.0
    %11109 = vmatpush1.msra.mxu0 0.0
    %11110 = vmatprep.subr.mxu0 0.0
    %11111 = vmatpush1.msra.mxu0 0.0
    %11112 = vmatprep.subr.mxu0 0.0
    %11113 = vmatpush1.msra.mxu0 0.0
    %11114 = vmatprep.subr.mxu0 0.0
    %11115 = vmatpush1.msra.mxu0 0.0
    %11116 = vmatprep.subr.mxu0 0.0
    %11117 = vmatpush1.msra.mxu0 0.0
    %11118 = vmatprep.subr.mxu0 0.0
    %11119 = vmatpush1.msra.mxu0 0.0
    %11120 = vmatprep.subr.mxu0 0.0
    %11121 = vmatpush1.msra.mxu0 0.0
    %11122 = vmatprep.subr.mxu0 0.0
    %11123 = vmatpush1.msra.mxu0 0.0
    %11124 = vmatprep.subr.mxu0 0.0
    %11125 = vmatpush1.msra.mxu0 0.0
    %11126 = vmatprep.subr.mxu0 0.0
    %11127 = vmatpush1.msra.mxu0 0.0
    %11128 = vmatprep.subr.mxu0 0.0
    %11129 = vmatpush1.msra.mxu0 0.0
    %11130 = vmatprep.subr.mxu0 0.0
    %11131 = vmatpush1.msra.mxu0 0.0
    %11132 = vmatprep.subr.mxu0 0.0
    %11133 = vmatpush1.msra.mxu0 0.0
    %11134 = vmatprep.subr.mxu0 0.0
    %11135 = vmatpush1.msra.mxu0 0.0
    %11136 = vmatprep.subr.mxu0 0.0
    %11137 = vmatpush1.msra.mxu0 0.0
    %11138 = vmatprep.subr.mxu0 0.0
    %11139 = vmatpush1.msra.mxu0 0.0
    %11140 = vmatprep.subr.mxu0 0.0
    %11141 = vmatpush1.msra.mxu0 0.0
    %11142 = vmatprep.subr.mxu0 0.0
    %11143 = vmatpush1.msra.mxu0 0.0
    %11144 = vmatprep.subr.mxu0 0.0
    %11145 = vmatpush1.msra.mxu0 0.0
    %11146 = vmatprep.subr.mxu0 0.0
    %11147 = vmatpush1.msra.mxu0 0.0
    %11148 = vmatprep.subr.mxu0 0.0
    %11149 = vmatpush1.msra.mxu0 0.0
    %11150 = vmatprep.subr.mxu0 0.0
    %11151 = vmatpush1.msra.mxu0 0.0
    %11152 = vmatprep.mubr.f32.mxu0 0.0
    %11153 = vmatmul.mubr.f32.gmra.mrb[0].mxu0 %v10876
    %v11154 = vpop.f32.mrb[0].mxu0
    %v11155 = vadd.f32 %v11085, %v11154
    %v11156 = vpop.f32.mrb[0].mxu0
    %11157 = vdwg.mxu0
    %v11158 = vmul.f32 %v11155, 0.010204081
    %v11159 = vld [vmem:[%s5] sm:$0xff]
    %v11160 = vld [vmem:[%s5 + $0x8] sm:$0xff]
    %v11161 = vld [vmem:[%s5 + $0x10] sm:$0xff]
    %v11162 = vld [vmem:[%s5 + $0x18] sm:$0xff]
    %v11163 = vld [vmem:[%s5 + $0x20] sm:$0xff]
    %v11164 = vld [vmem:[%s5 + $0x28] sm:$0xff]
    %v11165 = vld [vmem:[%s5 + $0x30] sm:$0xff]
    %v11166 = vld [vmem:[%s5 + $0x38] sm:$0xff]
    %v11167 = vld [vmem:[%s5 + $0x40] sm:$0xff]
    %v11168 = vld [vmem:[%s5 + $0x48] sm:$0xff]
    %v11169 = vld [vmem:[%s5 + $0x50] sm:$0xff]
    %v11170 = vld [vmem:[%s5 + $0x58] sm:$0xff]
    %v11171 = vld [vmem:[%s5 + $0x60] sm:$0xff]
    %v11172 = vld [vmem:[%s5 + $0x68] sm:$0xff]
    %v11174 = vsel %vm4095, %v11158, 0
    %11176 = vmatprep.subr.mxu0 %v11160
    %11177 = vmatpush1.msra.mxu0 %v11159
    %11178 = vmatprep.subr.mxu0 %v11167
    %11179 = vmatpush1.msra.mxu0 %v11166
    %11180 = vmatprep.subr.mxu0 0.0
    %11181 = vmatpush1.msra.mxu0 0.0
    %11182 = vmatprep.subr.mxu0 0.0
    %11183 = vmatpush1.msra.mxu0 0.0
    %11184 = vmatprep.subr.mxu0 0.0
    %11185 = vmatpush1.msra.mxu0 0.0
    %11186 = vmatprep.subr.mxu0 0.0
    %11187 = vmatpush1.msra.mxu0 0.0
    %11188 = vmatprep.subr.mxu0 0.0
    %11189 = vmatpush1.msra.mxu0 0.0
    %11190 = vmatprep.subr.mxu0 0.0
    %11191 = vmatpush1.msra.mxu0 0.0
    %11192 = vmatprep.subr.mxu0 0.0
    %11193 = vmatpush1.msra.mxu0 0.0
    %11194 = vmatprep.subr.mxu0 0.0
    %11195 = vmatpush1.msra.mxu0 0.0
    %11196 = vmatprep.subr.mxu0 0.0
    %11197 = vmatpush1.msra.mxu0 0.0
    %11198 = vmatprep.subr.mxu0 0.0
    %11199 = vmatpush1.msra.mxu0 0.0
    %11200 = vmatprep.subr.mxu0 0.0
    %11201 = vmatpush1.msra.mxu0 0.0
    %11202 = vmatprep.subr.mxu0 0.0
    %11203 = vmatpush1.msra.mxu0 0.0
    %11204 = vmatprep.subr.mxu0 0.0
    %11205 = vmatpush1.msra.mxu0 0.0
    %11206 = vmatprep.subr.mxu0 0.0
    %11207 = vmatpush1.msra.mxu0 0.0
    %11208 = vmatprep.subr.mxu0 0.0
    %11209 = vmatpush1.msra.mxu0 0.0
    %11210 = vmatprep.subr.mxu0 0.0
    %11211 = vmatpush1.msra.mxu0 0.0
    %11212 = vmatprep.subr.mxu0 0.0
    %11213 = vmatpush1.msra.mxu0 0.0
    %11214 = vmatprep.subr.mxu0 0.0
    %11215 = vmatpush1.msra.mxu0 0.0
    %11216 = vmatprep.subr.mxu0 0.0
    %11217 = vmatpush1.msra.mxu0 0.0
    %11218 = vmatprep.subr.mxu0 0.0
    %11219 = vmatpush1.msra.mxu0 0.0
    %11220 = vmatprep.subr.mxu0 0.0
    %11221 = vmatpush1.msra.mxu0 0.0
    %11222 = vmatprep.subr.mxu0 0.0
    %11223 = vmatpush1.msra.mxu0 0.0
    %11224 = vmatprep.subr.mxu0 0.0
    %11225 = vmatpush1.msra.mxu0 0.0
    %11226 = vmatprep.subr.mxu0 0.0
    %11227 = vmatpush1.msra.mxu0 0.0
    %11228 = vmatprep.subr.mxu0 0.0
    %11229 = vmatpush1.msra.mxu0 0.0
    %11230 = vmatprep.subr.mxu0 0.0
    %11231 = vmatpush1.msra.mxu0 0.0
    %11232 = vmatprep.subr.mxu0 0.0
    %11233 = vmatpush1.msra.mxu0 0.0
    %11234 = vmatprep.subr.mxu0 0.0
    %11235 = vmatpush1.msra.mxu0 0.0
    %11236 = vmatprep.subr.mxu0 0.0
    %11237 = vmatpush1.msra.mxu0 0.0
    %11238 = vmatprep.subr.mxu0 0.0
    %11239 = vmatpush1.msra.mxu0 0.0
    %11240 = vmatprep.mubr.f32.mxu0 0.0
    %11241 = vmatmul.mubr.f32.gmra.mrb[0].mxu0 %v11174
    %v11242 = vpop.f32.mrb[0].mxu0
    %v11243 = vadd.f32 0.0, %v11242
    %v11244 = vpop.f32.mrb[0].mxu0
    %v11245 = vadd.f32 0.0, %v11244
    %11246 = vdwg.mxu0
    %11247 = vmatprep.subr.mxu0 %v11162
    %11248 = vmatpush1.msra.mxu0 %v11161
    %11249 = vmatprep.subr.mxu0 %v11169
    %11250 = vmatpush1.msra.mxu0 %v11168
    %11251 = vmatprep.subr.mxu0 0.0
    %11252 = vmatpush1.msra.mxu0 0.0
    %11253 = vmatprep.subr.mxu0 0.0
    %11254 = vmatpush1.msra.mxu0 0.0
    %11255 = vmatprep.subr.mxu0 0.0
    %11256 = vmatpush1.msra.mxu0 0.0
    %11257 = vmatprep.subr.mxu0 0.0
    %11258 = vmatpush1.msra.mxu0 0.0
    %11259 = vmatprep.subr.mxu0 0.0
    %11260 = vmatpush1.msra.mxu0 0.0
    %11261 = vmatprep.subr.mxu0 0.0
    %11262 = vmatpush1.msra.mxu0 0.0
    %11263 = vmatprep.subr.mxu0 0.0
    %11264 = vmatpush1.msra.mxu0 0.0
    %11265 = vmatprep.subr.mxu0 0.0
    %11266 = vmatpush1.msra.mxu0 0.0
    %11267 = vmatprep.subr.mxu0 0.0
    %11268 = vmatpush1.msra.mxu0 0.0
    %11269 = vmatprep.subr.mxu0 0.0
    %11270 = vmatpush1.msra.mxu0 0.0
    %11271 = vmatprep.subr.mxu0 0.0
    %11272 = vmatpush1.msra.mxu0 0.0
    %11273 = vmatprep.subr.mxu0 0.0
    %11274 = vmatpush1.msra.mxu0 0.0
    %11275 = vmatprep.subr.mxu0 0.0
    %11276 = vmatpush1.msra.mxu0 0.0
    %11277 = vmatprep.subr.mxu0 0.0
    %11278 = vmatpush1.msra.mxu0 0.0
    %11279 = vmatprep.subr.mxu0 0.0
    %11280 = vmatpush1.msra.mxu0 0.0
    %11281 = vmatprep.subr.mxu0 0.0
    %11282 = vmatpush1.msra.mxu0 0.0
    %11283 = vmatprep.subr.mxu0 0.0
    %11284 = vmatpush1.msra.mxu0 0.0
    %11285 = vmatprep.subr.mxu0 0.0
    %11286 = vmatpush1.msra.mxu0 0.0
    %11287 = vmatprep.subr.mxu0 0.0
    %11288 = vmatpush1.msra.mxu0 0.0
    %11289 = vmatprep.subr.mxu0 0.0
    %11290 = vmatpush1.msra.mxu0 0.0
    %11291 = vmatprep.subr.mxu0 0.0
    %11292 = vmatpush1.msra.mxu0 0.0
    %11293 = vmatprep.subr.mxu0 0.0
    %11294 = vmatpush1.msra.mxu0 0.0
    %11295 = vmatprep.subr.mxu0 0.0
    %11296 = vmatpush1.msra.mxu0 0.0
    %11297 = vmatprep.subr.mxu0 0.0
    %11298 = vmatpush1.msra.mxu0 0.0
    %11299 = vmatprep.subr.mxu0 0.0
    %11300 = vmatpush1.msra.mxu0 0.0
    %11301 = vmatprep.subr.mxu0 0.0
    %11302 = vmatpush1.msra.mxu0 0.0
    %11303 = vmatprep.subr.mxu0 0.0
    %11304 = vmatpush1.msra.mxu0 0.0
    %11305 = vmatprep.subr.mxu0 0.0
    %11306 = vmatpush1.msra.mxu0 0.0
    %11307 = vmatprep.subr.mxu0 0.0
    %11308 = vmatpush1.msra.mxu0 0.0
    %11309 = vmatprep.subr.mxu0 0.0
    %11310 = vmatpush1.msra.mxu0 0.0
    %11311 = vmatprep.mubr.f32.mxu0 0.0
    %11312 = vmatmul.mubr.f32.gmra.mrb[0].mxu0 %v11174
    %v11313 = vpop.f32.mrb[0].mxu0
    %v11314 = vadd.f32 0.0, %v11313
    %v11315 = vpop.f32.mrb[0].mxu0
    %v11316 = vadd.f32 0.0, %v11315
    %11317 = vdwg.mxu0
    %11318 = vmatprep.subr.mxu0 %v11164
    %11319 = vmatpush1.msra.mxu0 %v11163
    %11320 = vmatprep.subr.mxu0 %v11171
    %11321 = vmatpush1.msra.mxu0 %v11170
    %11322 = vmatprep.subr.mxu0 0.0
    %11323 = vmatpush1.msra.mxu0 0.0
    %11324 = vmatprep.subr.mxu0 0.0
    %11325 = vmatpush1.msra.mxu0 0.0
    %11326 = vmatprep.subr.mxu0 0.0
    %11327 = vmatpush1.msra.mxu0 0.0
    %11328 = vmatprep.subr.mxu0 0.0
    %11329 = vmatpush1.msra.mxu0 0.0
    %11330 = vmatprep.subr.mxu0 0.0
    %11331 = vmatpush1.msra.mxu0 0.0
    %11332 = vmatprep.subr.mxu0 0.0
    %11333 = vmatpush1.msra.mxu0 0.0
    %11334 = vmatprep.subr.mxu0 0.0
    %11335 = vmatpush1.msra.mxu0 0.0
    %11336 = vmatprep.subr.mxu0 0.0
    %11337 = vmatpush1.msra.mxu0 0.0
    %11338 = vmatprep.subr.mxu0 0.0
    %11339 = vmatpush1.msra.mxu0 0.0
    %11340 = vmatprep.subr.mxu0 0.0
    %11341 = vmatpush1.msra.mxu0 0.0
    %11342 = vmatprep.subr.mxu0 0.0
    %11343 = vmatpush1.msra.mxu0 0.0
    %11344 = vmatprep.subr.mxu0 0.0
    %11345 = vmatpush1.msra.mxu0 0.0
    %11346 = vmatprep.subr.mxu0 0.0
    %11347 = vmatpush1.msra.mxu0 0.0
    %11348 = vmatprep.subr.mxu0 0.0
    %11349 = vmatpush1.msra.mxu0 0.0
    %11350 = vmatprep.subr.mxu0 0.0
    %11351 = vmatpush1.msra.mxu0 0.0
    %11352 = vmatprep.subr.mxu0 0.0
    %11353 = vmatpush1.msra.mxu0 0.0
    %11354 = vmatprep.subr.mxu0 0.0
    %11355 = vmatpush1.msra.mxu0 0.0
    %11356 = vmatprep.subr.mxu0 0.0
    %11357 = vmatpush1.msra.mxu0 0.0
    %11358 = vmatprep.subr.mxu0 0.0
    %11359 = vmatpush1.msra.mxu0 0.0
    %11360 = vmatprep.subr.mxu0 0.0
    %11361 = vmatpush1.msra.mxu0 0.0
    %11362 = vmatprep.subr.mxu0 0.0
    %11363 = vmatpush1.msra.mxu0 0.0
    %11364 = vmatprep.subr.mxu0 0.0
    %11365 = vmatpush1.msra.mxu0 0.0
    %11366 = vmatprep.subr.mxu0 0.0
    %11367 = vmatpush1.msra.mxu0 0.0
    %11368 = vmatprep.subr.mxu0 0.0
    %11369 = vmatpush1.msra.mxu0 0.0
    %11370 = vmatprep.subr.mxu0 0.0
    %11371 = vmatpush1.msra.mxu0 0.0
    %11372 = vmatprep.subr.mxu0 0.0
    %11373 = vmatpush1.msra.mxu0 0.0
    %11374 = vmatprep.subr.mxu0 0.0
    %11375 = vmatpush1.msra.mxu0 0.0
    %11376 = vmatprep.subr.mxu0 0.0
    %11377 = vmatpush1.msra.mxu0 0.0
    %11378 = vmatprep.subr.mxu0 0.0
    %11379 = vmatpush1.msra.mxu0 0.0
    %11380 = vmatprep.subr.mxu0 0.0
    %11381 = vmatpush1.msra.mxu0 0.0
    %11382 = vmatprep.mubr.f32.mxu0 0.0
    %11383 = vmatmul.mubr.f32.gmra.mrb[0].mxu0 %v11174
    %v11384 = vpop.f32.mrb[0].mxu0
    %v11385 = vadd.f32 0.0, %v11384
    %v11386 = vpop.f32.mrb[0].mxu0
    %v11387 = vadd.f32 0.0, %v11386
    %11388 = vdwg.mxu0
    %11389 = vmatprep.subr.mxu0 0.0
    %11390 = vmatpush1.msra.mxu0 %v11165
    %11391 = vmatprep.subr.mxu0 0.0
    %11392 = vmatpush1.msra.mxu0 %v11172
    %11393 = vmatprep.subr.mxu0 0.0
    %11394 = vmatpush1.msra.mxu0 0.0
    %11395 = vmatprep.subr.mxu0 0.0
    %11396 = vmatpush1.msra.mxu0 0.0
    %11397 = vmatprep.subr.mxu0 0.0
    %11398 = vmatpush1.msra.mxu0 0.0
    %11399 = vmatprep.subr.mxu0 0.0
    %11400 = vmatpush1.msra.mxu0 0.0
    %11401 = vmatprep.subr.mxu0 0.0
    %11402 = vmatpush1.msra.mxu0 0.0
    %11403 = vmatprep.subr.mxu0 0.0
    %11404 = vmatpush1.msra.mxu0 0.0
    %11405 = vmatprep.subr.mxu0 0.0
    %11406 = vmatpush1.msra.mxu0 0.0
    %11407 = vmatprep.subr.mxu0 0.0
    %11408 = vmatpush1.msra.mxu0 0.0
    %11409 = vmatprep.subr.mxu0 0.0
    %11410 = vmatpush1.msra.mxu0 0.0
    %11411 = vmatprep.subr.mxu0 0.0
    %11412 = vmatpush1.msra.mxu0 0.0
    %11413 = vmatprep.subr.mxu0 0.0
    %11414 = vmatpush1.msra.mxu0 0.0
    %11415 = vmatprep.subr.mxu0 0.0
    %11416 = vmatpush1.msra.mxu0 0.0
    %11417 = vmatprep.subr.mxu0 0.0
    %11418 = vmatpush1.msra.mxu0 0.0
    %11419 = vmatprep.subr.mxu0 0.0
    %11420 = vmatpush1.msra.mxu0 0.0
    %11421 = vmatprep.subr.mxu0 0.0
    %11422 = vmatpush1.msra.mxu0 0.0
    %11423 = vmatprep.subr.mxu0 0.0
    %11424 = vmatpush1.msra.mxu0 0.0
    %11425 = vmatprep.subr.mxu0 0.0
    %11426 = vmatpush1.msra.mxu0 0.0
    %11427 = vmatprep.subr.mxu0 0.0
    %11428 = vmatpush1.msra.mxu0 0.0
    %11429 = vmatprep.subr.mxu0 0.0
    %11430 = vmatpush1.msra.mxu0 0.0
    %11431 = vmatprep.subr.mxu0 0.0
    %11432 = vmatpush1.msra.mxu0 0.0
    %11433 = vmatprep.subr.mxu0 0.0
    %11434 = vmatpush1.msra.mxu0 0.0
    %11435 = vmatprep.subr.mxu0 0.0
    %11436 = vmatpush1.msra.mxu0 0.0
    %11437 = vmatprep.subr.mxu0 0.0
    %11438 = vmatpush1.msra.mxu0 0.0
    %11439 = vmatprep.subr.mxu0 0.0
    %11440 = vmatpush1.msra.mxu0 0.0
    %11441 = vmatprep.subr.mxu0 0.0
    %11442 = vmatpush1.msra.mxu0 0.0
    %11443 = vmatprep.subr.mxu0 0.0
    %11444 = vmatpush1.msra.mxu0 0.0
    %11445 = vmatprep.subr.mxu0 0.0
    %11446 = vmatpush1.msra.mxu0 0.0
    %11447 = vmatprep.subr.mxu0 0.0
    %11448 = vmatpush1.msra.mxu0 0.0
    %11449 = vmatprep.subr.mxu0 0.0
    %11450 = vmatpush1.msra.mxu0 0.0
    %11451 = vmatprep.subr.mxu0 0.0
    %11452 = vmatpush1.msra.mxu0 0.0
    %11453 = vmatprep.mubr.f32.mxu0 0.0
    %11454 = vmatmul.mubr.f32.gmra.mrb[0].mxu0 %v11174
    %v11455 = vpop.f32.mrb[0].mxu0
    %v11456 = vadd.f32 0.0, %v11455
    %v11457 = vpop.f32.mrb[0].mxu0
    %11458 = vdwg.mxu0
    %v11459 = vlaneseq
    %v11460 = vshrl.u32 %v11459, 7
    %v11461 = vsub.s32 0, %v11460
    %v11462 = vrot.slane %v11243, %v11461
    %v11463 = vlaneseq
    %v11464 = vshrl.u32 %v11463, 7
    %v11465 = vsub.s32 0, %v11464
    %v11466 = vrot.slane %v11245, %v11465
    %v11467 = vlaneseq
    %v11468 = vshrl.u32 %v11467, 7
    %v11469 = vsub.s32 0, %v11468
    %v11470 = vrot.slane %v11314, %v11469
    %v11471 = vlaneseq
    %v11472 = vshrl.u32 %v11471, 7
    %v11473 = vsub.s32 0, %v11472
    %v11474 = vrot.slane %v11316, %v11473
    %v11475 = vlaneseq
    %v11476 = vshrl.u32 %v11475, 7
    %v11477 = vsub.s32 0, %v11476
    %v11478 = vrot.slane %v11385, %v11477
    %v11479 = vlaneseq
    %v11480 = vshrl.u32 %v11479, 7
    %v11481 = vsub.s32 0, %v11480
    %v11482 = vrot.slane %v11387, %v11481
    %v11483 = vlaneseq
    %v11484 = vshrl.u32 %v11483, 7
    %v11485 = vsub.s32 0, %v11484
    %v11486 = vrot.slane %v11456, %v11485
    %v11487 = vsub.f32 %v9866, %v11462
    %v11488 = vsub.f32 %v9868, %v11466
    %v11489 = vsub.f32 %v10153, %v11470
    %v11490 = vsub.f32 %v10155, %v11474
    %v11491 = vsub.f32 %v10440, %v11478
    %v11492 = vsub.f32 %v10442, %v11482
    %v11493 = vsub.f32 %v10721, %v11486
    %v11494 = vmul.f32 %v11487, %v11487
    %v11495 = vmul.f32 %v11488, %v11488
    %v11496 = vmul.f32 %v11489, %v11489
    %v11497 = vmul.f32 %v11490, %v11490
    %v11498 = vmul.f32 %v11491, %v11491
    %v11499 = vmul.f32 %v11492, %v11492
    %v11500 = vmul.f32 %v11493, %v11493
    %v11501 = vsel %vm10726, %v11494, 0.0
    %v11502 = vrot.slane %v11501, 4
    %v11503 = vadd.f32 %v11501, %v11502
    %v11504 = vrot.slane %v11503, 2
    %v11505 = vadd.f32 %v11503, %v11504
    %v11506 = vrot.slane %v11505, 1
    %v11507 = vadd.f32 %v11505, %v11506
    %v11508 = vsel %vm10726, %v11495, 0.0
    %v11509 = vrot.slane %v11508, 4
    %v11510 = vadd.f32 %v11508, %v11509
    %v11511 = vrot.slane %v11510, 2
    %v11512 = vadd.f32 %v11510, %v11511
    %v11513 = vrot.slane %v11512, 1
    %v11514 = vadd.f32 %v11512, %v11513
    %v11515 = vsel %vm10726, %v11496, 0.0
    %v11516 = vrot.slane %v11515, 4
    %v11517 = vadd.f32 %v11515, %v11516
    %v11518 = vrot.slane %v11517, 2
    %v11519 = vadd.f32 %v11517, %v11518
    %v11520 = vrot.slane %v11519, 1
    %v11521 = vadd.f32 %v11519, %v11520
    %v11522 = vsel %vm10726, %v11497, 0.0
    %v11523 = vrot.slane %v11522, 4
    %v11524 = vadd.f32 %v11522, %v11523
    %v11525 = vrot.slane %v11524, 2
    %v11526 = vadd.f32 %v11524, %v11525
    %v11527 = vrot.slane %v11526, 1
    %v11528 = vadd.f32 %v11526, %v11527
    %v11529 = vsel %vm10726, %v11498, 0.0
    %v11530 = vrot.slane %v11529, 4
    %v11531 = vadd.f32 %v11529, %v11530
    %v11532 = vrot.slane %v11531, 2
    %v11533 = vadd.f32 %v11531, %v11532
    %v11534 = vrot.slane %v11533, 1
    %v11535 = vadd.f32 %v11533, %v11534
    %v11536 = vsel %vm10726, %v11499, 0.0
    %v11537 = vrot.slane %v11536, 4
    %v11538 = vadd.f32 %v11536, %v11537
    %v11539 = vrot.slane %v11538, 2
    %v11540 = vadd.f32 %v11538, %v11539
    %v11541 = vrot.slane %v11540, 1
    %v11542 = vadd.f32 %v11540, %v11541
    %v11543 = vsel %vm10769, %v11500, 0.0
    %v11544 = vrot.slane %v11543, 4
    %v11545 = vadd.f32 %v11543, %v11544
    %v11546 = vrot.slane %v11545, 2
    %v11547 = vadd.f32 %v11545, %v11546
    %v11548 = vrot.slane %v11547, 1
    %v11549 = vadd.f32 %v11547, %v11548
    %v11551 = vsel %vm4095, %v11549, 0
    %11553 = vmatprep.subr.mxu0 0.0
    %11554 = vmatpush1.msra.mxu0 %v10777
    %11555 = vmatprep.subr.mxu0 0.0
    %11556 = vmatpush1.msra.mxu0 %v10778
    %11557 = vmatprep.subr.mxu0 0.0
    %11558 = vmatpush1.msra.mxu0 %v10779
    %11559 = vmatprep.subr.mxu0 0.0
    %11560 = vmatpush1.msra.mxu0 %v10780
    %11561 = vmatprep.subr.mxu0 0.0
    %11562 = vmatpush1.msra.mxu0 %v10781
    %11563 = vmatprep.subr.mxu0 0.0
    %11564 = vmatpush1.msra.mxu0 %v10782
    %11565 = vmatprep.subr.mxu0 0.0
    %11566 = vmatpush1.msra.mxu0 %v10783
    %11567 = vmatprep.subr.mxu0 0.0
    %11568 = vmatpush1.msra.mxu0 %v10784
    %11569 = vmatprep.subr.mxu0 0.0
    %11570 = vmatpush1.msra.mxu0 %v10785
    %11571 = vmatprep.subr.mxu0 0.0
    %11572 = vmatpush1.msra.mxu0 %v10786
    %11573 = vmatprep.subr.mxu0 0.0
    %11574 = vmatpush1.msra.mxu0 %v10787
    %11575 = vmatprep.subr.mxu0 0.0
    %11576 = vmatpush1.msra.mxu0 %v10788
    %11577 = vmatprep.subr.mxu0 0.0
    %11578 = vmatpush1.msra.mxu0 %v10789
    %11579 = vmatprep.subr.mxu0 0.0
    %11580 = vmatpush1.msra.mxu0 %v10790
    %11581 = vmatprep.subr.mxu0 0.0
    %11582 = vmatpush1.msra.mxu0 %v10791
    %11583 = vmatprep.subr.mxu0 0.0
    %11584 = vmatpush1.msra.mxu0 %v10792
    %11585 = vmatprep.subr.mxu0 0.0
    %11586 = vmatpush1.msra.mxu0 %v10793
    %11587 = vmatprep.subr.mxu0 0.0
    %11588 = vmatpush1.msra.mxu0 %v10794
    %11589 = vmatprep.subr.mxu0 0.0
    %11590 = vmatpush1.msra.mxu0 %v10795
    %11591 = vmatprep.subr.mxu0 0.0
    %11592 = vmatpush1.msra.mxu0 %v10796
    %11593 = vmatprep.subr.mxu0 0.0
    %11594 = vmatpush1.msra.mxu0 %v10797
    %11595 = vmatprep.subr.mxu0 0.0
    %11596 = vmatpush1.msra.mxu0 %v10798
    %11597 = vmatprep.subr.mxu0 0.0
    %11598 = vmatpush1.msra.mxu0 %v10799
    %11599 = vmatprep.subr.mxu0 0.0
    %11600 = vmatpush1.msra.mxu0 %v10800
    %11601 = vmatprep.subr.mxu0 0.0
    %11602 = vmatpush1.msra.mxu0 %v10801
    %11603 = vmatprep.subr.mxu0 0.0
    %11604 = vmatpush1.msra.mxu0 %v10802
    %11605 = vmatprep.subr.mxu0 0.0
    %11606 = vmatpush1.msra.mxu0 %v10803
    %11607 = vmatprep.subr.mxu0 0.0
    %11608 = vmatpush1.msra.mxu0 %v10804
    %11609 = vmatprep.subr.mxu0 0.0
    %11610 = vmatpush1.msra.mxu0 %v10805
    %11611 = vmatprep.subr.mxu0 0.0
    %11612 = vmatpush1.msra.mxu0 %v10806
    %11613 = vmatprep.subr.mxu0 0.0
    %11614 = vmatpush1.msra.mxu0 %v10807
    %11615 = vmatprep.subr.mxu0 0.0
    %11616 = vmatpush1.msra.mxu0 %v10808
    %11617 = vmatprep.mubr.f32.mxu0 %v11514
    %11618 = vmatmul.mubr.f32.gmra.mrb[0].mxu0 %v11507
    %v11619 = vpop.f32.mrb[0].mxu0
    %v11620 = vadd.f32 0.0, %v11619
    %v11621 = vpop.f32.mrb[0].mxu0
    %11622 = vdwg.mxu0
    %11623 = vmatprep.subr.mxu0 0.0
    %11624 = vmatpush1.msra.mxu0 %v10809
    %11625 = vmatprep.subr.mxu0 0.0
    %11626 = vmatpush1.msra.mxu0 %v10810
    %11627 = vmatprep.subr.mxu0 0.0
    %11628 = vmatpush1.msra.mxu0 %v10811
    %11629 = vmatprep.subr.mxu0 0.0
    %11630 = vmatpush1.msra.mxu0 %v10812
    %11631 = vmatprep.subr.mxu0 0.0
    %11632 = vmatpush1.msra.mxu0 %v10813
    %11633 = vmatprep.subr.mxu0 0.0
    %11634 = vmatpush1.msra.mxu0 %v10814
    %11635 = vmatprep.subr.mxu0 0.0
    %11636 = vmatpush1.msra.mxu0 %v10815
    %11637 = vmatprep.subr.mxu0 0.0
    %11638 = vmatpush1.msra.mxu0 %v10816
    %11639 = vmatprep.subr.mxu0 0.0
    %11640 = vmatpush1.msra.mxu0 %v10817
    %11641 = vmatprep.subr.mxu0 0.0
    %11642 = vmatpush1.msra.mxu0 %v10818
    %11643 = vmatprep.subr.mxu0 0.0
    %11644 = vmatpush1.msra.mxu0 %v10819
    %11645 = vmatprep.subr.mxu0 0.0
    %11646 = vmatpush1.msra.mxu0 %v10820
    %11647 = vmatprep.subr.mxu0 0.0
    %11648 = vmatpush1.msra.mxu0 %v10821
    %11649 = vmatprep.subr.mxu0 0.0
    %11650 = vmatpush1.msra.mxu0 %v10822
    %11651 = vmatprep.subr.mxu0 0.0
    %11652 = vmatpush1.msra.mxu0 %v10823
    %11653 = vmatprep.subr.mxu0 0.0
    %11654 = vmatpush1.msra.mxu0 %v10824
    %11655 = vmatprep.subr.mxu0 0.0
    %11656 = vmatpush1.msra.mxu0 %v10825
    %11657 = vmatprep.subr.mxu0 0.0
    %11658 = vmatpush1.msra.mxu0 %v10826
    %11659 = vmatprep.subr.mxu0 0.0
    %11660 = vmatpush1.msra.mxu0 %v10827
    %11661 = vmatprep.subr.mxu0 0.0
    %11662 = vmatpush1.msra.mxu0 %v10828
    %11663 = vmatprep.subr.mxu0 0.0
    %11664 = vmatpush1.msra.mxu0 %v10829
    %11665 = vmatprep.subr.mxu0 0.0
    %11666 = vmatpush1.msra.mxu0 %v10830
    %11667 = vmatprep.subr.mxu0 0.0
    %11668 = vmatpush1.msra.mxu0 %v10831
    %11669 = vmatprep.subr.mxu0 0.0
    %11670 = vmatpush1.msra.mxu0 %v10832
    %11671 = vmatprep.subr.mxu0 0.0
    %11672 = vmatpush1.msra.mxu0 %v10833
    %11673 = vmatprep.subr.mxu0 0.0
    %11674 = vmatpush1.msra.mxu0 %v10834
    %11675 = vmatprep.subr.mxu0 0.0
    %11676 = vmatpush1.msra.mxu0 %v10835
    %11677 = vmatprep.subr.mxu0 0.0
    %11678 = vmatpush1.msra.mxu0 %v10836
    %11679 = vmatprep.subr.mxu0 0.0
    %11680 = vmatpush1.msra.mxu0 %v10837
    %11681 = vmatprep.subr.mxu0 0.0
    %11682 = vmatpush1.msra.mxu0 %v10838
    %11683 = vmatprep.subr.mxu0 0.0
    %11684 = vmatpush1.msra.mxu0 %v10839
    %11685 = vmatprep.subr.mxu0 0.0
    %11686 = vmatpush1.msra.mxu0 %v10840
    %11687 = vmatprep.mubr.f32.mxu0 %v11528
    %11688 = vmatmul.mubr.f32.gmra.mrb[0].mxu0 %v11521
    %v11689 = vpop.f32.mrb[0].mxu0
    %v11690 = vadd.f32 %v11620, %v11689
    %v11691 = vpop.f32.mrb[0].mxu0
    %11692 = vdwg.mxu0
    %11693 = vmatprep.subr.mxu0 0.0
    %11694 = vmatpush1.msra.mxu0 %v10841
    %11695 = vmatprep.subr.mxu0 0.0
    %11696 = vmatpush1.msra.mxu0 %v10842
    %11697 = vmatprep.subr.mxu0 0.0
    %11698 = vmatpush1.msra.mxu0 %v10843
    %11699 = vmatprep.subr.mxu0 0.0
    %11700 = vmatpush1.msra.mxu0 %v10844
    %11701 = vmatprep.subr.mxu0 0.0
    %11702 = vmatpush1.msra.mxu0 %v10845
    %11703 = vmatprep.subr.mxu0 0.0
    %11704 = vmatpush1.msra.mxu0 %v10846
    %11705 = vmatprep.subr.mxu0 0.0
    %11706 = vmatpush1.msra.mxu0 %v10847
    %11707 = vmatprep.subr.mxu0 0.0
    %11708 = vmatpush1.msra.mxu0 %v10848
    %11709 = vmatprep.subr.mxu0 0.0
    %11710 = vmatpush1.msra.mxu0 %v10849
    %11711 = vmatprep.subr.mxu0 0.0
    %11712 = vmatpush1.msra.mxu0 %v10850
    %11713 = vmatprep.subr.mxu0 0.0
    %11714 = vmatpush1.msra.mxu0 %v10851
    %11715 = vmatprep.subr.mxu0 0.0
    %11716 = vmatpush1.msra.mxu0 %v10852
    %11717 = vmatprep.subr.mxu0 0.0
    %11718 = vmatpush1.msra.mxu0 %v10853
    %11719 = vmatprep.subr.mxu0 0.0
    %11720 = vmatpush1.msra.mxu0 %v10854
    %11721 = vmatprep.subr.mxu0 0.0
    %11722 = vmatpush1.msra.mxu0 %v10855
    %11723 = vmatprep.subr.mxu0 0.0
    %11724 = vmatpush1.msra.mxu0 %v10856
    %11725 = vmatprep.subr.mxu0 0.0
    %11726 = vmatpush1.msra.mxu0 %v10857
    %11727 = vmatprep.subr.mxu0 0.0
    %11728 = vmatpush1.msra.mxu0 %v10858
    %11729 = vmatprep.subr.mxu0 0.0
    %11730 = vmatpush1.msra.mxu0 %v10859
    %11731 = vmatprep.subr.mxu0 0.0
    %11732 = vmatpush1.msra.mxu0 %v10860
    %11733 = vmatprep.subr.mxu0 0.0
    %11734 = vmatpush1.msra.mxu0 %v10861
    %11735 = vmatprep.subr.mxu0 0.0
    %11736 = vmatpush1.msra.mxu0 %v10862
    %11737 = vmatprep.subr.mxu0 0.0
    %11738 = vmatpush1.msra.mxu0 %v10863
    %11739 = vmatprep.subr.mxu0 0.0
    %11740 = vmatpush1.msra.mxu0 %v10864
    %11741 = vmatprep.subr.mxu0 0.0
    %11742 = vmatpush1.msra.mxu0 %v10865
    %11743 = vmatprep.subr.mxu0 0.0
    %11744 = vmatpush1.msra.mxu0 %v10866
    %11745 = vmatprep.subr.mxu0 0.0
    %11746 = vmatpush1.msra.mxu0 %v10867
    %11747 = vmatprep.subr.mxu0 0.0
    %11748 = vmatpush1.msra.mxu0 %v10868
    %11749 = vmatprep.subr.mxu0 0.0
    %11750 = vmatpush1.msra.mxu0 %v10869
    %11751 = vmatprep.subr.mxu0 0.0
    %11752 = vmatpush1.msra.mxu0 %v10870
    %11753 = vmatprep.subr.mxu0 0.0
    %11754 = vmatpush1.msra.mxu0 %v10871
    %11755 = vmatprep.subr.mxu0 0.0
    %11756 = vmatpush1.msra.mxu0 %v10872
    %11757 = vmatprep.mubr.f32.mxu0 %v11542
    %11758 = vmatmul.mubr.f32.gmra.mrb[0].mxu0 %v11535
    %v11759 = vpop.f32.mrb[0].mxu0
    %v11760 = vadd.f32 %v11690, %v11759
    %v11761 = vpop.f32.mrb[0].mxu0
    %11762 = vdwg.mxu0
    %11763 = vmatprep.subr.mxu0 0.0
    %11764 = vmatpush1.msra.mxu0 %v10873
    %11765 = vmatprep.subr.mxu0 0.0
    %11766 = vmatpush1.msra.mxu0 %v10874
    %11767 = vmatprep.subr.mxu0 0.0
    %11768 = vmatpush1.msra.mxu0 0.0
    %11769 = vmatprep.subr.mxu0 0.0
    %11770 = vmatpush1.msra.mxu0 0.0
    %11771 = vmatprep.subr.mxu0 0.0
    %11772 = vmatpush1.msra.mxu0 0.0
    %11773 = vmatprep.subr.mxu0 0.0
    %11774 = vmatpush1.msra.mxu0 0.0
    %11775 = vmatprep.subr.mxu0 0.0
    %11776 = vmatpush1.msra.mxu0 0.0
    %11777 = vmatprep.subr.mxu0 0.0
    %11778 = vmatpush1.msra.mxu0 0.0
    %11779 = vmatprep.subr.mxu0 0.0
    %11780 = vmatpush1.msra.mxu0 0.0
    %11781 = vmatprep.subr.mxu0 0.0
    %11782 = vmatpush1.msra.mxu0 0.0
    %11783 = vmatprep.subr.mxu0 0.0
    %11784 = vmatpush1.msra.mxu0 0.0
    %11785 = vmatprep.subr.mxu0 0.0
    %11786 = vmatpush1.msra.mxu0 0.0
    %11787 = vmatprep.subr.mxu0 0.0
    %11788 = vmatpush1.msra.mxu0 0.0
    %11789 = vmatprep.subr.mxu0 0.0
    %11790 = vmatpush1.msra.mxu0 0.0
    %11791 = vmatprep.subr.mxu0 0.0
    %11792 = vmatpush1.msra.mxu0 0.0
    %11793 = vmatprep.subr.mxu0 0.0
    %11794 = vmatpush1.msra.mxu0 0.0
    %11795 = vmatprep.subr.mxu0 0.0
    %11796 = vmatpush1.msra.mxu0 0.0
    %11797 = vmatprep.subr.mxu0 0.0
    %11798 = vmatpush1.msra.mxu0 0.0
    %11799 = vmatprep.subr.mxu0 0.0
    %11800 = vmatpush1.msra.mxu0 0.0
    %11801 = vmatprep.subr.mxu0 0.0
    %11802 = vmatpush1.msra.mxu0 0.0
    %11803 = vmatprep.subr.mxu0 0.0
    %11804 = vmatpush1.msra.mxu0 0.0
    %11805 = vmatprep.subr.mxu0 0.0
    %11806 = vmatpush1.msra.mxu0 0.0
    %11807 = vmatprep.subr.mxu0 0.0
    %11808 = vmatpush1.msra.mxu0 0.0
    %11809 = vmatprep.subr.mxu0 0.0
    %11810 = vmatpush1.msra.mxu0 0.0
    %11811 = vmatprep.subr.mxu0 0.0
    %11812 = vmatpush1.msra.mxu0 0.0
    %11813 = vmatprep.subr.mxu0 0.0
    %11814 = vmatpush1.msra.mxu0 0.0
    %11815 = vmatprep.subr.mxu0 0.0
    %11816 = vmatpush1.msra.mxu0 0.0
    %11817 = vmatprep.subr.mxu0 0.0
    %11818 = vmatpush1.msra.mxu0 0.0
    %11819 = vmatprep.subr.mxu0 0.0
    %11820 = vmatpush1.msra.mxu0 0.0
    %11821 = vmatprep.subr.mxu0 0.0
    %11822 = vmatpush1.msra.mxu0 0.0
    %11823 = vmatprep.subr.mxu0 0.0
    %11824 = vmatpush1.msra.mxu0 0.0
    %11825 = vmatprep.subr.mxu0 0.0
    %11826 = vmatpush1.msra.mxu0 0.0
    %11827 = vmatprep.mubr.f32.mxu0 0.0
    %11828 = vmatmul.mubr.f32.gmra.mrb[0].mxu0 %v11551
    %v11829 = vpop.f32.mrb[0].mxu0
    %v11830 = vadd.f32 %v11760, %v11829
    %v11831 = vpop.f32.mrb[0].mxu0
    %11832 = vdwg.mxu0
    %v11833 = vmul.f32 %v11830, 0.010204081
    %v11834 = vld [vmem:[%s6] sm:$0x1]
    %v11835 = vadd.f32 %v11833, 1e-05
    %v11836 = vrsqrt.pop %v11835
    %v11837 = vmul.f32 %v11834, %v11836
    %v11839 = vsel %vm4095, %v11837, 0
    %11841 = vmatprep.subr.mxu0 %v11160
    %11842 = vmatpush1.msra.mxu0 %v11159
    %11843 = vmatprep.subr.mxu0 %v11167
    %11844 = vmatpush1.msra.mxu0 %v11166
    %11845 = vmatprep.subr.mxu0 0.0
    %11846 = vmatpush1.msra.mxu0 0.0
    %11847 = vmatprep.subr.mxu0 0.0
    %11848 = vmatpush1.msra.mxu0 0.0
    %11849 = vmatprep.subr.mxu0 0.0
    %11850 = vmatpush1.msra.mxu0 0.0
    %11851 = vmatprep.subr.mxu0 0.0
    %11852 = vmatpush1.msra.mxu0 0.0
    %11853 = vmatprep.subr.mxu0 0.0
    %11854 = vmatpush1.msra.mxu0 0.0
    %11855 = vmatprep.subr.mxu0 0.0
    %11856 = vmatpush1.msra.mxu0 0.0
    %11857 = vmatprep.subr.mxu0 0.0
    %11858 = vmatpush1.msra.mxu0 0.0
    %11859 = vmatprep.subr.mxu0 0.0
    %11860 = vmatpush1.msra.mxu0 0.0
    %11861 = vmatprep.subr.mxu0 0.0
    %11862 = vmatpush1.msra.mxu0 0.0
    %11863 = vmatprep.subr.mxu0 0.0
    %11864 = vmatpush1.msra.mxu0 0.0
    %11865 = vmatprep.subr.mxu0 0.0
    %11866 = vmatpush1.msra.mxu0 0.0
    %11867 = vmatprep.subr.mxu0 0.0
    %11868 = vmatpush1.msra.mxu0 0.0
    %11869 = vmatprep.subr.mxu0 0.0
    %11870 = vmatpush1.msra.mxu0 0.0
    %11871 = vmatprep.subr.mxu0 0.0
    %11872 = vmatpush1.msra.mxu0 0.0
    %11873 = vmatprep.subr.mxu0 0.0
    %11874 = vmatpush1.msra.mxu0 0.0
    %11875 = vmatprep.subr.mxu0 0.0
    %11876 = vmatpush1.msra.mxu0 0.0
    %11877 = vmatprep.subr.mxu0 0.0
    %11878 = vmatpush1.msra.mxu0 0.0
    %11879 = vmatprep.subr.mxu0 0.0
    %11880 = vmatpush1.msra.mxu0 0.0
    %11881 = vmatprep.subr.mxu0 0.0
    %11882 = vmatpush1.msra.mxu0 0.0
    %11883 = vmatprep.subr.mxu0 0.0
    %11884 = vmatpush1.msra.mxu0 0.0
    %11885 = vmatprep.subr.mxu0 0.0
    %11886 = vmatpush1.msra.mxu0 0.0
    %11887 = vmatprep.subr.mxu0 0.0
    %11888 = vmatpush1.msra.mxu0 0.0
    %11889 = vmatprep.subr.mxu0 0.0
    %11890 = vmatpush1.msra.mxu0 0.0
    %11891 = vmatprep.subr.mxu0 0.0
    %11892 = vmatpush1.msra.mxu0 0.0
    %11893 = vmatprep.subr.mxu0 0.0
    %11894 = vmatpush1.msra.mxu0 0.0
    %11895 = vmatprep.subr.mxu0 0.0
    %11896 = vmatpush1.msra.mxu0 0.0
    %11897 = vmatprep.subr.mxu0 0.0
    %11898 = vmatpush1.msra.mxu0 0.0
    %11899 = vmatprep.subr.mxu0 0.0
    %11900 = vmatpush1.msra.mxu0 0.0
    %11901 = vmatprep.subr.mxu0 0.0
    %11902 = vmatpush1.msra.mxu0 0.0
    %11903 = vmatprep.subr.mxu0 0.0
    %11904 = vmatpush1.msra.mxu0 0.0
    %11905 = vmatprep.mubr.f32.mxu0 0.0
    %11906 = vmatmul.mubr.f32.gmra.mrb[0].mxu0 %v11839
    %v11907 = vpop.f32.mrb[0].mxu0
    %v11908 = vadd.f32 0.0, %v11907
    %v11909 = vpop.f32.mrb[0].mxu0
    %v11910 = vadd.f32 0.0, %v11909
    %11911 = vdwg.mxu0
    %11912 = vmatprep.subr.mxu0 %v11162
    %11913 = vmatpush1.msra.mxu0 %v11161
    %11914 = vmatprep.subr.mxu0 %v11169
    %11915 = vmatpush1.msra.mxu0 %v11168
    %11916 = vmatprep.subr.mxu0 0.0
    %11917 = vmatpush1.msra.mxu0 0.0
    %11918 = vmatprep.subr.mxu0 0.0
    %11919 = vmatpush1.msra.mxu0 0.0
    %11920 = vmatprep.subr.mxu0 0.0
    %11921 = vmatpush1.msra.mxu0 0.0
    %11922 = vmatprep.subr.mxu0 0.0
    %11923 = vmatpush1.msra.mxu0 0.0
    %11924 = vmatprep.subr.mxu0 0.0
    %11925 = vmatpush1.msra.mxu0 0.0
    %11926 = vmatprep.subr.mxu0 0.0
    %11927 = vmatpush1.msra.mxu0 0.0
    %11928 = vmatprep.subr.mxu0 0.0
    %11929 = vmatpush1.msra.mxu0 0.0
    %11930 = vmatprep.subr.mxu0 0.0
    %11931 = vmatpush1.msra.mxu0 0.0
    %11932 = vmatprep.subr.mxu0 0.0
    %11933 = vmatpush1.msra.mxu0 0.0
    %11934 = vmatprep.subr.mxu0 0.0
    %11935 = vmatpush1.msra.mxu0 0.0
    %11936 = vmatprep.subr.mxu0 0.0
    %11937 = vmatpush1.msra.mxu0 0.0
    %11938 = vmatprep.subr.mxu0 0.0
    %11939 = vmatpush1.msra.mxu0 0.0
    %11940 = vmatprep.subr.mxu0 0.0
    %11941 = vmatpush1.msra.mxu0 0.0
    %11942 = vmatprep.subr.mxu0 0.0
    %11943 = vmatpush1.msra.mxu0 0.0
    %11944 = vmatprep.subr.mxu0 0.0
    %11945 = vmatpush1.msra.mxu0 0.0
    %11946 = vmatprep.subr.mxu0 0.0
    %11947 = vmatpush1.msra.mxu0 0.0
    %11948 = vmatprep.subr.mxu0 0.0
    %11949 = vmatpush1.msra.mxu0 0.0
    %11950 = vmatprep.subr.mxu0 0.0
    %11951 = vmatpush1.msra.mxu0 0.0
    %11952 = vmatprep.subr.mxu0 0.0
    %11953 = vmatpush1.msra.mxu0 0.0
    %11954 = vmatprep.subr.mxu0 0.0
    %11955 = vmatpush1.msra.mxu0 0.0
    %11956 = vmatprep.subr.mxu0 0.0
    %11957 = vmatpush1.msra.mxu0 0.0
    %11958 = vmatprep.subr.mxu0 0.0
    %11959 = vmatpush1.msra.mxu0 0.0
    %11960 = vmatprep.subr.mxu0 0.0
    %11961 = vmatpush1.msra.mxu0 0.0
    %11962 = vmatprep.subr.mxu0 0.0
    %11963 = vmatpush1.msra.mxu0 0.0
    %11964 = vmatprep.subr.mxu0 0.0
    %11965 = vmatpush1.msra.mxu0 0.0
    %11966 = vmatprep.subr.mxu0 0.0
    %11967 = vmatpush1.msra.mxu0 0.0
    %11968 = vmatprep.subr.mxu0 0.0
    %11969 = vmatpush1.msra.mxu0 0.0
    %11970 = vmatprep.subr.mxu0 0.0
    %11971 = vmatpush1.msra.mxu0 0.0
    %11972 = vmatprep.subr.mxu0 0.0
    %11973 = vmatpush1.msra.mxu0 0.0
    %11974 = vmatprep.subr.mxu0 0.0
    %11975 = vmatpush1.msra.mxu0 0.0
    %11976 = vmatprep.mubr.f32.mxu0 0.0
    %11977 = vmatmul.mubr.f32.gmra.mrb[0].mxu0 %v11839
    %v11978 = vpop.f32.mrb[0].mxu0
    %v11979 = vadd.f32 0.0, %v11978
    %v11980 = vpop.f32.mrb[0].mxu0
    %v11981 = vadd.f32 0.0, %v11980
    %11982 = vdwg.mxu0
    %11983 = vmatprep.subr.mxu0 %v11164
    %11984 = vmatpush1.msra.mxu0 %v11163
    %11985 = vmatprep.subr.mxu0 %v11171
    %11986 = vmatpush1.msra.mxu0 %v11170
    %11987 = vmatprep.subr.mxu0 0.0
    %11988 = vmatpush1.msra.mxu0 0.0
    %11989 = vmatprep.subr.mxu0 0.0
    %11990 = vmatpush1.msra.mxu0 0.0
    %11991 = vmatprep.subr.mxu0 0.0
    %11992 = vmatpush1.msra.mxu0 0.0
    %11993 = vmatprep.subr.mxu0 0.0
    %11994 = vmatpush1.msra.mxu0 0.0
    %11995 = vmatprep.subr.mxu0 0.0
    %11996 = vmatpush1.msra.mxu0 0.0
    %11997 = vmatprep.subr.mxu0 0.0
    %11998 = vmatpush1.msra.mxu0 0.0
    %11999 = vmatprep.subr.mxu0 0.0
    %12000 = vmatpush1.msra.mxu0 0.0
    %12001 = vmatprep.subr.mxu0 0.0
    %12002 = vmatpush1.msra.mxu0 0.0
    %12003 = vmatprep.subr.mxu0 0.0
    %12004 = vmatpush1.msra.mxu0 0.0
    %12005 = vmatprep.subr.mxu0 0.0
    %12006 = vmatpush1.msra.mxu0 0.0
    %12007 = vmatprep.subr.mxu0 0.0
    %12008 = vmatpush1.msra.mxu0 0.0
    %12009 = vmatprep.subr.mxu0 0.0
    %12010 = vmatpush1.msra.mxu0 0.0
    %12011 = vmatprep.subr.mxu0 0.0
    %12012 = vmatpush1.msra.mxu0 0.0
    %12013 = vmatprep.subr.mxu0 0.0
    %12014 = vmatpush1.msra.mxu0 0.0
    %12015 = vmatprep.subr.mxu0 0.0
    %12016 = vmatpush1.msra.mxu0 0.0
    %12017 = vmatprep.subr.mxu0 0.0
    %12018 = vmatpush1.msra.mxu0 0.0
    %12019 = vmatprep.subr.mxu0 0.0
    %12020 = vmatpush1.msra.mxu0 0.0
    %12021 = vmatprep.subr.mxu0 0.0
    %12022 = vmatpush1.msra.mxu0 0.0
    %12023 = vmatprep.subr.mxu0 0.0
    %12024 = vmatpush1.msra.mxu0 0.0
    %12025 = vmatprep.subr.mxu0 0.0
    %12026 = vmatpush1.msra.mxu0 0.0
    %12027 = vmatprep.subr.mxu0 0.0
    %12028 = vmatpush1.msra.mxu0 0.0
    %12029 = vmatprep.subr.mxu0 0.0
    %12030 = vmatpush1.msra.mxu0 0.0
    %12031 = vmatprep.subr.mxu0 0.0
    %12032 = vmatpush1.msra.mxu0 0.0
    %12033 = vmatprep.subr.mxu0 0.0
    %12034 = vmatpush1.msra.mxu0 0.0
    %12035 = vmatprep.subr.mxu0 0.0
    %12036 = vmatpush1.msra.mxu0 0.0
    %12037 = vmatprep.subr.mxu0 0.0
    %12038 = vmatpush1.msra.mxu0 0.0
    %12039 = vmatprep.subr.mxu0 0.0
    %12040 = vmatpush1.msra.mxu0 0.0
    %12041 = vmatprep.subr.mxu0 0.0
    %12042 = vmatpush1.msra.mxu0 0.0
    %12043 = vmatprep.subr.mxu0 0.0
    %12044 = vmatpush1.msra.mxu0 0.0
    %12045 = vmatprep.subr.mxu0 0.0
    %12046 = vmatpush1.msra.mxu0 0.0
    %12047 = vmatprep.mubr.f32.mxu0 0.0
    %12048 = vmatmul.mubr.f32.gmra.mrb[0].mxu0 %v11839
    %v12049 = vpop.f32.mrb[0].mxu0
    %v12050 = vadd.f32 0.0, %v12049
    %v12051 = vpop.f32.mrb[0].mxu0
    %v12052 = vadd.f32 0.0, %v12051
    %12053 = vdwg.mxu0
    %12054 = vmatprep.subr.mxu0 0.0
    %12055 = vmatpush1.msra.mxu0 %v11165
    %12056 = vmatprep.subr.mxu0 0.0
    %12057 = vmatpush1.msra.mxu0 %v11172
    %12058 = vmatprep.subr.mxu0 0.0
    %12059 = vmatpush1.msra.mxu0 0.0
    %12060 = vmatprep.subr.mxu0 0.0
    %12061 = vmatpush1.msra.mxu0 0.0
    %12062 = vmatprep.subr.mxu0 0.0
    %12063 = vmatpush1.msra.mxu0 0.0
    %12064 = vmatprep.subr.mxu0 0.0
    %12065 = vmatpush1.msra.mxu0 0.0
    %12066 = vmatprep.subr.mxu0 0.0
    %12067 = vmatpush1.msra.mxu0 0.0
    %12068 = vmatprep.subr.mxu0 0.0
    %12069 = vmatpush1.msra.mxu0 0.0
    %12070 = vmatprep.subr.mxu0 0.0
    %12071 = vmatpush1.msra.mxu0 0.0
    %12072 = vmatprep.subr.mxu0 0.0
    %12073 = vmatpush1.msra.mxu0 0.0
    %12074 = vmatprep.subr.mxu0 0.0
    %12075 = vmatpush1.msra.mxu0 0.0
    %12076 = vmatprep.subr.mxu0 0.0
    %12077 = vmatpush1.msra.mxu0 0.0
    %12078 = vmatprep.subr.mxu0 0.0
    %12079 = vmatpush1.msra.mxu0 0.0
    %12080 = vmatprep.subr.mxu0 0.0
    %12081 = vmatpush1.msra.mxu0 0.0
    %12082 = vmatprep.subr.mxu0 0.0
    %12083 = vmatpush1.msra.mxu0 0.0
    %12084 = vmatprep.subr.mxu0 0.0
    %12085 = vmatpush1.msra.mxu0 0.0
    %12086 = vmatprep.subr.mxu0 0.0
    %12087 = vmatpush1.msra.mxu0 0.0
    %12088 = vmatprep.subr.mxu0 0.0
    %12089 = vmatpush1.msra.mxu0 0.0
    %12090 = vmatprep.subr.mxu0 0.0
    %12091 = vmatpush1.msra.mxu0 0.0
    %12092 = vmatprep.subr.mxu0 0.0
    %12093 = vmatpush1.msra.mxu0 0.0
    %12094 = vmatprep.subr.mxu0 0.0
    %12095 = vmatpush1.msra.mxu0 0.0
    %12096 = vmatprep.subr.mxu0 0.0
    %12097 = vmatpush1.msra.mxu0 0.0
    %12098 = vmatprep.subr.mxu0 0.0
    %12099 = vmatpush1.msra.mxu0 0.0
    %12100 = vmatprep.subr.mxu0 0.0
    %12101 = vmatpush1.msra.mxu0 0.0
    %12102 = vmatprep.subr.mxu0 0.0
    %12103 = vmatpush1.msra.mxu0 0.0
    %12104 = vmatprep.subr.mxu0 0.0
    %12105 = vmatpush1.msra.mxu0 0.0
    %12106 = vmatprep.subr.mxu0 0.0
    %12107 = vmatpush1.msra.mxu0 0.0
    %12108 = vmatprep.subr.mxu0 0.0
    %12109 = vmatpush1.msra.mxu0 0.0
    %12110 = vmatprep.subr.mxu0 0.0
    %12111 = vmatpush1.msra.mxu0 0.0
    %12112 = vmatprep.subr.mxu0 0.0
    %12113 = vmatpush1.msra.mxu0 0.0
    %12114 = vmatprep.subr.mxu0 0.0
    %12115 = vmatpush1.msra.mxu0 0.0
    %12116 = vmatprep.subr.mxu0 0.0
    %12117 = vmatpush1.msra.mxu0 0.0
    %12118 = vmatprep.mubr.f32.mxu0 0.0
    %12119 = vmatmul.mubr.f32.gmra.mrb[0].mxu0 %v11839
    %v12120 = vpop.f32.mrb[0].mxu0
    %v12121 = vadd.f32 0.0, %v12120
    %v12122 = vpop.f32.mrb[0].mxu0
    %12123 = vdwg.mxu0
    %v12124 = vld [vmem:[%s7] sm:$0x1]
    %v12126 = vsel %vm4095, %v12124, 0
    %12128 = vmatprep.subr.mxu0 %v11160
    %12129 = vmatpush1.msra.mxu0 %v11159
    %12130 = vmatprep.subr.mxu0 %v11167
    %12131 = vmatpush1.msra.mxu0 %v11166
    %12132 = vmatprep.subr.mxu0 0.0
    %12133 = vmatpush1.msra.mxu0 0.0
    %12134 = vmatprep.subr.mxu0 0.0
    %12135 = vmatpush1.msra.mxu0 0.0
    %12136 = vmatprep.subr.mxu0 0.0
    %12137 = vmatpush1.msra.mxu0 0.0
    %12138 = vmatprep.subr.mxu0 0.0
    %12139 = vmatpush1.msra.mxu0 0.0
    %12140 = vmatprep.subr.mxu0 0.0
    %12141 = vmatpush1.msra.mxu0 0.0
    %12142 = vmatprep.subr.mxu0 0.0
    %12143 = vmatpush1.msra.mxu0 0.0
    %12144 = vmatprep.subr.mxu0 0.0
    %12145 = vmatpush1.msra.mxu0 0.0
    %12146 = vmatprep.subr.mxu0 0.0
    %12147 = vmatpush1.msra.mxu0 0.0
    %12148 = vmatprep.subr.mxu0 0.0
    %12149 = vmatpush1.msra.mxu0 0.0
    %12150 = vmatprep.subr.mxu0 0.0
    %12151 = vmatpush1.msra.mxu0 0.0
    %12152 = vmatprep.subr.mxu0 0.0
    %12153 = vmatpush1.msra.mxu0 0.0
    %12154 = vmatprep.subr.mxu0 0.0
    %12155 = vmatpush1.msra.mxu0 0.0
    %12156 = vmatprep.subr.mxu0 0.0
    %12157 = vmatpush1.msra.mxu0 0.0
    %12158 = vmatprep.subr.mxu0 0.0
    %12159 = vmatpush1.msra.mxu0 0.0
    %12160 = vmatprep.subr.mxu0 0.0
    %12161 = vmatpush1.msra.mxu0 0.0
    %12162 = vmatprep.subr.mxu0 0.0
    %12163 = vmatpush1.msra.mxu0 0.0
    %12164 = vmatprep.subr.mxu0 0.0
    %12165 = vmatpush1.msra.mxu0 0.0
    %12166 = vmatprep.subr.mxu0 0.0
    %12167 = vmatpush1.msra.mxu0 0.0
    %12168 = vmatprep.subr.mxu0 0.0
    %12169 = vmatpush1.msra.mxu0 0.0
    %12170 = vmatprep.subr.mxu0 0.0
    %12171 = vmatpush1.msra.mxu0 0.0
    %12172 = vmatprep.subr.mxu0 0.0
    %12173 = vmatpush1.msra.mxu0 0.0
    %12174 = vmatprep.subr.mxu0 0.0
    %12175 = vmatpush1.msra.mxu0 0.0
    %12176 = vmatprep.subr.mxu0 0.0
    %12177 = vmatpush1.msra.mxu0 0.0
    %12178 = vmatprep.subr.mxu0 0.0
    %12179 = vmatpush1.msra.mxu0 0.0
    %12180 = vmatprep.subr.mxu0 0.0
    %12181 = vmatpush1.msra.mxu0 0.0
    %12182 = vmatprep.subr.mxu0 0.0
    %12183 = vmatpush1.msra.mxu0 0.0
    %12184 = vmatprep.subr.mxu0 0.0
    %12185 = vmatpush1.msra.mxu0 0.0
    %12186 = vmatprep.subr.mxu0 0.0
    %12187 = vmatpush1.msra.mxu0 0.0
    %12188 = vmatprep.subr.mxu0 0.0
    %12189 = vmatpush1.msra.mxu0 0.0
    %12190 = vmatprep.subr.mxu0 0.0
    %12191 = vmatpush1.msra.mxu0 0.0
    %12192 = vmatprep.mubr.f32.mxu0 0.0
    %12193 = vmatmul.mubr.f32.gmra.mrb[0].mxu0 %v12126
    %v12194 = vpop.f32.mrb[0].mxu0
    %v12195 = vadd.f32 0.0, %v12194
    %v12196 = vpop.f32.mrb[0].mxu0
    %v12197 = vadd.f32 0.0, %v12196
    %12198 = vdwg.mxu0
    %12199 = vmatprep.subr.mxu0 %v11162
    %12200 = vmatpush1.msra.mxu0 %v11161
    %12201 = vmatprep.subr.mxu0 %v11169
    %12202 = vmatpush1.msra.mxu0 %v11168
    %12203 = vmatprep.subr.mxu0 0.0
    %12204 = vmatpush1.msra.mxu0 0.0
    %12205 = vmatprep.subr.mxu0 0.0
    %12206 = vmatpush1.msra.mxu0 0.0
    %12207 = vmatprep.subr.mxu0 0.0
    %12208 = vmatpush1.msra.mxu0 0.0
    %12209 = vmatprep.subr.mxu0 0.0
    %12210 = vmatpush1.msra.mxu0 0.0
    %12211 = vmatprep.subr.mxu0 0.0
    %12212 = vmatpush1.msra.mxu0 0.0
    %12213 = vmatprep.subr.mxu0 0.0
    %12214 = vmatpush1.msra.mxu0 0.0
    %12215 = vmatprep.subr.mxu0 0.0
    %12216 = vmatpush1.msra.mxu0 0.0
    %12217 = vmatprep.subr.mxu0 0.0
    %12218 = vmatpush1.msra.mxu0 0.0
    %12219 = vmatprep.subr.mxu0 0.0
    %12220 = vmatpush1.msra.mxu0 0.0
    %12221 = vmatprep.subr.mxu0 0.0
    %12222 = vmatpush1.msra.mxu0 0.0
    %12223 = vmatprep.subr.mxu0 0.0
    %12224 = vmatpush1.msra.mxu0 0.0
    %12225 = vmatprep.subr.mxu0 0.0
    %12226 = vmatpush1.msra.mxu0 0.0
    %12227 = vmatprep.subr.mxu0 0.0
    %12228 = vmatpush1.msra.mxu0 0.0
    %12229 = vmatprep.subr.mxu0 0.0
    %12230 = vmatpush1.msra.mxu0 0.0
    %12231 = vmatprep.subr.mxu0 0.0
    %12232 = vmatpush1.msra.mxu0 0.0
    %12233 = vmatprep.subr.mxu0 0.0
    %12234 = vmatpush1.msra.mxu0 0.0
    %12235 = vmatprep.subr.mxu0 0.0
    %12236 = vmatpush1.msra.mxu0 0.0
    %12237 = vmatprep.subr.mxu0 0.0
    %12238 = vmatpush1.msra.mxu0 0.0
    %12239 = vmatprep.subr.mxu0 0.0
    %12240 = vmatpush1.msra.mxu0 0.0
    %12241 = vmatprep.subr.mxu0 0.0
    %12242 = vmatpush1.msra.mxu0 0.0
    %12243 = vmatprep.subr.mxu0 0.0
    %12244 = vmatpush1.msra.mxu0 0.0
    %12245 = vmatprep.subr.mxu0 0.0
    %12246 = vmatpush1.msra.mxu0 0.0
    %12247 = vmatprep.subr.mxu0 0.0
    %12248 = vmatpush1.msra.mxu0 0.0
    %12249 = vmatprep.subr.mxu0 0.0
    %12250 = vmatpush1.msra.mxu0 0.0
    %12251 = vmatprep.subr.mxu0 0.0
    %12252 = vmatpush1.msra.mxu0 0.0
    %12253 = vmatprep.subr.mxu0 0.0
    %12254 = vmatpush1.msra.mxu0 0.0
    %12255 = vmatprep.subr.mxu0 0.0
    %12256 = vmatpush1.msra.mxu0 0.0
    %12257 = vmatprep.subr.mxu0 0.0
    %12258 = vmatpush1.msra.mxu0 0.0
    %12259 = vmatprep.subr.mxu0 0.0
    %12260 = vmatpush1.msra.mxu0 0.0
    %12261 = vmatprep.subr.mxu0 0.0
    %12262 = vmatpush1.msra.mxu0 0.0
    %12263 = vmatprep.mubr.f32.mxu0 0.0
    %12264 = vmatmul.mubr.f32.gmra.mrb[0].mxu0 %v12126
    %v12265 = vpop.f32.mrb[0].mxu0
    %v12266 = vadd.f32 0.0, %v12265
    %v12267 = vpop.f32.mrb[0].mxu0
    %v12268 = vadd.f32 0.0, %v12267
    %12269 = vdwg.mxu0
    %12270 = vmatprep.subr.mxu0 %v11164
    %12271 = vmatpush1.msra.mxu0 %v11163
    %12272 = vmatprep.subr.mxu0 %v11171
    %12273 = vmatpush1.msra.mxu0 %v11170
    %12274 = vmatprep.subr.mxu0 0.0
    %12275 = vmatpush1.msra.mxu0 0.0
    %12276 = vmatprep.subr.mxu0 0.0
    %12277 = vmatpush1.msra.mxu0 0.0
    %12278 = vmatprep.subr.mxu0 0.0
    %12279 = vmatpush1.msra.mxu0 0.0
    %12280 = vmatprep.subr.mxu0 0.0
    %12281 = vmatpush1.msra.mxu0 0.0
    %12282 = vmatprep.subr.mxu0 0.0
    %12283 = vmatpush1.msra.mxu0 0.0
    %12284 = vmatprep.subr.mxu0 0.0
    %12285 = vmatpush1.msra.mxu0 0.0
    %12286 = vmatprep.subr.mxu0 0.0
    %12287 = vmatpush1.msra.mxu0 0.0
    %12288 = vmatprep.subr.mxu0 0.0
    %12289 = vmatpush1.msra.mxu0 0.0
    %12290 = vmatprep.subr.mxu0 0.0
    %12291 = vmatpush1.msra.mxu0 0.0
    %12292 = vmatprep.subr.mxu0 0.0
    %12293 = vmatpush1.msra.mxu0 0.0
    %12294 = vmatprep.subr.mxu0 0.0
    %12295 = vmatpush1.msra.mxu0 0.0
    %12296 = vmatprep.subr.mxu0 0.0
    %12297 = vmatpush1.msra.mxu0 0.0
    %12298 = vmatprep.subr.mxu0 0.0
    %12299 = vmatpush1.msra.mxu0 0.0
    %12300 = vmatprep.subr.mxu0 0.0
    %12301 = vmatpush1.msra.mxu0 0.0
    %12302 = vmatprep.subr.mxu0 0.0
    %12303 = vmatpush1.msra.mxu0 0.0
    %12304 = vmatprep.subr.mxu0 0.0
    %12305 = vmatpush1.msra.mxu0 0.0
    %12306 = vmatprep.subr.mxu0 0.0
    %12307 = vmatpush1.msra.mxu0 0.0
    %12308 = vmatprep.subr.mxu0 0.0
    %12309 = vmatpush1.msra.mxu0 0.0
    %12310 = vmatprep.subr.mxu0 0.0
    %12311 = vmatpush1.msra.mxu0 0.0
    %12312 = vmatprep.subr.mxu0 0.0
    %12313 = vmatpush1.msra.mxu0 0.0
    %12314 = vmatprep.subr.mxu0 0.0
    %12315 = vmatpush1.msra.mxu0 0.0
    %12316 = vmatprep.subr.mxu0 0.0
    %12317 = vmatpush1.msra.mxu0 0.0
    %12318 = vmatprep.subr.mxu0 0.0
    %12319 = vmatpush1.msra.mxu0 0.0
    %12320 = vmatprep.subr.mxu0 0.0
    %12321 = vmatpush1.msra.mxu0 0.0
    %12322 = vmatprep.subr.mxu0 0.0
    %12323 = vmatpush1.msra.mxu0 0.0
    %12324 = vmatprep.subr.mxu0 0.0
    %12325 = vmatpush1.msra.mxu0 0.0
    %12326 = vmatprep.subr.mxu0 0.0
    %12327 = vmatpush1.msra.mxu0 0.0
    %12328 = vmatprep.subr.mxu0 0.0
    %12329 = vmatpush1.msra.mxu0 0.0
    %12330 = vmatprep.subr.mxu0 0.0
    %12331 = vmatpush1.msra.mxu0 0.0
    %12332 = vmatprep.subr.mxu0 0.0
    %12333 = vmatpush1.msra.mxu0 0.0
    %12334 = vmatprep.mubr.f32.mxu0 0.0
    %12335 = vmatmul.mubr.f32.gmra.mrb[0].mxu0 %v12126
    %v12336 = vpop.f32.mrb[0].mxu0
    %v12337 = vadd.f32 0.0, %v12336
    %v12338 = vpop.f32.mrb[0].mxu0
    %v12339 = vadd.f32 0.0, %v12338
    %12340 = vdwg.mxu0
    %12341 = vmatprep.subr.mxu0 0.0
    %12342 = vmatpush1.msra.mxu0 %v11165
    %12343 = vmatprep.subr.mxu0 0.0
    %12344 = vmatpush1.msra.mxu0 %v11172
    %12345 = vmatprep.subr.mxu0 0.0
    %12346 = vmatpush1.msra.mxu0 0.0
    %12347 = vmatprep.subr.mxu0 0.0
    %12348 = vmatpush1.msra.mxu0 0.0
    %12349 = vmatprep.subr.mxu0 0.0
    %12350 = vmatpush1.msra.mxu0 0.0
    %12351 = vmatprep.subr.mxu0 0.0
    %12352 = vmatpush1.msra.mxu0 0.0
    %12353 = vmatprep.subr.mxu0 0.0
    %12354 = vmatpush1.msra.mxu0 0.0
    %12355 = vmatprep.subr.mxu0 0.0
    %12356 = vmatpush1.msra.mxu0 0.0
    %12357 = vmatprep.subr.mxu0 0.0
    %12358 = vmatpush1.msra.mxu0 0.0
    %12359 = vmatprep.subr.mxu0 0.0
    %12360 = vmatpush1.msra.mxu0 0.0
    %12361 = vmatprep.subr.mxu0 0.0
    %12362 = vmatpush1.msra.mxu0 0.0
    %12363 = vmatprep.subr.mxu0 0.0
    %12364 = vmatpush1.msra.mxu0 0.0
    %12365 = vmatprep.subr.mxu0 0.0
    %12366 = vmatpush1.msra.mxu0 0.0
    %12367 = vmatprep.subr.mxu0 0.0
    %12368 = vmatpush1.msra.mxu0 0.0
    %12369 = vmatprep.subr.mxu0 0.0
    %12370 = vmatpush1.msra.mxu0 0.0
    %12371 = vmatprep.subr.mxu0 0.0
    %12372 = vmatpush1.msra.mxu0 0.0
    %12373 = vmatprep.subr.mxu0 0.0
    %12374 = vmatpush1.msra.mxu0 0.0
    %12375 = vmatprep.subr.mxu0 0.0
    %12376 = vmatpush1.msra.mxu0 0.0
    %12377 = vmatprep.subr.mxu0 0.0
    %12378 = vmatpush1.msra.mxu0 0.0
    %12379 = vmatprep.subr.mxu0 0.0
    %12380 = vmatpush1.msra.mxu0 0.0
    %12381 = vmatprep.subr.mxu0 0.0
    %12382 = vmatpush1.msra.mxu0 0.0
    %12383 = vmatprep.subr.mxu0 0.0
    %12384 = vmatpush1.msra.mxu0 0.0
    %12385 = vmatprep.subr.mxu0 0.0
    %12386 = vmatpush1.msra.mxu0 0.0
    %12387 = vmatprep.subr.mxu0 0.0
    %12388 = vmatpush1.msra.mxu0 0.0
    %12389 = vmatprep.subr.mxu0 0.0
    %12390 = vmatpush1.msra.mxu0 0.0
    %12391 = vmatprep.subr.mxu0 0.0
    %12392 = vmatpush1.msra.mxu0 0.0
    %12393 = vmatprep.subr.mxu0 0.0
    %12394 = vmatpush1.msra.mxu0 0.0
    %12395 = vmatprep.subr.mxu0 0.0
    %12396 = vmatpush1.msra.mxu0 0.0
    %12397 = vmatprep.subr.mxu0 0.0
    %12398 = vmatpush1.msra.mxu0 0.0
    %12399 = vmatprep.subr.mxu0 0.0
    %12400 = vmatpush1.msra.mxu0 0.0
    %12401 = vmatprep.subr.mxu0 0.0
    %12402 = vmatpush1.msra.mxu0 0.0
    %12403 = vmatprep.subr.mxu0 0.0
    %12404 = vmatpush1.msra.mxu0 0.0
    %12405 = vmatprep.mubr.f32.mxu0 0.0
    %12406 = vmatmul.mubr.f32.gmra.mrb[0].mxu0 %v12126
    %v12407 = vpop.f32.mrb[0].mxu0
    %v12408 = vadd.f32 0.0, %v12407
    %v12409 = vpop.f32.mrb[0].mxu0
    %12410 = vdwg.mxu0
    %v12411 = vlaneseq
    %v12412 = vshrl.u32 %v12411, 7
    %v12413 = vsub.s32 0, %v12412
    %v12414 = vrot.slane %v11908, %v12413
    %v12415 = vlaneseq
    %v12416 = vshrl.u32 %v12415, 7
    %v12417 = vsub.s32 0, %v12416
    %v12418 = vrot.slane %v11910, %v12417
    %v12419 = vlaneseq
    %v12420 = vshrl.u32 %v12419, 7
    %v12421 = vsub.s32 0, %v12420
    %v12422 = vrot.slane %v11979, %v12421
    %v12423 = vlaneseq
    %v12424 = vshrl.u32 %v12423, 7
    %v12425 = vsub.s32 0, %v12424
    %v12426 = vrot.slane %v11981, %v12425
    %v12427 = vlaneseq
    %v12428 = vshrl.u32 %v12427, 7
    %v12429 = vsub.s32 0, %v12428
    %v12430 = vrot.slane %v12050, %v12429
    %v12431 = vlaneseq
    %v12432 = vshrl.u32 %v12431, 7
    %v12433 = vsub.s32 0, %v12432
    %v12434 = vrot.slane %v12052, %v12433
    %v12435 = vlaneseq
    %v12436 = vshrl.u32 %v12435, 7
    %v12437 = vsub.s32 0, %v12436
    %v12438 = vrot.slane %v12121, %v12437
    %v12439 = vmul.f32 %v11487, %v12414
    %v12440 = vmul.f32 %v11488, %v12418
    %v12441 = vmul.f32 %v11489, %v12422
    %v12442 = vmul.f32 %v11490, %v12426
    %v12443 = vmul.f32 %v11491, %v12430
    %v12444 = vmul.f32 %v11492, %v12434
    %v12445 = vmul.f32 %v11493, %v12438
    %v12446 = vlaneseq
    %v12447 = vshrl.u32 %v12446, 7
    %v12448 = vsub.s32 0, %v12447
    %v12449 = vrot.slane %v12195, %v12448
    %v12450 = vlaneseq
    %v12451 = vshrl.u32 %v12450, 7
    %v12452 = vsub.s32 0, %v12451
    %v12453 = vrot.slane %v12197, %v12452
    %v12454 = vlaneseq
    %v12455 = vshrl.u32 %v12454, 7
    %v12456 = vsub.s32 0, %v12455
    %v12457 = vrot.slane %v12266, %v12456
    %v12458 = vlaneseq
    %v12459 = vshrl.u32 %v12458, 7
    %v12460 = vsub.s32 0, %v12459
    %v12461 = vrot.slane %v12268, %v12460
    %v12462 = vlaneseq
    %v12463 = vshrl.u32 %v12462, 7
    %v12464 = vsub.s32 0, %v12463
    %v12465 = vrot.slane %v12337, %v12464
    %v12466 = vlaneseq
    %v12467 = vshrl.u32 %v12466, 7
    %v12468 = vsub.s32 0, %v12467
    %v12469 = vrot.slane %v12339, %v12468
    %v12470 = vlaneseq
    %v12471 = vshrl.u32 %v12470, 7
    %v12472 = vsub.s32 0, %v12471
    %v12473 = vrot.slane %v12408, %v12472
    %v12474 = vadd.f32 %v12439, %v12449
    %v12475 = vadd.f32 %v12440, %v12453
    %v12476 = vadd.f32 %v12441, %v12457
    %v12477 = vadd.f32 %v12442, %v12461
    %v12478 = vadd.f32 %v12443, %v12465
    %v12479 = vadd.f32 %v12444, %v12469
    %v12480 = vadd.f32 %v12445, %v12473
    %v12481 = vmax.f32 %v12474, 0.0
    %v12482 = vmax.f32 %v12475, 0.0
    %v12483 = vmax.f32 %v12476, 0.0
    %v12484 = vmax.f32 %v12477, 0.0
    %v12485 = vmax.f32 %v12478, 0.0
    %v12486 = vmax.f32 %v12479, 0.0
    %v12487 = vmax.f32 %v12480, 0.0
    %v12488 = vpack.c.bf16 %v12481, %v12481
    %v12489 = vpack.c.bf16 %v12482, %v12482
    %v12490 = vpack.c.bf16 %v12483, %v12483
    %v12491 = vpack.c.bf16 %v12484, %v12484
    %v12492 = vpack.c.bf16 %v12485, %v12485
    %v12493 = vpack.c.bf16 %v12486, %v12486
    %v12494 = vpack.c.bf16 %v12487, %v12487
    %v12495 = vld [vmem:[%s8] sm:$0xff]
    %v12496 = vld [vmem:[%s8 + $0x8] sm:$0xf]
    %v12497 = vld [vmem:[%s8 + $0xc] sm:$0xff]
    %v12498 = vld [vmem:[%s8 + $0x14] sm:$0xf]
    %v12499 = vld [vmem:[%s8 + $0x18] sm:$0xff]
    %v12500 = vld [vmem:[%s8 + $0x20] sm:$0xf]
    %v12501 = vld [vmem:[%s8 + $0x24] sm:$0xff]
    %v12502 = vld [vmem:[%s8 + $0x2c] sm:$0xf]
    %v12503 = vld [vmem:[%s8 + $0x30] sm:$0xff]
    %v12504 = vld [vmem:[%s8 + $0x38] sm:$0xf]
    %v12505 = vld [vmem:[%s8 + $0x3c] sm:$0xff]
    %v12506 = vld [vmem:[%s8 + $0x44] sm:$0xf]
    %v12507 = vld [vmem:[%s8 + $0x48] sm:$0xff]
    %v12508 = vld [vmem:[%s8 + $0x50] sm:$0xf]
    %v12509 = vld [vmem:[%s8 + $0x54] sm:$0xff]
    %v12510 = vld [vmem:[%s8 + $0x5c] sm:$0xf]
    %v12511 = vld [vmem:[%s8 + $0x60] sm:$0xff]
    %v12512 = vld [vmem:[%s8 + $0x68] sm:$0xf]
    %v12513 = vld [vmem:[%s8 + $0x6c] sm:$0xff]
    %v12514 = vld [vmem:[%s8 + $0x74] sm:$0xf]
    %v12515 = vld [vmem:[%s8 + $0x78] sm:$0xff]
    %v12516 = vld [vmem:[%s8 + $0x80] sm:$0xf]
    %v12517 = vld [vmem:[%s8 + $0x84] sm:$0xff]
    %v12518 = vld [vmem:[%s8 + $0x8c] sm:$0xf]
    %v12519 = vld [vmem:[%s8 + $0x90] sm:$0xff]
    %v12520 = vld [vmem:[%s8 + $0x98] sm:$0xf]
    %v12521 = vld [vmem:[%s8 + $0x9c] sm:$0xff]
    %v12522 = vld [vmem:[%s8 + $0xa4] sm:$0xf]
    %v12523 = vld [vmem:[%s8 + $0xa8] sm:$0xff]
    %v12524 = vld [vmem:[%s8 + $0xb0] sm:$0xf]
    %v12525 = vld [vmem:[%s8 + $0xb4] sm:$0xff]
    %v12526 = vld [vmem:[%s8 + $0xbc] sm:$0xf]
    %v12527 = vld [vmem:[%s8 + $0xc0] sm:$0xff]
    %v12528 = vld [vmem:[%s8 + $0xc8] sm:$0xf]
    %v12529 = vld [vmem:[%s8 + $0xcc] sm:$0xff]
    %v12530 = vld [vmem:[%s8 + $0xd4] sm:$0xf]
    %v12531 = vld [vmem:[%s8 + $0xd8] sm:$0xff]
    %v12532 = vld [vmem:[%s8 + $0xe0] sm:$0xf]
    %v12533 = vld [vmem:[%s8 + $0xe4] sm:$0xff]
    %v12534 = vld [vmem:[%s8 + $0xec] sm:$0xf]
    %v12535 = vld [vmem:[%s8 + $0xf0] sm:$0xff]
    %v12536 = vld [vmem:[%s8 + $0xf8] sm:$0xf]
    %v12537 = vld [vmem:[%s8 + $0xfc] sm:$0xff]
    %v12538 = vld [vmem:[%s8 + $0x104] sm:$0xf]
    %v12539 = vld [vmem:[%s8 + $0x108] sm:$0xff]
    %v12540 = vld [vmem:[%s8 + $0x110] sm:$0xf]
    %v12541 = vld [vmem:[%s8 + $0x114] sm:$0xff]
    %v12542 = vld [vmem:[%s8 + $0x11c] sm:$0xf]
    %v12543 = vld [vmem:[%s8 + $0x120] sm:$0xff]
    %v12544 = vld [vmem:[%s8 + $0x128] sm:$0xf]
    %v12545 = vld [vmem:[%s8 + $0x12c] sm:$0xff]
    %v12546 = vld [vmem:[%s8 + $0x134] sm:$0xf]
    %v12547 = vld [vmem:[%s8 + $0x138] sm:$0xff]
    %v12548 = vld [vmem:[%s8 + $0x140] sm:$0xf]
    %v12549 = vld [vmem:[%s8 + $0x144] sm:$0xff]
    %v12550 = vld [vmem:[%s8 + $0x14c] sm:$0xf]
    %v12551 = vld [vmem:[%s8 + $0x150] sm:$0xff]
    %v12552 = vld [vmem:[%s8 + $0x158] sm:$0xf]
    %v12553 = vld [vmem:[%s8 + $0x15c] sm:$0xff]
    %v12554 = vld [vmem:[%s8 + $0x164] sm:$0xf]
    %v12555 = vld [vmem:[%s8 + $0x168] sm:$0xff]
    %v12556 = vld [vmem:[%s8 + $0x170] sm:$0xf]
    %v12557 = vld [vmem:[%s8 + $0x174] sm:$0xff]
    %v12558 = vld [vmem:[%s8 + $0x17c] sm:$0xf]
    %v12559 = vld [vmem:[%s8 + $0x180] sm:$0xff]
    %v12560 = vld [vmem:[%s8 + $0x188] sm:$0xf]
    %v12561 = vld [vmem:[%s8 + $0x18c] sm:$0xff]
    %v12562 = vld [vmem:[%s8 + $0x194] sm:$0xf]
    %v12563 = vld [vmem:[%s8 + $0x198] sm:$0xff]
    %v12564 = vld [vmem:[%s8 + $0x1a0] sm:$0xf]
    %v12565 = vld [vmem:[%s8 + $0x1a4] sm:$0xff]
    %v12566 = vld [vmem:[%s8 + $0x1ac] sm:$0xf]
    %v12567 = vld [vmem:[%s8 + $0x1b0] sm:$0xff]
    %v12568 = vld [vmem:[%s8 + $0x1b8] sm:$0xf]
    %v12569 = vld [vmem:[%s8 + $0x1bc] sm:$0xff]
    %v12570 = vld [vmem:[%s8 + $0x1c4] sm:$0xf]
    %v12571 = vld [vmem:[%s8 + $0x1c8] sm:$0xff]
    %v12572 = vld [vmem:[%s8 + $0x1d0] sm:$0xf]
    %v12573 = vld [vmem:[%s8 + $0x1d4] sm:$0xff]
    %v12574 = vld [vmem:[%s8 + $0x1dc] sm:$0xf]
    %v12575 = vld [vmem:[%s8 + $0x1e0] sm:$0xff]
    %v12576 = vld [vmem:[%s8 + $0x1e8] sm:$0xf]
    %v12577 = vld [vmem:[%s8 + $0x1ec] sm:$0xff]
    %v12578 = vld [vmem:[%s8 + $0x1f4] sm:$0xf]
    %v12579 = vld [vmem:[%s8 + $0x1f8] sm:$0xff]
    %v12580 = vld [vmem:[%s8 + $0x200] sm:$0xf]
    %v12581 = vld [vmem:[%s8 + $0x204] sm:$0xff]
    %v12582 = vld [vmem:[%s8 + $0x20c] sm:$0xf]
    %v12583 = vld [vmem:[%s8 + $0x210] sm:$0xff]
    %v12584 = vld [vmem:[%s8 + $0x218] sm:$0xf]
    %v12585 = vld [vmem:[%s8 + $0x21c] sm:$0xff]
    %v12586 = vld [vmem:[%s8 + $0x224] sm:$0xf]
    %v12587 = vld [vmem:[%s8 + $0x228] sm:$0xff]
    %v12588 = vld [vmem:[%s8 + $0x230] sm:$0xf]
    %v12589 = vld [vmem:[%s8 + $0x234] sm:$0xff]
    %v12590 = vld [vmem:[%s8 + $0x23c] sm:$0xf]
    %v12591 = vld [vmem:[%s8 + $0x240] sm:$0xff]
    %v12592 = vld [vmem:[%s8 + $0x248] sm:$0xf]
    %v12593 = vld [vmem:[%s8 + $0x24c] sm:$0xff]
    %v12594 = vld [vmem:[%s8 + $0x254] sm:$0xf]
    %v12595 = vld [vmem:[%s8 + $0x258] sm:$0xff]
    %v12596 = vld [vmem:[%s8 + $0x260] sm:$0xf]
    %v12597 = vld [vmem:[%s8 + $0x264] sm:$0xff]
    %v12598 = vld [vmem:[%s8 + $0x26c] sm:$0xf]
    %v12599 = vld [vmem:[%s8 + $0x270] sm:$0xff]
    %v12600 = vld [vmem:[%s8 + $0x278] sm:$0xf]
    %v12601 = vld [vmem:[%s8 + $0x27c] sm:$0xff]
    %v12602 = vld [vmem:[%s8 + $0x284] sm:$0xf]
    %v12603 = vld [vmem:[%s8 + $0x288] sm:$0xff]
    %v12604 = vld [vmem:[%s8 + $0x290] sm:$0xf]
    %v12605 = vld [vmem:[%s8 + $0x294] sm:$0xff]
    %v12606 = vld [vmem:[%s8 + $0x29c] sm:$0xf]
    %v12607 = vld [vmem:[%s8 + $0x2a0] sm:$0xff]
    %v12608 = vld [vmem:[%s8 + $0x2a8] sm:$0xf]
    %v12609 = vld [vmem:[%s8 + $0x2ac] sm:$0xff]
    %v12610 = vld [vmem:[%s8 + $0x2b4] sm:$0xf]
    %v12611 = vld [vmem:[%s8 + $0x2b8] sm:$0xff]
    %v12612 = vld [vmem:[%s8 + $0x2c0] sm:$0xf]
    %v12613 = vld [vmem:[%s8 + $0x2c4] sm:$0xff]
    %v12614 = vld [vmem:[%s8 + $0x2cc] sm:$0xf]
    %v12615 = vld [vmem:[%s8 + $0x2d0] sm:$0xff]
    %v12616 = vld [vmem:[%s8 + $0x2d8] sm:$0xf]
    %v12617 = vld [vmem:[%s8 + $0x2dc] sm:$0xff]
    %v12618 = vld [vmem:[%s8 + $0x2e4] sm:$0xf]
    %v12619 = vld [vmem:[%s8 + $0x2e8] sm:$0xff]
    %v12620 = vld [vmem:[%s8 + $0x2f0] sm:$0xf]
    %v12621 = vld [vmem:[%s8 + $0x2f4] sm:$0xff]
    %v12622 = vld [vmem:[%s8 + $0x2fc] sm:$0xf]
    %v12623 = vld [vmem:[%s8 + $0x300] sm:$0xff]
    %v12624 = vld [vmem:[%s8 + $0x308] sm:$0xf]
    %v12625 = vld [vmem:[%s8 + $0x30c] sm:$0xff]
    %v12626 = vld [vmem:[%s8 + $0x314] sm:$0xf]
    %v12627 = vld [vmem:[%s8 + $0x318] sm:$0xff]
    %v12628 = vld [vmem:[%s8 + $0x320] sm:$0xf]
    %v12629 = vld [vmem:[%s8 + $0x324] sm:$0xff]
    %v12630 = vld [vmem:[%s8 + $0x32c] sm:$0xf]
    %v12631 = vld [vmem:[%s8 + $0x330] sm:$0xff]
    %v12632 = vld [vmem:[%s8 + $0x338] sm:$0xf]
    %v12633 = vld [vmem:[%s8 + $0x33c] sm:$0xff]
    %v12634 = vld [vmem:[%s8 + $0x344] sm:$0xf]
    %v12635 = vld [vmem:[%s8 + $0x348] sm:$0xff]
    %v12636 = vld [vmem:[%s8 + $0x350] sm:$0xf]
    %v12637 = vld [vmem:[%s8 + $0x354] sm:$0xff]
    %v12638 = vld [vmem:[%s8 + $0x35c] sm:$0xf]
    %v12639 = vld [vmem:[%s8 + $0x360] sm:$0xff]
    %v12640 = vld [vmem:[%s8 + $0x368] sm:$0xf]
    %v12641 = vld [vmem:[%s8 + $0x36c] sm:$0xff]
    %v12642 = vld [vmem:[%s8 + $0x374] sm:$0xf]
    %v12643 = vld [vmem:[%s8 + $0x378] sm:$0xff]
    %v12644 = vld [vmem:[%s8 + $0x380] sm:$0xf]
    %v12645 = vld [vmem:[%s8 + $0x384] sm:$0xff]
    %v12646 = vld [vmem:[%s8 + $0x38c] sm:$0xf]
    %v12647 = vld [vmem:[%s8 + $0x390] sm:$0xff]
    %v12648 = vld [vmem:[%s8 + $0x398] sm:$0xf]
    %v12649 = vld [vmem:[%s8 + $0x39c] sm:$0xff]
    %v12650 = vld [vmem:[%s8 + $0x3a4] sm:$0xf]
    %v12651 = vld [vmem:[%s8 + $0x3a8] sm:$0xff]
    %v12652 = vld [vmem:[%s8 + $0x3b0] sm:$0xf]
    %v12653 = vld [vmem:[%s8 + $0x3b4] sm:$0xff]
    %v12654 = vld [vmem:[%s8 + $0x3bc] sm:$0xf]
    %v12655 = vld [vmem:[%s8 + $0x3c0] sm:$0xff]
    %v12656 = vld [vmem:[%s8 + $0x3c8] sm:$0xf]
    %v12657 = vld [vmem:[%s8 + $0x3cc] sm:$0xff]
    %v12658 = vld [vmem:[%s8 + $0x3d4] sm:$0xf]
    %v12659 = vld [vmem:[%s8 + $0x3d8] sm:$0xff]
    %v12660 = vld [vmem:[%s8 + $0x3e0] sm:$0xf]
    %v12661 = vld [vmem:[%s8 + $0x3e4] sm:$0xff]
    %v12662 = vld [vmem:[%s8 + $0x3ec] sm:$0xf]
    %v12663 = vld [vmem:[%s8 + $0x3f0] sm:$0xff]
    %v12664 = vld [vmem:[%s8 + $0x3f8] sm:$0xf]
    %v12665 = vld [vmem:[%s8 + $0x3fc] sm:$0xff]
    %v12666 = vld [vmem:[%s8 + $0x404] sm:$0xf]
    %v12667 = vld [vmem:[%s8 + $0x408] sm:$0xff]
    %v12668 = vld [vmem:[%s8 + $0x410] sm:$0xf]
    %v12669 = vld [vmem:[%s8 + $0x414] sm:$0xff]
    %v12670 = vld [vmem:[%s8 + $0x41c] sm:$0xf]
    %v12671 = vld [vmem:[%s8 + $0x420] sm:$0xff]
    %v12672 = vld [vmem:[%s8 + $0x428] sm:$0xf]
    %v12673 = vld [vmem:[%s8 + $0x42c] sm:$0xff]
    %v12674 = vld [vmem:[%s8 + $0x434] sm:$0xf]
    %v12675 = vld [vmem:[%s8 + $0x438] sm:$0xff]
    %v12676 = vld [vmem:[%s8 + $0x440] sm:$0xf]
    %v12677 = vld [vmem:[%s8 + $0x444] sm:$0xff]
    %v12678 = vld [vmem:[%s8 + $0x44c] sm:$0xf]
    %v12679 = vld [vmem:[%s8 + $0x450] sm:$0xff]
    %v12680 = vld [vmem:[%s8 + $0x458] sm:$0xf]
    %v12681 = vld [vmem:[%s8 + $0x45c] sm:$0xff]
    %v12682 = vld [vmem:[%s8 + $0x464] sm:$0xf]
    %v12683 = vld [vmem:[%s8 + $0x468] sm:$0xff]
    %v12684 = vld [vmem:[%s8 + $0x470] sm:$0xf]
    %v12685 = vld [vmem:[%s8 + $0x474] sm:$0xff]
    %v12686 = vld [vmem:[%s8 + $0x47c] sm:$0xf]
    %v12687 = vld [vmem:[%s8 + $0x480] sm:$0xff]
    %v12688 = vld [vmem:[%s8 + $0x488] sm:$0xf]
    %v12689 = vld [vmem:[%s8 + $0x48c] sm:$0xff]
    %v12690 = vld [vmem:[%s8 + $0x494] sm:$0xf]
    %v12691 = vld [vmem:[%s9] sm:$0x7]
    %v12693 = vlaneseq
    %v12694 = vshrl.u32 %v12693, 7
    %v12695 = vsub.s32 0, %v12694
    %v12696 = vrot.slane %v12691, %v12695
    %v12697 = vlaneseq
    %v12698 = vshrl.u32 %v12697, 7
    %v12699 = vsub.s32 1, %v12698
    %v12700 = vrot.slane %v12691, %v12699
    %v12701 = vlaneseq
    %v12702 = vshrl.u32 %v12701, 7
    %v12703 = vsub.s32 2, %v12702
    %v12704 = vrot.slane %v12691, %v12703
    %v12904 = vunpack.c.l.b16 %v12495
    %v12905 = vunpack.c.h.b16 %v12495
    %v12906 = vunpack.c.l.b16 %v12496
    %v12907 = vunpack.c.l.b16 %v12497
    %v12908 = vunpack.c.h.b16 %v12497
    %v12909 = vunpack.c.l.b16 %v12498
    %v12910 = vunpack.c.l.b16 %v12499
    %v12911 = vunpack.c.h.b16 %v12499
    %v12912 = vunpack.c.l.b16 %v12500
    %v12913 = vunpack.c.l.b16 %v12501
    %v12914 = vunpack.c.h.b16 %v12501
    %v12915 = vunpack.c.l.b16 %v12502
    %v12916 = vunpack.c.l.b16 %v12503
    %v12917 = vunpack.c.h.b16 %v12503
    %v12918 = vunpack.c.l.b16 %v12504
    %v12919 = vunpack.c.l.b16 %v12505
    %v12920 = vunpack.c.h.b16 %v12505
    %v12921 = vunpack.c.l.b16 %v12506
    %v12922 = vunpack.c.l.b16 %v12507
    %v12923 = vunpack.c.h.b16 %v12507
    %v12924 = vunpack.c.l.b16 %v12508
    %v12925 = vunpack.c.l.b16 %v12509
    %v12926 = vunpack.c.h.b16 %v12509
    %v12927 = vunpack.c.l.b16 %v12510
    %v12928 = vunpack.c.l.b16 %v12511
    %v12929 = vunpack.c.h.b16 %v12511
    %v12930 = vunpack.c.l.b16 %v12512
    %v12931 = vunpack.c.l.b16 %v12513
    %v12932 = vunpack.c.h.b16 %v12513
    %v12933 = vunpack.c.l.b16 %v12514
    %v12934 = vunpack.c.l.b16 %v12515
    %v12935 = vunpack.c.h.b16 %v12515
    %v12936 = vunpack.c.l.b16 %v12516
    %v12937 = vunpack.c.l.b16 %v12517
    %v12938 = vunpack.c.h.b16 %v12517
    %v12939 = vunpack.c.l.b16 %v12518
    %v12940 = vunpack.c.l.b16 %v12519
    %v12941 = vunpack.c.h.b16 %v12519
    %v12942 = vunpack.c.l.b16 %v12520
    %v12943 = vunpack.c.l.b16 %v12521
    %v12944 = vunpack.c.h.b16 %v12521
    %v12945 = vunpack.c.l.b16 %v12522
    %v12946 = vunpack.c.l.b16 %v12523
    %v12947 = vunpack.c.h.b16 %v12523
    %v12948 = vunpack.c.l.b16 %v12524
    %v12949 = vunpack.c.l.b16 %v12525
    %v12950 = vunpack.c.h.b16 %v12525
    %v12951 = vunpack.c.l.b16 %v12526
    %v12952 = vunpack.c.l.b16 %v12527
    %v12953 = vunpack.c.h.b16 %v12527
    %v12954 = vunpack.c.l.b16 %v12528
    %v12955 = vunpack.c.l.b16 %v12529
    %v12956 = vunpack.c.h.b16 %v12529
    %v12957 = vunpack.c.l.b16 %v12530
    %v12958 = vunpack.c.l.b16 %v12531
    %v12959 = vunpack.c.h.b16 %v12531
    %v12960 = vunpack.c.l.b16 %v12532
    %v12961 = vunpack.c.l.b16 %v12533
    %v12962 = vunpack.c.h.b16 %v12533
    %v12963 = vunpack.c.l.b16 %v12534
    %v12964 = vunpack.c.l.b16 %v12535
    %v12965 = vunpack.c.h.b16 %v12535
    %v12966 = vunpack.c.l.b16 %v12536
    %v12967 = vunpack.c.l.b16 %v12537
    %v12968 = vunpack.c.h.b16 %v12537
    %v12969 = vunpack.c.l.b16 %v12538
    %v12970 = vunpack.c.l.b16 %v12539
    %v12971 = vunpack.c.h.b16 %v12539
    %v12972 = vunpack.c.l.b16 %v12540
    %v12973 = vunpack.c.l.b16 %v12541
    %v12974 = vunpack.c.h.b16 %v12541
    %v12975 = vunpack.c.l.b16 %v12542
    %v12976 = vunpack.c.l.b16 %v12543
    %v12977 = vunpack.c.h.b16 %v12543
    %v12978 = vunpack.c.l.b16 %v12544
    %v12979 = vunpack.c.l.b16 %v12545
    %v12980 = vunpack.c.h.b16 %v12545
    %v12981 = vunpack.c.l.b16 %v12546
    %v12982 = vunpack.c.l.b16 %v12547
    %v12983 = vunpack.c.h.b16 %v12547
    %v12984 = vunpack.c.l.b16 %v12548
    %v12985 = vunpack.c.l.b16 %v12549
    %v12986 = vunpack.c.h.b16 %v12549
    %v12987 = vunpack.c.l.b16 %v12550
    %v12988 = vunpack.c.l.b16 %v12551
    %v12989 = vunpack.c.h.b16 %v12551
    %v12990 = vunpack.c.l.b16 %v12552
    %v12991 = vunpack.c.l.b16 %v12553
    %v12992 = vunpack.c.h.b16 %v12553
    %v12993 = vunpack.c.l.b16 %v12554
    %v12994 = vunpack.c.l.b16 %v12555
    %v12995 = vunpack.c.h.b16 %v12555
    %v12996 = vunpack.c.l.b16 %v12556
    %v12997 = vunpack.c.l.b16 %v12557
    %v12998 = vunpack.c.h.b16 %v12557
    %v12999 = vunpack.c.l.b16 %v12558
    %v13000 = vunpack.c.l.b16 %v12559
    %v13001 = vunpack.c.h.b16 %v12559
    %v13002 = vunpack.c.l.b16 %v12560
    %v13003 = vunpack.c.l.b16 %v12561
    %v13004 = vunpack.c.h.b16 %v12561
    %v13005 = vunpack.c.l.b16 %v12562
    %v13006 = vunpack.c.l.b16 %v12563
    %v13007 = vunpack.c.h.b16 %v12563
    %v13008 = vunpack.c.l.b16 %v12564
    %v13009 = vunpack.c.l.b16 %v12565
    %v13010 = vunpack.c.h.b16 %v12565
    %v13011 = vunpack.c.l.b16 %v12566
    %v13012 = vunpack.c.l.b16 %v12567
    %v13013 = vunpack.c.h.b16 %v12567
    %v13014 = vunpack.c.l.b16 %v12568
    %v13015 = vunpack.c.l.b16 %v12569
    %v13016 = vunpack.c.h.b16 %v12569
    %v13017 = vunpack.c.l.b16 %v12570
    %v13018 = vunpack.c.l.b16 %v12571
    %v13019 = vunpack.c.h.b16 %v12571
    %v13020 = vunpack.c.l.b16 %v12572
    %v13021 = vunpack.c.l.b16 %v12573
    %v13022 = vunpack.c.h.b16 %v12573
    %v13023 = vunpack.c.l.b16 %v12574
    %v13024 = vunpack.c.l.b16 %v12575
    %v13025 = vunpack.c.h.b16 %v12575
    %v13026 = vunpack.c.l.b16 %v12576
    %v13027 = vunpack.c.l.b16 %v12577
    %v13028 = vunpack.c.h.b16 %v12577
    %v13029 = vunpack.c.l.b16 %v12578
    %v13030 = vunpack.c.l.b16 %v12579
    %v13031 = vunpack.c.h.b16 %v12579
    %v13032 = vunpack.c.l.b16 %v12580
    %v13033 = vunpack.c.l.b16 %v12581
    %v13034 = vunpack.c.h.b16 %v12581
    %v13035 = vunpack.c.l.b16 %v12582
    %v13036 = vunpack.c.l.b16 %v12583
    %v13037 = vunpack.c.h.b16 %v12583
    %v13038 = vunpack.c.l.b16 %v12584
    %v13039 = vunpack.c.l.b16 %v12585
    %v13040 = vunpack.c.h.b16 %v12585
    %v13041 = vunpack.c.l.b16 %v12586
    %v13042 = vunpack.c.l.b16 %v12587
    %v13043 = vunpack.c.h.b16 %v12587
    %v13044 = vunpack.c.l.b16 %v12588
    %v13045 = vunpack.c.l.b16 %v12589
    %v13046 = vunpack.c.h.b16 %v12589
    %v13047 = vunpack.c.l.b16 %v12590
    %v13048 = vunpack.c.l.b16 %v12591
    %v13049 = vunpack.c.h.b16 %v12591
    %v13050 = vunpack.c.l.b16 %v12592
    %v13051 = vunpack.c.l.b16 %v12593
    %v13052 = vunpack.c.h.b16 %v12593
    %v13053 = vunpack.c.l.b16 %v12594
    %v13054 = vunpack.c.l.b16 %v12595
    %v13055 = vunpack.c.h.b16 %v12595
    %v13056 = vunpack.c.l.b16 %v12596
    %v13057 = vunpack.c.l.b16 %v12597
    %v13058 = vunpack.c.h.b16 %v12597
    %v13059 = vunpack.c.l.b16 %v12598
    %v13060 = vunpack.c.l.b16 %v12599
    %v13061 = vunpack.c.h.b16 %v12599
    %v13062 = vunpack.c.l.b16 %v12600
    %v13063 = vunpack.c.l.b16 %v12601
    %v13064 = vunpack.c.h.b16 %v12601
    %v13065 = vunpack.c.l.b16 %v12602
    %v13066 = vunpack.c.l.b16 %v12603
    %v13067 = vunpack.c.h.b16 %v12603
    %v13068 = vunpack.c.l.b16 %v12604
    %v13069 = vunpack.c.l.b16 %v12605
    %v13070 = vunpack.c.h.b16 %v12605
    %v13071 = vunpack.c.l.b16 %v12606
    %v13072 = vunpack.c.l.b16 %v12607
    %v13073 = vunpack.c.h.b16 %v12607
    %v13074 = vunpack.c.l.b16 %v12608
    %v13075 = vunpack.c.l.b16 %v12609
    %v13076 = vunpack.c.h.b16 %v12609
    %v13077 = vunpack.c.l.b16 %v12610
    %v13078 = vunpack.c.l.b16 %v12611
    %v13079 = vunpack.c.h.b16 %v12611
    %v13080 = vunpack.c.l.b16 %v12612
    %v13081 = vunpack.c.l.b16 %v12613
    %v13082 = vunpack.c.h.b16 %v12613
    %v13083 = vunpack.c.l.b16 %v12614
    %v13084 = vunpack.c.l.b16 %v12615
    %v13085 = vunpack.c.h.b16 %v12615
    %v13086 = vunpack.c.l.b16 %v12616
    %v13087 = vunpack.c.l.b16 %v12617
    %v13088 = vunpack.c.h.b16 %v12617
    %v13089 = vunpack.c.l.b16 %v12618
    %v13090 = vunpack.c.l.b16 %v12619
    %v13091 = vunpack.c.h.b16 %v12619
    %v13092 = vunpack.c.l.b16 %v12620
    %v13093 = vunpack.c.l.b16 %v12621
    %v13094 = vunpack.c.h.b16 %v12621
    %v13095 = vunpack.c.l.b16 %v12622
    %v13096 = vunpack.c.l.b16 %v12623
    %v13097 = vunpack.c.h.b16 %v12623
    %v13098 = vunpack.c.l.b16 %v12624
    %v13099 = vunpack.c.l.b16 %v12625
    %v13100 = vunpack.c.h.b16 %v12625
    %v13101 = vunpack.c.l.b16 %v12626
    %v13102 = vunpack.c.l.b16 %v12627
    %v13103 = vunpack.c.h.b16 %v12627
    %v13104 = vunpack.c.l.b16 %v12628
    %v13105 = vunpack.c.l.b16 %v12629
    %v13106 = vunpack.c.h.b16 %v12629
    %v13107 = vunpack.c.l.b16 %v12630
    %v13108 = vunpack.c.l.b16 %v12631
    %v13109 = vunpack.c.h.b16 %v12631
    %v13110 = vunpack.c.l.b16 %v12632
    %v13111 = vunpack.c.l.b16 %v12633
    %v13112 = vunpack.c.h.b16 %v12633
    %v13113 = vunpack.c.l.b16 %v12634
    %v13114 = vunpack.c.l.b16 %v12635
    %v13115 = vunpack.c.h.b16 %v12635
    %v13116 = vunpack.c.l.b16 %v12636
    %v13117 = vunpack.c.l.b16 %v12637
    %v13118 = vunpack.c.h.b16 %v12637
    %v13119 = vunpack.c.l.b16 %v12638
    %v13120 = vunpack.c.l.b16 %v12639
    %v13121 = vunpack.c.h.b16 %v12639
    %v13122 = vunpack.c.l.b16 %v12640
    %v13123 = vunpack.c.l.b16 %v12641
    %v13124 = vunpack.c.h.b16 %v12641
    %v13125 = vunpack.c.l.b16 %v12642
    %v13126 = vunpack.c.l.b16 %v12643
    %v13127 = vunpack.c.h.b16 %v12643
    %v13128 = vunpack.c.l.b16 %v12644
    %v13129 = vunpack.c.l.b16 %v12645
    %v13130 = vunpack.c.h.b16 %v12645
    %v13131 = vunpack.c.l.b16 %v12646
    %v13132 = vunpack.c.l.b16 %v12647
    %v13133 = vunpack.c.h.b16 %v12647
    %v13134 = vunpack.c.l.b16 %v12648
    %v13135 = vunpack.c.l.b16 %v12649
    %v13136 = vunpack.c.h.b16 %v12649
    %v13137 = vunpack.c.l.b16 %v12650
    %v13138 = vunpack.c.l.b16 %v12651
    %v13139 = vunpack.c.h.b16 %v12651
    %v13140 = vunpack.c.l.b16 %v12652
    %v13141 = vunpack.c.l.b16 %v12653
    %v13142 = vunpack.c.h.b16 %v12653
    %v13143 = vunpack.c.l.b16 %v12654
    %v13144 = vunpack.c.l.b16 %v12655
    %v13145 = vunpack.c.h.b16 %v12655
    %v13146 = vunpack.c.l.b16 %v12656
    %v13147 = vunpack.c.l.b16 %v12657
    %v13148 = vunpack.c.h.b16 %v12657
    %v13149 = vunpack.c.l.b16 %v12658
    %v13150 = vunpack.c.l.b16 %v12659
    %v13151 = vunpack.c.h.b16 %v12659
    %v13152 = vunpack.c.l.b16 %v12660
    %v13153 = vunpack.c.l.b16 %v12661
    %v13154 = vunpack.c.h.b16 %v12661
    %v13155 = vunpack.c.l.b16 %v12662
    %v13156 = vunpack.c.l.b16 %v12663
    %v13157 = vunpack.c.h.b16 %v12663
    %v13158 = vunpack.c.l.b16 %v12664
    %v13159 = vunpack.c.l.b16 %v12665
    %v13160 = vunpack.c.h.b16 %v12665
    %v13161 = vunpack.c.l.b16 %v12666
    %v13162 = vunpack.c.l.b16 %v12667
    %v13163 = vunpack.c.h.b16 %v12667
    %v13164 = vunpack.c.l.b16 %v12668
    %v13165 = vunpack.c.l.b16 %v12669
    %v13166 = vunpack.c.h.b16 %v12669
    %v13167 = vunpack.c.l.b16 %v12670
    %v13168 = vunpack.c.l.b16 %v12671
    %v13169 = vunpack.c.h.b16 %v12671
    %v13170 = vunpack.c.l.b16 %v12672
    %v13171 = vunpack.c.l.b16 %v12673
    %v13172 = vunpack.c.h.b16 %v12673
    %v13173 = vunpack.c.l.b16 %v12674
    %v13174 = vunpack.c.l.b16 %v12675
    %v13175 = vunpack.c.h.b16 %v12675
    %v13176 = vunpack.c.l.b16 %v12676
    %v13177 = vunpack.c.l.b16 %v12677
    %v13178 = vunpack.c.h.b16 %v12677
    %v13179 = vunpack.c.l.b16 %v12678
    %v13180 = vunpack.c.l.b16 %v12679
    %v13181 = vunpack.c.h.b16 %v12679
    %v13182 = vunpack.c.l.b16 %v12680
    %v13183 = vunpack.c.l.b16 %v12681
    %v13184 = vunpack.c.h.b16 %v12681
    %v13185 = vunpack.c.l.b16 %v12682
    %v13186 = vunpack.c.l.b16 %v12683
    %v13187 = vunpack.c.h.b16 %v12683
    %v13188 = vunpack.c.l.b16 %v12684
    %v13189 = vunpack.c.l.b16 %v12685
    %v13190 = vunpack.c.h.b16 %v12685
    %v13191 = vunpack.c.l.b16 %v12686
    %v13192 = vunpack.c.l.b16 %v12687
    %v13193 = vunpack.c.h.b16 %v12687
    %v13194 = vunpack.c.l.b16 %v12688
    %v13195 = vunpack.c.l.b16 %v12689
    %v13196 = vunpack.c.h.b16 %v12689
    %v13197 = vunpack.c.l.b16 %v12690
    %v13198 = vpack.c.b16 %v12907, %v12904
    %v13199 = vpack.c.b16 %v12908, %v12905
    %v13200 = vpack.c.b16 %v12909, %v12906
    %v13201 = vpack.c.b16 %v12913, %v12910
    %v13202 = vpack.c.b16 %v12914, %v12911
    %v13203 = vpack.c.b16 %v12915, %v12912
    %v13204 = vpack.c.b16 %v12919, %v12916
    %v13205 = vpack.c.b16 %v12920, %v12917
    %v13206 = vpack.c.b16 %v12921, %v12918
    %v13207 = vpack.c.b16 %v12925, %v12922
    %v13208 = vpack.c.b16 %v12926, %v12923
    %v13209 = vpack.c.b16 %v12927, %v12924
    %v13210 = vpack.c.b16 %v12931, %v12928
    %v13211 = vpack.c.b16 %v12932, %v12929
    %v13212 = vpack.c.b16 %v12933, %v12930
    %v13213 = vpack.c.b16 %v12937, %v12934
    %v13214 = vpack.c.b16 %v12938, %v12935
    %v13215 = vpack.c.b16 %v12939, %v12936
    %v13216 = vpack.c.b16 %v12943, %v12940
    %v13217 = vpack.c.b16 %v12944, %v12941
    %v13218 = vpack.c.b16 %v12945, %v12942
    %v13219 = vpack.c.b16 %v12949, %v12946
    %v13220 = vpack.c.b16 %v12950, %v12947
    %v13221 = vpack.c.b16 %v12951, %v12948
    %v13222 = vpack.c.b16 %v12955, %v12952
    %v13223 = vpack.c.b16 %v12956, %v12953
    %v13224 = vpack.c.b16 %v12957, %v12954
    %v13225 = vpack.c.b16 %v12961, %v12958
    %v13226 = vpack.c.b16 %v12962, %v12959
    %v13227 = vpack.c.b16 %v12963, %v12960
    %v13228 = vpack.c.b16 %v12967, %v12964
    %v13229 = vpack.c.b16 %v12968, %v12965
    %v13230 = vpack.c.b16 %v12969, %v12966
    %v13231 = vpack.c.b16 %v12973, %v12970
    %v13232 = vpack.c.b16 %v12974, %v12971
    %v13233 = vpack.c.b16 %v12975, %v12972
    %v13234 = vpack.c.b16 %v12979, %v12976
    %v13235 = vpack.c.b16 %v12980, %v12977
    %v13236 = vpack.c.b16 %v12981, %v12978
    %v13237 = vpack.c.b16 %v12985, %v12982
    %v13238 = vpack.c.b16 %v12986, %v12983
    %v13239 = vpack.c.b16 %v12987, %v12984
    %v13240 = vpack.c.b16 %v12991, %v12988
    %v13241 = vpack.c.b16 %v12992, %v12989
    %v13242 = vpack.c.b16 %v12993, %v12990
    %v13243 = vpack.c.b16 %v12997, %v12994
    %v13244 = vpack.c.b16 %v12998, %v12995
    %v13245 = vpack.c.b16 %v12999, %v12996
    %v13246 = vpack.c.b16 %v13003, %v13000
    %v13247 = vpack.c.b16 %v13004, %v13001
    %v13248 = vpack.c.b16 %v13005, %v13002
    %v13249 = vpack.c.b16 %v13009, %v13006
    %v13250 = vpack.c.b16 %v13010, %v13007
    %v13251 = vpack.c.b16 %v13011, %v13008
    %v13252 = vpack.c.b16 %v13015, %v13012
    %v13253 = vpack.c.b16 %v13016, %v13013
    %v13254 = vpack.c.b16 %v13017, %v13014
    %v13255 = vpack.c.b16 %v13021, %v13018
    %v13256 = vpack.c.b16 %v13022, %v13019
    %v13257 = vpack.c.b16 %v13023, %v13020
    %v13258 = vpack.c.b16 %v13027, %v13024
    %v13259 = vpack.c.b16 %v13028, %v13025
    %v13260 = vpack.c.b16 %v13029, %v13026
    %v13261 = vpack.c.b16 %v13033, %v13030
    %v13262 = vpack.c.b16 %v13034, %v13031
    %v13263 = vpack.c.b16 %v13035, %v13032
    %v13264 = vpack.c.b16 %v13039, %v13036
    %v13265 = vpack.c.b16 %v13040, %v13037
    %v13266 = vpack.c.b16 %v13041, %v13038
    %v13267 = vpack.c.b16 %v13045, %v13042
    %v13268 = vpack.c.b16 %v13046, %v13043
    %v13269 = vpack.c.b16 %v13047, %v13044
    %v13270 = vpack.c.b16 %v13051, %v13048
    %v13271 = vpack.c.b16 %v13052, %v13049
    %v13272 = vpack.c.b16 %v13053, %v13050
    %v13273 = vpack.c.b16 %v13057, %v13054
    %v13274 = vpack.c.b16 %v13058, %v13055
    %v13275 = vpack.c.b16 %v13059, %v13056
    %v13276 = vpack.c.b16 %v13063, %v13060
    %v13277 = vpack.c.b16 %v13064, %v13061
    %v13278 = vpack.c.b16 %v13065, %v13062
    %v13279 = vpack.c.b16 %v13069, %v13066
    %v13280 = vpack.c.b16 %v13070, %v13067
    %v13281 = vpack.c.b16 %v13071, %v13068
    %v13282 = vpack.c.b16 %v13075, %v13072
    %v13283 = vpack.c.b16 %v13076, %v13073
    %v13284 = vpack.c.b16 %v13077, %v13074
    %v13285 = vpack.c.b16 %v13081, %v13078
    %v13286 = vpack.c.b16 %v13082, %v13079
    %v13287 = vpack.c.b16 %v13083, %v13080
    %v13288 = vpack.c.b16 %v13087, %v13084
    %v13289 = vpack.c.b16 %v13088, %v13085
    %v13290 = vpack.c.b16 %v13089, %v13086
    %v13291 = vpack.c.b16 %v13093, %v13090
    %v13292 = vpack.c.b16 %v13094, %v13091
    %v13293 = vpack.c.b16 %v13095, %v13092
    %v13294 = vpack.c.b16 %v13099, %v13096
    %v13295 = vpack.c.b16 %v13100, %v13097
    %v13296 = vpack.c.b16 %v13101, %v13098
    %v13297 = vpack.c.b16 %v13105, %v13102
    %v13298 = vpack.c.b16 %v13106, %v13103
    %v13299 = vpack.c.b16 %v13107, %v13104
    %v13300 = vpack.c.b16 %v13111, %v13108
    %v13301 = vpack.c.b16 %v13112, %v13109
    %v13302 = vpack.c.b16 %v13113, %v13110
    %v13303 = vpack.c.b16 %v13117, %v13114
    %v13304 = vpack.c.b16 %v13118, %v13115
    %v13305 = vpack.c.b16 %v13119, %v13116
    %v13306 = vpack.c.b16 %v13123, %v13120
    %v13307 = vpack.c.b16 %v13124, %v13121
    %v13308 = vpack.c.b16 %v13125, %v13122
    %v13309 = vpack.c.b16 %v13129, %v13126
    %v13310 = vpack.c.b16 %v13130, %v13127
    %v13311 = vpack.c.b16 %v13131, %v13128
    %v13312 = vpack.c.b16 %v13135, %v13132
    %v13313 = vpack.c.b16 %v13136, %v13133
    %v13314 = vpack.c.b16 %v13137, %v13134
    %v13315 = vpack.c.b16 %v13141, %v13138
    %v13316 = vpack.c.b16 %v13142, %v13139
    %v13317 = vpack.c.b16 %v13143, %v13140
    %v13318 = vpack.c.b16 %v13147, %v13144
    %v13319 = vpack.c.b16 %v13148, %v13145
    %v13320 = vpack.c.b16 %v13149, %v13146
    %v13321 = vpack.c.b16 %v13153, %v13150
    %v13322 = vpack.c.b16 %v13154, %v13151
    %v13323 = vpack.c.b16 %v13155, %v13152
    %v13324 = vpack.c.b16 %v13159, %v13156
    %v13325 = vpack.c.b16 %v13160, %v13157
    %v13326 = vpack.c.b16 %v13161, %v13158
    %v13327 = vpack.c.b16 %v13165, %v13162
    %v13328 = vpack.c.b16 %v13166, %v13163
    %v13329 = vpack.c.b16 %v13167, %v13164
    %v13330 = vpack.c.b16 %v13171, %v13168
    %v13331 = vpack.c.b16 %v13172, %v13169
    %v13332 = vpack.c.b16 %v13173, %v13170
    %v13333 = vpack.c.b16 %v13177, %v13174
    %v13334 = vpack.c.b16 %v13178, %v13175
    %v13335 = vpack.c.b16 %v13179, %v13176
    %v13336 = vpack.c.b16 %v13183, %v13180
    %v13337 = vpack.c.b16 %v13184, %v13181
    %v13338 = vpack.c.b16 %v13185, %v13182
    %v13339 = vpack.c.b16 %v13189, %v13186
    %v13340 = vpack.c.b16 %v13190, %v13187
    %v13341 = vpack.c.b16 %v13191, %v13188
    %v13342 = vpack.c.b16 %v13195, %v13192
    %v13343 = vpack.c.b16 %v13196, %v13193
    %v13344 = vpack.c.b16 %v13197, %v13194
    %v13493 = vsel %vm4095, %v12494, 0
    %13495 = vmatprep.subr.bf16.mxu0 %v13199
    %13496 = vmatpush1.bf16.msra.mxu0 %v13198
    %13497 = vmatprep.subr.bf16.mxu0 %v13202
    %13498 = vmatpush1.bf16.msra.mxu0 %v13201
    %13499 = vmatprep.subr.bf16.mxu0 %v13205
    %13500 = vmatpush1.bf16.msra.mxu0 %v13204
    %13501 = vmatprep.subr.bf16.mxu0 %v13208
    %13502 = vmatpush1.bf16.msra.mxu0 %v13207
    %13503 = vmatprep.subr.bf16.mxu0 %v13211
    %13504 = vmatpush1.bf16.msra.mxu0 %v13210
    %13505 = vmatprep.subr.bf16.mxu0 %v13214
    %13506 = vmatpush1.bf16.msra.mxu0 %v13213
    %13507 = vmatprep.subr.bf16.mxu0 %v13217
    %13508 = vmatpush1.bf16.msra.mxu0 %v13216
    %13509 = vmatprep.subr.bf16.mxu0 %v13220
    %13510 = vmatpush1.bf16.msra.mxu0 %v13219
    %13511 = vmatprep.subr.bf16.mxu0 %v13223
    %13512 = vmatpush1.bf16.msra.mxu0 %v13222
    %13513 = vmatprep.subr.bf16.mxu0 %v13226
    %13514 = vmatpush1.bf16.msra.mxu0 %v13225
    %13515 = vmatprep.subr.bf16.mxu0 %v13229
    %13516 = vmatpush1.bf16.msra.mxu0 %v13228
    %13517 = vmatprep.subr.bf16.mxu0 %v13232
    %13518 = vmatpush1.bf16.msra.mxu0 %v13231
    %13519 = vmatprep.subr.bf16.mxu0 %v13235
    %13520 = vmatpush1.bf16.msra.mxu0 %v13234
    %13521 = vmatprep.subr.bf16.mxu0 %v13238
    %13522 = vmatpush1.bf16.msra.mxu0 %v13237
    %13523 = vmatprep.subr.bf16.mxu0 %v13241
    %13524 = vmatpush1.bf16.msra.mxu0 %v13240
    %13525 = vmatprep.subr.bf16.mxu0 %v13244
    %13526 = vmatpush1.bf16.msra.mxu0 %v13243
    %13527 = vmatprep.mubr.bf16.mxu0 %v12489
    %13528 = vmatmul.mubr.bf16.gmra.mrb[0].mxu0 %v12488
    %v13529 = vpop.f32.mrb[0].mxu0
    %v13530 = vadd.f32 %v12696, %v13529
    %v13531 = vpop.f32.mrb[0].mxu0
    %v13532 = vadd.f32 %v12700, %v13531
    %v13533 = vpop.f32.mrb[0].mxu0
    %v13534 = vpop.f32.mrb[0].mxu0
    %13535 = vdwg.mxu0
    %13536 = vmatprep.subr.bf16.mxu0 %v13247
    %13537 = vmatpush1.bf16.msra.mxu0 %v13246
    %13538 = vmatprep.subr.bf16.mxu0 %v13250
    %13539 = vmatpush1.bf16.msra.mxu0 %v13249
    %13540 = vmatprep.subr.bf16.mxu0 %v13253
    %13541 = vmatpush1.bf16.msra.mxu0 %v13252
    %13542 = vmatprep.subr.bf16.mxu0 %v13256
    %13543 = vmatpush1.bf16.msra.mxu0 %v13255
    %13544 = vmatprep.subr.bf16.mxu0 %v13259
    %13545 = vmatpush1.bf16.msra.mxu0 %v13258
    %13546 = vmatprep.subr.bf16.mxu0 %v13262
    %13547 = vmatpush1.bf16.msra.mxu0 %v13261
    %13548 = vmatprep.subr.bf16.mxu0 %v13265
    %13549 = vmatpush1.bf16.msra.mxu0 %v13264
    %13550 = vmatprep.subr.bf16.mxu0 %v13268
    %13551 = vmatpush1.bf16.msra.mxu0 %v13267
    %13552 = vmatprep.subr.bf16.mxu0 %v13271
    %13553 = vmatpush1.bf16.msra.mxu0 %v13270
    %13554 = vmatprep.subr.bf16.mxu0 %v13274
    %13555 = vmatpush1.bf16.msra.mxu0 %v13273
    %13556 = vmatprep.subr.bf16.mxu0 %v13277
    %13557 = vmatpush1.bf16.msra.mxu0 %v13276
    %13558 = vmatprep.subr.bf16.mxu0 %v13280
    %13559 = vmatpush1.bf16.msra.mxu0 %v13279
    %13560 = vmatprep.subr.bf16.mxu0 %v13283
    %13561 = vmatpush1.bf16.msra.mxu0 %v13282
    %13562 = vmatprep.subr.bf16.mxu0 %v13286
    %13563 = vmatpush1.bf16.msra.mxu0 %v13285
    %13564 = vmatprep.subr.bf16.mxu0 %v13289
    %13565 = vmatpush1.bf16.msra.mxu0 %v13288
    %13566 = vmatprep.subr.bf16.mxu0 %v13292
    %13567 = vmatpush1.bf16.msra.mxu0 %v13291
    %13568 = vmatprep.mubr.bf16.mxu0 %v12491
    %13569 = vmatmul.mubr.bf16.gmra.mrb[0].mxu0 %v12490
    %v13570 = vpop.f32.mrb[0].mxu0
    %v13571 = vadd.f32 %v13530, %v13570
    %v13572 = vpop.f32.mrb[0].mxu0
    %v13573 = vadd.f32 %v13532, %v13572
    %v13574 = vpop.f32.mrb[0].mxu0
    %v13575 = vpop.f32.mrb[0].mxu0
    %13576 = vdwg.mxu0
    %13577 = vmatprep.subr.bf16.mxu0 %v13295
    %13578 = vmatpush1.bf16.msra.mxu0 %v13294
    %13579 = vmatprep.subr.bf16.mxu0 %v13298
    %13580 = vmatpush1.bf16.msra.mxu0 %v13297
    %13581 = vmatprep.subr.bf16.mxu0 %v13301
    %13582 = vmatpush1.bf16.msra.mxu0 %v13300
    %13583 = vmatprep.subr.bf16.mxu0 %v13304
    %13584 = vmatpush1.bf16.msra.mxu0 %v13303
    %13585 = vmatprep.subr.bf16.mxu0 %v13307
    %13586 = vmatpush1.bf16.msra.mxu0 %v13306
    %13587 = vmatprep.subr.bf16.mxu0 %v13310
    %13588 = vmatpush1.bf16.msra.mxu0 %v13309
    %13589 = vmatprep.subr.bf16.mxu0 %v13313
    %13590 = vmatpush1.bf16.msra.mxu0 %v13312
    %13591 = vmatprep.subr.bf16.mxu0 %v13316
    %13592 = vmatpush1.bf16.msra.mxu0 %v13315
    %13593 = vmatprep.subr.bf16.mxu0 %v13319
    %13594 = vmatpush1.bf16.msra.mxu0 %v13318
    %13595 = vmatprep.subr.bf16.mxu0 %v13322
    %13596 = vmatpush1.bf16.msra.mxu0 %v13321
    %13597 = vmatprep.subr.bf16.mxu0 %v13325
    %13598 = vmatpush1.bf16.msra.mxu0 %v13324
    %13599 = vmatprep.subr.bf16.mxu0 %v13328
    %13600 = vmatpush1.bf16.msra.mxu0 %v13327
    %13601 = vmatprep.subr.bf16.mxu0 %v13331
    %13602 = vmatpush1.bf16.msra.mxu0 %v13330
    %13603 = vmatprep.subr.bf16.mxu0 %v13334
    %13604 = vmatpush1.bf16.msra.mxu0 %v13333
    %13605 = vmatprep.subr.bf16.mxu0 %v13337
    %13606 = vmatpush1.bf16.msra.mxu0 %v13336
    %13607 = vmatprep.subr.bf16.mxu0 %v13340
    %13608 = vmatpush1.bf16.msra.mxu0 %v13339
    %13609 = vmatprep.mubr.bf16.mxu0 %v12493
    %13610 = vmatmul.mubr.bf16.gmra.mrb[0].mxu0 %v12492
    %v13611 = vpop.f32.mrb[0].mxu0
    %v13612 = vadd.f32 %v13571, %v13611
    %v13613 = vpop.f32.mrb[0].mxu0
    %v13614 = vadd.f32 %v13573, %v13613
    %v13615 = vpop.f32.mrb[0].mxu0
    %v13616 = vpop.f32.mrb[0].mxu0
    %13617 = vdwg.mxu0
    %13618 = vmatprep.subr.bf16.mxu0 %v13343
    %13619 = vmatpush1.bf16.msra.mxu0 %v13342
    %13620 = vmatprep.subr.bf16.mxu0 0
    %13621 = vmatpush1.bf16.msra.mxu0 0
    %13622 = vmatprep.subr.bf16.mxu0 0
    %13623 = vmatpush1.bf16.msra.mxu0 0
    %13624 = vmatprep.subr.bf16.mxu0 0
    %13625 = vmatpush1.bf16.msra.mxu0 0
    %13626 = vmatprep.subr.bf16.mxu0 0
    %13627 = vmatpush1.bf16.msra.mxu0 0
    %13628 = vmatprep.subr.bf16.mxu0 0
    %13629 = vmatpush1.bf16.msra.mxu0 0
    %13630 = vmatprep.subr.bf16.mxu0 0
    %13631 = vmatpush1.bf16.msra.mxu0 0
    %13632 = vmatprep.subr.bf16.mxu0 0
    %13633 = vmatpush1.bf16.msra.mxu0 0
    %13634 = vmatprep.subr.bf16.mxu0 0
    %13635 = vmatpush1.bf16.msra.mxu0 0
    %13636 = vmatprep.subr.bf16.mxu0 0
    %13637 = vmatpush1.bf16.msra.mxu0 0
    %13638 = vmatprep.subr.bf16.mxu0 0
    %13639 = vmatpush1.bf16.msra.mxu0 0
    %13640 = vmatprep.subr.bf16.mxu0 0
    %13641 = vmatpush1.bf16.msra.mxu0 0
    %13642 = vmatprep.subr.bf16.mxu0 0
    %13643 = vmatpush1.bf16.msra.mxu0 0
    %13644 = vmatprep.subr.bf16.mxu0 0
    %13645 = vmatpush1.bf16.msra.mxu0 0
    %13646 = vmatprep.subr.bf16.mxu0 0
    %13647 = vmatpush1.bf16.msra.mxu0 0
    %13648 = vmatprep.subr.bf16.mxu0 0
    %13649 = vmatpush1.bf16.msra.mxu0 0
    %13650 = vmatprep.mubr.bf16.mxu0 0
    %13651 = vmatmul.mubr.bf16.gmra.mrb[0].mxu0 %v13493
    %v13652 = vpop.f32.mrb[0].mxu0
    %v13653 = vadd.f32 %v13612, %v13652
    %v13654 = vpop.f32.mrb[0].mxu0
    %v13655 = vadd.f32 %v13614, %v13654
    %v13656 = vpop.f32.mrb[0].mxu0
    %v13657 = vpop.f32.mrb[0].mxu0
    %13658 = vdwg.mxu0
    %13659 = vmatprep.subr.bf16.mxu0 0
    %13660 = vmatpush1.bf16.msra.mxu0 %v13200
    %13661 = vmatprep.subr.bf16.mxu0 0
    %13662 = vmatpush1.bf16.msra.mxu0 %v13203
    %13663 = vmatprep.subr.bf16.mxu0 0
    %13664 = vmatpush1.bf16.msra.mxu0 %v13206
    %13665 = vmatprep.subr.bf16.mxu0 0
    %13666 = vmatpush1.bf16.msra.mxu0 %v13209
    %13667 = vmatprep.subr.bf16.mxu0 0
    %13668 = vmatpush1.bf16.msra.mxu0 %v13212
    %13669 = vmatprep.subr.bf16.mxu0 0
    %13670 = vmatpush1.bf16.msra.mxu0 %v13215
    %13671 = vmatprep.subr.bf16.mxu0 0
    %13672 = vmatpush1.bf16.msra.mxu0 %v13218
    %13673 = vmatprep.subr.bf16.mxu0 0
    %13674 = vmatpush1.bf16.msra.mxu0 %v13221
    %13675 = vmatprep.subr.bf16.mxu0 0
    %13676 = vmatpush1.bf16.msra.mxu0 %v13224
    %13677 = vmatprep.subr.bf16.mxu0 0
    %13678 = vmatpush1.bf16.msra.mxu0 %v13227
    %13679 = vmatprep.subr.bf16.mxu0 0
    %13680 = vmatpush1.bf16.msra.mxu0 %v13230
    %13681 = vmatprep.subr.bf16.mxu0 0
    %13682 = vmatpush1.bf16.msra.mxu0 %v13233
    %13683 = vmatprep.subr.bf16.mxu0 0
    %13684 = vmatpush1.bf16.msra.mxu0 %v13236
    %13685 = vmatprep.subr.bf16.mxu0 0
    %13686 = vmatpush1.bf16.msra.mxu0 %v13239
    %13687 = vmatprep.subr.bf16.mxu0 0
    %13688 = vmatpush1.bf16.msra.mxu0 %v13242
    %13689 = vmatprep.subr.bf16.mxu0 0
    %13690 = vmatpush1.bf16.msra.mxu0 %v13245
    %13691 = vmatprep.mubr.bf16.mxu0 %v12489
    %13692 = vmatmul.mubr.bf16.gmra.mrb[0].mxu0 %v12488
    %v13693 = vpop.f32.mrb[0].mxu0
    %v13694 = vadd.f32 %v12704, %v13693
    %v13695 = vpop.f32.mrb[0].mxu0
    %v13696 = vpop.f32.mrb[0].mxu0
    %v13697 = vpop.f32.mrb[0].mxu0
    %13698 = vdwg.mxu0
    %13699 = vmatprep.subr.bf16.mxu0 0
    %13700 = vmatpush1.bf16.msra.mxu0 %v13248
    %13701 = vmatprep.subr.bf16.mxu0 0
    %13702 = vmatpush1.bf16.msra.mxu0 %v13251
    %13703 = vmatprep.subr.bf16.mxu0 0
    %13704 = vmatpush1.bf16.msra.mxu0 %v13254
    %13705 = vmatprep.subr.bf16.mxu0 0
    %13706 = vmatpush1.bf16.msra.mxu0 %v13257
    %13707 = vmatprep.subr.bf16.mxu0 0
    %13708 = vmatpush1.bf16.msra.mxu0 %v13260
    %13709 = vmatprep.subr.bf16.mxu0 0
    %13710 = vmatpush1.bf16.msra.mxu0 %v13263
    %13711 = vmatprep.subr.bf16.mxu0 0
    %13712 = vmatpush1.bf16.msra.mxu0 %v13266
    %13713 = vmatprep.subr.bf16.mxu0 0
    %13714 = vmatpush1.bf16.msra.mxu0 %v13269
    %13715 = vmatprep.subr.bf16.mxu0 0
    %13716 = vmatpush1.bf16.msra.mxu0 %v13272
    %13717 = vmatprep.subr.bf16.mxu0 0
    %13718 = vmatpush1.bf16.msra.mxu0 %v13275
    %13719 = vmatprep.subr.bf16.mxu0 0
    %13720 = vmatpush1.bf16.msra.mxu0 %v13278
    %13721 = vmatprep.subr.bf16.mxu0 0
    %13722 = vmatpush1.bf16.msra.mxu0 %v13281
    %13723 = vmatprep.subr.bf16.mxu0 0
    %13724 = vmatpush1.bf16.msra.mxu0 %v13284
    %13725 = vmatprep.subr.bf16.mxu0 0
    %13726 = vmatpush1.bf16.msra.mxu0 %v13287
    %13727 = vmatprep.subr.bf16.mxu0 0
    %13728 = vmatpush1.bf16.msra.mxu0 %v13290
    %13729 = vmatprep.subr.bf16.mxu0 0
    %13730 = vmatpush1.bf16.msra.mxu0 %v13293
    %13731 = vmatprep.mubr.bf16.mxu0 %v12491
    %13732 = vmatmul.mubr.bf16.gmra.mrb[0].mxu0 %v12490
    %v13733 = vpop.f32.mrb[0].mxu0
    %v13734 = vadd.f32 %v13694, %v13733
    %v13735 = vpop.f32.mrb[0].mxu0
    %v13736 = vpop.f32.mrb[0].mxu0
    %v13737 = vpop.f32.mrb[0].mxu0
    %13738 = vdwg.mxu0
    %13739 = vmatprep.subr.bf16.mxu0 0
    %13740 = vmatpush1.bf16.msra.mxu0 %v13296
    %13741 = vmatprep.subr.bf16.mxu0 0
    %13742 = vmatpush1.bf16.msra.mxu0 %v13299
    %13743 = vmatprep.subr.bf16.mxu0 0
    %13744 = vmatpush1.bf16.msra.mxu0 %v13302
    %13745 = vmatprep.subr.bf16.mxu0 0
    %13746 = vmatpush1.bf16.msra.mxu0 %v13305
    %13747 = vmatprep.subr.bf16.mxu0 0
    %13748 = vmatpush1.bf16.msra.mxu0 %v13308
    %13749 = vmatprep.subr.bf16.mxu0 0
    %13750 = vmatpush1.bf16.msra.mxu0 %v13311
    %13751 = vmatprep.subr.bf16.mxu0 0
    %13752 = vmatpush1.bf16.msra.mxu0 %v13314
    %13753 = vmatprep.subr.bf16.mxu0 0
    %13754 = vmatpush1.bf16.msra.mxu0 %v13317
    %13755 = vmatprep.subr.bf16.mxu0 0
    %13756 = vmatpush1.bf16.msra.mxu0 %v13320
    %13757 = vmatprep.subr.bf16.mxu0 0
    %13758 = vmatpush1.bf16.msra.mxu0 %v13323
    %13759 = vmatprep.subr.bf16.mxu0 0
    %13760 = vmatpush1.bf16.msra.mxu0 %v13326
    %13761 = vmatprep.subr.bf16.mxu0 0
    %13762 = vmatpush1.bf16.msra.mxu0 %v13329
    %13763 = vmatprep.subr.bf16.mxu0 0
    %13764 = vmatpush1.bf16.msra.mxu0 %v13332
    %13765 = vmatprep.subr.bf16.mxu0 0
    %13766 = vmatpush1.bf16.msra.mxu0 %v13335
    %13767 = vmatprep.subr.bf16.mxu0 0
    %13768 = vmatpush1.bf16.msra.mxu0 %v13338
    %13769 = vmatprep.subr.bf16.mxu0 0
    %13770 = vmatpush1.bf16.msra.mxu0 %v13341
    %13771 = vmatprep.mubr.bf16.mxu0 %v12493
    %13772 = vmatmul.mubr.bf16.gmra.mrb[0].mxu0 %v12492
    %v13773 = vpop.f32.mrb[0].mxu0
    %v13774 = vadd.f32 %v13734, %v13773
    %v13775 = vpop.f32.mrb[0].mxu0
    %v13776 = vpop.f32.mrb[0].mxu0
    %v13777 = vpop.f32.mrb[0].mxu0
    %13778 = vdwg.mxu0
    %13779 = vmatprep.subr.bf16.mxu0 0
    %13780 = vmatpush1.bf16.msra.mxu0 %v13344
    %13781 = vmatprep.subr.bf16.mxu0 0
    %13782 = vmatpush1.bf16.msra.mxu0 0
    %13783 = vmatprep.subr.bf16.mxu0 0
    %13784 = vmatpush1.bf16.msra.mxu0 0
    %13785 = vmatprep.subr.bf16.mxu0 0
    %13786 = vmatpush1.bf16.msra.mxu0 0
    %13787 = vmatprep.subr.bf16.mxu0 0
    %13788 = vmatpush1.bf16.msra.mxu0 0
    %13789 = vmatprep.subr.bf16.mxu0 0
    %13790 = vmatpush1.bf16.msra.mxu0 0
    %13791 = vmatprep.subr.bf16.mxu0 0
    %13792 = vmatpush1.bf16.msra.mxu0 0
    %13793 = vmatprep.subr.bf16.mxu0 0
    %13794 = vmatpush1.bf16.msra.mxu0 0
    %13795 = vmatprep.subr.bf16.mxu0 0
    %13796 = vmatpush1.bf16.msra.mxu0 0
    %13797 = vmatprep.subr.bf16.mxu0 0
    %13798 = vmatpush1.bf16.msra.mxu0 0
    %13799 = vmatprep.subr.bf16.mxu0 0
    %13800 = vmatpush1.bf16.msra.mxu0 0
    %13801 = vmatprep.subr.bf16.mxu0 0
    %13802 = vmatpush1.bf16.msra.mxu0 0
    %13803 = vmatprep.subr.bf16.mxu0 0
    %13804 = vmatpush1.bf16.msra.mxu0 0
    %13805 = vmatprep.subr.bf16.mxu0 0
    %13806 = vmatpush1.bf16.msra.mxu0 0
    %13807 = vmatprep.subr.bf16.mxu0 0
    %13808 = vmatpush1.bf16.msra.mxu0 0
    %13809 = vmatprep.subr.bf16.mxu0 0
    %13810 = vmatpush1.bf16.msra.mxu0 0
    %13811 = vmatprep.mubr.bf16.mxu0 0
    %13812 = vmatmul.mubr.bf16.gmra.mrb[0].mxu0 %v13493
    %v13813 = vpop.f32.mrb[0].mxu0
    %v13814 = vadd.f32 %v13774, %v13813
    %v13815 = vpop.f32.mrb[0].mxu0
    %v13816 = vpop.f32.mrb[0].mxu0
    %v13817 = vpop.f32.mrb[0].mxu0
    %13818 = vdwg.mxu0
    %v13819 = vmax.f32 %v13653, 0.0
    %v13820 = vmax.f32 %v13655, 0.0
    %v13821 = vmax.f32 %v13814, 0.0
    %v13822 = vpack.c.bf16 %v13819, %v13819
    %v13823 = vpack.c.bf16 %v13820, %v13820
    %v13824 = vpack.c.bf16 %v13821, %v13821
    %v13825 = vld [vmem:[%s10] sm:$0xf]
    %v13826 = vld [vmem:[%s10 + $0x4] sm:$0xf]
    %v13827 = vld [vmem:[%s10 + $0x8] sm:$0xf]
    %v13828 = vld [vmem:[%s10 + $0xc] sm:$0xf]
    %v13829 = vld [vmem:[%s10 + $0x10] sm:$0xf]
    %v13830 = vld [vmem:[%s10 + $0x14] sm:$0xf]
    %v13831 = vld [vmem:[%s10 + $0x18] sm:$0xf]
    %v13832 = vld [vmem:[%s10 + $0x1c] sm:$0xf]
    %v13833 = vld [vmem:[%s10 + $0x20] sm:$0xf]
    %v13834 = vld [vmem:[%s10 + $0x24] sm:$0xf]
    %v13835 = vld [vmem:[%s10 + $0x28] sm:$0xf]
    %v13836 = vld [vmem:[%s10 + $0x2c] sm:$0xf]
    %v13837 = vld [vmem:[%s10 + $0x30] sm:$0xf]
    %v13838 = vld [vmem:[%s10 + $0x34] sm:$0xf]
    %v13839 = vld [vmem:[%s10 + $0x38] sm:$0xf]
    %v13840 = vld [vmem:[%s10 + $0x3c] sm:$0xf]
    %v13841 = vld [vmem:[%s10 + $0x40] sm:$0xf]
    %v13842 = vld [vmem:[%s10 + $0x44] sm:$0xf]
    %v13843 = vld [vmem:[%s10 + $0x48] sm:$0xf]
    %v13844 = vld [vmem:[%s10 + $0x4c] sm:$0xf]
    %v13845 = vld [vmem:[%s10 + $0x50] sm:$0xf]
    %v13846 = vld [vmem:[%s10 + $0x54] sm:$0xf]
    %v13847 = vld [vmem:[%s10 + $0x58] sm:$0xf]
    %v13848 = vld [vmem:[%s10 + $0x5c] sm:$0xf]
    %v13849 = vld [vmem:[%s10 + $0x60] sm:$0xf]
    %v13850 = vld [vmem:[%s10 + $0x64] sm:$0xf]
    %v13851 = vld [vmem:[%s10 + $0x68] sm:$0xf]
    %v13852 = vld [vmem:[%s10 + $0x6c] sm:$0xf]
    %v13853 = vld [vmem:[%s10 + $0x70] sm:$0xf]
    %v13854 = vld [vmem:[%s10 + $0x74] sm:$0xf]
    %v13855 = vld [vmem:[%s10 + $0x78] sm:$0xf]
    %v13856 = vld [vmem:[%s10 + $0x7c] sm:$0xf]
    %v13857 = vld [vmem:[%s10 + $0x80] sm:$0xf]
    %v13858 = vld [vmem:[%s10 + $0x84] sm:$0xf]
    %v13859 = vld [vmem:[%s10 + $0x88] sm:$0xf]
    %v13860 = vld [vmem:[%s10 + $0x8c] sm:$0xf]
    %v13861 = vld [vmem:[%s11] sm:$0x1]
    %v13863 = vlaneseq
    %v13864 = vshrl.u32 %v13863, 7
    %v13865 = vsub.s32 0, %v13864
    %v13866 = vrot.slane %v13861, %v13865
    %v13904 = vunpack.c.l.b16 %v13825
    %v13905 = vunpack.c.l.b16 %v13826
    %v13906 = vunpack.c.l.b16 %v13827
    %v13907 = vunpack.c.l.b16 %v13828
    %v13908 = vunpack.c.l.b16 %v13829
    %v13909 = vunpack.c.l.b16 %v13830
    %v13910 = vunpack.c.l.b16 %v13831
    %v13911 = vunpack.c.l.b16 %v13832
    %v13912 = vunpack.c.l.b16 %v13833
    %v13913 = vunpack.c.l.b16 %v13834
    %v13914 = vunpack.c.l.b16 %v13835
    %v13915 = vunpack.c.l.b16 %v13836
    %v13916 = vunpack.c.l.b16 %v13837
    %v13917 = vunpack.c.l.b16 %v13838
    %v13918 = vunpack.c.l.b16 %v13839
    %v13919 = vunpack.c.l.b16 %v13840
    %v13920 = vunpack.c.l.b16 %v13841
    %v13921 = vunpack.c.l.b16 %v13842
    %v13922 = vunpack.c.l.b16 %v13843
    %v13923 = vunpack.c.l.b16 %v13844
    %v13924 = vunpack.c.l.b16 %v13845
    %v13925 = vunpack.c.l.b16 %v13846
    %v13926 = vunpack.c.l.b16 %v13847
    %v13927 = vunpack.c.l.b16 %v13848
    %v13928 = vunpack.c.l.b16 %v13849
    %v13929 = vunpack.c.l.b16 %v13850
    %v13930 = vunpack.c.l.b16 %v13851
    %v13931 = vunpack.c.l.b16 %v13852
    %v13932 = vunpack.c.l.b16 %v13853
    %v13933 = vunpack.c.l.b16 %v13854
    %v13934 = vunpack.c.l.b16 %v13855
    %v13935 = vunpack.c.l.b16 %v13856
    %v13936 = vunpack.c.l.b16 %v13857
    %v13937 = vunpack.c.l.b16 %v13858
    %v13938 = vunpack.c.l.b16 %v13859
    %v13939 = vunpack.c.l.b16 %v13860
    %v13940 = vpack.c.b16 %v13905, %v13904
    %v13941 = vpack.c.b16 %v13907, %v13906
    %v13942 = vpack.c.b16 %v13909, %v13908
    %v13943 = vpack.c.b16 %v13911, %v13910
    %v13944 = vpack.c.b16 %v13913, %v13912
    %v13945 = vpack.c.b16 %v13915, %v13914
    %v13946 = vpack.c.b16 %v13917, %v13916
    %v13947 = vpack.c.b16 %v13919, %v13918
    %v13948 = vpack.c.b16 %v13921, %v13920
    %v13949 = vpack.c.b16 %v13923, %v13922
    %v13950 = vpack.c.b16 %v13925, %v13924
    %v13951 = vpack.c.b16 %v13927, %v13926
    %v13952 = vpack.c.b16 %v13929, %v13928
    %v13953 = vpack.c.b16 %v13931, %v13930
    %v13954 = vpack.c.b16 %v13933, %v13932
    %v13955 = vpack.c.b16 %v13935, %v13934
    %v13956 = vpack.c.b16 %v13937, %v13936
    %v13957 = vpack.c.b16 %v13939, %v13938
    %v13977 = vsel %vm9581, %v13824, 0
    %13979 = vmatprep.subr.bf16.mxu0 0
    %13980 = vmatpush1.bf16.msra.mxu0 %v13940
    %13981 = vmatprep.subr.bf16.mxu0 0
    %13982 = vmatpush1.bf16.msra.mxu0 %v13941
    %13983 = vmatprep.subr.bf16.mxu0 0
    %13984 = vmatpush1.bf16.msra.mxu0 %v13942
    %13985 = vmatprep.subr.bf16.mxu0 0
    %13986 = vmatpush1.bf16.msra.mxu0 %v13943
    %13987 = vmatprep.subr.bf16.mxu0 0
    %13988 = vmatpush1.bf16.msra.mxu0 %v13944
    %13989 = vmatprep.subr.bf16.mxu0 0
    %13990 = vmatpush1.bf16.msra.mxu0 %v13945
    %13991 = vmatprep.subr.bf16.mxu0 0
    %13992 = vmatpush1.bf16.msra.mxu0 %v13946
    %13993 = vmatprep.subr.bf16.mxu0 0
    %13994 = vmatpush1.bf16.msra.mxu0 %v13947
    %13995 = vmatprep.subr.bf16.mxu0 0
    %13996 = vmatpush1.bf16.msra.mxu0 %v13948
    %13997 = vmatprep.subr.bf16.mxu0 0
    %13998 = vmatpush1.bf16.msra.mxu0 %v13949
    %13999 = vmatprep.subr.bf16.mxu0 0
    %14000 = vmatpush1.bf16.msra.mxu0 %v13950
    %14001 = vmatprep.subr.bf16.mxu0 0
    %14002 = vmatpush1.bf16.msra.mxu0 %v13951
    %14003 = vmatprep.subr.bf16.mxu0 0
    %14004 = vmatpush1.bf16.msra.mxu0 %v13952
    %14005 = vmatprep.subr.bf16.mxu0 0
    %14006 = vmatpush1.bf16.msra.mxu0 %v13953
    %14007 = vmatprep.subr.bf16.mxu0 0
    %14008 = vmatpush1.bf16.msra.mxu0 %v13954
    %14009 = vmatprep.subr.bf16.mxu0 0
    %14010 = vmatpush1.bf16.msra.mxu0 %v13955
    %14011 = vmatprep.mubr.bf16.mxu0 %v13823
    %14012 = vmatmul.mubr.bf16.gmra.mrb[0].mxu0 %v13822
    %v14013 = vpop.f32.mrb[0].mxu0
    %v14014 = vadd.f32 %v13866, %v14013
    %v14015 = vpop.f32.mrb[0].mxu0
    %v14016 = vpop.f32.mrb[0].mxu0
    %v14017 = vpop.f32.mrb[0].mxu0
    %14018 = vdwg.mxu0
    %14019 = vmatprep.subr.bf16.mxu0 0
    %14020 = vmatpush1.bf16.msra.mxu0 %v13956
    %14021 = vmatprep.subr.bf16.mxu0 0
    %14022 = vmatpush1.bf16.msra.mxu0 %v13957
    %14023 = vmatprep.subr.bf16.mxu0 0
    %14024 = vmatpush1.bf16.msra.mxu0 0
    %14025 = vmatprep.subr.bf16.mxu0 0
    %14026 = vmatpush1.bf16.msra.mxu0 0
    %14027 = vmatprep.subr.bf16.mxu0 0
    %14028 = vmatpush1.bf16.msra.mxu0 0
    %14029 = vmatprep.subr.bf16.mxu0 0
    %14030 = vmatpush1.bf16.msra.mxu0 0
    %14031 = vmatprep.subr.bf16.mxu0 0
    %14032 = vmatpush1.bf16.msra.mxu0 0
    %14033 = vmatprep.subr.bf16.mxu0 0
    %14034 = vmatpush1.bf16.msra.mxu0 0
    %14035 = vmatprep.subr.bf16.mxu0 0
    %14036 = vmatpush1.bf16.msra.mxu0 0
    %14037 = vmatprep.subr.bf16.mxu0 0
    %14038 = vmatpush1.bf16.msra.mxu0 0
    %14039 = vmatprep.subr.bf16.mxu0 0
    %14040 = vmatpush1.bf16.msra.mxu0 0
    %14041 = vmatprep.subr.bf16.mxu0 0
    %14042 = vmatpush1.bf16.msra.mxu0 0
    %14043 = vmatprep.subr.bf16.mxu0 0
    %14044 = vmatpush1.bf16.msra.mxu0 0
    %14045 = vmatprep.subr.bf16.mxu0 0
    %14046 = vmatpush1.bf16.msra.mxu0 0
    %14047 = vmatprep.subr.bf16.mxu0 0
    %14048 = vmatpush1.bf16.msra.mxu0 0
    %14049 = vmatprep.subr.bf16.mxu0 0
    %14050 = vmatpush1.bf16.msra.mxu0 0
    %14051 = vmatprep.mubr.bf16.mxu0 0
    %14052 = vmatmul.mubr.bf16.gmra.mrb[0].mxu0 %v13977
    %v14053 = vpop.f32.mrb[0].mxu0
    %v14054 = vadd.f32 %v14014, %v14053
    %v14055 = vpop.f32.mrb[0].mxu0
    %v14056 = vpop.f32.mrb[0].mxu0
    %v14057 = vpop.f32.mrb[0].mxu0
    %14058 = vdwg.mxu0
    %v14059 = vmax.f32 %v14054, 0.0
    %v14060 = vpack.c.bf16 %v14059, %v14059
    %v14061 = vld [vmem:[%s12] sm:$0xf]
    %v14062 = vld [vmem:[%s12 + $0x4] sm:$0xf]
    %v14063 = vld [vmem:[%s12 + $0x8] sm:$0xf]
    %v14064 = vld [vmem:[%s12 + $0xc] sm:$0xf]
    %v14065 = vld [vmem:[%s12 + $0x10] sm:$0xf]
    %v14066 = vld [vmem:[%s12 + $0x14] sm:$0xf]
    %v14067 = vld [vmem:[%s12 + $0x18] sm:$0xf]
    %v14068 = vld [vmem:[%s12 + $0x1c] sm:$0xf]
    %v14069 = vld [vmem:[%s12 + $0x20] sm:$0xf]
    %v14070 = vld [vmem:[%s12 + $0x24] sm:$0xf]
    %v14071 = vld [vmem:[%s12 + $0x28] sm:$0xf]
    %v14072 = vld [vmem:[%s12 + $0x2c] sm:$0xf]
    %v14073 = vld [vmem:[%s12 + $0x30] sm:$0xf]
    %v14074 = vld [vmem:[%s12 + $0x34] sm:$0xf]
    %v14075 = vld [vmem:[%s12 + $0x38] sm:$0xf]
    %v14076 = vld [vmem:[%s12 + $0x3c] sm:$0xf]
    %v14077 = vld [vmem:[%s13] sm:$0x1]
    %v14079 = vlaneseq
    %v14080 = vshrl.u32 %v14079, 7
    %v14081 = vsub.s32 0, %v14080
    %v14082 = vrot.slane %v14077, %v14081
    %v14100 = vunpack.c.l.b16 %v14061
    %v14101 = vunpack.c.l.b16 %v14062
    %v14102 = vunpack.c.l.b16 %v14063
    %v14103 = vunpack.c.l.b16 %v14064
    %v14104 = vunpack.c.l.b16 %v14065
    %v14105 = vunpack.c.l.b16 %v14066
    %v14106 = vunpack.c.l.b16 %v14067
    %v14107 = vunpack.c.l.b16 %v14068
    %v14108 = vunpack.c.l.b16 %v14069
    %v14109 = vunpack.c.l.b16 %v14070
    %v14110 = vunpack.c.l.b16 %v14071
    %v14111 = vunpack.c.l.b16 %v14072
    %v14112 = vunpack.c.l.b16 %v14073
    %v14113 = vunpack.c.l.b16 %v14074
    %v14114 = vunpack.c.l.b16 %v14075
    %v14115 = vunpack.c.l.b16 %v14076
    %v14116 = vpack.c.b16 %v14101, %v14100
    %v14117 = vpack.c.b16 %v14103, %v14102
    %v14118 = vpack.c.b16 %v14105, %v14104
    %v14119 = vpack.c.b16 %v14107, %v14106
    %v14120 = vpack.c.b16 %v14109, %v14108
    %v14121 = vpack.c.b16 %v14111, %v14110
    %v14122 = vpack.c.b16 %v14113, %v14112
    %v14123 = vpack.c.b16 %v14115, %v14114
    %14132 = vmatprep.subr.bf16.mxu0 0
    %14133 = vmatpush1.bf16.msra.mxu0 %v14116
    %14134 = vmatprep.subr.bf16.mxu0 0
    %14135 = vmatpush1.bf16.msra.mxu0 %v14117
    %14136 = vmatprep.subr.bf16.mxu0 0
    %14137 = vmatpush1.bf16.msra.mxu0 %v14118
    %14138 = vmatprep.subr.bf16.mxu0 0
    %14139 = vmatpush1.bf16.msra.mxu0 %v14119
    %14140 = vmatprep.subr.bf16.mxu0 0
    %14141 = vmatpush1.bf16.msra.mxu0 %v14120
    %14142 = vmatprep.subr.bf16.mxu0 0
    %14143 = vmatpush1.bf16.msra.mxu0 %v14121
    %14144 = vmatprep.subr.bf16.mxu0 0
    %14145 = vmatpush1.bf16.msra.mxu0 %v14122
    %14146 = vmatprep.subr.bf16.mxu0 0
    %14147 = vmatpush1.bf16.msra.mxu0 %v14123
    %14148 = vmatprep.subr.bf16.mxu0 0
    %14149 = vmatpush1.bf16.msra.mxu0 0
    %14150 = vmatprep.subr.bf16.mxu0 0
    %14151 = vmatpush1.bf16.msra.mxu0 0
    %14152 = vmatprep.subr.bf16.mxu0 0
    %14153 = vmatpush1.bf16.msra.mxu0 0
    %14154 = vmatprep.subr.bf16.mxu0 0
    %14155 = vmatpush1.bf16.msra.mxu0 0
    %14156 = vmatprep.subr.bf16.mxu0 0
    %14157 = vmatpush1.bf16.msra.mxu0 0
    %14158 = vmatprep.subr.bf16.mxu0 0
    %14159 = vmatpush1.bf16.msra.mxu0 0
    %14160 = vmatprep.subr.bf16.mxu0 0
    %14161 = vmatpush1.bf16.msra.mxu0 0
    %14162 = vmatprep.subr.bf16.mxu0 0
    %14163 = vmatpush1.bf16.msra.mxu0 0
    %14164 = vmatprep.mubr.bf16.mxu0 0
    %14165 = vmatmul.mubr.bf16.gmra.mrb[0].mxu0 %v14060
    %v14166 = vpop.f32.mrb[0].mxu0
    %v14167 = vadd.f32 %v14082, %v14166
    %v14168 = vpop.f32.mrb[0].mxu0
    %v14169 = vpop.f32.mrb[0].mxu0
    %v14170 = vpop.f32.mrb[0].mxu0
    %14171 = vdwg.mxu0
    %v14172 = vmul.f32 %v14167, 1.442695
    %v14173 = vpow.pop %v14172
    %v14174 = vld [vmem:[%s14] sm:$0x3]
    %14176 = vrot.lane.b32.xlu0 %v14174, 8
    %v14177 = vpop.permute.xlu0 %14176
    %v14179 = vmul.f32 %v14173, %v14177
    %14181 = vrot.lane.b32.xlu0 %v14179, 120
    %v14182 = vpop.permute.xlu0 %14181
    %v14184 = vadd.f32 %v14167, %v14182
    %vm14185 = vcmask 58368
    %14186 = vst.msk [vmem:[#allocation2] sm:$0x3] %vm14185, %v14184
    %v14187 = vmul.f32 %v14173, %v14173
    %v14188 = vmul.f32 %v14167, %v14167
    %14190 = vrot.lane.b32.xlu0 %v14188, 8
    %v14191 = vpop.permute.xlu0 %14190
    %v14193 = vadd.f32 %v14187, %v14191
    %v14194 = vsub.f32 %v14193, %v14167
    %v14195 = vsub.f32 %v14194, 0.5
    %14197 = vrot.lane.b32.xlu0 %v14195, 120
    %v14198 = vpop.permute.xlu0 %14197
    %v14200 = vsel %vm14185, %v14198, 0.0
    %14201 = vadd.xlane.f32.xlu0 %v14200
    %v14202 = vpop.xlane.xlu0 %14201
    %v14203 = vsel %vm10726, %v14202, 0.0
    %v14204 = vrot.slane %v14203, 4
    %v14205 = vadd.f32 %v14203, %v14204
    %v14206 = vrot.slane %v14205, 2
    %v14207 = vadd.f32 %v14205, %v14206
    %v14208 = vrot.slane %v14207, 1
    %v14209 = vadd.f32 %v14207, %v14208
    %vm14210 = vcmask 0
    %14211 = vst.msk [vmem:[#allocation4] sm:$0x1] %vm14210, %v14209
    // Predicated region
    $region62: #{variational_encoder_forward.1} parent=1 // pred_check
      _
    $region63: #{variational_encoder_forward.1} parent=1 // pred_check_branch
      %14213 = sbr.rel (0) target = $region65
    $region64: #{variational_encoder_forward.1} parent=1 // pred_region
      %s14215 = ssub.s32 32, 32
      %14216 = vsyncadd [#allocation3], %s14215
      %s14218 = sshll.u32 [#allocation2], 4
      %s14219 = int_to_ptr.vmem [resolvable:$true] %s14218
      %14221 = dma.vmem_to_hbm [thread:$0]  %s14219, 32, %s15, [#allocation3]
    $region65: #{variational_encoder_forward.1} parent=1 // pred_fallthru
      _
    // Predicated region
    $region66: #{variational_encoder_forward.1} parent=1 // pred_check
      _
    $region67: #{variational_encoder_forward.1} parent=1 // pred_check_branch
      %14223 = sbr.rel (0) target = $region69
    $region68: #{variational_encoder_forward.1} parent=1 // pred_region
      %s14225 = ssub.s32 16, 16
      %14226 = vsyncadd [#allocation5], %s14225
      %s14228 = sshll.u32 [#allocation4], 4
      %s14229 = int_to_ptr.vmem [resolvable:$true] %s14228
      %14231 = dma.vmem_to_hbm [thread:$0]  %s14229, 16, %s16, [#allocation5]
    $region69: #{variational_encoder_forward.1} parent=1 // pred_fallthru
      _
    // Predicated region
    $region70: #{variational_encoder_forward.1} parent=1 // pred_check
      _
    $region71: #{variational_encoder_forward.1} parent=1 // pred_check_branch
      %14233 = sbr.rel (0) target = $region73
    $region72: #{variational_encoder_forward.1} parent=1 // pred_region
      %14234 = dma.done [#allocation3], 32
    $region73: #{variational_encoder_forward.1} parent=1 // pred_fallthru
      _
    // Predicated region
    $region74: #{variational_encoder_forward.1} parent=1 // pred_check
      _
    $region75: #{variational_encoder_forward.1} parent=1 // pred_check_branch
      %14236 = sbr.rel (0) target = $region77
    $region76: #{variational_encoder_forward.1} parent=1 // pred_region
      %14237 = dma.done [#allocation5], 16
    $region77: #{variational_encoder_forward.1} parent=1 // pred_fallthru
      _
    %14238 = vsyncpa [#allocation3], 1
    %14239 = vsyncpa [#allocation5], 1

</llo_original>
